<compile_context>
chip_gen: v6e
topology: v6e:2x2x1
jax: 0.10.0
libtpu: 0.0.40
codegen_flags: <defaults>
</compile_context>

<pallas_src>
import functools

import jax
import jax.numpy as jnp
from jax import lax
from jax.experimental import pallas as pl
from jax.experimental.pallas import tpu as pltpu


NEG = -1.0e12      # masked_fill value from the reference `pool`


def _round_up(x, m):
    return (x + m - 1) // m * m


def _default_vmem_limit():
    """Generation-dependent scoped-VMEM budget (v5e/v6e: 96 MiB, v7x: 48 MiB)."""
    try:
        cap = getattr(pltpu.get_tpu_info(), "vmem_capacity_bytes", None)
        if cap:
            return int(min(max(cap * 3 // 4, 32 * 1024 * 1024), 96 * 1024 * 1024))
    except Exception:
        pass
    return 32 * 1024 * 1024


_VMEM_LIMIT = _default_vmem_limit()


def _pick_tile(n, candidates):
    for c in candidates:
        if c and c <= n and n % c == 0:
            return c
    return n


def _pick_time_tile(L, bytes_per_step, budget):
    for c in (512, 256, 128, 64, 32, 16, 8):
        if L % c == 0 and c * bytes_per_step <= budget:
            return c
    for c in (512, 256, 128, 64, 32, 16, 8):
        if L % c == 0:
            return c
    return L


def _sigmoid(x):
    # logistic via tanh: a single EUP push instead of exp + reciprocal.
    return 0.5 * (jnp.tanh(0.5 * x) + 1.0)


# --------------------------------------------------------------------------
# Tiled bf16 matmul + bias (MXU, f32 accumulation)
# --------------------------------------------------------------------------
def _matmul_bias_kernel_1k(x_ref, w_ref, b_ref, o_ref):
    o_ref[...] = (jnp.dot(x_ref[...], w_ref[...],
                          preferred_element_type=jnp.float32)
                  + b_ref[...]).astype(o_ref.dtype)


def _matmul_bias_kernel_acc(x_ref, w_ref, b_ref, o_ref, acc_ref):
    k = pl.program_id(2)

    @pl.when(k == 0)
    def _():
        acc_ref[...] = jnp.zeros_like(acc_ref)

    acc_ref[...] += jnp.dot(x_ref[...], w_ref[...],
                            preferred_element_type=jnp.float32)

    @pl.when(k == pl.num_programs(2) - 1)
    def _():
        o_ref[...] = (acc_ref[...] + b_ref[...]).astype(o_ref.dtype)


def matmul_bias(x, w, b, *, out_dtype=jnp.float32, tm=256, tn=None, tk=None):
    """(M,K) @ (K,N) + b.  bf16 MXU operands, f32 accumulation.

    Fast path: if x is already bf16 with aligned shapes and w/b are pre-padded
    (done once in prepare_params), no per-call pad/cast is emitted."""
    M, K = x.shape
    N = w.shape[1]
    aligned = (x.dtype == jnp.bfloat16 and w.dtype == jnp.bfloat16
               and M % 8 == 0 and K % 128 == 0 and N % 128 == 0
               and w.shape[0] == K and b.ndim == 2 and b.shape == (1, N))
    if aligned:
        xp, wp, bp = x, w, b
        Mp, Kp, Np = M, K, N
    else:
        Mp, Kp, Np = _round_up(M, 8), _round_up(K, 128), _round_up(N, 128)
        xp = jnp.pad(x.astype(jnp.bfloat16), ((0, Mp - M), (0, Kp - K)))
        wp = jnp.pad(w.astype(jnp.bfloat16), ((0, Kp - K), (0, Np - N)))
        bp = jnp.pad(b.reshape(-1).astype(jnp.float32), (0, Np - N)).reshape(1, Np)

    tm = _pick_tile(Mp, (tm, 256, 128, 64, 32, 16, 8))
    tn = Np if tn is None else _pick_tile(Np, (tn, 512, 256, 128))
    tk = Kp if tk is None else _pick_tile(Kp, (tk, 512, 256, 128))
    nk = Kp // tk

    if nk == 1:
        out = pl.pallas_call(
            _matmul_bias_kernel_1k,
            out_shape=jax.ShapeDtypeStruct((Mp, Np), out_dtype),
            grid_spec=pltpu.PrefetchScalarGridSpec(
                num_scalar_prefetch=0,
                grid=(Mp // tm, Np // tn),
                in_specs=[pl.BlockSpec((tm, Kp), lambda i, j: (i, 0)),
                          pl.BlockSpec((Kp, tn), lambda i, j: (0, j)),
                          pl.BlockSpec((1, tn), lambda i, j: (0, j))],
                out_specs=pl.BlockSpec((tm, tn), lambda i, j: (i, j))),
            compiler_params=pltpu.CompilerParams(
                dimension_semantics=("parallel", "parallel"),
                vmem_limit_bytes=_VMEM_LIMIT),
        )(xp, wp, bp)
    else:
        out = pl.pallas_call(
            _matmul_bias_kernel_acc,
            out_shape=jax.ShapeDtypeStruct((Mp, Np), out_dtype),
            grid_spec=pltpu.PrefetchScalarGridSpec(
                num_scalar_prefetch=0,
                grid=(Mp // tm, Np // tn, nk),
                in_specs=[pl.BlockSpec((tm, tk), lambda i, j, k: (i, k)),
                          pl.BlockSpec((tk, tn), lambda i, j, k: (k, j)),
                          pl.BlockSpec((1, tn), lambda i, j, k: (0, j))],
                out_specs=pl.BlockSpec((tm, tn), lambda i, j, k: (i, j)),
                scratch_shapes=[pltpu.VMEM((tm, tn), jnp.float32)]),
            compiler_params=pltpu.CompilerParams(
                dimension_semantics=("parallel", "parallel", "arbitrary"),
                vmem_limit_bytes=_VMEM_LIMIT),
        )(xp, wp, bp)

    if (Mp, Np) != (M, N):
        out = out[:M, :N]
    return out


# --------------------------------------------------------------------------
# Bidirectional LSTM recurrence: time-chunked grid, both directions in one
# MXU matmul per step (block-diagonal stacked state), h/c carried in VMEM.
# Backward direction is fed / written through reversed index_maps so its
# input arrives and its output lands in forward-time order with zero glue.
# --------------------------------------------------------------------------
def _bilstm_kernel(pf_ref, pb_ref, whh_ref, hf_ref, hb_ref, hbd_ref, c_ref):
    cblk = pl.program_id(0)
    T = pf_ref.shape[0]
    Bp2, Hp2 = hbd_ref.shape          # (2*Bp, 2*Hp)
    Bp, Hp = Bp2 // 2, Hp2 // 2

    @pl.when(cblk == 0)
    def _():
        hbd_ref[...] = jnp.zeros_like(hbd_ref)
        c_ref[...] = jnp.zeros_like(c_ref)

    whh = whh_ref[...]

    def step(s, carry):
        # forward proj at local step s; backward proj at local step T-1-s
        # (its block index is already time-reversed by the index_map).
        pin = jnp.concatenate([pf_ref[s].astype(jnp.float32),
                               pb_ref[T - 1 - s].astype(jnp.float32)], axis=0)
        gates = pin + jnp.dot(hbd_ref[...].astype(jnp.bfloat16), whh,
                              preferred_element_type=jnp.float32)
        i = _sigmoid(gates[:, 0 * Hp:1 * Hp])
        f = _sigmoid(gates[:, 1 * Hp:2 * Hp])
        g = jnp.tanh(gates[:, 2 * Hp:3 * Hp])
        o = _sigmoid(gates[:, 3 * Hp:4 * Hp])
        c_new = f * c_ref[...] + i * g
        h_new = o * jnp.tanh(c_new)
        c_ref[...] = c_new
        hf_ref[s] = h_new[:Bp]
        hb_ref[T - 1 - s] = h_new[Bp:]        # lands in forward-time order
        # refresh block-diagonal state (off-diagonal blocks stay zero)
        hbd_ref[0:Bp, 0:Hp] = h_new[:Bp]
        hbd_ref[Bp:Bp2, Hp:Hp2] = h_new[Bp:]
        return carry

    lax.fori_loop(0, T, step, 0, unroll=True)


def bilstm(params, emb_t, *, L, Bp, Hp):
    """emb_t: (L, Bp, Kp) bf16 -> (hf, hb), each (L, Bp, Hp) f32, forward-time order."""
    Kp = emb_t.shape[-1]
    # one tiled bf16 matmul produces both directions' input projections (incl. biases)
    proj = matmul_bias(emb_t.reshape(L * Bp, Kp), params["w_in"], params["b_in"],
                       out_dtype=jnp.bfloat16)
    proj = proj.reshape(L, Bp, 8 * Hp)

    T = next(c for c in (16, 8, 4, 2, 1) if L % c == 0)
    Lc = L // T

    hf, hb = pl.pallas_call(
        _bilstm_kernel,
        out_shape=(jax.ShapeDtypeStruct((L, Bp, Hp), jnp.float32),
                   jax.ShapeDtypeStruct((L, Bp, Hp), jnp.float32)),
        grid_spec=pltpu.PrefetchScalarGridSpec(
            num_scalar_prefetch=0,
            grid=(Lc,),
            in_specs=[pl.BlockSpec((T, Bp, 4 * Hp), lambda c: (c, 0, 0)),
                      pl.BlockSpec((T, Bp, 4 * Hp), lambda c: (Lc - 1 - c, 0, 1)),
                      pl.BlockSpec((2 * Hp, 4 * Hp), lambda c: (0, 0))],
            out_specs=(pl.BlockSpec((T, Bp, Hp), lambda c: (c, 0, 0)),
                       pl.BlockSpec((T, Bp, Hp), lambda c: (Lc - 1 - c, 0, 0))),
            scratch_shapes=[pltpu.VMEM((2 * Bp, 2 * Hp), jnp.float32),  # block-diag h
                            pltpu.VMEM((2 * Bp, Hp), jnp.float32)]),    # cell state
        compiler_params=pltpu.CompilerParams(
            dimension_semantics=("arbitrary",),
            vmem_limit_bytes=_VMEM_LIMIT),
    )(proj, proj, params["w_hh_bd"])
    return hf, hb


# --------------------------------------------------------------------------
# Fused: pooled_output max-pool, linear_latent, subj/obj max-pools over ctx,
# and the classifier epilogue.  Grid over L-tiles, batch fully resident in
# VMEM accumulators; ctx / pooled / subj / obj never hit HBM.
# --------------------------------------------------------------------------
def _latent_pool_cls_kernel(hf_ref, hb_ref, bias_ref,
                            wlf_ref, wlb_ref, blat_ref,
                            wcp_ref, wcs_ref, wco_ref, bcls_ref,
                            logits_ref, acc_pool, acc_subj, acc_obj):
    li = pl.program_id(0)
    tl, Bp, Hp = hf_ref.shape

    @pl.when(li == 0)
    def _():
        acc_pool[...] = jnp.full_like(acc_pool, -jnp.inf)
        acc_subj[...] = jnp.full_like(acc_subj, -jnp.inf)
        acc_obj[...] = jnp.full_like(acc_obj, -jnp.inf)

    hf = hf_ref[...]                      # (tl, Bp, Hp) f32, forward-time order
    hb = hb_ref[...]
    bpool = bias_ref[0]                   # (tl, Bp, 1) additive masks
    bsubj = bias_ref[1]
    bobj = bias_ref[2]

    # pooled_output running max: forward lanes | backward lanes
    acc_pool[:, :Hp] = jnp.maximum(acc_pool[:, :Hp],
                                   jnp.max(hf + bpool, axis=0))
    acc_pool[:, Hp:] = jnp.maximum(acc_pool[:, Hp:],
                                   jnp.max(hb + bpool, axis=0))

    # ctx = linear_latent([hf | hb])  (stays in VMEM)
    ctx = (jnp.dot(hf.reshape(tl * Bp, Hp).astype(jnp.bfloat16), wlf_ref[...],
                   preferred_element_type=jnp.float32)
           + jnp.dot(hb.reshape(tl * Bp, Hp).astype(jnp.bfloat16), wlb_ref[...],
                     preferred_element_type=jnp.float32)
           + blat_ref[...])
    Hhp = ctx.shape[-1]
    ctx = ctx.reshape(tl, Bp, Hhp)
    acc_subj[...] = jnp.maximum(acc_subj[...], jnp.max(ctx + bsubj, axis=0))
    acc_obj[...] = jnp.maximum(acc_obj[...], jnp.max(ctx + bobj, axis=0))

    # classifier epilogue (removes the (B, 3H) concat + extra HBM round trip)
    @pl.when(li == pl.num_programs(0) - 1)
    def _():
        logits_ref[...] = (
            jnp.dot(acc_pool[...].astype(jnp.bfloat16), wcp_ref[...],
                    preferred_element_type=jnp.float32)
            + jnp.dot(acc_subj[...].astype(jnp.bfloat16), wcs_ref[...],
                      preferred_element_type=jnp.float32)
            + jnp.dot(acc_obj[...].astype(jnp.bfloat16), wco_ref[...],
                      preferred_element_type=jnp.float32)
            + bcls_ref[...])


def fused_latent_pool_classify(hf, hb, biases, wlf, wlb, blat, wcp, wcs, wco, bcls):
    L, Bp, Hp = hf.shape
    Hhp = wlf.shape[1]
    NCp = bcls.shape[1]
    # two f32 streams x double buffering of (tl, Bp, Hp) blocks must fit the budget
    tl = _pick_time_tile(L, Bp * Hp * 4 * 4, _VMEM_LIMIT // 2)
    grid = (L // tl,)

    return pl.pallas_call(
        _latent_pool_cls_kernel,
        out_shape=jax.ShapeDtypeStruct((Bp, NCp), jnp.float32),
        grid_spec=pltpu.PrefetchScalarGridSpec(
            num_scalar_prefetch=0,
            grid=grid,
            in_specs=[pl.BlockSpec((tl, Bp, Hp), lambda l: (l, 0, 0)),
                      pl.BlockSpec((tl, Bp, Hp), lambda l: (l, 0, 0)),
                      pl.BlockSpec((3, tl, Bp, 1), lambda l: (0, l, 0, 0)),
                      pl.BlockSpec((Hp, Hhp), lambda l: (0, 0)),
                      pl.BlockSpec((Hp, Hhp), lambda l: (0, 0)),
                      pl.BlockSpec((1, Hhp), lambda l: (0, 0)),
                      pl.BlockSpec((2 * Hp, NCp), lambda l: (0, 0)),
                      pl.BlockSpec((Hhp, NCp), lambda l: (0, 0)),
                      pl.BlockSpec((Hhp, NCp), lambda l: (0, 0)),
                      pl.BlockSpec((1, NCp), lambda l: (0, 0))],
            out_specs=pl.BlockSpec((Bp, NCp), lambda l: (0, 0)),
            scratch_shapes=[pltpu.VMEM((Bp, 2 * Hp), jnp.float32),
                            pltpu.VMEM((Bp, Hhp), jnp.float32),
                            pltpu.VMEM((Bp, Hhp), jnp.float32)]),
        compiler_params=pltpu.CompilerParams(
            dimension_semantics=("arbitrary",),
            vmem_limit_bytes=_VMEM_LIMIT),
    )(hf, hb, biases, wlf, wlb, blat, wcp, wcs, wco, bcls)


# --------------------------------------------------------------------------
# Forward pass
# --------------------------------------------------------------------------
def forward(params, input_ids, token_type_ids, attention_mask,
            subj_pos, obj_pos, pos_ids, x_type, y_type, labels,
            *, num_labels, NUM, hidden):
    # NER embedding concats are dead under latent_type == 'sols'; skip them.
    del token_type_ids, x_type, y_type
    H = hidden
    Hp = _round_up(H, 128)
    B = input_ids.shape[0]
    L = input_ids.shape[-1]
    Bp = _round_up(B, 8)

    ids = input_ids.reshape(B, L)
    pid = pos_ids.reshape(B, L)
    attn = attention_mask.reshape(B, L).astype(jnp.float32)

    # embedding lookups directly in time-major, batch-padded, K-padded bf16 layout
    ids_t = jnp.pad(ids, ((0, Bp - B), (0, 0))).T            # (L, Bp)
    pid_t = jnp.pad(pid, ((0, Bp - B), (0, 0))).T
    emb = params["embedding"][ids_t]                         # (L, Bp, E) bf16
    pemb = params["pos_emb"][pid_t]                          # (L, Bp, 30) bf16
    Kp = params["w_in"].shape[0]
    k_pad = Kp - (emb.shape[-1] + pemb.shape[-1])
    parts = [emb, pemb]
    if k_pad:
        parts.append(jnp.zeros((L, Bp, k_pad), jnp.bfloat16))
    emb_t = jnp.concatenate(parts, axis=-1)                  # (L, Bp, Kp)

    # Bidirectional LSTM (input-projection matmul + time-chunked recurrence kernel)
    hf, hb = bilstm(params, emb_t, L=L, Bp=Bp, Hp=Hp)        # (L, Bp, Hp) f32 each

    # Additive pool biases (0 keep / -1e12 masked).  The attention-mask multiply is
    # folded into the pool bias (exact under the declared full-length semantics).
    subj = subj_pos.reshape(B, -1)[:, :L]
    obj = obj_pos.reshape(B, -1)[:, :L]
    bias_pool = jnp.where(attn == 0, NEG, 0.0)
    bias_subj = jnp.where(subj != 0, NEG, 0.0)
    bias_obj = jnp.where(obj != 0, NEG, 0.0)
    biases = jnp.stack([bias_pool, bias_subj, bias_obj], axis=0).astype(jnp.float32)
    biases = jnp.pad(biases, ((0, 0), (0, Bp - B), (0, 0)))
    biases = jnp.transpose(biases, (0, 2, 1))[..., None]     # (3, L, Bp, 1)

    # TODO(synk): SOLS latent graph is undefined in the reference source; it is
    # treated as identity on ctx with aux_loss = 0, so h_subj/h_obj pool ctx directly.
    logits_p = fused_latent_pool_classify(
        hf, hb, biases,
        params["w_lat_f"], params["w_lat_b"], params["b_lat"],
        params["w_cls_pool"], params["w_cls_subj"], params["w_cls_obj"],
        params["b_cls"])                                      # (Bp, NCp) f32

    NC = num_labels * NUM
    logits = logits_p[:B, :NC].reshape(-1, NUM)
    labels = labels.reshape(-1, NUM).astype(jnp.float32)

    # BCEWithLogitsLoss (mean), stable formulation
    x = logits
    loss = jnp.mean(jnp.maximum(x, 0.0) - x * labels
                    + jnp.log1p(jnp.exp(-jnp.abs(x))))
    aux_loss = jnp.float32(0.0)
    return loss + aux_loss, logits


# --------------------------------------------------------------------------
# Parameters: raw (PyTorch-layout) construction + one-time kernel-ready prep
# --------------------------------------------------------------------------
def make_params(key, *, vocab, embed_dim, pos_vocab, hidden, num_labels, NUM):
    ks = jax.random.split(key, 16)
    s = 0.1

    def rnd(k, shape):
        return jax.random.normal(k, shape, jnp.float32) * s

    H = hidden
    E_in = embed_dim + 30
    return {
        "embedding": rnd(ks[0], (vocab, embed_dim)).at[0].set(0.0),   # PAD_ID = 0
        "pos_emb": rnd(ks[1], (pos_vocab, 30)),
        "ner_emb": rnd(ks[2], (6, 20)).at[5].set(0.0),                # dead under 'sols'
        "lstm": {
            "W_ih_f": rnd(ks[3], (4 * H, E_in)), "W_hh_f": rnd(ks[4], (4 * H, H)),
            "b_ih_f": rnd(ks[5], (4 * H,)), "b_hh_f": rnd(ks[6], (4 * H,)),
            "W_ih_b": rnd(ks[7], (4 * H, E_in)), "W_hh_b": rnd(ks[8], (4 * H, H)),
            "b_ih_b": rnd(ks[9], (4 * H,)), "b_hh_b": rnd(ks[10], (4 * H,)),
        },
        "linear_latent_w": rnd(ks[11], (H // 2, 2 * H)),   # torch (out, in)
        "linear_latent_b": jnp.zeros((H // 2,), jnp.float32),
        "classifier_w": rnd(ks[12], (num_labels * NUM, 2 * H + 2 * (H // 2))),
        "classifier_b": jnp.zeros((num_labels * NUM,), jnp.float32),
    }


def prepare_params(raw, *, hidden):
    """One-time transposes / padding (incl. K->Kp) / bias sums / bf16 casts."""
    H = hidden
    Hp = _round_up(H, 128)
    Hh = H // 2
    Hhp = _round_up(Hh, 128)
    lstm = raw["lstm"]
    E_in = lstm["W_ih_f"].shape[1]
    Kp = _round_up(E_in, 128)

    def prep_ih(W_ih, b_ih, b_hh):
        Wg = W_ih.reshape(4, H, E_in)
        Wg = jnp.pad(Wg, ((0, 0), (0, Hp - H), (0, Kp - E_in)))
        Wt = jnp.transpose(Wg, (2, 0, 1)).reshape(Kp, 4 * Hp)          # x @ W_ih.T
        bb = jnp.pad((b_ih + b_hh).reshape(4, H),
                     ((0, 0), (0, Hp - H))).reshape(4 * Hp)
        return Wt, bb

    def prep_hh(W_hh):
        Wg = W_hh.reshape(4, H, H)            # (gate, out, in)
        Wg = jnp.transpose(Wg, (2, 0, 1))     # (in, gate, out)  -> h @ W_hh.T
        Wg = jnp.pad(Wg, ((0, Hp - H), (0, 0), (0, Hp - H)))
        return Wg.reshape(Hp, 4 * Hp)

    Wf, bfv = prep_ih(lstm["W_ih_f"], lstm["b_ih_f"], lstm["b_hh_f"])
    Wb, bbv = prep_ih(lstm["W_ih_b"], lstm["b_ih_b"], lstm["b_hh_b"])

    Wl = raw["linear_latent_w"]               # (Hh, 2H)
    Wc = raw["classifier_w"]                  # (NC, 3H): [pooled 2H | subj Hh | obj Hh]
    NC = Wc.shape[0]
    NCp = _round_up(NC, 128)

    # classifier weights laid out to match the padded accumulator layouts
    wcp = jnp.zeros((2 * Hp, NCp), jnp.float32)
    wcp = wcp.at[0:H, :NC].set(Wc[:, 0:H].T)                  # pooled forward half
    wcp = wcp.at[Hp:Hp + H, :NC].set(Wc[:, H:2 * H].T)        # pooled backward half
    wcs = jnp.zeros((Hhp, NCp), jnp.float32).at[:Hh, :NC].set(Wc[:, 2 * H:2 * H + Hh].T)
    wco = jnp.zeros((Hhp, NCp), jnp.float32).at[:Hh, :NC].set(Wc[:, 2 * H + Hh:3 * H].T)

    return {
        "embedding": raw["embedding"].astype(jnp.bfloat16),
        "pos_emb": raw["pos_emb"].astype(jnp.bfloat16),
        # both directions' input projections in one (Kp, 8Hp) bf16 matrix
        "w_in": jnp.concatenate([Wf, Wb], axis=1).astype(jnp.bfloat16),
        "b_in": jnp.concatenate([bfv, bbv]).reshape(1, 8 * Hp).astype(jnp.float32),
        # stacked recurrent RHS: rows [0:Hp] forward, [Hp:2Hp] backward
        "w_hh_bd": jnp.concatenate([prep_hh(lstm["W_hh_f"]),
                                    prep_hh(lstm["W_hh_b"])],
                                   axis=0).astype(jnp.bfloat16),
        # linear_latent split into forward/backward row blocks
        "w_lat_f": jnp.pad(Wl[:, :H].T,
                           ((0, Hp - H), (0, Hhp - Hh))).astype(jnp.bfloat16),
        "w_lat_b": jnp.pad(Wl[:, H:2 * H].T,
                           ((0, Hp - H), (0, Hhp - Hh))).astype(jnp.bfloat16),
        "b_lat": jnp.pad(raw["linear_latent_b"],
                         (0, Hhp - Hh)).reshape(1, Hhp).astype(jnp.float32),
        "w_cls_pool": wcp.astype(jnp.bfloat16),
        "w_cls_subj": wcs.astype(jnp.bfloat16),
        "w_cls_obj": wco.astype(jnp.bfloat16),
        "b_cls": jnp.pad(raw["classifier_b"],
                         (0, NCp - NC)).reshape(1, NCp).astype(jnp.float32),
    }


# --------------------------------------------------------------------------
# Deterministic smoke test
# --------------------------------------------------------------------------
if __name__ == "__main__":
    B, L = 2, 16
    embed_dim = 32
    hidden = 32          # args.rnn_hidden_size
    vocab = 50
    pos_vocab = 10
    num_labels, NUM = 2, 36

    raw = make_params(jax.random.PRNGKey(0), vocab=vocab, embed_dim=embed_dim,
                      pos_vocab=pos_vocab, hidden=hidden,
                      num_labels=num_labels, NUM=NUM)
    params = prepare_params(raw, hidden=hidden)

    k1, k2, k3, k4, k5 = jax.random.split(jax.random.PRNGKey(1), 5)
    input_ids = jax.random.randint(k1, (B, 1, L), 1, vocab)
    token_type_ids = jnp.zeros((B, 1, L), jnp.int32)
    attention_mask = jnp.ones((B, 1, L), jnp.int32)          # full-length sequences
    pos_ids = jax.random.randint(k2, (B, 1, L), 0, pos_vocab)
    base = jnp.arange(L, dtype=jnp.int32)[None, :]
    subj_pos = jnp.tile(base - 3, (B, 1))     # value 0 marks entity positions
    obj_pos = jnp.tile(base - 10, (B, 1))
    x_type = jax.random.randint(k3, (B,), 0, 5)
    y_type = jax.random.randint(k4, (B,), 0, 5)
    labels = jax.random.bernoulli(k5, 0.1, (B, num_labels * NUM)).astype(jnp.float32)

    fwd = jax.jit(functools.partial(forward, num_labels=num_labels, NUM=NUM,
                                    hidden=hidden))
    loss, logits = fwd(params, input_ids, token_type_ids, attention_mask,
                       subj_pos, obj_pos, pos_ids, x_type, y_type, labels)
    jax.block_until_ready((loss, logits))
    assert logits.shape == (B * num_labels, NUM)
    assert jnp.isfinite(loss)
    print("KERNEL_OK")
</pallas_src>

<mosaic_0001>
module attributes {stable_mosaic.version = 11 : i64} {
  func.func @_matmul_bias_kernel_1k(%arg0: i32, %arg1: i32, %arg2: memref<128x128xbf16, #tpu.memory_space<vmem>>, %arg3: memref<128x1024xbf16, #tpu.memory_space<vmem>>, %arg4: memref<1x1024xf32, #tpu.memory_space<vmem>>, %arg5: memref<128x1024xbf16, #tpu.memory_space<vmem>>) attributes {dimension_semantics = [#tpu.dimension_semantics<parallel>, #tpu.dimension_semantics<parallel>], iteration_bounds = array<i64: 1, 1>, scalar_prefetch = 0 : i64, scratch_operands = 0 : i64, tpu.core_type = #tpu.core_type<tc>, window_params = [{transform_indices = @transform_0, window_bounds = array<i64: 128, 128>}, {transform_indices = @transform_1, window_bounds = array<i64: 128, 1024>}, {transform_indices = @transform_2, window_bounds = array<i64: 1, 1024>}, {transform_indices = @transform_3, window_bounds = array<i64: 128, 1024>}]} {
    %c0 = arith.constant 0 : index
    %c0_0 = arith.constant 0 : index
    %0 = vector.load %arg2[%c0, %c0_0] : memref<128x128xbf16, #tpu.memory_space<vmem>>, vector<128x128xbf16>
    %c0_1 = arith.constant 0 : index
    %c0_2 = arith.constant 0 : index
    %1 = vector.load %arg3[%c0_1, %c0_2] : memref<128x1024xbf16, #tpu.memory_space<vmem>>, vector<128x1024xbf16>
    %cst = arith.constant dense<0.000000e+00> : vector<128x1024xf32>
    %2 = tpu.matmul %0, %1, %cst {dimension_numbers = #tpu.dot_dimension_numbers<[1], [0], [0], [1], [0, 0, 1, 1], [], []>} : vector<128x128xbf16>, vector<128x1024xbf16>, vector<128x1024xf32> -> vector<128x1024xf32>
    %c0_3 = arith.constant 0 : index
    %c0_4 = arith.constant 0 : index
    %3 = vector.load %arg4[%c0_3, %c0_4] : memref<1x1024xf32, #tpu.memory_space<vmem>>, vector<1x1024xf32>
    %4 = vector.broadcast %3 : vector<1x1024xf32> to vector<128x1024xf32>
    %5 = arith.addf %2, %4 : vector<128x1024xf32>
    %6 = arith.truncf %5 : vector<128x1024xf32> to vector<128x1024xbf16>
    %c0_5 = arith.constant 0 : index
    %c0_6 = arith.constant 0 : index
    %7 = vector.load %arg5[%c0_5, %c0_6] : memref<128x1024xbf16, #tpu.memory_space<vmem>>, vector<128x1024xbf16>
    tpu.vector_store %arg5[%c0_5, %c0_6], %6 {strides = array<i32>} : memref<128x1024xbf16, #tpu.memory_space<vmem>>, vector<128x1024xbf16>,
    return
  }
  func.func @transform_0(%arg0: i32, %arg1: i32) -> (i32, i32) {
    %c0_i32 = arith.constant 0 : i32
    %c0_i32_0 = arith.constant 0 : i32
    return %arg0, %c0_i32 : i32, i32
  }
  func.func @transform_1(%arg0: i32, %arg1: i32) -> (i32, i32) {
    %c0_i32 = arith.constant 0 : i32
    %c0_i32_0 = arith.constant 0 : i32
    return %c0_i32, %arg1 : i32, i32
  }
  func.func @transform_2(%arg0: i32, %arg1: i32) -> (i32, i32) {
    %c0_i32 = arith.constant 0 : i32
    %c0_i32_0 = arith.constant 0 : i32
    return %c0_i32, %arg1 : i32, i32
  }
  func.func @transform_3(%arg0: i32, %arg1: i32) -> (i32, i32) {
    %c0_i32 = arith.constant 0 : i32
    return %arg0, %arg1 : i32, i32
  }
}

module attributes {stable_mosaic.version = 11 : i64} {
  func.func @_latent_pool_cls_kernel(%arg0: i32, %arg1: memref<16x8x128xf32, #tpu.memory_space<vmem>>, %arg2: memref<16x8x128xf32, #tpu.memory_space<vmem>>, %arg3: memref<3x16x8x1xf32, #tpu.memory_space<vmem>>, %arg4: memref<128x128xbf16, #tpu.memory_space<vmem>>, %arg5: memref<128x128xbf16, #tpu.memory_space<vmem>>, %arg6: memref<1x128xf32, #tpu.memory_space<vmem>>, %arg7: memref<256x128xbf16, #tpu.memory_space<vmem>>, %arg8: memref<128x128xbf16, #tpu.memory_space<vmem>>, %arg9: memref<128x128xbf16, #tpu.memory_space<vmem>>, %arg10: memref<1x128xf32, #tpu.memory_space<vmem>>, %arg11: memref<8x128xf32, #tpu.memory_space<vmem>>, %arg12: memref<8x256xf32, #tpu.memory_space<vmem>>, %arg13: memref<8x128xf32, #tpu.memory_space<vmem>>, %arg14: memref<8x128xf32, #tpu.memory_space<vmem>>) attributes {dimension_semantics = [#tpu.dimension_semantics<arbitrary>], iteration_bounds = array<i64: 1>, scalar_prefetch = 0 : i64, scratch_operands = 3 : i64, tpu.core_type = #tpu.core_type<tc>, window_params = [{transform_indices = @transform_0, window_bounds = array<i64: 16, 8, 128>}, {transform_indices = @transform_1, window_bounds = array<i64: 16, 8, 128>}, {transform_indices = @transform_2, window_bounds = array<i64: 3, 16, 8, 1>}, {pipeline_mode = #tpu.pipeline_mode<synchronous>, transform_indices = @transform_3, window_bounds = array<i64: 128, 128>}, {pipeline_mode = #tpu.pipeline_mode<synchronous>, transform_indices = @transform_4, window_bounds = array<i64: 128, 128>}, {pipeline_mode = #tpu.pipeline_mode<synchronous>, transform_indices = @transform_5, window_bounds = array<i64: 1, 128>}, {pipeline_mode = #tpu.pipeline_mode<synchronous>, transform_indices = @transform_6, window_bounds = array<i64: 256, 128>}, {pipeline_mode = #tpu.pipeline_mode<synchronous>, transform_indices = @transform_7, window_bounds = array<i64: 128, 128>}, {pipeline_mode = #tpu.pipeline_mode<synchronous>, transform_indices = @transform_8, window_bounds = array<i64: 128, 128>}, {pipeline_mode = #tpu.pipeline_mode<synchronous>, transform_indices = @transform_9, window_bounds = array<i64: 1, 128>}, {pipeline_mode = #tpu.pipeline_mode<synchronous>, transform_indices = @transform_10, window_bounds = array<i64: 8, 128>}]} {
    %c0_i32 = arith.constant 0 : i32
    %0 = arith.cmpi eq, %arg0, %c0_i32 : i32
    %1 = arith.extui %0 : i1 to i32
    %c0_i32_0 = arith.constant 0 : i32
    %2 = arith.cmpi ne, %1, %c0_i32_0 : i32
    scf.if %2 {
      %cst_44 = arith.constant 0xFF800000 : f32
      %51 = vector.broadcast %cst_44 : f32 to vector<8x256xf32>
      %c0_45 = arith.constant 0 : index
      %c0_46 = arith.constant 0 : index
      %52 = vector.load %arg12[%c0_45, %c0_46] : memref<8x256xf32, #tpu.memory_space<vmem>>, vector<8x256xf32>
      tpu.vector_store %arg12[%c0_45, %c0_46], %51 {strides = array<i32>} : memref<8x256xf32, #tpu.memory_space<vmem>>, vector<8x256xf32>,
      %cst_47 = arith.constant 0xFF800000 : f32
      %53 = vector.broadcast %cst_47 : f32 to vector<8x128xf32>
      %c0_48 = arith.constant 0 : index
      %c0_49 = arith.constant 0 : index
      %54 = vector.load %arg13[%c0_48, %c0_49] : memref<8x128xf32, #tpu.memory_space<vmem>>, vector<8x128xf32>
      tpu.vector_store %arg13[%c0_48, %c0_49], %53 {strides = array<i32>} : memref<8x128xf32, #tpu.memory_space<vmem>>, vector<8x128xf32>,
      %cst_50 = arith.constant 0xFF800000 : f32
      %55 = vector.broadcast %cst_50 : f32 to vector<8x128xf32>
      %c0_51 = arith.constant 0 : index
      %c0_52 = arith.constant 0 : index
      %56 = vector.load %arg14[%c0_51, %c0_52] : memref<8x128xf32, #tpu.memory_space<vmem>>, vector<8x128xf32>
      tpu.vector_store %arg14[%c0_51, %c0_52], %55 {strides = array<i32>} : memref<8x128xf32, #tpu.memory_space<vmem>>, vector<8x128xf32>,
    } else {
    }
    %c0 = arith.constant 0 : index
    %c0_1 = arith.constant 0 : index
    %c0_2 = arith.constant 0 : index
    %3 = vector.load %arg1[%c0, %c0_1, %c0_2] : memref<16x8x128xf32, #tpu.memory_space<vmem>>, vector<16x8x128xf32>
    %c0_3 = arith.constant 0 : index
    %c0_4 = arith.constant 0 : index
    %c0_5 = arith.constant 0 : index
    %4 = vector.load %arg2[%c0_3, %c0_4, %c0_5] : memref<16x8x128xf32, #tpu.memory_space<vmem>>, vector<16x8x128xf32>
    %c0_6 = arith.constant 0 : index
    %c0_7 = arith.constant 0 : index
    %c0_8 = arith.constant 0 : index
    %c0_9 = arith.constant 0 : index
    %5 = vector.load %arg3[%c0_6, %c0_7, %c0_8, %c0_9] : memref<3x16x8x1xf32, #tpu.memory_space<vmem>>, vector<1x16x8x1xf32>
    %6 = vector.shape_cast %5 : vector<1x16x8x1xf32> to vector<16x8x1xf32>
    %c1 = arith.constant 1 : index
    %c0_10 = arith.constant 0 : index
    %c0_11 = arith.constant 0 : index
    %c0_12 = arith.constant 0 : index
    %7 = vector.load %arg3[%c1, %c0_10, %c0_11, %c0_12] : memref<3x16x8x1xf32, #tpu.memory_space<vmem>>, vector<1x16x8x1xf32>
    %8 = vector.shape_cast %7 : vector<1x16x8x1xf32> to vector<16x8x1xf32>
    %c2 = arith.constant 2 : index
    %c0_13 = arith.constant 0 : index
    %c0_14 = arith.constant 0 : index
    %c0_15 = arith.constant 0 : index
    %9 = vector.load %arg3[%c2, %c0_13, %c0_14, %c0_15] : memref<3x16x8x1xf32, #tpu.memory_space<vmem>>, vector<1x16x8x1xf32>
    %10 = vector.shape_cast %9 : vector<1x16x8x1xf32> to vector<16x8x1xf32>
    %c0_16 = arith.constant 0 : index
    %c0_17 = arith.constant 0 : index
    %11 = vector.load %arg12[%c0_16, %c0_17] : memref<8x256xf32, #tpu.memory_space<vmem>>, vector<8x128xf32>
    %12 = vector.broadcast %6 : vector<16x8x1xf32> to vector<16x8x128xf32>
    %13 = arith.addf %3, %12 : vector<16x8x128xf32>
    %cst = arith.constant dense<0xFF800000> : vector<8x128xf32>
    %14 = vector.multi_reduction <maximumf>, %13, %cst [0] : vector<16x8x128xf32> to vector<8x128xf32>
    %15 = arith.maximumf %11, %14 : vector<8x128xf32>
    %c0_18 = arith.constant 0 : index
    %c0_19 = arith.constant 0 : index
    %16 = vector.load %arg12[%c0_18, %c0_19] : memref<8x256xf32, #tpu.memory_space<vmem>>, vector<8x128xf32>
    tpu.vector_store %arg12[%c0_18, %c0_19], %15 {strides = array<i32>} : memref<8x256xf32, #tpu.memory_space<vmem>>, vector<8x128xf32>,
    %c0_20 = arith.constant 0 : index
    %c128 = arith.constant 128 : index
    %17 = vector.load %arg12[%c0_20, %c128] : memref<8x256xf32, #tpu.memory_space<vmem>>, vector<8x128xf32>
    %18 = vector.broadcast %6 : vector<16x8x1xf32> to vector<16x8x128xf32>
    %19 = arith.addf %4, %18 : vector<16x8x128xf32>
    %cst_21 = arith.constant dense<0xFF800000> : vector<8x128xf32>
    %20 = vector.multi_reduction <maximumf>, %19, %cst_21 [0] : vector<16x8x128xf32> to vector<8x128xf32>
    %21 = arith.maximumf %17, %20 : vector<8x128xf32>
    %c0_22 = arith.constant 0 : index
    %c128_23 = arith.constant 128 : index
    %22 = vector.load %arg12[%c0_22, %c128_23] : memref<8x256xf32, #tpu.memory_space<vmem>>, vector<8x128xf32>
    tpu.vector_store %arg12[%c0_22, %c128_23], %21 {strides = array<i32>} : memref<8x256xf32, #tpu.memory_space<vmem>>, vector<8x128xf32>,
    %23 = vector.shape_cast %3 : vector<16x8x128xf32> to vector<128x128xf32>
    %24 = arith.truncf %23 : vector<128x128xf32> to vector<128x128xbf16>
    %c0_24 = arith.constant 0 : index
    %c0_25 = arith.constant 0 : index
    %25 = vector.load %arg4[%c0_24, %c0_25] : memref<128x128xbf16, #tpu.memory_space<vmem>>, vector<128x128xbf16>
    %cst_26 = arith.constant dense<0.000000e+00> : vector<128x128xf32>
    %26 = tpu.matmul %24, %25, %cst_26 {dimension_numbers = #tpu.dot_dimension_numbers<[1], [0], [0], [1], [0, 0, 1, 1], [], []>} : vector<128x128xbf16>, vector<128x128xbf16>, vector<128x128xf32> -> vector<128x128xf32>
    %27 = vector.shape_cast %4 : vector<16x8x128xf32> to vector<128x128xf32>
    %28 = arith.truncf %27 : vector<128x128xf32> to vector<128x128xbf16>
    %c0_27 = arith.constant 0 : index
    %c0_28 = arith.constant 0 : index
    %29 = vector.load %arg5[%c0_27, %c0_28] : memref<128x128xbf16, #tpu.memory_space<vmem>>, vector<128x128xbf16>
    %cst_29 = arith.constant dense<0.000000e+00> : vector<128x128xf32>
    %30 = tpu.matmul %28, %29, %cst_29 {dimension_numbers = #tpu.dot_dimension_numbers<[1], [0], [0], [1], [0, 0, 1, 1], [], []>} : vector<128x128xbf16>, vector<128x128xbf16>, vector<128x128xf32> -> vector<128x128xf32>
    %31 = arith.addf %26, %30 : vector<128x128xf32>
    %c0_30 = arith.constant 0 : index
    %c0_31 = arith.constant 0 : index
    %32 = vector.load %arg6[%c0_30, %c0_31] : memref<1x128xf32, #tpu.memory_space<vmem>>, vector<1x128xf32>
    %33 = vector.broadcast %32 : vector<1x128xf32> to vector<128x128xf32>
    %34 = arith.addf %31, %33 : vector<128x128xf32>
    %35 = vector.shape_cast %34 : vector<128x128xf32> to vector<16x8x128xf32>
    %c0_32 = arith.constant 0 : index
    %c0_33 = arith.constant 0 : index
    %36 = vector.load %arg13[%c0_32, %c0_33] : memref<8x128xf32, #tpu.memory_space<vmem>>, vector<8x128xf32>
    %37 = vector.broadcast %8 : vector<16x8x1xf32> to vector<16x8x128xf32>
    %38 = arith.addf %35, %37 : vector<16x8x128xf32>
    %cst_34 = arith.constant dense<0xFF800000> : vector<8x128xf32>
    %39 = vector.multi_reduction <maximumf>, %38, %cst_34 [0] : vector<16x8x128xf32> to vector<8x128xf32>
    %40 = arith.maximumf %36, %39 : vector<8x128xf32>
    %c0_35 = arith.constant 0 : index
    %c0_36 = arith.constant 0 : index
    %41 = vector.load %arg13[%c0_35, %c0_36] : memref<8x128xf32, #tpu.memory_space<vmem>>, vector<8x128xf32>
    tpu.vector_store %arg13[%c0_35, %c0_36], %40 {strides = array<i32>} : memref<8x128xf32, #tpu.memory_space<vmem>>, vector<8x128xf32>,
    %c0_37 = arith.constant 0 : index
    %c0_38 = arith.constant 0 : index
    %42 = vector.load %arg14[%c0_37, %c0_38] : memref<8x128xf32, #tpu.memory_space<vmem>>, vector<8x128xf32>
    %43 = vector.broadcast %10 : vector<16x8x1xf32> to vector<16x8x128xf32>
    %44 = arith.addf %35, %43 : vector<16x8x128xf32>
    %cst_39 = arith.constant dense<0xFF800000> : vector<8x128xf32>
    %45 = vector.multi_reduction <maximumf>, %44, %cst_39 [0] : vector<16x8x128xf32> to vector<8x128xf32>
    %46 = arith.maximumf %42, %45 : vector<8x128xf32>
    %c0_40 = arith.constant 0 : index
    %c0_41 = arith.constant 0 : index
    %47 = vector.load %arg14[%c0_40, %c0_41] : memref<8x128xf32, #tpu.memory_space<vmem>>, vector<8x128xf32>
    tpu.vector_store %arg14[%c0_40, %c0_41], %46 {strides = array<i32>} : memref<8x128xf32, #tpu.memory_space<vmem>>, vector<8x128xf32>,
    %c0_i32_42 = arith.constant 0 : i32
    %48 = arith.cmpi eq, %arg0, %c0_i32_42 : i32
    %49 = arith.extui %48 : i1 to i32
    %c0_i32_43 = arith.constant 0 : i32
    %50 = arith.cmpi ne, %49, %c0_i32_43 : i32
    scf.if %50 {
      %c0_44 = arith.constant 0 : index
      %c0_45 = arith.constant 0 : index
      %51 = vector.load %arg12[%c0_44, %c0_45] : memref<8x256xf32, #tpu.memory_space<vmem>>, vector<8x256xf32>
      %52 = arith.truncf %51 : vector<8x256xf32> to vector<8x256xbf16>
      %c0_46 = arith.constant 0 : index
      %c0_47 = arith.constant 0 : index
      %53 = vector.load %arg7[%c0_46, %c0_47] : memref<256x128xbf16, #tpu.memory_space<vmem>>, vector<256x128xbf16>
      %cst_48 = arith.constant dense<0.000000e+00> : vector<8x128xf32>
      %54 = tpu.matmul %52, %53, %cst_48 {dimension_numbers = #tpu.dot_dimension_numbers<[1], [0], [0], [1], [0, 0, 1, 1], [], []>} : vector<8x256xbf16>, vector<256x128xbf16>, vector<8x128xf32> -> vector<8x128xf32>
      %c0_49 = arith.constant 0 : index
      %c0_50 = arith.constant 0 : index
      %55 = vector.load %arg13[%c0_49, %c0_50] : memref<8x128xf32, #tpu.memory_space<vmem>>, vector<8x128xf32>
      %56 = arith.truncf %55 : vector<8x128xf32> to vector<8x128xbf16>
      %c0_51 = arith.constant 0 : index
      %c0_52 = arith.constant 0 : index
      %57 = vector.load %arg8[%c0_51, %c0_52] : memref<128x128xbf16, #tpu.memory_space<vmem>>, vector<128x128xbf16>
      %cst_53 = arith.constant dense<0.000000e+00> : vector<8x128xf32>
      %58 = tpu.matmul %56, %57, %cst_53 {dimension_numbers = #tpu.dot_dimension_numbers<[1], [0], [0], [1], [0, 0, 1, 1], [], []>} : vector<8x128xbf16>, vector<128x128xbf16>, vector<8x128xf32> -> vector<8x128xf32>
      %59 = arith.addf %54, %58 : vector<8x128xf32>
      %c0_54 = arith.constant 0 : index
      %c0_55 = arith.constant 0 : index
      %60 = vector.load %arg14[%c0_54, %c0_55] : memref<8x128xf32, #tpu.memory_space<vmem>>, vector<8x128xf32>
      %61 = arith.truncf %60 : vector<8x128xf32> to vector<8x128xbf16>
      %c0_56 = arith.constant 0 : index
      %c0_57 = arith.constant 0 : index
      %62 = vector.load %arg9[%c0_56, %c0_57] : memref<128x128xbf16, #tpu.memory_space<vmem>>, vector<128x128xbf16>
      %cst_58 = arith.constant dense<0.000000e+00> : vector<8x128xf32>
      %63 = tpu.matmul %61, %62, %cst_58 {dimension_numbers = #tpu.dot_dimension_numbers<[1], [0], [0], [1], [0, 0, 1, 1], [], []>} : vector<8x128xbf16>, vector<128x128xbf16>, vector<8x128xf32> -> vector<8x128xf32>
      %64 = arith.addf %59, %63 : vector<8x128xf32>
      %c0_59 = arith.constant 0 : index
      %c0_60 = arith.constant 0 : index
      %65 = vector.load %arg10[%c0_59, %c0_60] : memref<1x128xf32, #tpu.memory_space<vmem>>, vector<1x128xf32>
      %66 = vector.broadcast %65 : vector<1x128xf32> to vector<8x128xf32>
      %67 = arith.addf %64, %66 : vector<8x128xf32>
      %c0_61 = arith.constant 0 : index
      %c0_62 = arith.constant 0 : index
      %68 = vector.load %arg11[%c0_61, %c0_62] : memref<8x128xf32, #tpu.memory_space<vmem>>, vector<8x128xf32>
      tpu.vector_store %arg11[%c0_61, %c0_62], %67 {strides = array<i32>} : memref<8x128xf32, #tpu.memory_space<vmem>>, vector<8x128xf32>,
    } else {
    }
    return
  }
  func.func @transform_0(%arg0: i32) -> (i32, i32, i32) {
    %c0_i32 = arith.constant 0 : i32
    %c0_i32_0 = arith.constant 0 : i32
    %c0_i32_1 = arith.constant 0 : i32
    return %arg0, %c0_i32, %c0_i32_0 : i32, i32, i32
  }
  func.func @transform_1(%arg0: i32) -> (i32, i32, i32) {
    %c0_i32 = arith.constant 0 : i32
    %c0_i32_0 = arith.constant 0 : i32
    %c0_i32_1 = arith.constant 0 : i32
    return %arg0, %c0_i32, %c0_i32_0 : i32, i32, i32
  }
  func.func @transform_2(%arg0: i32) -> (i32, i32, i32, i32) {
    %c0_i32 = arith.constant 0 : i32
    %c0_i32_0 = arith.constant 0 : i32
    %c0_i32_1 = arith.constant 0 : i32
    %c0_i32_2 = arith.constant 0 : i32
    return %c0_i32, %arg0, %c0_i32_0, %c0_i32_1 : i32, i32, i32, i32
  }
  func.func @transform_3(%arg0: i32) -> (i32, i32) {
    %c0_i32 = arith.constant 0 : i32
    %c0_i32_0 = arith.constant 0 : i32
    %c0_i32_1 = arith.constant 0 : i32
    return %c0_i32, %c0_i32_0 : i32, i32
  }
  func.func @transform_4(%arg0: i32) -> (i32, i32) {
    %c0_i32 = arith.constant 0 : i32
    %c0_i32_0 = arith.constant 0 : i32
    %c0_i32_1 = arith.constant 0 : i32
    return %c0_i32, %c0_i32_0 : i32, i32
  }
  func.func @transform_5(%arg0: i32) -> (i32, i32) {
    %c0_i32 = arith.constant 0 : i32
    %c0_i32_0 = arith.constant 0 : i32
    %c0_i32_1 = arith.constant 0 : i32
    return %c0_i32, %c0_i32_0 : i32, i32
  }
  func.func @transform_6(%arg0: i32) -> (i32, i32) {
    %c0_i32 = arith.constant 0 : i32
    %c0_i32_0 = arith.constant 0 : i32
    %c0_i32_1 = arith.constant 0 : i32
    return %c0_i32, %c0_i32_0 : i32, i32
  }
  func.func @transform_7(%arg0: i32) -> (i32, i32) {
    %c0_i32 = arith.constant 0 : i32
    %c0_i32_0 = arith.constant 0 : i32
    %c0_i32_1 = arith.constant 0 : i32
    return %c0_i32, %c0_i32_0 : i32, i32
  }
  func.func @transform_8(%arg0: i32) -> (i32, i32) {
    %c0_i32 = arith.constant 0 : i32
    %c0_i32_0 = arith.constant 0 : i32
    %c0_i32_1 = arith.constant 0 : i32
    return %c0_i32, %c0_i32_0 : i32, i32
  }
  func.func @transform_9(%arg0: i32) -> (i32, i32) {
    %c0_i32 = arith.constant 0 : i32
    %c0_i32_0 = arith.constant 0 : i32
    %c0_i32_1 = arith.constant 0 : i32
    return %c0_i32, %c0_i32_0 : i32, i32
  }
  func.func @transform_10(%arg0: i32) -> (i32, i32) {
    %c0_i32 = arith.constant 0 : i32
    %c0_i32_0 = arith.constant 0 : i32
    %c0_i32_1 = arith.constant 0 : i32
    return %c0_i32, %c0_i32_0 : i32, i32
  }
}

module attributes {stable_mosaic.version = 11 : i64} {
  func.func @_bilstm_kernel(%arg0: i32, %arg1: memref<16x8x512xbf16, #tpu.memory_space<vmem>>, %arg2: memref<16x8x512xbf16, #tpu.memory_space<vmem>>, %arg3: memref<256x512xbf16, #tpu.memory_space<vmem>>, %arg4: memref<16x8x128xf32, #tpu.memory_space<vmem>>, %arg5: memref<16x8x128xf32, #tpu.memory_space<vmem>>, %arg6: memref<16x256xf32, #tpu.memory_space<vmem>>, %arg7: memref<16x128xf32, #tpu.memory_space<vmem>>) attributes {dimension_semantics = [#tpu.dimension_semantics<arbitrary>], iteration_bounds = array<i64: 1>, scalar_prefetch = 0 : i64, scratch_operands = 2 : i64, tpu.core_type = #tpu.core_type<tc>, window_params = [{transform_indices = @transform_0, window_bounds = array<i64: 16, 8, 512>}, {transform_indices = @transform_1, window_bounds = array<i64: 16, 8, 512>}, {pipeline_mode = #tpu.pipeline_mode<synchronous>, transform_indices = @transform_2, window_bounds = array<i64: 256, 512>}, {transform_indices = @transform_3, window_bounds = array<i64: 16, 8, 128>}, {transform_indices = @transform_4, window_bounds = array<i64: 16, 8, 128>}]} {
    %c0_i32 = arith.constant 0 : i32
    %0 = arith.cmpi eq, %arg0, %c0_i32 : i32
    %1 = arith.extui %0 : i1 to i32
    %c0_i32_0 = arith.constant 0 : i32
    %2 = arith.cmpi ne, %1, %c0_i32_0 : i32
    scf.if %2 {
      %cst_480 = arith.constant 0.000000e+00 : f32
      %996 = vector.broadcast %cst_480 : f32 to vector<16x256xf32>
      %c0_481 = arith.constant 0 : index
      %c0_482 = arith.constant 0 : index
      %997 = vector.load %arg6[%c0_481, %c0_482] : memref<16x256xf32, #tpu.memory_space<vmem>>, vector<16x256xf32>
      tpu.vector_store %arg6[%c0_481, %c0_482], %996 {strides = array<i32>} : memref<16x256xf32, #tpu.memory_space<vmem>>, vector<16x256xf32>,
      %cst_483 = arith.constant 0.000000e+00 : f32
      %998 = vector.broadcast %cst_483 : f32 to vector<16x128xf32>
      %c0_484 = arith.constant 0 : index
      %c0_485 = arith.constant 0 : index
      %999 = vector.load %arg7[%c0_484, %c0_485] : memref<16x128xf32, #tpu.memory_space<vmem>>, vector<16x128xf32>
      tpu.vector_store %arg7[%c0_484, %c0_485], %998 {strides = array<i32>} : memref<16x128xf32, #tpu.memory_space<vmem>>, vector<16x128xf32>,
    } else {
    }
    %c0 = arith.constant 0 : index
    %c0_1 = arith.constant 0 : index
    %3 = vector.load %arg3[%c0, %c0_1] : memref<256x512xbf16, #tpu.memory_space<vmem>>, vector<256x512xbf16>
    %c0_i32_2 = arith.constant 0 : i32
    %4 = arith.index_cast %c0_i32_2 : i32 to index
    %c0_3 = arith.constant 0 : index
    %c0_4 = arith.constant 0 : index
    %5 = vector.load %arg1[%4, %c0_3, %c0_4] : memref<16x8x512xbf16, #tpu.memory_space<vmem>>, vector<1x8x512xbf16>
    %6 = vector.shape_cast %5 : vector<1x8x512xbf16> to vector<8x512xbf16>
    %7 = arith.extf %6 : vector<8x512xbf16> to vector<8x512xf32>
    %c15_i32 = arith.constant 15 : i32
    %8 = arith.subi %c15_i32, %c0_i32_2 : i32
    %9 = arith.index_cast %8 : i32 to index
    %c0_5 = arith.constant 0 : index
    %c0_6 = arith.constant 0 : index
    %10 = vector.load %arg2[%9, %c0_5, %c0_6] : memref<16x8x512xbf16, #tpu.memory_space<vmem>>, vector<1x8x512xbf16>
    %11 = vector.shape_cast %10 : vector<1x8x512xbf16> to vector<8x512xbf16>
    %12 = arith.extf %11 : vector<8x512xbf16> to vector<8x512xf32>
    %13 = tpu.concatenate %7, %12 in 0 : vector<8x512xf32>, vector<8x512xf32> -> vector<16x512xf32>
    %c0_7 = arith.constant 0 : index
    %c0_8 = arith.constant 0 : index
    %14 = vector.load %arg6[%c0_7, %c0_8] : memref<16x256xf32, #tpu.memory_space<vmem>>, vector<16x256xf32>
    %15 = arith.truncf %14 : vector<16x256xf32> to vector<16x256xbf16>
    %cst = arith.constant dense<0.000000e+00> : vector<16x512xf32>
    %16 = tpu.matmul %15, %3, %cst {dimension_numbers = #tpu.dot_dimension_numbers<[1], [0], [0], [1], [0, 0, 1, 1], [], []>} : vector<16x256xbf16>, vector<256x512xbf16>, vector<16x512xf32> -> vector<16x512xf32>
    %17 = arith.addf %13, %16 : vector<16x512xf32>
    %18 = vector.extract_strided_slice %17 {offsets = [0, 0], sizes = [16, 128], strides = [1, 1]} : vector<16x512xf32> to vector<16x128xf32>
    %cst_9 = arith.constant 5.000000e-01 : f32
    %19 = vector.broadcast %cst_9 : f32 to vector<16x128xf32>
    %20 = arith.mulf %19, %18 : vector<16x128xf32>
    %21 = math.tanh %20 : vector<16x128xf32>
    %cst_10 = arith.constant 1.000000e+00 : f32
    %22 = vector.broadcast %cst_10 : f32 to vector<16x128xf32>
    %23 = arith.addf %21, %22 : vector<16x128xf32>
    %cst_11 = arith.constant 5.000000e-01 : f32
    %24 = vector.broadcast %cst_11 : f32 to vector<16x128xf32>
    %25 = arith.mulf %24, %23 : vector<16x128xf32>
    %26 = vector.extract_strided_slice %17 {offsets = [0, 128], sizes = [16, 128], strides = [1, 1]} : vector<16x512xf32> to vector<16x128xf32>
    %cst_12 = arith.constant 5.000000e-01 : f32
    %27 = vector.broadcast %cst_12 : f32 to vector<16x128xf32>
    %28 = arith.mulf %27, %26 : vector<16x128xf32>
    %29 = math.tanh %28 : vector<16x128xf32>
    %cst_13 = arith.constant 1.000000e+00 : f32
    %30 = vector.broadcast %cst_13 : f32 to vector<16x128xf32>
    %31 = arith.addf %29, %30 : vector<16x128xf32>
    %cst_14 = arith.constant 5.000000e-01 : f32
    %32 = vector.broadcast %cst_14 : f32 to vector<16x128xf32>
    %33 = arith.mulf %32, %31 : vector<16x128xf32>
    %34 = vector.extract_strided_slice %17 {offsets = [0, 256], sizes = [16, 128], strides = [1, 1]} : vector<16x512xf32> to vector<16x128xf32>
    %35 = math.tanh %34 : vector<16x128xf32>
    %36 = vector.extract_strided_slice %17 {offsets = [0, 384], sizes = [16, 128], strides = [1, 1]} : vector<16x512xf32> to vector<16x128xf32>
    %cst_15 = arith.constant 5.000000e-01 : f32
    %37 = vector.broadcast %cst_15 : f32 to vector<16x128xf32>
    %38 = arith.mulf %37, %36 : vector<16x128xf32>
    %39 = math.tanh %38 : vector<16x128xf32>
    %cst_16 = arith.constant 1.000000e+00 : f32
    %40 = vector.broadcast %cst_16 : f32 to vector<16x128xf32>
    %41 = arith.addf %39, %40 : vector<16x128xf32>
    %cst_17 = arith.constant 5.000000e-01 : f32
    %42 = vector.broadcast %cst_17 : f32 to vector<16x128xf32>
    %43 = arith.mulf %42, %41 : vector<16x128xf32>
    %c0_18 = arith.constant 0 : index
    %c0_19 = arith.constant 0 : index
    %44 = vector.load %arg7[%c0_18, %c0_19] : memref<16x128xf32, #tpu.memory_space<vmem>>, vector<16x128xf32>
    %45 = arith.mulf %33, %44 : vector<16x128xf32>
    %46 = arith.mulf %25, %35 : vector<16x128xf32>
    %47 = arith.addf %45, %46 : vector<16x128xf32>
    %48 = math.tanh %47 : vector<16x128xf32>
    %49 = arith.mulf %43, %48 : vector<16x128xf32>
    %c0_20 = arith.constant 0 : index
    %c0_21 = arith.constant 0 : index
    %50 = vector.load %arg7[%c0_20, %c0_21] : memref<16x128xf32, #tpu.memory_space<vmem>>, vector<16x128xf32>
    tpu.vector_store %arg7[%c0_20, %c0_21], %47 {strides = array<i32>} : memref<16x128xf32, #tpu.memory_space<vmem>>, vector<16x128xf32>,
    %51 = vector.extract_strided_slice %49 {offsets = [0, 0], sizes = [8, 128], strides = [1, 1]} : vector<16x128xf32> to vector<8x128xf32>
    %52 = arith.index_cast %c0_i32_2 : i32 to index
    %c0_22 = arith.constant 0 : index
    %c0_23 = arith.constant 0 : index
    %53 = vector.load %arg4[%52, %c0_22, %c0_23] : memref<16x8x128xf32, #tpu.memory_space<vmem>>, vector<1x8x128xf32>
    %54 = vector.shape_cast %53 : vector<1x8x128xf32> to vector<8x128xf32>
    %55 = vector.shape_cast %51 : vector<8x128xf32> to vector<1x8x128xf32>
    tpu.vector_store %arg4[%52, %c0_22, %c0_23], %55 {strides = array<i32>} : memref<16x8x128xf32, #tpu.memory_space<vmem>>, vector<1x8x128xf32>,
    %56 = vector.extract_strided_slice %49 {offsets = [8, 0], sizes = [8, 128], strides = [1, 1]} : vector<16x128xf32> to vector<8x128xf32>
    %c15_i32_24 = arith.constant 15 : i32
    %57 = arith.subi %c15_i32_24, %c0_i32_2 : i32
    %58 = arith.index_cast %57 : i32 to index
    %c0_25 = arith.constant 0 : index
    %c0_26 = arith.constant 0 : index
    %59 = vector.load %arg5[%58, %c0_25, %c0_26] : memref<16x8x128xf32, #tpu.memory_space<vmem>>, vector<1x8x128xf32>
    %60 = vector.shape_cast %59 : vector<1x8x128xf32> to vector<8x128xf32>
    %61 = vector.shape_cast %56 : vector<8x128xf32> to vector<1x8x128xf32>
    tpu.vector_store %arg5[%58, %c0_25, %c0_26], %61 {strides = array<i32>} : memref<16x8x128xf32, #tpu.memory_space<vmem>>, vector<1x8x128xf32>,
    %62 = vector.extract_strided_slice %49 {offsets = [0, 0], sizes = [8, 128], strides = [1, 1]} : vector<16x128xf32> to vector<8x128xf32>
    %c0_27 = arith.constant 0 : index
    %c0_28 = arith.constant 0 : index
    %63 = vector.load %arg6[%c0_27, %c0_28] : memref<16x256xf32, #tpu.memory_space<vmem>>, vector<8x128xf32>
    tpu.vector_store %arg6[%c0_27, %c0_28], %62 {strides = array<i32>} : memref<16x256xf32, #tpu.memory_space<vmem>>, vector<8x128xf32>,
    %64 = vector.extract_strided_slice %49 {offsets = [8, 0], sizes = [8, 128], strides = [1, 1]} : vector<16x128xf32> to vector<8x128xf32>
    %c8 = arith.constant 8 : index
    %c128 = arith.constant 128 : index
    %65 = vector.load %arg6[%c8, %c128] : memref<16x256xf32, #tpu.memory_space<vmem>>, vector<8x128xf32>
    tpu.vector_store %arg6[%c8, %c128], %64 {strides = array<i32>} : memref<16x256xf32, #tpu.memory_space<vmem>>, vector<8x128xf32>,
    %c1_i32 = arith.constant 1 : i32
    %66 = arith.index_cast %c1_i32 : i32 to index
    %c0_29 = arith.constant 0 : index
    %c0_30 = arith.constant 0 : index
    %67 = vector.load %arg1[%66, %c0_29, %c0_30] : memref<16x8x512xbf16, #tpu.memory_space<vmem>>, vector<1x8x512xbf16>
    %68 = vector.shape_cast %67 : vector<1x8x512xbf16> to vector<8x512xbf16>
    %69 = arith.extf %68 : vector<8x512xbf16> to vector<8x512xf32>
    %c15_i32_31 = arith.constant 15 : i32
    %70 = arith.subi %c15_i32_31, %c1_i32 : i32
    %71 = arith.index_cast %70 : i32 to index
    %c0_32 = arith.constant 0 : index
    %c0_33 = arith.constant 0 : index
    %72 = vector.load %arg2[%71, %c0_32, %c0_33] : memref<16x8x512xbf16, #tpu.memory_space<vmem>>, vector<1x8x512xbf16>
    %73 = vector.shape_cast %72 : vector<1x8x512xbf16> to vector<8x512xbf16>
    %74 = arith.extf %73 : vector<8x512xbf16> to vector<8x512xf32>
    %75 = tpu.concatenate %69, %74 in 0 : vector<8x512xf32>, vector<8x512xf32> -> vector<16x512xf32>
    %c0_34 = arith.constant 0 : index
    %c0_35 = arith.constant 0 : index
    %76 = vector.load %arg6[%c0_34, %c0_35] : memref<16x256xf32, #tpu.memory_space<vmem>>, vector<16x256xf32>
    %77 = arith.truncf %76 : vector<16x256xf32> to vector<16x256xbf16>
    %cst_36 = arith.constant dense<0.000000e+00> : vector<16x512xf32>
    %78 = tpu.matmul %77, %3, %cst_36 {dimension_numbers = #tpu.dot_dimension_numbers<[1], [0], [0], [1], [0, 0, 1, 1], [], []>} : vector<16x256xbf16>, vector<256x512xbf16>, vector<16x512xf32> -> vector<16x512xf32>
    %79 = arith.addf %75, %78 : vector<16x512xf32>
    %80 = vector.extract_strided_slice %79 {offsets = [0, 0], sizes = [16, 128], strides = [1, 1]} : vector<16x512xf32> to vector<16x128xf32>
    %cst_37 = arith.constant 5.000000e-01 : f32
    %81 = vector.broadcast %cst_37 : f32 to vector<16x128xf32>
    %82 = arith.mulf %81, %80 : vector<16x128xf32>
    %83 = math.tanh %82 : vector<16x128xf32>
    %cst_38 = arith.constant 1.000000e+00 : f32
    %84 = vector.broadcast %cst_38 : f32 to vector<16x128xf32>
    %85 = arith.addf %83, %84 : vector<16x128xf32>
    %cst_39 = arith.constant 5.000000e-01 : f32
    %86 = vector.broadcast %cst_39 : f32 to vector<16x128xf32>
    %87 = arith.mulf %86, %85 : vector<16x128xf32>
    %88 = vector.extract_strided_slice %79 {offsets = [0, 128], sizes = [16, 128], strides = [1, 1]} : vector<16x512xf32> to vector<16x128xf32>
    %cst_40 = arith.constant 5.000000e-01 : f32
    %89 = vector.broadcast %cst_40 : f32 to vector<16x128xf32>
    %90 = arith.mulf %89, %88 : vector<16x128xf32>
    %91 = math.tanh %90 : vector<16x128xf32>
    %cst_41 = arith.constant 1.000000e+00 : f32
    %92 = vector.broadcast %cst_41 : f32 to vector<16x128xf32>
    %93 = arith.addf %91, %92 : vector<16x128xf32>
    %cst_42 = arith.constant 5.000000e-01 : f32
    %94 = vector.broadcast %cst_42 : f32 to vector<16x128xf32>
    %95 = arith.mulf %94, %93 : vector<16x128xf32>
    %96 = vector.extract_strided_slice %79 {offsets = [0, 256], sizes = [16, 128], strides = [1, 1]} : vector<16x512xf32> to vector<16x128xf32>
    %97 = math.tanh %96 : vector<16x128xf32>
    %98 = vector.extract_strided_slice %79 {offsets = [0, 384], sizes = [16, 128], strides = [1, 1]} : vector<16x512xf32> to vector<16x128xf32>
    %cst_43 = arith.constant 5.000000e-01 : f32
    %99 = vector.broadcast %cst_43 : f32 to vector<16x128xf32>
    %100 = arith.mulf %99, %98 : vector<16x128xf32>
    %101 = math.tanh %100 : vector<16x128xf32>
    %cst_44 = arith.constant 1.000000e+00 : f32
    %102 = vector.broadcast %cst_44 : f32 to vector<16x128xf32>
    %103 = arith.addf %101, %102 : vector<16x128xf32>
    %cst_45 = arith.constant 5.000000e-01 : f32
    %104 = vector.broadcast %cst_45 : f32 to vector<16x128xf32>
    %105 = arith.mulf %104, %103 : vector<16x128xf32>
    %c0_46 = arith.constant 0 : index
    %c0_47 = arith.constant 0 : index
    %106 = vector.load %arg7[%c0_46, %c0_47] : memref<16x128xf32, #tpu.memory_space<vmem>>, vector<16x128xf32>
    %107 = arith.mulf %95, %106 : vector<16x128xf32>
    %108 = arith.mulf %87, %97 : vector<16x128xf32>
    %109 = arith.addf %107, %108 : vector<16x128xf32>
    %110 = math.tanh %109 : vector<16x128xf32>
    %111 = arith.mulf %105, %110 : vector<16x128xf32>
    %c0_48 = arith.constant 0 : index
    %c0_49 = arith.constant 0 : index
    %112 = vector.load %arg7[%c0_48, %c0_49] : memref<16x128xf32, #tpu.memory_space<vmem>>, vector<16x128xf32>
    tpu.vector_store %arg7[%c0_48, %c0_49], %109 {strides = array<i32>} : memref<16x128xf32, #tpu.memory_space<vmem>>, vector<16x128xf32>,
    %113 = vector.extract_strided_slice %111 {offsets = [0, 0], sizes = [8, 128], strides = [1, 1]} : vector<16x128xf32> to vector<8x128xf32>
    %114 = arith.index_cast %c1_i32 : i32 to index
    %c0_50 = arith.constant 0 : index
    %c0_51 = arith.constant 0 : index
    %115 = vector.load %arg4[%114, %c0_50, %c0_51] : memref<16x8x128xf32, #tpu.memory_space<vmem>>, vector<1x8x128xf32>
    %116 = vector.shape_cast %115 : vector<1x8x128xf32> to vector<8x128xf32>
    %117 = vector.shape_cast %113 : vector<8x128xf32> to vector<1x8x128xf32>
    tpu.vector_store %arg4[%114, %c0_50, %c0_51], %117 {strides = array<i32>} : memref<16x8x128xf32, #tpu.memory_space<vmem>>, vector<1x8x128xf32>,
    %118 = vector.extract_strided_slice %111 {offsets = [8, 0], sizes = [8, 128], strides = [1, 1]} : vector<16x128xf32> to vector<8x128xf32>
    %c15_i32_52 = arith.constant 15 : i32
    %119 = arith.subi %c15_i32_52, %c1_i32 : i32
    %120 = arith.index_cast %119 : i32 to index
    %c0_53 = arith.constant 0 : index
    %c0_54 = arith.constant 0 : index
    %121 = vector.load %arg5[%120, %c0_53, %c0_54] : memref<16x8x128xf32, #tpu.memory_space<vmem>>, vector<1x8x128xf32>
    %122 = vector.shape_cast %121 : vector<1x8x128xf32> to vector<8x128xf32>
    %123 = vector.shape_cast %118 : vector<8x128xf32> to vector<1x8x128xf32>
    tpu.vector_store %arg5[%120, %c0_53, %c0_54], %123 {strides = array<i32>} : memref<16x8x128xf32, #tpu.memory_space<vmem>>, vector<1x8x128xf32>,
    %124 = vector.extract_strided_slice %111 {offsets = [0, 0], sizes = [8, 128], strides = [1, 1]} : vector<16x128xf32> to vector<8x128xf32>
    %c0_55 = arith.constant 0 : index
    %c0_56 = arith.constant 0 : index
    %125 = vector.load %arg6[%c0_55, %c0_56] : memref<16x256xf32, #tpu.memory_space<vmem>>, vector<8x128xf32>
    tpu.vector_store %arg6[%c0_55, %c0_56], %124 {strides = array<i32>} : memref<16x256xf32, #tpu.memory_space<vmem>>, vector<8x128xf32>,
    %126 = vector.extract_strided_slice %111 {offsets = [8, 0], sizes = [8, 128], strides = [1, 1]} : vector<16x128xf32> to vector<8x128xf32>
    %c8_57 = arith.constant 8 : index
    %c128_58 = arith.constant 128 : index
    %127 = vector.load %arg6[%c8_57, %c128_58] : memref<16x256xf32, #tpu.memory_space<vmem>>, vector<8x128xf32>
    tpu.vector_store %arg6[%c8_57, %c128_58], %126 {strides = array<i32>} : memref<16x256xf32, #tpu.memory_space<vmem>>, vector<8x128xf32>,
    %c2_i32 = arith.constant 2 : i32
    %128 = arith.index_cast %c2_i32 : i32 to index
    %c0_59 = arith.constant 0 : index
    %c0_60 = arith.constant 0 : index
    %129 = vector.load %arg1[%128, %c0_59, %c0_60] : memref<16x8x512xbf16, #tpu.memory_space<vmem>>, vector<1x8x512xbf16>
    %130 = vector.shape_cast %129 : vector<1x8x512xbf16> to vector<8x512xbf16>
    %131 = arith.extf %130 : vector<8x512xbf16> to vector<8x512xf32>
    %c15_i32_61 = arith.constant 15 : i32
    %132 = arith.subi %c15_i32_61, %c2_i32 : i32
    %133 = arith.index_cast %132 : i32 to index
    %c0_62 = arith.constant 0 : index
    %c0_63 = arith.constant 0 : index
    %134 = vector.load %arg2[%133, %c0_62, %c0_63] : memref<16x8x512xbf16, #tpu.memory_space<vmem>>, vector<1x8x512xbf16>
    %135 = vector.shape_cast %134 : vector<1x8x512xbf16> to vector<8x512xbf16>
    %136 = arith.extf %135 : vector<8x512xbf16> to vector<8x512xf32>
    %137 = tpu.concatenate %131, %136 in 0 : vector<8x512xf32>, vector<8x512xf32> -> vector<16x512xf32>
    %c0_64 = arith.constant 0 : index
    %c0_65 = arith.constant 0 : index
    %138 = vector.load %arg6[%c0_64, %c0_65] : memref<16x256xf32, #tpu.memory_space<vmem>>, vector<16x256xf32>
    %139 = arith.truncf %138 : vector<16x256xf32> to vector<16x256xbf16>
    %cst_66 = arith.constant dense<0.000000e+00> : vector<16x512xf32>
    %140 = tpu.matmul %139, %3, %cst_66 {dimension_numbers = #tpu.dot_dimension_numbers<[1], [0], [0], [1], [0, 0, 1, 1], [], []>} : vector<16x256xbf16>, vector<256x512xbf16>, vector<16x512xf32> -> vector<16x512xf32>
    %141 = arith.addf %137, %140 : vector<16x512xf32>
    %142 = vector.extract_strided_slice %141 {offsets = [0, 0], sizes = [16, 128], strides = [1, 1]} : vector<16x512xf32> to vector<16x128xf32>
    %cst_67 = arith.constant 5.000000e-01 : f32
    %143 = vector.broadcast %cst_67 : f32 to vector<16x128xf32>
    %144 = arith.mulf %143, %142 : vector<16x128xf32>
    %145 = math.tanh %144 : vector<16x128xf32>
    %cst_68 = arith.constant 1.000000e+00 : f32
    %146 = vector.broadcast %cst_68 : f32 to vector<16x128xf32>
    %147 = arith.addf %145, %146 : vector<16x128xf32>
    %cst_69 = arith.constant 5.000000e-01 : f32
    %148 = vector.broadcast %cst_69 : f32 to vector<16x128xf32>
    %149 = arith.mulf %148, %147 : vector<16x128xf32>
    %150 = vector.extract_strided_slice %141 {offsets = [0, 128], sizes = [16, 128], strides = [1, 1]} : vector<16x512xf32> to vector<16x128xf32>
    %cst_70 = arith.constant 5.000000e-01 : f32
    %151 = vector.broadcast %cst_70 : f32 to vector<16x128xf32>
    %152 = arith.mulf %151, %150 : vector<16x128xf32>
    %153 = math.tanh %152 : vector<16x128xf32>
    %cst_71 = arith.constant 1.000000e+00 : f32
    %154 = vector.broadcast %cst_71 : f32 to vector<16x128xf32>
    %155 = arith.addf %153, %154 : vector<16x128xf32>
    %cst_72 = arith.constant 5.000000e-01 : f32
    %156 = vector.broadcast %cst_72 : f32 to vector<16x128xf32>
    %157 = arith.mulf %156, %155 : vector<16x128xf32>
    %158 = vector.extract_strided_slice %141 {offsets = [0, 256], sizes = [16, 128], strides = [1, 1]} : vector<16x512xf32> to vector<16x128xf32>
    %159 = math.tanh %158 : vector<16x128xf32>
    %160 = vector.extract_strided_slice %141 {offsets = [0, 384], sizes = [16, 128], strides = [1, 1]} : vector<16x512xf32> to vector<16x128xf32>
    %cst_73 = arith.constant 5.000000e-01 : f32
    %161 = vector.broadcast %cst_73 : f32 to vector<16x128xf32>
    %162 = arith.mulf %161, %160 : vector<16x128xf32>
    %163 = math.tanh %162 : vector<16x128xf32>
    %cst_74 = arith.constant 1.000000e+00 : f32
    %164 = vector.broadcast %cst_74 : f32 to vector<16x128xf32>
    %165 = arith.addf %163, %164 : vector<16x128xf32>
    %cst_75 = arith.constant 5.000000e-01 : f32
    %166 = vector.broadcast %cst_75 : f32 to vector<16x128xf32>
    %167 = arith.mulf %166, %165 : vector<16x128xf32>
    %c0_76 = arith.constant 0 : index
    %c0_77 = arith.constant 0 : index
    %168 = vector.load %arg7[%c0_76, %c0_77] : memref<16x128xf32, #tpu.memory_space<vmem>>, vector<16x128xf32>
    %169 = arith.mulf %157, %168 : vector<16x128xf32>
    %170 = arith.mulf %149, %159 : vector<16x128xf32>
    %171 = arith.addf %169, %170 : vector<16x128xf32>
    %172 = math.tanh %171 : vector<16x128xf32>
    %173 = arith.mulf %167, %172 : vector<16x128xf32>
    %c0_78 = arith.constant 0 : index
    %c0_79 = arith.constant 0 : index
    %174 = vector.load %arg7[%c0_78, %c0_79] : memref<16x128xf32, #tpu.memory_space<vmem>>, vector<16x128xf32>
    tpu.vector_store %arg7[%c0_78, %c0_79], %171 {strides = array<i32>} : memref<16x128xf32, #tpu.memory_space<vmem>>, vector<16x128xf32>,
    %175 = vector.extract_strided_slice %173 {offsets = [0, 0], sizes = [8, 128], strides = [1, 1]} : vector<16x128xf32> to vector<8x128xf32>
    %176 = arith.index_cast %c2_i32 : i32 to index
    %c0_80 = arith.constant 0 : index
    %c0_81 = arith.constant 0 : index
    %177 = vector.load %arg4[%176, %c0_80, %c0_81] : memref<16x8x128xf32, #tpu.memory_space<vmem>>, vector<1x8x128xf32>
    %178 = vector.shape_cast %177 : vector<1x8x128xf32> to vector<8x128xf32>
    %179 = vector.shape_cast %175 : vector<8x128xf32> to vector<1x8x128xf32>
    tpu.vector_store %arg4[%176, %c0_80, %c0_81], %179 {strides = array<i32>} : memref<16x8x128xf32, #tpu.memory_space<vmem>>, vector<1x8x128xf32>,
    %180 = vector.extract_strided_slice %173 {offsets = [8, 0], sizes = [8, 128], strides = [1, 1]} : vector<16x128xf32> to vector<8x128xf32>
    %c15_i32_82 = arith.constant 15 : i32
    %181 = arith.subi %c15_i32_82, %c2_i32 : i32
    %182 = arith.index_cast %181 : i32 to index
    %c0_83 = arith.constant 0 : index
    %c0_84 = arith.constant 0 : index
    %183 = vector.load %arg5[%182, %c0_83, %c0_84] : memref<16x8x128xf32, #tpu.memory_space<vmem>>, vector<1x8x128xf32>
    %184 = vector.shape_cast %183 : vector<1x8x128xf32> to vector<8x128xf32>
    %185 = vector.shape_cast %180 : vector<8x128xf32> to vector<1x8x128xf32>
    tpu.vector_store %arg5[%182, %c0_83, %c0_84], %185 {strides = array<i32>} : memref<16x8x128xf32, #tpu.memory_space<vmem>>, vector<1x8x128xf32>,
    %186 = vector.extract_strided_slice %173 {offsets = [0, 0], sizes = [8, 128], strides = [1, 1]} : vector<16x128xf32> to vector<8x128xf32>
    %c0_85 = arith.constant 0 : index
    %c0_86 = arith.constant 0 : index
    %187 = vector.load %arg6[%c0_85, %c0_86] : memref<16x256xf32, #tpu.memory_space<vmem>>, vector<8x128xf32>
    tpu.vector_store %arg6[%c0_85, %c0_86], %186 {strides = array<i32>} : memref<16x256xf32, #tpu.memory_space<vmem>>, vector<8x128xf32>,
    %188 = vector.extract_strided_slice %173 {offsets = [8, 0], sizes = [8, 128], strides = [1, 1]} : vector<16x128xf32> to vector<8x128xf32>
    %c8_87 = arith.constant 8 : index
    %c128_88 = arith.constant 128 : index
    %189 = vector.load %arg6[%c8_87, %c128_88] : memref<16x256xf32, #tpu.memory_space<vmem>>, vector<8x128xf32>
    tpu.vector_store %arg6[%c8_87, %c128_88], %188 {strides = array<i32>} : memref<16x256xf32, #tpu.memory_space<vmem>>, vector<8x128xf32>,
    %c3_i32 = arith.constant 3 : i32
    %190 = arith.index_cast %c3_i32 : i32 to index
    %c0_89 = arith.constant 0 : index
    %c0_90 = arith.constant 0 : index
    %191 = vector.load %arg1[%190, %c0_89, %c0_90] : memref<16x8x512xbf16, #tpu.memory_space<vmem>>, vector<1x8x512xbf16>
    %192 = vector.shape_cast %191 : vector<1x8x512xbf16> to vector<8x512xbf16>
    %193 = arith.extf %192 : vector<8x512xbf16> to vector<8x512xf32>
    %c15_i32_91 = arith.constant 15 : i32
    %194 = arith.subi %c15_i32_91, %c3_i32 : i32
    %195 = arith.index_cast %194 : i32 to index
    %c0_92 = arith.constant 0 : index
    %c0_93 = arith.constant 0 : index
    %196 = vector.load %arg2[%195, %c0_92, %c0_93] : memref<16x8x512xbf16, #tpu.memory_space<vmem>>, vector<1x8x512xbf16>
    %197 = vector.shape_cast %196 : vector<1x8x512xbf16> to vector<8x512xbf16>
    %198 = arith.extf %197 : vector<8x512xbf16> to vector<8x512xf32>
    %199 = tpu.concatenate %193, %198 in 0 : vector<8x512xf32>, vector<8x512xf32> -> vector<16x512xf32>
    %c0_94 = arith.constant 0 : index
    %c0_95 = arith.constant 0 : index
    %200 = vector.load %arg6[%c0_94, %c0_95] : memref<16x256xf32, #tpu.memory_space<vmem>>, vector<16x256xf32>
    %201 = arith.truncf %200 : vector<16x256xf32> to vector<16x256xbf16>
    %cst_96 = arith.constant dense<0.000000e+00> : vector<16x512xf32>
    %202 = tpu.matmul %201, %3, %cst_96 {dimension_numbers = #tpu.dot_dimension_numbers<[1], [0], [0], [1], [0, 0, 1, 1], [], []>} : vector<16x256xbf16>, vector<256x512xbf16>, vector<16x512xf32> -> vector<16x512xf32>
    %203 = arith.addf %199, %202 : vector<16x512xf32>
    %204 = vector.extract_strided_slice %203 {offsets = [0, 0], sizes = [16, 128], strides = [1, 1]} : vector<16x512xf32> to vector<16x128xf32>
    %cst_97 = arith.constant 5.000000e-01 : f32
    %205 = vector.broadcast %cst_97 : f32 to vector<16x128xf32>
    %206 = arith.mulf %205, %204 : vector<16x128xf32>
    %207 = math.tanh %206 : vector<16x128xf32>
    %cst_98 = arith.constant 1.000000e+00 : f32
    %208 = vector.broadcast %cst_98 : f32 to vector<16x128xf32>
    %209 = arith.addf %207, %208 : vector<16x128xf32>
    %cst_99 = arith.constant 5.000000e-01 : f32
    %210 = vector.broadcast %cst_99 : f32 to vector<16x128xf32>
    %211 = arith.mulf %210, %209 : vector<16x128xf32>
    %212 = vector.extract_strided_slice %203 {offsets = [0, 128], sizes = [16, 128], strides = [1, 1]} : vector<16x512xf32> to vector<16x128xf32>
    %cst_100 = arith.constant 5.000000e-01 : f32
    %213 = vector.broadcast %cst_100 : f32 to vector<16x128xf32>
    %214 = arith.mulf %213, %212 : vector<16x128xf32>
    %215 = math.tanh %214 : vector<16x128xf32>
    %cst_101 = arith.constant 1.000000e+00 : f32
    %216 = vector.broadcast %cst_101 : f32 to vector<16x128xf32>
    %217 = arith.addf %215, %216 : vector<16x128xf32>
    %cst_102 = arith.constant 5.000000e-01 : f32
    %218 = vector.broadcast %cst_102 : f32 to vector<16x128xf32>
    %219 = arith.mulf %218, %217 : vector<16x128xf32>
    %220 = vector.extract_strided_slice %203 {offsets = [0, 256], sizes = [16, 128], strides = [1, 1]} : vector<16x512xf32> to vector<16x128xf32>
    %221 = math.tanh %220 : vector<16x128xf32>
    %222 = vector.extract_strided_slice %203 {offsets = [0, 384], sizes = [16, 128], strides = [1, 1]} : vector<16x512xf32> to vector<16x128xf32>
    %cst_103 = arith.constant 5.000000e-01 : f32
    %223 = vector.broadcast %cst_103 : f32 to vector<16x128xf32>
    %224 = arith.mulf %223, %222 : vector<16x128xf32>
    %225 = math.tanh %224 : vector<16x128xf32>
    %cst_104 = arith.constant 1.000000e+00 : f32
    %226 = vector.broadcast %cst_104 : f32 to vector<16x128xf32>
    %227 = arith.addf %225, %226 : vector<16x128xf32>
    %cst_105 = arith.constant 5.000000e-01 : f32
    %228 = vector.broadcast %cst_105 : f32 to vector<16x128xf32>
    %229 = arith.mulf %228, %227 : vector<16x128xf32>
    %c0_106 = arith.constant 0 : index
    %c0_107 = arith.constant 0 : index
    %230 = vector.load %arg7[%c0_106, %c0_107] : memref<16x128xf32, #tpu.memory_space<vmem>>, vector<16x128xf32>
    %231 = arith.mulf %219, %230 : vector<16x128xf32>
    %232 = arith.mulf %211, %221 : vector<16x128xf32>
    %233 = arith.addf %231, %232 : vector<16x128xf32>
    %234 = math.tanh %233 : vector<16x128xf32>
    %235 = arith.mulf %229, %234 : vector<16x128xf32>
    %c0_108 = arith.constant 0 : index
    %c0_109 = arith.constant 0 : index
    %236 = vector.load %arg7[%c0_108, %c0_109] : memref<16x128xf32, #tpu.memory_space<vmem>>, vector<16x128xf32>
    tpu.vector_store %arg7[%c0_108, %c0_109], %233 {strides = array<i32>} : memref<16x128xf32, #tpu.memory_space<vmem>>, vector<16x128xf32>,
    %237 = vector.extract_strided_slice %235 {offsets = [0, 0], sizes = [8, 128], strides = [1, 1]} : vector<16x128xf32> to vector<8x128xf32>
    %238 = arith.index_cast %c3_i32 : i32 to index
    %c0_110 = arith.constant 0 : index
    %c0_111 = arith.constant 0 : index
    %239 = vector.load %arg4[%238, %c0_110, %c0_111] : memref<16x8x128xf32, #tpu.memory_space<vmem>>, vector<1x8x128xf32>
    %240 = vector.shape_cast %239 : vector<1x8x128xf32> to vector<8x128xf32>
    %241 = vector.shape_cast %237 : vector<8x128xf32> to vector<1x8x128xf32>
    tpu.vector_store %arg4[%238, %c0_110, %c0_111], %241 {strides = array<i32>} : memref<16x8x128xf32, #tpu.memory_space<vmem>>, vector<1x8x128xf32>,
    %242 = vector.extract_strided_slice %235 {offsets = [8, 0], sizes = [8, 128], strides = [1, 1]} : vector<16x128xf32> to vector<8x128xf32>
    %c15_i32_112 = arith.constant 15 : i32
    %243 = arith.subi %c15_i32_112, %c3_i32 : i32
    %244 = arith.index_cast %243 : i32 to index
    %c0_113 = arith.constant 0 : index
    %c0_114 = arith.constant 0 : index
    %245 = vector.load %arg5[%244, %c0_113, %c0_114] : memref<16x8x128xf32, #tpu.memory_space<vmem>>, vector<1x8x128xf32>
    %246 = vector.shape_cast %245 : vector<1x8x128xf32> to vector<8x128xf32>
    %247 = vector.shape_cast %242 : vector<8x128xf32> to vector<1x8x128xf32>
    tpu.vector_store %arg5[%244, %c0_113, %c0_114], %247 {strides = array<i32>} : memref<16x8x128xf32, #tpu.memory_space<vmem>>, vector<1x8x128xf32>,
    %248 = vector.extract_strided_slice %235 {offsets = [0, 0], sizes = [8, 128], strides = [1, 1]} : vector<16x128xf32> to vector<8x128xf32>
    %c0_115 = arith.constant 0 : index
    %c0_116 = arith.constant 0 : index
    %249 = vector.load %arg6[%c0_115, %c0_116] : memref<16x256xf32, #tpu.memory_space<vmem>>, vector<8x128xf32>
    tpu.vector_store %arg6[%c0_115, %c0_116], %248 {strides = array<i32>} : memref<16x256xf32, #tpu.memory_space<vmem>>, vector<8x128xf32>,
    %250 = vector.extract_strided_slice %235 {offsets = [8, 0], sizes = [8, 128], strides = [1, 1]} : vector<16x128xf32> to vector<8x128xf32>
    %c8_117 = arith.constant 8 : index
    %c128_118 = arith.constant 128 : index
    %251 = vector.load %arg6[%c8_117, %c128_118] : memref<16x256xf32, #tpu.memory_space<vmem>>, vector<8x128xf32>
    tpu.vector_store %arg6[%c8_117, %c128_118], %250 {strides = array<i32>} : memref<16x256xf32, #tpu.memory_space<vmem>>, vector<8x128xf32>,
    %c4_i32 = arith.constant 4 : i32
    %252 = arith.index_cast %c4_i32 : i32 to index
    %c0_119 = arith.constant 0 : index
    %c0_120 = arith.constant 0 : index
    %253 = vector.load %arg1[%252, %c0_119, %c0_120] : memref<16x8x512xbf16, #tpu.memory_space<vmem>>, vector<1x8x512xbf16>
    %254 = vector.shape_cast %253 : vector<1x8x512xbf16> to vector<8x512xbf16>
    %255 = arith.extf %254 : vector<8x512xbf16> to vector<8x512xf32>
    %c15_i32_121 = arith.constant 15 : i32
    %256 = arith.subi %c15_i32_121, %c4_i32 : i32
    %257 = arith.index_cast %256 : i32 to index
    %c0_122 = arith.constant 0 : index
    %c0_123 = arith.constant 0 : index
    %258 = vector.load %arg2[%257, %c0_122, %c0_123] : memref<16x8x512xbf16, #tpu.memory_space<vmem>>, vector<1x8x512xbf16>
    %259 = vector.shape_cast %258 : vector<1x8x512xbf16> to vector<8x512xbf16>
    %260 = arith.extf %259 : vector<8x512xbf16> to vector<8x512xf32>
    %261 = tpu.concatenate %255, %260 in 0 : vector<8x512xf32>, vector<8x512xf32> -> vector<16x512xf32>
    %c0_124 = arith.constant 0 : index
    %c0_125 = arith.constant 0 : index
    %262 = vector.load %arg6[%c0_124, %c0_125] : memref<16x256xf32, #tpu.memory_space<vmem>>, vector<16x256xf32>
    %263 = arith.truncf %262 : vector<16x256xf32> to vector<16x256xbf16>
    %cst_126 = arith.constant dense<0.000000e+00> : vector<16x512xf32>
    %264 = tpu.matmul %263, %3, %cst_126 {dimension_numbers = #tpu.dot_dimension_numbers<[1], [0], [0], [1], [0, 0, 1, 1], [], []>} : vector<16x256xbf16>, vector<256x512xbf16>, vector<16x512xf32> -> vector<16x512xf32>
    %265 = arith.addf %261, %264 : vector<16x512xf32>
    %266 = vector.extract_strided_slice %265 {offsets = [0, 0], sizes = [16, 128], strides = [1, 1]} : vector<16x512xf32> to vector<16x128xf32>
    %cst_127 = arith.constant 5.000000e-01 : f32
    %267 = vector.broadcast %cst_127 : f32 to vector<16x128xf32>
    %268 = arith.mulf %267, %266 : vector<16x128xf32>
    %269 = math.tanh %268 : vector<16x128xf32>
    %cst_128 = arith.constant 1.000000e+00 : f32
    %270 = vector.broadcast %cst_128 : f32 to vector<16x128xf32>
    %271 = arith.addf %269, %270 : vector<16x128xf32>
    %cst_129 = arith.constant 5.000000e-01 : f32
    %272 = vector.broadcast %cst_129 : f32 to vector<16x128xf32>
    %273 = arith.mulf %272, %271 : vector<16x128xf32>
    %274 = vector.extract_strided_slice %265 {offsets = [0, 128], sizes = [16, 128], strides = [1, 1]} : vector<16x512xf32> to vector<16x128xf32>
    %cst_130 = arith.constant 5.000000e-01 : f32
    %275 = vector.broadcast %cst_130 : f32 to vector<16x128xf32>
    %276 = arith.mulf %275, %274 : vector<16x128xf32>
    %277 = math.tanh %276 : vector<16x128xf32>
    %cst_131 = arith.constant 1.000000e+00 : f32
    %278 = vector.broadcast %cst_131 : f32 to vector<16x128xf32>
    %279 = arith.addf %277, %278 : vector<16x128xf32>
    %cst_132 = arith.constant 5.000000e-01 : f32
    %280 = vector.broadcast %cst_132 : f32 to vector<16x128xf32>
    %281 = arith.mulf %280, %279 : vector<16x128xf32>
    %282 = vector.extract_strided_slice %265 {offsets = [0, 256], sizes = [16, 128], strides = [1, 1]} : vector<16x512xf32> to vector<16x128xf32>
    %283 = math.tanh %282 : vector<16x128xf32>
    %284 = vector.extract_strided_slice %265 {offsets = [0, 384], sizes = [16, 128], strides = [1, 1]} : vector<16x512xf32> to vector<16x128xf32>
    %cst_133 = arith.constant 5.000000e-01 : f32
    %285 = vector.broadcast %cst_133 : f32 to vector<16x128xf32>
    %286 = arith.mulf %285, %284 : vector<16x128xf32>
    %287 = math.tanh %286 : vector<16x128xf32>
    %cst_134 = arith.constant 1.000000e+00 : f32
    %288 = vector.broadcast %cst_134 : f32 to vector<16x128xf32>
    %289 = arith.addf %287, %288 : vector<16x128xf32>
    %cst_135 = arith.constant 5.000000e-01 : f32
    %290 = vector.broadcast %cst_135 : f32 to vector<16x128xf32>
    %291 = arith.mulf %290, %289 : vector<16x128xf32>
    %c0_136 = arith.constant 0 : index
    %c0_137 = arith.constant 0 : index
    %292 = vector.load %arg7[%c0_136, %c0_137] : memref<16x128xf32, #tpu.memory_space<vmem>>, vector<16x128xf32>
    %293 = arith.mulf %281, %292 : vector<16x128xf32>
    %294 = arith.mulf %273, %283 : vector<16x128xf32>
    %295 = arith.addf %293, %294 : vector<16x128xf32>
    %296 = math.tanh %295 : vector<16x128xf32>
    %297 = arith.mulf %291, %296 : vector<16x128xf32>
    %c0_138 = arith.constant 0 : index
    %c0_139 = arith.constant 0 : index
    %298 = vector.load %arg7[%c0_138, %c0_139] : memref<16x128xf32, #tpu.memory_space<vmem>>, vector<16x128xf32>
    tpu.vector_store %arg7[%c0_138, %c0_139], %295 {strides = array<i32>} : memref<16x128xf32, #tpu.memory_space<vmem>>, vector<16x128xf32>,
    %299 = vector.extract_strided_slice %297 {offsets = [0, 0], sizes = [8, 128], strides = [1, 1]} : vector<16x128xf32> to vector<8x128xf32>
    %300 = arith.index_cast %c4_i32 : i32 to index
    %c0_140 = arith.constant 0 : index
    %c0_141 = arith.constant 0 : index
    %301 = vector.load %arg4[%300, %c0_140, %c0_141] : memref<16x8x128xf32, #tpu.memory_space<vmem>>, vector<1x8x128xf32>
    %302 = vector.shape_cast %301 : vector<1x8x128xf32> to vector<8x128xf32>
    %303 = vector.shape_cast %299 : vector<8x128xf32> to vector<1x8x128xf32>
    tpu.vector_store %arg4[%300, %c0_140, %c0_141], %303 {strides = array<i32>} : memref<16x8x128xf32, #tpu.memory_space<vmem>>, vector<1x8x128xf32>,
    %304 = vector.extract_strided_slice %297 {offsets = [8, 0], sizes = [8, 128], strides = [1, 1]} : vector<16x128xf32> to vector<8x128xf32>
    %c15_i32_142 = arith.constant 15 : i32
    %305 = arith.subi %c15_i32_142, %c4_i32 : i32
    %306 = arith.index_cast %305 : i32 to index
    %c0_143 = arith.constant 0 : index
    %c0_144 = arith.constant 0 : index
    %307 = vector.load %arg5[%306, %c0_143, %c0_144] : memref<16x8x128xf32, #tpu.memory_space<vmem>>, vector<1x8x128xf32>
    %308 = vector.shape_cast %307 : vector<1x8x128xf32> to vector<8x128xf32>
    %309 = vector.shape_cast %304 : vector<8x128xf32> to vector<1x8x128xf32>
    tpu.vector_store %arg5[%306, %c0_143, %c0_144], %309 {strides = array<i32>} : memref<16x8x128xf32, #tpu.memory_space<vmem>>, vector<1x8x128xf32>,
    %310 = vector.extract_strided_slice %297 {offsets = [0, 0], sizes = [8, 128], strides = [1, 1]} : vector<16x128xf32> to vector<8x128xf32>
    %c0_145 = arith.constant 0 : index
    %c0_146 = arith.constant 0 : index
    %311 = vector.load %arg6[%c0_145, %c0_146] : memref<16x256xf32, #tpu.memory_space<vmem>>, vector<8x128xf32>
    tpu.vector_store %arg6[%c0_145, %c0_146], %310 {strides = array<i32>} : memref<16x256xf32, #tpu.memory_space<vmem>>, vector<8x128xf32>,
    %312 = vector.extract_strided_slice %297 {offsets = [8, 0], sizes = [8, 128], strides = [1, 1]} : vector<16x128xf32> to vector<8x128xf32>
    %c8_147 = arith.constant 8 : index
    %c128_148 = arith.constant 128 : index
    %313 = vector.load %arg6[%c8_147, %c128_148] : memref<16x256xf32, #tpu.memory_space<vmem>>, vector<8x128xf32>
    tpu.vector_store %arg6[%c8_147, %c128_148], %312 {strides = array<i32>} : memref<16x256xf32, #tpu.memory_space<vmem>>, vector<8x128xf32>,
    %c5_i32 = arith.constant 5 : i32
    %314 = arith.index_cast %c5_i32 : i32 to index
    %c0_149 = arith.constant 0 : index
    %c0_150 = arith.constant 0 : index
    %315 = vector.load %arg1[%314, %c0_149, %c0_150] : memref<16x8x512xbf16, #tpu.memory_space<vmem>>, vector<1x8x512xbf16>
    %316 = vector.shape_cast %315 : vector<1x8x512xbf16> to vector<8x512xbf16>
    %317 = arith.extf %316 : vector<8x512xbf16> to vector<8x512xf32>
    %c15_i32_151 = arith.constant 15 : i32
    %318 = arith.subi %c15_i32_151, %c5_i32 : i32
    %319 = arith.index_cast %318 : i32 to index
    %c0_152 = arith.constant 0 : index
    %c0_153 = arith.constant 0 : index
    %320 = vector.load %arg2[%319, %c0_152, %c0_153] : memref<16x8x512xbf16, #tpu.memory_space<vmem>>, vector<1x8x512xbf16>
    %321 = vector.shape_cast %320 : vector<1x8x512xbf16> to vector<8x512xbf16>
    %322 = arith.extf %321 : vector<8x512xbf16> to vector<8x512xf32>
    %323 = tpu.concatenate %317, %322 in 0 : vector<8x512xf32>, vector<8x512xf32> -> vector<16x512xf32>
    %c0_154 = arith.constant 0 : index
    %c0_155 = arith.constant 0 : index
    %324 = vector.load %arg6[%c0_154, %c0_155] : memref<16x256xf32, #tpu.memory_space<vmem>>, vector<16x256xf32>
    %325 = arith.truncf %324 : vector<16x256xf32> to vector<16x256xbf16>
    %cst_156 = arith.constant dense<0.000000e+00> : vector<16x512xf32>
    %326 = tpu.matmul %325, %3, %cst_156 {dimension_numbers = #tpu.dot_dimension_numbers<[1], [0], [0], [1], [0, 0, 1, 1], [], []>} : vector<16x256xbf16>, vector<256x512xbf16>, vector<16x512xf32> -> vector<16x512xf32>
    %327 = arith.addf %323, %326 : vector<16x512xf32>
    %328 = vector.extract_strided_slice %327 {offsets = [0, 0], sizes = [16, 128], strides = [1, 1]} : vector<16x512xf32> to vector<16x128xf32>
    %cst_157 = arith.constant 5.000000e-01 : f32
    %329 = vector.broadcast %cst_157 : f32 to vector<16x128xf32>
    %330 = arith.mulf %329, %328 : vector<16x128xf32>
    %331 = math.tanh %330 : vector<16x128xf32>
    %cst_158 = arith.constant 1.000000e+00 : f32
    %332 = vector.broadcast %cst_158 : f32 to vector<16x128xf32>
    %333 = arith.addf %331, %332 : vector<16x128xf32>
    %cst_159 = arith.constant 5.000000e-01 : f32
    %334 = vector.broadcast %cst_159 : f32 to vector<16x128xf32>
    %335 = arith.mulf %334, %333 : vector<16x128xf32>
    %336 = vector.extract_strided_slice %327 {offsets = [0, 128], sizes = [16, 128], strides = [1, 1]} : vector<16x512xf32> to vector<16x128xf32>
    %cst_160 = arith.constant 5.000000e-01 : f32
    %337 = vector.broadcast %cst_160 : f32 to vector<16x128xf32>
    %338 = arith.mulf %337, %336 : vector<16x128xf32>
    %339 = math.tanh %338 : vector<16x128xf32>
    %cst_161 = arith.constant 1.000000e+00 : f32
    %340 = vector.broadcast %cst_161 : f32 to vector<16x128xf32>
    %341 = arith.addf %339, %340 : vector<16x128xf32>
    %cst_162 = arith.constant 5.000000e-01 : f32
    %342 = vector.broadcast %cst_162 : f32 to vector<16x128xf32>
    %343 = arith.mulf %342, %341 : vector<16x128xf32>
    %344 = vector.extract_strided_slice %327 {offsets = [0, 256], sizes = [16, 128], strides = [1, 1]} : vector<16x512xf32> to vector<16x128xf32>
    %345 = math.tanh %344 : vector<16x128xf32>
    %346 = vector.extract_strided_slice %327 {offsets = [0, 384], sizes = [16, 128], strides = [1, 1]} : vector<16x512xf32> to vector<16x128xf32>
    %cst_163 = arith.constant 5.000000e-01 : f32
    %347 = vector.broadcast %cst_163 : f32 to vector<16x128xf32>
    %348 = arith.mulf %347, %346 : vector<16x128xf32>
    %349 = math.tanh %348 : vector<16x128xf32>
    %cst_164 = arith.constant 1.000000e+00 : f32
    %350 = vector.broadcast %cst_164 : f32 to vector<16x128xf32>
    %351 = arith.addf %349, %350 : vector<16x128xf32>
    %cst_165 = arith.constant 5.000000e-01 : f32
    %352 = vector.broadcast %cst_165 : f32 to vector<16x128xf32>
    %353 = arith.mulf %352, %351 : vector<16x128xf32>
    %c0_166 = arith.constant 0 : index
    %c0_167 = arith.constant 0 : index
    %354 = vector.load %arg7[%c0_166, %c0_167] : memref<16x128xf32, #tpu.memory_space<vmem>>, vector<16x128xf32>
    %355 = arith.mulf %343, %354 : vector<16x128xf32>
    %356 = arith.mulf %335, %345 : vector<16x128xf32>
    %357 = arith.addf %355, %356 : vector<16x128xf32>
    %358 = math.tanh %357 : vector<16x128xf32>
    %359 = arith.mulf %353, %358 : vector<16x128xf32>
    %c0_168 = arith.constant 0 : index
    %c0_169 = arith.constant 0 : index
    %360 = vector.load %arg7[%c0_168, %c0_169] : memref<16x128xf32, #tpu.memory_space<vmem>>, vector<16x128xf32>
    tpu.vector_store %arg7[%c0_168, %c0_169], %357 {strides = array<i32>} : memref<16x128xf32, #tpu.memory_space<vmem>>, vector<16x128xf32>,
    %361 = vector.extract_strided_slice %359 {offsets = [0, 0], sizes = [8, 128], strides = [1, 1]} : vector<16x128xf32> to vector<8x128xf32>
    %362 = arith.index_cast %c5_i32 : i32 to index
    %c0_170 = arith.constant 0 : index
    %c0_171 = arith.constant 0 : index
    %363 = vector.load %arg4[%362, %c0_170, %c0_171] : memref<16x8x128xf32, #tpu.memory_space<vmem>>, vector<1x8x128xf32>
    %364 = vector.shape_cast %363 : vector<1x8x128xf32> to vector<8x128xf32>
    %365 = vector.shape_cast %361 : vector<8x128xf32> to vector<1x8x128xf32>
    tpu.vector_store %arg4[%362, %c0_170, %c0_171], %365 {strides = array<i32>} : memref<16x8x128xf32, #tpu.memory_space<vmem>>, vector<1x8x128xf32>,
    %366 = vector.extract_strided_slice %359 {offsets = [8, 0], sizes = [8, 128], strides = [1, 1]} : vector<16x128xf32> to vector<8x128xf32>
    %c15_i32_172 = arith.constant 15 : i32
    %367 = arith.subi %c15_i32_172, %c5_i32 : i32
    %368 = arith.index_cast %367 : i32 to index
    %c0_173 = arith.constant 0 : index
    %c0_174 = arith.constant 0 : index
    %369 = vector.load %arg5[%368, %c0_173, %c0_174] : memref<16x8x128xf32, #tpu.memory_space<vmem>>, vector<1x8x128xf32>
    %370 = vector.shape_cast %369 : vector<1x8x128xf32> to vector<8x128xf32>
    %371 = vector.shape_cast %366 : vector<8x128xf32> to vector<1x8x128xf32>
    tpu.vector_store %arg5[%368, %c0_173, %c0_174], %371 {strides = array<i32>} : memref<16x8x128xf32, #tpu.memory_space<vmem>>, vector<1x8x128xf32>,
    %372 = vector.extract_strided_slice %359 {offsets = [0, 0], sizes = [8, 128], strides = [1, 1]} : vector<16x128xf32> to vector<8x128xf32>
    %c0_175 = arith.constant 0 : index
    %c0_176 = arith.constant 0 : index
    %373 = vector.load %arg6[%c0_175, %c0_176] : memref<16x256xf32, #tpu.memory_space<vmem>>, vector<8x128xf32>
    tpu.vector_store %arg6[%c0_175, %c0_176], %372 {strides = array<i32>} : memref<16x256xf32, #tpu.memory_space<vmem>>, vector<8x128xf32>,
    %374 = vector.extract_strided_slice %359 {offsets = [8, 0], sizes = [8, 128], strides = [1, 1]} : vector<16x128xf32> to vector<8x128xf32>
    %c8_177 = arith.constant 8 : index
    %c128_178 = arith.constant 128 : index
    %375 = vector.load %arg6[%c8_177, %c128_178] : memref<16x256xf32, #tpu.memory_space<vmem>>, vector<8x128xf32>
    tpu.vector_store %arg6[%c8_177, %c128_178], %374 {strides = array<i32>} : memref<16x256xf32, #tpu.memory_space<vmem>>, vector<8x128xf32>,
    %c6_i32 = arith.constant 6 : i32
    %376 = arith.index_cast %c6_i32 : i32 to index
    %c0_179 = arith.constant 0 : index
    %c0_180 = arith.constant 0 : index
    %377 = vector.load %arg1[%376, %c0_179, %c0_180] : memref<16x8x512xbf16, #tpu.memory_space<vmem>>, vector<1x8x512xbf16>
    %378 = vector.shape_cast %377 : vector<1x8x512xbf16> to vector<8x512xbf16>
    %379 = arith.extf %378 : vector<8x512xbf16> to vector<8x512xf32>
    %c15_i32_181 = arith.constant 15 : i32
    %380 = arith.subi %c15_i32_181, %c6_i32 : i32
    %381 = arith.index_cast %380 : i32 to index
    %c0_182 = arith.constant 0 : index
    %c0_183 = arith.constant 0 : index
    %382 = vector.load %arg2[%381, %c0_182, %c0_183] : memref<16x8x512xbf16, #tpu.memory_space<vmem>>, vector<1x8x512xbf16>
    %383 = vector.shape_cast %382 : vector<1x8x512xbf16> to vector<8x512xbf16>
    %384 = arith.extf %383 : vector<8x512xbf16> to vector<8x512xf32>
    %385 = tpu.concatenate %379, %384 in 0 : vector<8x512xf32>, vector<8x512xf32> -> vector<16x512xf32>
    %c0_184 = arith.constant 0 : index
    %c0_185 = arith.constant 0 : index
    %386 = vector.load %arg6[%c0_184, %c0_185] : memref<16x256xf32, #tpu.memory_space<vmem>>, vector<16x256xf32>
    %387 = arith.truncf %386 : vector<16x256xf32> to vector<16x256xbf16>
    %cst_186 = arith.constant dense<0.000000e+00> : vector<16x512xf32>
    %388 = tpu.matmul %387, %3, %cst_186 {dimension_numbers = #tpu.dot_dimension_numbers<[1], [0], [0], [1], [0, 0, 1, 1], [], []>} : vector<16x256xbf16>, vector<256x512xbf16>, vector<16x512xf32> -> vector<16x512xf32>
    %389 = arith.addf %385, %388 : vector<16x512xf32>
    %390 = vector.extract_strided_slice %389 {offsets = [0, 0], sizes = [16, 128], strides = [1, 1]} : vector<16x512xf32> to vector<16x128xf32>
    %cst_187 = arith.constant 5.000000e-01 : f32
    %391 = vector.broadcast %cst_187 : f32 to vector<16x128xf32>
    %392 = arith.mulf %391, %390 : vector<16x128xf32>
    %393 = math.tanh %392 : vector<16x128xf32>
    %cst_188 = arith.constant 1.000000e+00 : f32
    %394 = vector.broadcast %cst_188 : f32 to vector<16x128xf32>
    %395 = arith.addf %393, %394 : vector<16x128xf32>
    %cst_189 = arith.constant 5.000000e-01 : f32
    %396 = vector.broadcast %cst_189 : f32 to vector<16x128xf32>
    %397 = arith.mulf %396, %395 : vector<16x128xf32>
    %398 = vector.extract_strided_slice %389 {offsets = [0, 128], sizes = [16, 128], strides = [1, 1]} : vector<16x512xf32> to vector<16x128xf32>
    %cst_190 = arith.constant 5.000000e-01 : f32
    %399 = vector.broadcast %cst_190 : f32 to vector<16x128xf32>
    %400 = arith.mulf %399, %398 : vector<16x128xf32>
    %401 = math.tanh %400 : vector<16x128xf32>
    %cst_191 = arith.constant 1.000000e+00 : f32
    %402 = vector.broadcast %cst_191 : f32 to vector<16x128xf32>
    %403 = arith.addf %401, %402 : vector<16x128xf32>
    %cst_192 = arith.constant 5.000000e-01 : f32
    %404 = vector.broadcast %cst_192 : f32 to vector<16x128xf32>
    %405 = arith.mulf %404, %403 : vector<16x128xf32>
    %406 = vector.extract_strided_slice %389 {offsets = [0, 256], sizes = [16, 128], strides = [1, 1]} : vector<16x512xf32> to vector<16x128xf32>
    %407 = math.tanh %406 : vector<16x128xf32>
    %408 = vector.extract_strided_slice %389 {offsets = [0, 384], sizes = [16, 128], strides = [1, 1]} : vector<16x512xf32> to vector<16x128xf32>
    %cst_193 = arith.constant 5.000000e-01 : f32
    %409 = vector.broadcast %cst_193 : f32 to vector<16x128xf32>
    %410 = arith.mulf %409, %408 : vector<16x128xf32>
    %411 = math.tanh %410 : vector<16x128xf32>
    %cst_194 = arith.constant 1.000000e+00 : f32
    %412 = vector.broadcast %cst_194 : f32 to vector<16x128xf32>
    %413 = arith.addf %411, %412 : vector<16x128xf32>
    %cst_195 = arith.constant 5.000000e-01 : f32
    %414 = vector.broadcast %cst_195 : f32 to vector<16x128xf32>
    %415 = arith.mulf %414, %413 : vector<16x128xf32>
    %c0_196 = arith.constant 0 : index
    %c0_197 = arith.constant 0 : index
    %416 = vector.load %arg7[%c0_196, %c0_197] : memref<16x128xf32, #tpu.memory_space<vmem>>, vector<16x128xf32>
    %417 = arith.mulf %405, %416 : vector<16x128xf32>
    %418 = arith.mulf %397, %407 : vector<16x128xf32>
    %419 = arith.addf %417, %418 : vector<16x128xf32>
    %420 = math.tanh %419 : vector<16x128xf32>
    %421 = arith.mulf %415, %420 : vector<16x128xf32>
    %c0_198 = arith.constant 0 : index
    %c0_199 = arith.constant 0 : index
    %422 = vector.load %arg7[%c0_198, %c0_199] : memref<16x128xf32, #tpu.memory_space<vmem>>, vector<16x128xf32>
    tpu.vector_store %arg7[%c0_198, %c0_199], %419 {strides = array<i32>} : memref<16x128xf32, #tpu.memory_space<vmem>>, vector<16x128xf32>,
    %423 = vector.extract_strided_slice %421 {offsets = [0, 0], sizes = [8, 128], strides = [1, 1]} : vector<16x128xf32> to vector<8x128xf32>
    %424 = arith.index_cast %c6_i32 : i32 to index
    %c0_200 = arith.constant 0 : index
    %c0_201 = arith.constant 0 : index
    %425 = vector.load %arg4[%424, %c0_200, %c0_201] : memref<16x8x128xf32, #tpu.memory_space<vmem>>, vector<1x8x128xf32>
    %426 = vector.shape_cast %425 : vector<1x8x128xf32> to vector<8x128xf32>
    %427 = vector.shape_cast %423 : vector<8x128xf32> to vector<1x8x128xf32>
    tpu.vector_store %arg4[%424, %c0_200, %c0_201], %427 {strides = array<i32>} : memref<16x8x128xf32, #tpu.memory_space<vmem>>, vector<1x8x128xf32>,
    %428 = vector.extract_strided_slice %421 {offsets = [8, 0], sizes = [8, 128], strides = [1, 1]} : vector<16x128xf32> to vector<8x128xf32>
    %c15_i32_202 = arith.constant 15 : i32
    %429 = arith.subi %c15_i32_202, %c6_i32 : i32
    %430 = arith.index_cast %429 : i32 to index
    %c0_203 = arith.constant 0 : index
    %c0_204 = arith.constant 0 : index
    %431 = vector.load %arg5[%430, %c0_203, %c0_204] : memref<16x8x128xf32, #tpu.memory_space<vmem>>, vector<1x8x128xf32>
    %432 = vector.shape_cast %431 : vector<1x8x128xf32> to vector<8x128xf32>
    %433 = vector.shape_cast %428 : vector<8x128xf32> to vector<1x8x128xf32>
    tpu.vector_store %arg5[%430, %c0_203, %c0_204], %433 {strides = array<i32>} : memref<16x8x128xf32, #tpu.memory_space<vmem>>, vector<1x8x128xf32>,
    %434 = vector.extract_strided_slice %421 {offsets = [0, 0], sizes = [8, 128], strides = [1, 1]} : vector<16x128xf32> to vector<8x128xf32>
    %c0_205 = arith.constant 0 : index
    %c0_206 = arith.constant 0 : index
    %435 = vector.load %arg6[%c0_205, %c0_206] : memref<16x256xf32, #tpu.memory_space<vmem>>, vector<8x128xf32>
    tpu.vector_store %arg6[%c0_205, %c0_206], %434 {strides = array<i32>} : memref<16x256xf32, #tpu.memory_space<vmem>>, vector<8x128xf32>,
    %436 = vector.extract_strided_slice %421 {offsets = [8, 0], sizes = [8, 128], strides = [1, 1]} : vector<16x128xf32> to vector<8x128xf32>
    %c8_207 = arith.constant 8 : index
    %c128_208 = arith.constant 128 : index
    %437 = vector.load %arg6[%c8_207, %c128_208] : memref<16x256xf32, #tpu.memory_space<vmem>>, vector<8x128xf32>
    tpu.vector_store %arg6[%c8_207, %c128_208], %436 {strides = array<i32>} : memref<16x256xf32, #tpu.memory_space<vmem>>, vector<8x128xf32>,
    %c7_i32 = arith.constant 7 : i32
    %438 = arith.index_cast %c7_i32 : i32 to index
    %c0_209 = arith.constant 0 : index
    %c0_210 = arith.constant 0 : index
    %439 = vector.load %arg1[%438, %c0_209, %c0_210] : memref<16x8x512xbf16, #tpu.memory_space<vmem>>, vector<1x8x512xbf16>
    %440 = vector.shape_cast %439 : vector<1x8x512xbf16> to vector<8x512xbf16>
    %441 = arith.extf %440 : vector<8x512xbf16> to vector<8x512xf32>
    %c15_i32_211 = arith.constant 15 : i32
    %442 = arith.subi %c15_i32_211, %c7_i32 : i32
    %443 = arith.index_cast %442 : i32 to index
    %c0_212 = arith.constant 0 : index
    %c0_213 = arith.constant 0 : index
    %444 = vector.load %arg2[%443, %c0_212, %c0_213] : memref<16x8x512xbf16, #tpu.memory_space<vmem>>, vector<1x8x512xbf16>
    %445 = vector.shape_cast %444 : vector<1x8x512xbf16> to vector<8x512xbf16>
    %446 = arith.extf %445 : vector<8x512xbf16> to vector<8x512xf32>
    %447 = tpu.concatenate %441, %446 in 0 : vector<8x512xf32>, vector<8x512xf32> -> vector<16x512xf32>
    %c0_214 = arith.constant 0 : index
    %c0_215 = arith.constant 0 : index
    %448 = vector.load %arg6[%c0_214, %c0_215] : memref<16x256xf32, #tpu.memory_space<vmem>>, vector<16x256xf32>
    %449 = arith.truncf %448 : vector<16x256xf32> to vector<16x256xbf16>
    %cst_216 = arith.constant dense<0.000000e+00> : vector<16x512xf32>
    %450 = tpu.matmul %449, %3, %cst_216 {dimension_numbers = #tpu.dot_dimension_numbers<[1], [0], [0], [1], [0, 0, 1, 1], [], []>} : vector<16x256xbf16>, vector<256x512xbf16>, vector<16x512xf32> -> vector<16x512xf32>
    %451 = arith.addf %447, %450 : vector<16x512xf32>
    %452 = vector.extract_strided_slice %451 {offsets = [0, 0], sizes = [16, 128], strides = [1, 1]} : vector<16x512xf32> to vector<16x128xf32>
    %cst_217 = arith.constant 5.000000e-01 : f32
    %453 = vector.broadcast %cst_217 : f32 to vector<16x128xf32>
    %454 = arith.mulf %453, %452 : vector<16x128xf32>
    %455 = math.tanh %454 : vector<16x128xf32>
    %cst_218 = arith.constant 1.000000e+00 : f32
    %456 = vector.broadcast %cst_218 : f32 to vector<16x128xf32>
    %457 = arith.addf %455, %456 : vector<16x128xf32>
    %cst_219 = arith.constant 5.000000e-01 : f32
    %458 = vector.broadcast %cst_219 : f32 to vector<16x128xf32>
    %459 = arith.mulf %458, %457 : vector<16x128xf32>
    %460 = vector.extract_strided_slice %451 {offsets = [0, 128], sizes = [16, 128], strides = [1, 1]} : vector<16x512xf32> to vector<16x128xf32>
    %cst_220 = arith.constant 5.000000e-01 : f32
    %461 = vector.broadcast %cst_220 : f32 to vector<16x128xf32>
    %462 = arith.mulf %461, %460 : vector<16x128xf32>
    %463 = math.tanh %462 : vector<16x128xf32>
    %cst_221 = arith.constant 1.000000e+00 : f32
    %464 = vector.broadcast %cst_221 : f32 to vector<16x128xf32>
    %465 = arith.addf %463, %464 : vector<16x128xf32>
    %cst_222 = arith.constant 5.000000e-01 : f32
    %466 = vector.broadcast %cst_222 : f32 to vector<16x128xf32>
    %467 = arith.mulf %466, %465 : vector<16x128xf32>
    %468 = vector.extract_strided_slice %451 {offsets = [0, 256], sizes = [16, 128], strides = [1, 1]} : vector<16x512xf32> to vector<16x128xf32>
    %469 = math.tanh %468 : vector<16x128xf32>
    %470 = vector.extract_strided_slice %451 {offsets = [0, 384], sizes = [16, 128], strides = [1, 1]} : vector<16x512xf32> to vector<16x128xf32>
    %cst_223 = arith.constant 5.000000e-01 : f32
    %471 = vector.broadcast %cst_223 : f32 to vector<16x128xf32>
    %472 = arith.mulf %471, %470 : vector<16x128xf32>
    %473 = math.tanh %472 : vector<16x128xf32>
    %cst_224 = arith.constant 1.000000e+00 : f32
    %474 = vector.broadcast %cst_224 : f32 to vector<16x128xf32>
    %475 = arith.addf %473, %474 : vector<16x128xf32>
    %cst_225 = arith.constant 5.000000e-01 : f32
    %476 = vector.broadcast %cst_225 : f32 to vector<16x128xf32>
    %477 = arith.mulf %476, %475 : vector<16x128xf32>
    %c0_226 = arith.constant 0 : index
    %c0_227 = arith.constant 0 : index
    %478 = vector.load %arg7[%c0_226, %c0_227] : memref<16x128xf32, #tpu.memory_space<vmem>>, vector<16x128xf32>
    %479 = arith.mulf %467, %478 : vector<16x128xf32>
    %480 = arith.mulf %459, %469 : vector<16x128xf32>
    %481 = arith.addf %479, %480 : vector<16x128xf32>
    %482 = math.tanh %481 : vector<16x128xf32>
    %483 = arith.mulf %477, %482 : vector<16x128xf32>
    %c0_228 = arith.constant 0 : index
    %c0_229 = arith.constant 0 : index
    %484 = vector.load %arg7[%c0_228, %c0_229] : memref<16x128xf32, #tpu.memory_space<vmem>>, vector<16x128xf32>
    tpu.vector_store %arg7[%c0_228, %c0_229], %481 {strides = array<i32>} : memref<16x128xf32, #tpu.memory_space<vmem>>, vector<16x128xf32>,
    %485 = vector.extract_strided_slice %483 {offsets = [0, 0], sizes = [8, 128], strides = [1, 1]} : vector<16x128xf32> to vector<8x128xf32>
    %486 = arith.index_cast %c7_i32 : i32 to index
    %c0_230 = arith.constant 0 : index
    %c0_231 = arith.constant 0 : index
    %487 = vector.load %arg4[%486, %c0_230, %c0_231] : memref<16x8x128xf32, #tpu.memory_space<vmem>>, vector<1x8x128xf32>
    %488 = vector.shape_cast %487 : vector<1x8x128xf32> to vector<8x128xf32>
    %489 = vector.shape_cast %485 : vector<8x128xf32> to vector<1x8x128xf32>
    tpu.vector_store %arg4[%486, %c0_230, %c0_231], %489 {strides = array<i32>} : memref<16x8x128xf32, #tpu.memory_space<vmem>>, vector<1x8x128xf32>,
    %490 = vector.extract_strided_slice %483 {offsets = [8, 0], sizes = [8, 128], strides = [1, 1]} : vector<16x128xf32> to vector<8x128xf32>
    %c15_i32_232 = arith.constant 15 : i32
    %491 = arith.subi %c15_i32_232, %c7_i32 : i32
    %492 = arith.index_cast %491 : i32 to index
    %c0_233 = arith.constant 0 : index
    %c0_234 = arith.constant 0 : index
    %493 = vector.load %arg5[%492, %c0_233, %c0_234] : memref<16x8x128xf32, #tpu.memory_space<vmem>>, vector<1x8x128xf32>
    %494 = vector.shape_cast %493 : vector<1x8x128xf32> to vector<8x128xf32>
    %495 = vector.shape_cast %490 : vector<8x128xf32> to vector<1x8x128xf32>
    tpu.vector_store %arg5[%492, %c0_233, %c0_234], %495 {strides = array<i32>} : memref<16x8x128xf32, #tpu.memory_space<vmem>>, vector<1x8x128xf32>,
    %496 = vector.extract_strided_slice %483 {offsets = [0, 0], sizes = [8, 128], strides = [1, 1]} : vector<16x128xf32> to vector<8x128xf32>
    %c0_235 = arith.constant 0 : index
    %c0_236 = arith.constant 0 : index
    %497 = vector.load %arg6[%c0_235, %c0_236] : memref<16x256xf32, #tpu.memory_space<vmem>>, vector<8x128xf32>
    tpu.vector_store %arg6[%c0_235, %c0_236], %496 {strides = array<i32>} : memref<16x256xf32, #tpu.memory_space<vmem>>, vector<8x128xf32>,
    %498 = vector.extract_strided_slice %483 {offsets = [8, 0], sizes = [8, 128], strides = [1, 1]} : vector<16x128xf32> to vector<8x128xf32>
    %c8_237 = arith.constant 8 : index
    %c128_238 = arith.constant 128 : index
    %499 = vector.load %arg6[%c8_237, %c128_238] : memref<16x256xf32, #tpu.memory_space<vmem>>, vector<8x128xf32>
    tpu.vector_store %arg6[%c8_237, %c128_238], %498 {strides = array<i32>} : memref<16x256xf32, #tpu.memory_space<vmem>>, vector<8x128xf32>,
    %c8_i32 = arith.constant 8 : i32
    %500 = arith.index_cast %c8_i32 : i32 to index
    %c0_239 = arith.constant 0 : index
    %c0_240 = arith.constant 0 : index
    %501 = vector.load %arg1[%500, %c0_239, %c0_240] : memref<16x8x512xbf16, #tpu.memory_space<vmem>>, vector<1x8x512xbf16>
    %502 = vector.shape_cast %501 : vector<1x8x512xbf16> to vector<8x512xbf16>
    %503 = arith.extf %502 : vector<8x512xbf16> to vector<8x512xf32>
    %c15_i32_241 = arith.constant 15 : i32
    %504 = arith.subi %c15_i32_241, %c8_i32 : i32
    %505 = arith.index_cast %504 : i32 to index
    %c0_242 = arith.constant 0 : index
    %c0_243 = arith.constant 0 : index
    %506 = vector.load %arg2[%505, %c0_242, %c0_243] : memref<16x8x512xbf16, #tpu.memory_space<vmem>>, vector<1x8x512xbf16>
    %507 = vector.shape_cast %506 : vector<1x8x512xbf16> to vector<8x512xbf16>
    %508 = arith.extf %507 : vector<8x512xbf16> to vector<8x512xf32>
    %509 = tpu.concatenate %503, %508 in 0 : vector<8x512xf32>, vector<8x512xf32> -> vector<16x512xf32>
    %c0_244 = arith.constant 0 : index
    %c0_245 = arith.constant 0 : index
    %510 = vector.load %arg6[%c0_244, %c0_245] : memref<16x256xf32, #tpu.memory_space<vmem>>, vector<16x256xf32>
    %511 = arith.truncf %510 : vector<16x256xf32> to vector<16x256xbf16>
    %cst_246 = arith.constant dense<0.000000e+00> : vector<16x512xf32>
    %512 = tpu.matmul %511, %3, %cst_246 {dimension_numbers = #tpu.dot_dimension_numbers<[1], [0], [0], [1], [0, 0, 1, 1], [], []>} : vector<16x256xbf16>, vector<256x512xbf16>, vector<16x512xf32> -> vector<16x512xf32>
    %513 = arith.addf %509, %512 : vector<16x512xf32>
    %514 = vector.extract_strided_slice %513 {offsets = [0, 0], sizes = [16, 128], strides = [1, 1]} : vector<16x512xf32> to vector<16x128xf32>
    %cst_247 = arith.constant 5.000000e-01 : f32
    %515 = vector.broadcast %cst_247 : f32 to vector<16x128xf32>
    %516 = arith.mulf %515, %514 : vector<16x128xf32>
    %517 = math.tanh %516 : vector<16x128xf32>
    %cst_248 = arith.constant 1.000000e+00 : f32
    %518 = vector.broadcast %cst_248 : f32 to vector<16x128xf32>
    %519 = arith.addf %517, %518 : vector<16x128xf32>
    %cst_249 = arith.constant 5.000000e-01 : f32
    %520 = vector.broadcast %cst_249 : f32 to vector<16x128xf32>
    %521 = arith.mulf %520, %519 : vector<16x128xf32>
    %522 = vector.extract_strided_slice %513 {offsets = [0, 128], sizes = [16, 128], strides = [1, 1]} : vector<16x512xf32> to vector<16x128xf32>
    %cst_250 = arith.constant 5.000000e-01 : f32
    %523 = vector.broadcast %cst_250 : f32 to vector<16x128xf32>
    %524 = arith.mulf %523, %522 : vector<16x128xf32>
    %525 = math.tanh %524 : vector<16x128xf32>
    %cst_251 = arith.constant 1.000000e+00 : f32
    %526 = vector.broadcast %cst_251 : f32 to vector<16x128xf32>
    %527 = arith.addf %525, %526 : vector<16x128xf32>
    %cst_252 = arith.constant 5.000000e-01 : f32
    %528 = vector.broadcast %cst_252 : f32 to vector<16x128xf32>
    %529 = arith.mulf %528, %527 : vector<16x128xf32>
    %530 = vector.extract_strided_slice %513 {offsets = [0, 256], sizes = [16, 128], strides = [1, 1]} : vector<16x512xf32> to vector<16x128xf32>
    %531 = math.tanh %530 : vector<16x128xf32>
    %532 = vector.extract_strided_slice %513 {offsets = [0, 384], sizes = [16, 128], strides = [1, 1]} : vector<16x512xf32> to vector<16x128xf32>
    %cst_253 = arith.constant 5.000000e-01 : f32
    %533 = vector.broadcast %cst_253 : f32 to vector<16x128xf32>
    %534 = arith.mulf %533, %532 : vector<16x128xf32>
    %535 = math.tanh %534 : vector<16x128xf32>
    %cst_254 = arith.constant 1.000000e+00 : f32
    %536 = vector.broadcast %cst_254 : f32 to vector<16x128xf32>
    %537 = arith.addf %535, %536 : vector<16x128xf32>
    %cst_255 = arith.constant 5.000000e-01 : f32
    %538 = vector.broadcast %cst_255 : f32 to vector<16x128xf32>
    %539 = arith.mulf %538, %537 : vector<16x128xf32>
    %c0_256 = arith.constant 0 : index
    %c0_257 = arith.constant 0 : index
    %540 = vector.load %arg7[%c0_256, %c0_257] : memref<16x128xf32, #tpu.memory_space<vmem>>, vector<16x128xf32>
    %541 = arith.mulf %529, %540 : vector<16x128xf32>
    %542 = arith.mulf %521, %531 : vector<16x128xf32>
    %543 = arith.addf %541, %542 : vector<16x128xf32>
    %544 = math.tanh %543 : vector<16x128xf32>
    %545 = arith.mulf %539, %544 : vector<16x128xf32>
    %c0_258 = arith.constant 0 : index
    %c0_259 = arith.constant 0 : index
    %546 = vector.load %arg7[%c0_258, %c0_259] : memref<16x128xf32, #tpu.memory_space<vmem>>, vector<16x128xf32>
    tpu.vector_store %arg7[%c0_258, %c0_259], %543 {strides = array<i32>} : memref<16x128xf32, #tpu.memory_space<vmem>>, vector<16x128xf32>,
    %547 = vector.extract_strided_slice %545 {offsets = [0, 0], sizes = [8, 128], strides = [1, 1]} : vector<16x128xf32> to vector<8x128xf32>
    %548 = arith.index_cast %c8_i32 : i32 to index
    %c0_260 = arith.constant 0 : index
    %c0_261 = arith.constant 0 : index
    %549 = vector.load %arg4[%548, %c0_260, %c0_261] : memref<16x8x128xf32, #tpu.memory_space<vmem>>, vector<1x8x128xf32>
    %550 = vector.shape_cast %549 : vector<1x8x128xf32> to vector<8x128xf32>
    %551 = vector.shape_cast %547 : vector<8x128xf32> to vector<1x8x128xf32>
    tpu.vector_store %arg4[%548, %c0_260, %c0_261], %551 {strides = array<i32>} : memref<16x8x128xf32, #tpu.memory_space<vmem>>, vector<1x8x128xf32>,
    %552 = vector.extract_strided_slice %545 {offsets = [8, 0], sizes = [8, 128], strides = [1, 1]} : vector<16x128xf32> to vector<8x128xf32>
    %c15_i32_262 = arith.constant 15 : i32
    %553 = arith.subi %c15_i32_262, %c8_i32 : i32
    %554 = arith.index_cast %553 : i32 to index
    %c0_263 = arith.constant 0 : index
    %c0_264 = arith.constant 0 : index
    %555 = vector.load %arg5[%554, %c0_263, %c0_264] : memref<16x8x128xf32, #tpu.memory_space<vmem>>, vector<1x8x128xf32>
    %556 = vector.shape_cast %555 : vector<1x8x128xf32> to vector<8x128xf32>
    %557 = vector.shape_cast %552 : vector<8x128xf32> to vector<1x8x128xf32>
    tpu.vector_store %arg5[%554, %c0_263, %c0_264], %557 {strides = array<i32>} : memref<16x8x128xf32, #tpu.memory_space<vmem>>, vector<1x8x128xf32>,
    %558 = vector.extract_strided_slice %545 {offsets = [0, 0], sizes = [8, 128], strides = [1, 1]} : vector<16x128xf32> to vector<8x128xf32>
    %c0_265 = arith.constant 0 : index
    %c0_266 = arith.constant 0 : index
    %559 = vector.load %arg6[%c0_265, %c0_266] : memref<16x256xf32, #tpu.memory_space<vmem>>, vector<8x128xf32>
    tpu.vector_store %arg6[%c0_265, %c0_266], %558 {strides = array<i32>} : memref<16x256xf32, #tpu.memory_space<vmem>>, vector<8x128xf32>,
    %560 = vector.extract_strided_slice %545 {offsets = [8, 0], sizes = [8, 128], strides = [1, 1]} : vector<16x128xf32> to vector<8x128xf32>
    %c8_267 = arith.constant 8 : index
    %c128_268 = arith.constant 128 : index
    %561 = vector.load %arg6[%c8_267, %c128_268] : memref<16x256xf32, #tpu.memory_space<vmem>>, vector<8x128xf32>
    tpu.vector_store %arg6[%c8_267, %c128_268], %560 {strides = array<i32>} : memref<16x256xf32, #tpu.memory_space<vmem>>, vector<8x128xf32>,
    %c9_i32 = arith.constant 9 : i32
    %562 = arith.index_cast %c9_i32 : i32 to index
    %c0_269 = arith.constant 0 : index
    %c0_270 = arith.constant 0 : index
    %563 = vector.load %arg1[%562, %c0_269, %c0_270] : memref<16x8x512xbf16, #tpu.memory_space<vmem>>, vector<1x8x512xbf16>
    %564 = vector.shape_cast %563 : vector<1x8x512xbf16> to vector<8x512xbf16>
    %565 = arith.extf %564 : vector<8x512xbf16> to vector<8x512xf32>
    %c15_i32_271 = arith.constant 15 : i32
    %566 = arith.subi %c15_i32_271, %c9_i32 : i32
    %567 = arith.index_cast %566 : i32 to index
    %c0_272 = arith.constant 0 : index
    %c0_273 = arith.constant 0 : index
    %568 = vector.load %arg2[%567, %c0_272, %c0_273] : memref<16x8x512xbf16, #tpu.memory_space<vmem>>, vector<1x8x512xbf16>
    %569 = vector.shape_cast %568 : vector<1x8x512xbf16> to vector<8x512xbf16>
    %570 = arith.extf %569 : vector<8x512xbf16> to vector<8x512xf32>
    %571 = tpu.concatenate %565, %570 in 0 : vector<8x512xf32>, vector<8x512xf32> -> vector<16x512xf32>
    %c0_274 = arith.constant 0 : index
    %c0_275 = arith.constant 0 : index
    %572 = vector.load %arg6[%c0_274, %c0_275] : memref<16x256xf32, #tpu.memory_space<vmem>>, vector<16x256xf32>
    %573 = arith.truncf %572 : vector<16x256xf32> to vector<16x256xbf16>
    %cst_276 = arith.constant dense<0.000000e+00> : vector<16x512xf32>
    %574 = tpu.matmul %573, %3, %cst_276 {dimension_numbers = #tpu.dot_dimension_numbers<[1], [0], [0], [1], [0, 0, 1, 1], [], []>} : vector<16x256xbf16>, vector<256x512xbf16>, vector<16x512xf32> -> vector<16x512xf32>
    %575 = arith.addf %571, %574 : vector<16x512xf32>
    %576 = vector.extract_strided_slice %575 {offsets = [0, 0], sizes = [16, 128], strides = [1, 1]} : vector<16x512xf32> to vector<16x128xf32>
    %cst_277 = arith.constant 5.000000e-01 : f32
    %577 = vector.broadcast %cst_277 : f32 to vector<16x128xf32>
    %578 = arith.mulf %577, %576 : vector<16x128xf32>
    %579 = math.tanh %578 : vector<16x128xf32>
    %cst_278 = arith.constant 1.000000e+00 : f32
    %580 = vector.broadcast %cst_278 : f32 to vector<16x128xf32>
    %581 = arith.addf %579, %580 : vector<16x128xf32>
    %cst_279 = arith.constant 5.000000e-01 : f32
    %582 = vector.broadcast %cst_279 : f32 to vector<16x128xf32>
    %583 = arith.mulf %582, %581 : vector<16x128xf32>
    %584 = vector.extract_strided_slice %575 {offsets = [0, 128], sizes = [16, 128], strides = [1, 1]} : vector<16x512xf32> to vector<16x128xf32>
    %cst_280 = arith.constant 5.000000e-01 : f32
    %585 = vector.broadcast %cst_280 : f32 to vector<16x128xf32>
    %586 = arith.mulf %585, %584 : vector<16x128xf32>
    %587 = math.tanh %586 : vector<16x128xf32>
    %cst_281 = arith.constant 1.000000e+00 : f32
    %588 = vector.broadcast %cst_281 : f32 to vector<16x128xf32>
    %589 = arith.addf %587, %588 : vector<16x128xf32>
    %cst_282 = arith.constant 5.000000e-01 : f32
    %590 = vector.broadcast %cst_282 : f32 to vector<16x128xf32>
    %591 = arith.mulf %590, %589 : vector<16x128xf32>
    %592 = vector.extract_strided_slice %575 {offsets = [0, 256], sizes = [16, 128], strides = [1, 1]} : vector<16x512xf32> to vector<16x128xf32>
    %593 = math.tanh %592 : vector<16x128xf32>
    %594 = vector.extract_strided_slice %575 {offsets = [0, 384], sizes = [16, 128], strides = [1, 1]} : vector<16x512xf32> to vector<16x128xf32>
    %cst_283 = arith.constant 5.000000e-01 : f32
    %595 = vector.broadcast %cst_283 : f32 to vector<16x128xf32>
    %596 = arith.mulf %595, %594 : vector<16x128xf32>
    %597 = math.tanh %596 : vector<16x128xf32>
    %cst_284 = arith.constant 1.000000e+00 : f32
    %598 = vector.broadcast %cst_284 : f32 to vector<16x128xf32>
    %599 = arith.addf %597, %598 : vector<16x128xf32>
    %cst_285 = arith.constant 5.000000e-01 : f32
    %600 = vector.broadcast %cst_285 : f32 to vector<16x128xf32>
    %601 = arith.mulf %600, %599 : vector<16x128xf32>
    %c0_286 = arith.constant 0 : index
    %c0_287 = arith.constant 0 : index
    %602 = vector.load %arg7[%c0_286, %c0_287] : memref<16x128xf32, #tpu.memory_space<vmem>>, vector<16x128xf32>
    %603 = arith.mulf %591, %602 : vector<16x128xf32>
    %604 = arith.mulf %583, %593 : vector<16x128xf32>
    %605 = arith.addf %603, %604 : vector<16x128xf32>
    %606 = math.tanh %605 : vector<16x128xf32>
    %607 = arith.mulf %601, %606 : vector<16x128xf32>
    %c0_288 = arith.constant 0 : index
    %c0_289 = arith.constant 0 : index
    %608 = vector.load %arg7[%c0_288, %c0_289] : memref<16x128xf32, #tpu.memory_space<vmem>>, vector<16x128xf32>
    tpu.vector_store %arg7[%c0_288, %c0_289], %605 {strides = array<i32>} : memref<16x128xf32, #tpu.memory_space<vmem>>, vector<16x128xf32>,
    %609 = vector.extract_strided_slice %607 {offsets = [0, 0], sizes = [8, 128], strides = [1, 1]} : vector<16x128xf32> to vector<8x128xf32>
    %610 = arith.index_cast %c9_i32 : i32 to index
    %c0_290 = arith.constant 0 : index
    %c0_291 = arith.constant 0 : index
    %611 = vector.load %arg4[%610, %c0_290, %c0_291] : memref<16x8x128xf32, #tpu.memory_space<vmem>>, vector<1x8x128xf32>
    %612 = vector.shape_cast %611 : vector<1x8x128xf32> to vector<8x128xf32>
    %613 = vector.shape_cast %609 : vector<8x128xf32> to vector<1x8x128xf32>
    tpu.vector_store %arg4[%610, %c0_290, %c0_291], %613 {strides = array<i32>} : memref<16x8x128xf32, #tpu.memory_space<vmem>>, vector<1x8x128xf32>,
    %614 = vector.extract_strided_slice %607 {offsets = [8, 0], sizes = [8, 128], strides = [1, 1]} : vector<16x128xf32> to vector<8x128xf32>
    %c15_i32_292 = arith.constant 15 : i32
    %615 = arith.subi %c15_i32_292, %c9_i32 : i32
    %616 = arith.index_cast %615 : i32 to index
    %c0_293 = arith.constant 0 : index
    %c0_294 = arith.constant 0 : index
    %617 = vector.load %arg5[%616, %c0_293, %c0_294] : memref<16x8x128xf32, #tpu.memory_space<vmem>>, vector<1x8x128xf32>
    %618 = vector.shape_cast %617 : vector<1x8x128xf32> to vector<8x128xf32>
    %619 = vector.shape_cast %614 : vector<8x128xf32> to vector<1x8x128xf32>
    tpu.vector_store %arg5[%616, %c0_293, %c0_294], %619 {strides = array<i32>} : memref<16x8x128xf32, #tpu.memory_space<vmem>>, vector<1x8x128xf32>,
    %620 = vector.extract_strided_slice %607 {offsets = [0, 0], sizes = [8, 128], strides = [1, 1]} : vector<16x128xf32> to vector<8x128xf32>
    %c0_295 = arith.constant 0 : index
    %c0_296 = arith.constant 0 : index
    %621 = vector.load %arg6[%c0_295, %c0_296] : memref<16x256xf32, #tpu.memory_space<vmem>>, vector<8x128xf32>
    tpu.vector_store %arg6[%c0_295, %c0_296], %620 {strides = array<i32>} : memref<16x256xf32, #tpu.memory_space<vmem>>, vector<8x128xf32>,
    %622 = vector.extract_strided_slice %607 {offsets = [8, 0], sizes = [8, 128], strides = [1, 1]} : vector<16x128xf32> to vector<8x128xf32>
    %c8_297 = arith.constant 8 : index
    %c128_298 = arith.constant 128 : index
    %623 = vector.load %arg6[%c8_297, %c128_298] : memref<16x256xf32, #tpu.memory_space<vmem>>, vector<8x128xf32>
    tpu.vector_store %arg6[%c8_297, %c128_298], %622 {strides = array<i32>} : memref<16x256xf32, #tpu.memory_space<vmem>>, vector<8x128xf32>,
    %c10_i32 = arith.constant 10 : i32
    %624 = arith.index_cast %c10_i32 : i32 to index
    %c0_299 = arith.constant 0 : index
    %c0_300 = arith.constant 0 : index
    %625 = vector.load %arg1[%624, %c0_299, %c0_300] : memref<16x8x512xbf16, #tpu.memory_space<vmem>>, vector<1x8x512xbf16>
    %626 = vector.shape_cast %625 : vector<1x8x512xbf16> to vector<8x512xbf16>
    %627 = arith.extf %626 : vector<8x512xbf16> to vector<8x512xf32>
    %c15_i32_301 = arith.constant 15 : i32
    %628 = arith.subi %c15_i32_301, %c10_i32 : i32
    %629 = arith.index_cast %628 : i32 to index
    %c0_302 = arith.constant 0 : index
    %c0_303 = arith.constant 0 : index
    %630 = vector.load %arg2[%629, %c0_302, %c0_303] : memref<16x8x512xbf16, #tpu.memory_space<vmem>>, vector<1x8x512xbf16>
    %631 = vector.shape_cast %630 : vector<1x8x512xbf16> to vector<8x512xbf16>
    %632 = arith.extf %631 : vector<8x512xbf16> to vector<8x512xf32>
    %633 = tpu.concatenate %627, %632 in 0 : vector<8x512xf32>, vector<8x512xf32> -> vector<16x512xf32>
    %c0_304 = arith.constant 0 : index
    %c0_305 = arith.constant 0 : index
    %634 = vector.load %arg6[%c0_304, %c0_305] : memref<16x256xf32, #tpu.memory_space<vmem>>, vector<16x256xf32>
    %635 = arith.truncf %634 : vector<16x256xf32> to vector<16x256xbf16>
    %cst_306 = arith.constant dense<0.000000e+00> : vector<16x512xf32>
    %636 = tpu.matmul %635, %3, %cst_306 {dimension_numbers = #tpu.dot_dimension_numbers<[1], [0], [0], [1], [0, 0, 1, 1], [], []>} : vector<16x256xbf16>, vector<256x512xbf16>, vector<16x512xf32> -> vector<16x512xf32>
    %637 = arith.addf %633, %636 : vector<16x512xf32>
    %638 = vector.extract_strided_slice %637 {offsets = [0, 0], sizes = [16, 128], strides = [1, 1]} : vector<16x512xf32> to vector<16x128xf32>
    %cst_307 = arith.constant 5.000000e-01 : f32
    %639 = vector.broadcast %cst_307 : f32 to vector<16x128xf32>
    %640 = arith.mulf %639, %638 : vector<16x128xf32>
    %641 = math.tanh %640 : vector<16x128xf32>
    %cst_308 = arith.constant 1.000000e+00 : f32
    %642 = vector.broadcast %cst_308 : f32 to vector<16x128xf32>
    %643 = arith.addf %641, %642 : vector<16x128xf32>
    %cst_309 = arith.constant 5.000000e-01 : f32
    %644 = vector.broadcast %cst_309 : f32 to vector<16x128xf32>
    %645 = arith.mulf %644, %643 : vector<16x128xf32>
    %646 = vector.extract_strided_slice %637 {offsets = [0, 128], sizes = [16, 128], strides = [1, 1]} : vector<16x512xf32> to vector<16x128xf32>
    %cst_310 = arith.constant 5.000000e-01 : f32
    %647 = vector.broadcast %cst_310 : f32 to vector<16x128xf32>
    %648 = arith.mulf %647, %646 : vector<16x128xf32>
    %649 = math.tanh %648 : vector<16x128xf32>
    %cst_311 = arith.constant 1.000000e+00 : f32
    %650 = vector.broadcast %cst_311 : f32 to vector<16x128xf32>
    %651 = arith.addf %649, %650 : vector<16x128xf32>
    %cst_312 = arith.constant 5.000000e-01 : f32
    %652 = vector.broadcast %cst_312 : f32 to vector<16x128xf32>
    %653 = arith.mulf %652, %651 : vector<16x128xf32>
    %654 = vector.extract_strided_slice %637 {offsets = [0, 256], sizes = [16, 128], strides = [1, 1]} : vector<16x512xf32> to vector<16x128xf32>
    %655 = math.tanh %654 : vector<16x128xf32>
    %656 = vector.extract_strided_slice %637 {offsets = [0, 384], sizes = [16, 128], strides = [1, 1]} : vector<16x512xf32> to vector<16x128xf32>
    %cst_313 = arith.constant 5.000000e-01 : f32
    %657 = vector.broadcast %cst_313 : f32 to vector<16x128xf32>
    %658 = arith.mulf %657, %656 : vector<16x128xf32>
    %659 = math.tanh %658 : vector<16x128xf32>
    %cst_314 = arith.constant 1.000000e+00 : f32
    %660 = vector.broadcast %cst_314 : f32 to vector<16x128xf32>
    %661 = arith.addf %659, %660 : vector<16x128xf32>
    %cst_315 = arith.constant 5.000000e-01 : f32
    %662 = vector.broadcast %cst_315 : f32 to vector<16x128xf32>
    %663 = arith.mulf %662, %661 : vector<16x128xf32>
    %c0_316 = arith.constant 0 : index
    %c0_317 = arith.constant 0 : index
    %664 = vector.load %arg7[%c0_316, %c0_317] : memref<16x128xf32, #tpu.memory_space<vmem>>, vector<16x128xf32>
    %665 = arith.mulf %653, %664 : vector<16x128xf32>
    %666 = arith.mulf %645, %655 : vector<16x128xf32>
    %667 = arith.addf %665, %666 : vector<16x128xf32>
    %668 = math.tanh %667 : vector<16x128xf32>
    %669 = arith.mulf %663, %668 : vector<16x128xf32>
    %c0_318 = arith.constant 0 : index
    %c0_319 = arith.constant 0 : index
    %670 = vector.load %arg7[%c0_318, %c0_319] : memref<16x128xf32, #tpu.memory_space<vmem>>, vector<16x128xf32>
    tpu.vector_store %arg7[%c0_318, %c0_319], %667 {strides = array<i32>} : memref<16x128xf32, #tpu.memory_space<vmem>>, vector<16x128xf32>,
    %671 = vector.extract_strided_slice %669 {offsets = [0, 0], sizes = [8, 128], strides = [1, 1]} : vector<16x128xf32> to vector<8x128xf32>
    %672 = arith.index_cast %c10_i32 : i32 to index
    %c0_320 = arith.constant 0 : index
    %c0_321 = arith.constant 0 : index
    %673 = vector.load %arg4[%672, %c0_320, %c0_321] : memref<16x8x128xf32, #tpu.memory_space<vmem>>, vector<1x8x128xf32>
    %674 = vector.shape_cast %673 : vector<1x8x128xf32> to vector<8x128xf32>
    %675 = vector.shape_cast %671 : vector<8x128xf32> to vector<1x8x128xf32>
    tpu.vector_store %arg4[%672, %c0_320, %c0_321], %675 {strides = array<i32>} : memref<16x8x128xf32, #tpu.memory_space<vmem>>, vector<1x8x128xf32>,
    %676 = vector.extract_strided_slice %669 {offsets = [8, 0], sizes = [8, 128], strides = [1, 1]} : vector<16x128xf32> to vector<8x128xf32>
    %c15_i32_322 = arith.constant 15 : i32
    %677 = arith.subi %c15_i32_322, %c10_i32 : i32
    %678 = arith.index_cast %677 : i32 to index
    %c0_323 = arith.constant 0 : index
    %c0_324 = arith.constant 0 : index
    %679 = vector.load %arg5[%678, %c0_323, %c0_324] : memref<16x8x128xf32, #tpu.memory_space<vmem>>, vector<1x8x128xf32>
    %680 = vector.shape_cast %679 : vector<1x8x128xf32> to vector<8x128xf32>
    %681 = vector.shape_cast %676 : vector<8x128xf32> to vector<1x8x128xf32>
    tpu.vector_store %arg5[%678, %c0_323, %c0_324], %681 {strides = array<i32>} : memref<16x8x128xf32, #tpu.memory_space<vmem>>, vector<1x8x128xf32>,
    %682 = vector.extract_strided_slice %669 {offsets = [0, 0], sizes = [8, 128], strides = [1, 1]} : vector<16x128xf32> to vector<8x128xf32>
    %c0_325 = arith.constant 0 : index
    %c0_326 = arith.constant 0 : index
    %683 = vector.load %arg6[%c0_325, %c0_326] : memref<16x256xf32, #tpu.memory_space<vmem>>, vector<8x128xf32>
    tpu.vector_store %arg6[%c0_325, %c0_326], %682 {strides = array<i32>} : memref<16x256xf32, #tpu.memory_space<vmem>>, vector<8x128xf32>,
    %684 = vector.extract_strided_slice %669 {offsets = [8, 0], sizes = [8, 128], strides = [1, 1]} : vector<16x128xf32> to vector<8x128xf32>
    %c8_327 = arith.constant 8 : index
    %c128_328 = arith.constant 128 : index
    %685 = vector.load %arg6[%c8_327, %c128_328] : memref<16x256xf32, #tpu.memory_space<vmem>>, vector<8x128xf32>
    tpu.vector_store %arg6[%c8_327, %c128_328], %684 {strides = array<i32>} : memref<16x256xf32, #tpu.memory_space<vmem>>, vector<8x128xf32>,
    %c11_i32 = arith.constant 11 : i32
    %686 = arith.index_cast %c11_i32 : i32 to index
    %c0_329 = arith.constant 0 : index
    %c0_330 = arith.constant 0 : index
    %687 = vector.load %arg1[%686, %c0_329, %c0_330] : memref<16x8x512xbf16, #tpu.memory_space<vmem>>, vector<1x8x512xbf16>
    %688 = vector.shape_cast %687 : vector<1x8x512xbf16> to vector<8x512xbf16>
    %689 = arith.extf %688 : vector<8x512xbf16> to vector<8x512xf32>
    %c15_i32_331 = arith.constant 15 : i32
    %690 = arith.subi %c15_i32_331, %c11_i32 : i32
    %691 = arith.index_cast %690 : i32 to index
    %c0_332 = arith.constant 0 : index
    %c0_333 = arith.constant 0 : index
    %692 = vector.load %arg2[%691, %c0_332, %c0_333] : memref<16x8x512xbf16, #tpu.memory_space<vmem>>, vector<1x8x512xbf16>
    %693 = vector.shape_cast %692 : vector<1x8x512xbf16> to vector<8x512xbf16>
    %694 = arith.extf %693 : vector<8x512xbf16> to vector<8x512xf32>
    %695 = tpu.concatenate %689, %694 in 0 : vector<8x512xf32>, vector<8x512xf32> -> vector<16x512xf32>
    %c0_334 = arith.constant 0 : index
    %c0_335 = arith.constant 0 : index
    %696 = vector.load %arg6[%c0_334, %c0_335] : memref<16x256xf32, #tpu.memory_space<vmem>>, vector<16x256xf32>
    %697 = arith.truncf %696 : vector<16x256xf32> to vector<16x256xbf16>
    %cst_336 = arith.constant dense<0.000000e+00> : vector<16x512xf32>
    %698 = tpu.matmul %697, %3, %cst_336 {dimension_numbers = #tpu.dot_dimension_numbers<[1], [0], [0], [1], [0, 0, 1, 1], [], []>} : vector<16x256xbf16>, vector<256x512xbf16>, vector<16x512xf32> -> vector<16x512xf32>
    %699 = arith.addf %695, %698 : vector<16x512xf32>
    %700 = vector.extract_strided_slice %699 {offsets = [0, 0], sizes = [16, 128], strides = [1, 1]} : vector<16x512xf32> to vector<16x128xf32>
    %cst_337 = arith.constant 5.000000e-01 : f32
    %701 = vector.broadcast %cst_337 : f32 to vector<16x128xf32>
    %702 = arith.mulf %701, %700 : vector<16x128xf32>
    %703 = math.tanh %702 : vector<16x128xf32>
    %cst_338 = arith.constant 1.000000e+00 : f32
    %704 = vector.broadcast %cst_338 : f32 to vector<16x128xf32>
    %705 = arith.addf %703, %704 : vector<16x128xf32>
    %cst_339 = arith.constant 5.000000e-01 : f32
    %706 = vector.broadcast %cst_339 : f32 to vector<16x128xf32>
    %707 = arith.mulf %706, %705 : vector<16x128xf32>
    %708 = vector.extract_strided_slice %699 {offsets = [0, 128], sizes = [16, 128], strides = [1, 1]} : vector<16x512xf32> to vector<16x128xf32>
    %cst_340 = arith.constant 5.000000e-01 : f32
    %709 = vector.broadcast %cst_340 : f32 to vector<16x128xf32>
    %710 = arith.mulf %709, %708 : vector<16x128xf32>
    %711 = math.tanh %710 : vector<16x128xf32>
    %cst_341 = arith.constant 1.000000e+00 : f32
    %712 = vector.broadcast %cst_341 : f32 to vector<16x128xf32>
    %713 = arith.addf %711, %712 : vector<16x128xf32>
    %cst_342 = arith.constant 5.000000e-01 : f32
    %714 = vector.broadcast %cst_342 : f32 to vector<16x128xf32>
    %715 = arith.mulf %714, %713 : vector<16x128xf32>
    %716 = vector.extract_strided_slice %699 {offsets = [0, 256], sizes = [16, 128], strides = [1, 1]} : vector<16x512xf32> to vector<16x128xf32>
    %717 = math.tanh %716 : vector<16x128xf32>
    %718 = vector.extract_strided_slice %699 {offsets = [0, 384], sizes = [16, 128], strides = [1, 1]} : vector<16x512xf32> to vector<16x128xf32>
    %cst_343 = arith.constant 5.000000e-01 : f32
    %719 = vector.broadcast %cst_343 : f32 to vector<16x128xf32>
    %720 = arith.mulf %719, %718 : vector<16x128xf32>
    %721 = math.tanh %720 : vector<16x128xf32>
    %cst_344 = arith.constant 1.000000e+00 : f32
    %722 = vector.broadcast %cst_344 : f32 to vector<16x128xf32>
    %723 = arith.addf %721, %722 : vector<16x128xf32>
    %cst_345 = arith.constant 5.000000e-01 : f32
    %724 = vector.broadcast %cst_345 : f32 to vector<16x128xf32>
    %725 = arith.mulf %724, %723 : vector<16x128xf32>
    %c0_346 = arith.constant 0 : index
    %c0_347 = arith.constant 0 : index
    %726 = vector.load %arg7[%c0_346, %c0_347] : memref<16x128xf32, #tpu.memory_space<vmem>>, vector<16x128xf32>
    %727 = arith.mulf %715, %726 : vector<16x128xf32>
    %728 = arith.mulf %707, %717 : vector<16x128xf32>
    %729 = arith.addf %727, %728 : vector<16x128xf32>
    %730 = math.tanh %729 : vector<16x128xf32>
    %731 = arith.mulf %725, %730 : vector<16x128xf32>
    %c0_348 = arith.constant 0 : index
    %c0_349 = arith.constant 0 : index
    %732 = vector.load %arg7[%c0_348, %c0_349] : memref<16x128xf32, #tpu.memory_space<vmem>>, vector<16x128xf32>
    tpu.vector_store %arg7[%c0_348, %c0_349], %729 {strides = array<i32>} : memref<16x128xf32, #tpu.memory_space<vmem>>, vector<16x128xf32>,
    %733 = vector.extract_strided_slice %731 {offsets = [0, 0], sizes = [8, 128], strides = [1, 1]} : vector<16x128xf32> to vector<8x128xf32>
    %734 = arith.index_cast %c11_i32 : i32 to index
    %c0_350 = arith.constant 0 : index
    %c0_351 = arith.constant 0 : index
    %735 = vector.load %arg4[%734, %c0_350, %c0_351] : memref<16x8x128xf32, #tpu.memory_space<vmem>>, vector<1x8x128xf32>
    %736 = vector.shape_cast %735 : vector<1x8x128xf32> to vector<8x128xf32>
    %737 = vector.shape_cast %733 : vector<8x128xf32> to vector<1x8x128xf32>
    tpu.vector_store %arg4[%734, %c0_350, %c0_351], %737 {strides = array<i32>} : memref<16x8x128xf32, #tpu.memory_space<vmem>>, vector<1x8x128xf32>,
    %738 = vector.extract_strided_slice %731 {offsets = [8, 0], sizes = [8, 128], strides = [1, 1]} : vector<16x128xf32> to vector<8x128xf32>
    %c15_i32_352 = arith.constant 15 : i32
    %739 = arith.subi %c15_i32_352, %c11_i32 : i32
    %740 = arith.index_cast %739 : i32 to index
    %c0_353 = arith.constant 0 : index
    %c0_354 = arith.constant 0 : index
    %741 = vector.load %arg5[%740, %c0_353, %c0_354] : memref<16x8x128xf32, #tpu.memory_space<vmem>>, vector<1x8x128xf32>
    %742 = vector.shape_cast %741 : vector<1x8x128xf32> to vector<8x128xf32>
    %743 = vector.shape_cast %738 : vector<8x128xf32> to vector<1x8x128xf32>
    tpu.vector_store %arg5[%740, %c0_353, %c0_354], %743 {strides = array<i32>} : memref<16x8x128xf32, #tpu.memory_space<vmem>>, vector<1x8x128xf32>,
    %744 = vector.extract_strided_slice %731 {offsets = [0, 0], sizes = [8, 128], strides = [1, 1]} : vector<16x128xf32> to vector<8x128xf32>
    %c0_355 = arith.constant 0 : index
    %c0_356 = arith.constant 0 : index
    %745 = vector.load %arg6[%c0_355, %c0_356] : memref<16x256xf32, #tpu.memory_space<vmem>>, vector<8x128xf32>
    tpu.vector_store %arg6[%c0_355, %c0_356], %744 {strides = array<i32>} : memref<16x256xf32, #tpu.memory_space<vmem>>, vector<8x128xf32>,
    %746 = vector.extract_strided_slice %731 {offsets = [8, 0], sizes = [8, 128], strides = [1, 1]} : vector<16x128xf32> to vector<8x128xf32>
    %c8_357 = arith.constant 8 : index
    %c128_358 = arith.constant 128 : index
    %747 = vector.load %arg6[%c8_357, %c128_358] : memref<16x256xf32, #tpu.memory_space<vmem>>, vector<8x128xf32>
    tpu.vector_store %arg6[%c8_357, %c128_358], %746 {strides = array<i32>} : memref<16x256xf32, #tpu.memory_space<vmem>>, vector<8x128xf32>,
    %c12_i32 = arith.constant 12 : i32
    %748 = arith.index_cast %c12_i32 : i32 to index
    %c0_359 = arith.constant 0 : index
    %c0_360 = arith.constant 0 : index
    %749 = vector.load %arg1[%748, %c0_359, %c0_360] : memref<16x8x512xbf16, #tpu.memory_space<vmem>>, vector<1x8x512xbf16>
    %750 = vector.shape_cast %749 : vector<1x8x512xbf16> to vector<8x512xbf16>
    %751 = arith.extf %750 : vector<8x512xbf16> to vector<8x512xf32>
    %c15_i32_361 = arith.constant 15 : i32
    %752 = arith.subi %c15_i32_361, %c12_i32 : i32
    %753 = arith.index_cast %752 : i32 to index
    %c0_362 = arith.constant 0 : index
    %c0_363 = arith.constant 0 : index
    %754 = vector.load %arg2[%753, %c0_362, %c0_363] : memref<16x8x512xbf16, #tpu.memory_space<vmem>>, vector<1x8x512xbf16>
    %755 = vector.shape_cast %754 : vector<1x8x512xbf16> to vector<8x512xbf16>
    %756 = arith.extf %755 : vector<8x512xbf16> to vector<8x512xf32>
    %757 = tpu.concatenate %751, %756 in 0 : vector<8x512xf32>, vector<8x512xf32> -> vector<16x512xf32>
    %c0_364 = arith.constant 0 : index
    %c0_365 = arith.constant 0 : index
    %758 = vector.load %arg6[%c0_364, %c0_365] : memref<16x256xf32, #tpu.memory_space<vmem>>, vector<16x256xf32>
    %759 = arith.truncf %758 : vector<16x256xf32> to vector<16x256xbf16>
    %cst_366 = arith.constant dense<0.000000e+00> : vector<16x512xf32>
    %760 = tpu.matmul %759, %3, %cst_366 {dimension_numbers = #tpu.dot_dimension_numbers<[1], [0], [0], [1], [0, 0, 1, 1], [], []>} : vector<16x256xbf16>, vector<256x512xbf16>, vector<16x512xf32> -> vector<16x512xf32>
    %761 = arith.addf %757, %760 : vector<16x512xf32>
    %762 = vector.extract_strided_slice %761 {offsets = [0, 0], sizes = [16, 128], strides = [1, 1]} : vector<16x512xf32> to vector<16x128xf32>
    %cst_367 = arith.constant 5.000000e-01 : f32
    %763 = vector.broadcast %cst_367 : f32 to vector<16x128xf32>
    %764 = arith.mulf %763, %762 : vector<16x128xf32>
    %765 = math.tanh %764 : vector<16x128xf32>
    %cst_368 = arith.constant 1.000000e+00 : f32
    %766 = vector.broadcast %cst_368 : f32 to vector<16x128xf32>
    %767 = arith.addf %765, %766 : vector<16x128xf32>
    %cst_369 = arith.constant 5.000000e-01 : f32
    %768 = vector.broadcast %cst_369 : f32 to vector<16x128xf32>
    %769 = arith.mulf %768, %767 : vector<16x128xf32>
    %770 = vector.extract_strided_slice %761 {offsets = [0, 128], sizes = [16, 128], strides = [1, 1]} : vector<16x512xf32> to vector<16x128xf32>
    %cst_370 = arith.constant 5.000000e-01 : f32
    %771 = vector.broadcast %cst_370 : f32 to vector<16x128xf32>
    %772 = arith.mulf %771, %770 : vector<16x128xf32>
    %773 = math.tanh %772 : vector<16x128xf32>
    %cst_371 = arith.constant 1.000000e+00 : f32
    %774 = vector.broadcast %cst_371 : f32 to vector<16x128xf32>
    %775 = arith.addf %773, %774 : vector<16x128xf32>
    %cst_372 = arith.constant 5.000000e-01 : f32
    %776 = vector.broadcast %cst_372 : f32 to vector<16x128xf32>
    %777 = arith.mulf %776, %775 : vector<16x128xf32>
    %778 = vector.extract_strided_slice %761 {offsets = [0, 256], sizes = [16, 128], strides = [1, 1]} : vector<16x512xf32> to vector<16x128xf32>
    %779 = math.tanh %778 : vector<16x128xf32>
    %780 = vector.extract_strided_slice %761 {offsets = [0, 384], sizes = [16, 128], strides = [1, 1]} : vector<16x512xf32> to vector<16x128xf32>
    %cst_373 = arith.constant 5.000000e-01 : f32
    %781 = vector.broadcast %cst_373 : f32 to vector<16x128xf32>
    %782 = arith.mulf %781, %780 : vector<16x128xf32>
    %783 = math.tanh %782 : vector<16x128xf32>
    %cst_374 = arith.constant 1.000000e+00 : f32
    %784 = vector.broadcast %cst_374 : f32 to vector<16x128xf32>
    %785 = arith.addf %783, %784 : vector<16x128xf32>
    %cst_375 = arith.constant 5.000000e-01 : f32
    %786 = vector.broadcast %cst_375 : f32 to vector<16x128xf32>
    %787 = arith.mulf %786, %785 : vector<16x128xf32>
    %c0_376 = arith.constant 0 : index
    %c0_377 = arith.constant 0 : index
    %788 = vector.load %arg7[%c0_376, %c0_377] : memref<16x128xf32, #tpu.memory_space<vmem>>, vector<16x128xf32>
    %789 = arith.mulf %777, %788 : vector<16x128xf32>
    %790 = arith.mulf %769, %779 : vector<16x128xf32>
    %791 = arith.addf %789, %790 : vector<16x128xf32>
    %792 = math.tanh %791 : vector<16x128xf32>
    %793 = arith.mulf %787, %792 : vector<16x128xf32>
    %c0_378 = arith.constant 0 : index
    %c0_379 = arith.constant 0 : index
    %794 = vector.load %arg7[%c0_378, %c0_379] : memref<16x128xf32, #tpu.memory_space<vmem>>, vector<16x128xf32>
    tpu.vector_store %arg7[%c0_378, %c0_379], %791 {strides = array<i32>} : memref<16x128xf32, #tpu.memory_space<vmem>>, vector<16x128xf32>,
    %795 = vector.extract_strided_slice %793 {offsets = [0, 0], sizes = [8, 128], strides = [1, 1]} : vector<16x128xf32> to vector<8x128xf32>
    %796 = arith.index_cast %c12_i32 : i32 to index
    %c0_380 = arith.constant 0 : index
    %c0_381 = arith.constant 0 : index
    %797 = vector.load %arg4[%796, %c0_380, %c0_381] : memref<16x8x128xf32, #tpu.memory_space<vmem>>, vector<1x8x128xf32>
    %798 = vector.shape_cast %797 : vector<1x8x128xf32> to vector<8x128xf32>
    %799 = vector.shape_cast %795 : vector<8x128xf32> to vector<1x8x128xf32>
    tpu.vector_store %arg4[%796, %c0_380, %c0_381], %799 {strides = array<i32>} : memref<16x8x128xf32, #tpu.memory_space<vmem>>, vector<1x8x128xf32>,
    %800 = vector.extract_strided_slice %793 {offsets = [8, 0], sizes = [8, 128], strides = [1, 1]} : vector<16x128xf32> to vector<8x128xf32>
    %c15_i32_382 = arith.constant 15 : i32
    %801 = arith.subi %c15_i32_382, %c12_i32 : i32
    %802 = arith.index_cast %801 : i32 to index
    %c0_383 = arith.constant 0 : index
    %c0_384 = arith.constant 0 : index
    %803 = vector.load %arg5[%802, %c0_383, %c0_384] : memref<16x8x128xf32, #tpu.memory_space<vmem>>, vector<1x8x128xf32>
    %804 = vector.shape_cast %803 : vector<1x8x128xf32> to vector<8x128xf32>
    %805 = vector.shape_cast %800 : vector<8x128xf32> to vector<1x8x128xf32>
    tpu.vector_store %arg5[%802, %c0_383, %c0_384], %805 {strides = array<i32>} : memref<16x8x128xf32, #tpu.memory_space<vmem>>, vector<1x8x128xf32>,
    %806 = vector.extract_strided_slice %793 {offsets = [0, 0], sizes = [8, 128], strides = [1, 1]} : vector<16x128xf32> to vector<8x128xf32>
    %c0_385 = arith.constant 0 : index
    %c0_386 = arith.constant 0 : index
    %807 = vector.load %arg6[%c0_385, %c0_386] : memref<16x256xf32, #tpu.memory_space<vmem>>, vector<8x128xf32>
    tpu.vector_store %arg6[%c0_385, %c0_386], %806 {strides = array<i32>} : memref<16x256xf32, #tpu.memory_space<vmem>>, vector<8x128xf32>,
    %808 = vector.extract_strided_slice %793 {offsets = [8, 0], sizes = [8, 128], strides = [1, 1]} : vector<16x128xf32> to vector<8x128xf32>
    %c8_387 = arith.constant 8 : index
    %c128_388 = arith.constant 128 : index
    %809 = vector.load %arg6[%c8_387, %c128_388] : memref<16x256xf32, #tpu.memory_space<vmem>>, vector<8x128xf32>
    tpu.vector_store %arg6[%c8_387, %c128_388], %808 {strides = array<i32>} : memref<16x256xf32, #tpu.memory_space<vmem>>, vector<8x128xf32>,
    %c13_i32 = arith.constant 13 : i32
    %810 = arith.index_cast %c13_i32 : i32 to index
    %c0_389 = arith.constant 0 : index
    %c0_390 = arith.constant 0 : index
    %811 = vector.load %arg1[%810, %c0_389, %c0_390] : memref<16x8x512xbf16, #tpu.memory_space<vmem>>, vector<1x8x512xbf16>
    %812 = vector.shape_cast %811 : vector<1x8x512xbf16> to vector<8x512xbf16>
    %813 = arith.extf %812 : vector<8x512xbf16> to vector<8x512xf32>
    %c15_i32_391 = arith.constant 15 : i32
    %814 = arith.subi %c15_i32_391, %c13_i32 : i32
    %815 = arith.index_cast %814 : i32 to index
    %c0_392 = arith.constant 0 : index
    %c0_393 = arith.constant 0 : index
    %816 = vector.load %arg2[%815, %c0_392, %c0_393] : memref<16x8x512xbf16, #tpu.memory_space<vmem>>, vector<1x8x512xbf16>
    %817 = vector.shape_cast %816 : vector<1x8x512xbf16> to vector<8x512xbf16>
    %818 = arith.extf %817 : vector<8x512xbf16> to vector<8x512xf32>
    %819 = tpu.concatenate %813, %818 in 0 : vector<8x512xf32>, vector<8x512xf32> -> vector<16x512xf32>
    %c0_394 = arith.constant 0 : index
    %c0_395 = arith.constant 0 : index
    %820 = vector.load %arg6[%c0_394, %c0_395] : memref<16x256xf32, #tpu.memory_space<vmem>>, vector<16x256xf32>
    %821 = arith.truncf %820 : vector<16x256xf32> to vector<16x256xbf16>
    %cst_396 = arith.constant dense<0.000000e+00> : vector<16x512xf32>
    %822 = tpu.matmul %821, %3, %cst_396 {dimension_numbers = #tpu.dot_dimension_numbers<[1], [0], [0], [1], [0, 0, 1, 1], [], []>} : vector<16x256xbf16>, vector<256x512xbf16>, vector<16x512xf32> -> vector<16x512xf32>
    %823 = arith.addf %819, %822 : vector<16x512xf32>
    %824 = vector.extract_strided_slice %823 {offsets = [0, 0], sizes = [16, 128], strides = [1, 1]} : vector<16x512xf32> to vector<16x128xf32>
    %cst_397 = arith.constant 5.000000e-01 : f32
    %825 = vector.broadcast %cst_397 : f32 to vector<16x128xf32>
    %826 = arith.mulf %825, %824 : vector<16x128xf32>
    %827 = math.tanh %826 : vector<16x128xf32>
    %cst_398 = arith.constant 1.000000e+00 : f32
    %828 = vector.broadcast %cst_398 : f32 to vector<16x128xf32>
    %829 = arith.addf %827, %828 : vector<16x128xf32>
    %cst_399 = arith.constant 5.000000e-01 : f32
    %830 = vector.broadcast %cst_399 : f32 to vector<16x128xf32>
    %831 = arith.mulf %830, %829 : vector<16x128xf32>
    %832 = vector.extract_strided_slice %823 {offsets = [0, 128], sizes = [16, 128], strides = [1, 1]} : vector<16x512xf32> to vector<16x128xf32>
    %cst_400 = arith.constant 5.000000e-01 : f32
    %833 = vector.broadcast %cst_400 : f32 to vector<16x128xf32>
    %834 = arith.mulf %833, %832 : vector<16x128xf32>
    %835 = math.tanh %834 : vector<16x128xf32>
    %cst_401 = arith.constant 1.000000e+00 : f32
    %836 = vector.broadcast %cst_401 : f32 to vector<16x128xf32>
    %837 = arith.addf %835, %836 : vector<16x128xf32>
    %cst_402 = arith.constant 5.000000e-01 : f32
    %838 = vector.broadcast %cst_402 : f32 to vector<16x128xf32>
    %839 = arith.mulf %838, %837 : vector<16x128xf32>
    %840 = vector.extract_strided_slice %823 {offsets = [0, 256], sizes = [16, 128], strides = [1, 1]} : vector<16x512xf32> to vector<16x128xf32>
    %841 = math.tanh %840 : vector<16x128xf32>
    %842 = vector.extract_strided_slice %823 {offsets = [0, 384], sizes = [16, 128], strides = [1, 1]} : vector<16x512xf32> to vector<16x128xf32>
    %cst_403 = arith.constant 5.000000e-01 : f32
    %843 = vector.broadcast %cst_403 : f32 to vector<16x128xf32>
    %844 = arith.mulf %843, %842 : vector<16x128xf32>
    %845 = math.tanh %844 : vector<16x128xf32>
    %cst_404 = arith.constant 1.000000e+00 : f32
    %846 = vector.broadcast %cst_404 : f32 to vector<16x128xf32>
    %847 = arith.addf %845, %846 : vector<16x128xf32>
    %cst_405 = arith.constant 5.000000e-01 : f32
    %848 = vector.broadcast %cst_405 : f32 to vector<16x128xf32>
    %849 = arith.mulf %848, %847 : vector<16x128xf32>
    %c0_406 = arith.constant 0 : index
    %c0_407 = arith.constant 0 : index
    %850 = vector.load %arg7[%c0_406, %c0_407] : memref<16x128xf32, #tpu.memory_space<vmem>>, vector<16x128xf32>
    %851 = arith.mulf %839, %850 : vector<16x128xf32>
    %852 = arith.mulf %831, %841 : vector<16x128xf32>
    %853 = arith.addf %851, %852 : vector<16x128xf32>
    %854 = math.tanh %853 : vector<16x128xf32>
    %855 = arith.mulf %849, %854 : vector<16x128xf32>
    %c0_408 = arith.constant 0 : index
    %c0_409 = arith.constant 0 : index
    %856 = vector.load %arg7[%c0_408, %c0_409] : memref<16x128xf32, #tpu.memory_space<vmem>>, vector<16x128xf32>
    tpu.vector_store %arg7[%c0_408, %c0_409], %853 {strides = array<i32>} : memref<16x128xf32, #tpu.memory_space<vmem>>, vector<16x128xf32>,
    %857 = vector.extract_strided_slice %855 {offsets = [0, 0], sizes = [8, 128], strides = [1, 1]} : vector<16x128xf32> to vector<8x128xf32>
    %858 = arith.index_cast %c13_i32 : i32 to index
    %c0_410 = arith.constant 0 : index
    %c0_411 = arith.constant 0 : index
    %859 = vector.load %arg4[%858, %c0_410, %c0_411] : memref<16x8x128xf32, #tpu.memory_space<vmem>>, vector<1x8x128xf32>
    %860 = vector.shape_cast %859 : vector<1x8x128xf32> to vector<8x128xf32>
    %861 = vector.shape_cast %857 : vector<8x128xf32> to vector<1x8x128xf32>
    tpu.vector_store %arg4[%858, %c0_410, %c0_411], %861 {strides = array<i32>} : memref<16x8x128xf32, #tpu.memory_space<vmem>>, vector<1x8x128xf32>,
    %862 = vector.extract_strided_slice %855 {offsets = [8, 0], sizes = [8, 128], strides = [1, 1]} : vector<16x128xf32> to vector<8x128xf32>
    %c15_i32_412 = arith.constant 15 : i32
    %863 = arith.subi %c15_i32_412, %c13_i32 : i32
    %864 = arith.index_cast %863 : i32 to index
    %c0_413 = arith.constant 0 : index
    %c0_414 = arith.constant 0 : index
    %865 = vector.load %arg5[%864, %c0_413, %c0_414] : memref<16x8x128xf32, #tpu.memory_space<vmem>>, vector<1x8x128xf32>
    %866 = vector.shape_cast %865 : vector<1x8x128xf32> to vector<8x128xf32>
    %867 = vector.shape_cast %862 : vector<8x128xf32> to vector<1x8x128xf32>
    tpu.vector_store %arg5[%864, %c0_413, %c0_414], %867 {strides = array<i32>} : memref<16x8x128xf32, #tpu.memory_space<vmem>>, vector<1x8x128xf32>,
    %868 = vector.extract_strided_slice %855 {offsets = [0, 0], sizes = [8, 128], strides = [1, 1]} : vector<16x128xf32> to vector<8x128xf32>
    %c0_415 = arith.constant 0 : index
    %c0_416 = arith.constant 0 : index
    %869 = vector.load %arg6[%c0_415, %c0_416] : memref<16x256xf32, #tpu.memory_space<vmem>>, vector<8x128xf32>
    tpu.vector_store %arg6[%c0_415, %c0_416], %868 {strides = array<i32>} : memref<16x256xf32, #tpu.memory_space<vmem>>, vector<8x128xf32>,
    %870 = vector.extract_strided_slice %855 {offsets = [8, 0], sizes = [8, 128], strides = [1, 1]} : vector<16x128xf32> to vector<8x128xf32>
    %c8_417 = arith.constant 8 : index
    %c128_418 = arith.constant 128 : index
    %871 = vector.load %arg6[%c8_417, %c128_418] : memref<16x256xf32, #tpu.memory_space<vmem>>, vector<8x128xf32>
    tpu.vector_store %arg6[%c8_417, %c128_418], %870 {strides = array<i32>} : memref<16x256xf32, #tpu.memory_space<vmem>>, vector<8x128xf32>,
    %c14_i32 = arith.constant 14 : i32
    %872 = arith.index_cast %c14_i32 : i32 to index
    %c0_419 = arith.constant 0 : index
    %c0_420 = arith.constant 0 : index
    %873 = vector.load %arg1[%872, %c0_419, %c0_420] : memref<16x8x512xbf16, #tpu.memory_space<vmem>>, vector<1x8x512xbf16>
    %874 = vector.shape_cast %873 : vector<1x8x512xbf16> to vector<8x512xbf16>
    %875 = arith.extf %874 : vector<8x512xbf16> to vector<8x512xf32>
    %c15_i32_421 = arith.constant 15 : i32
    %876 = arith.subi %c15_i32_421, %c14_i32 : i32
    %877 = arith.index_cast %876 : i32 to index
    %c0_422 = arith.constant 0 : index
    %c0_423 = arith.constant 0 : index
    %878 = vector.load %arg2[%877, %c0_422, %c0_423] : memref<16x8x512xbf16, #tpu.memory_space<vmem>>, vector<1x8x512xbf16>
    %879 = vector.shape_cast %878 : vector<1x8x512xbf16> to vector<8x512xbf16>
    %880 = arith.extf %879 : vector<8x512xbf16> to vector<8x512xf32>
    %881 = tpu.concatenate %875, %880 in 0 : vector<8x512xf32>, vector<8x512xf32> -> vector<16x512xf32>
    %c0_424 = arith.constant 0 : index
    %c0_425 = arith.constant 0 : index
    %882 = vector.load %arg6[%c0_424, %c0_425] : memref<16x256xf32, #tpu.memory_space<vmem>>, vector<16x256xf32>
    %883 = arith.truncf %882 : vector<16x256xf32> to vector<16x256xbf16>
    %cst_426 = arith.constant dense<0.000000e+00> : vector<16x512xf32>
    %884 = tpu.matmul %883, %3, %cst_426 {dimension_numbers = #tpu.dot_dimension_numbers<[1], [0], [0], [1], [0, 0, 1, 1], [], []>} : vector<16x256xbf16>, vector<256x512xbf16>, vector<16x512xf32> -> vector<16x512xf32>
    %885 = arith.addf %881, %884 : vector<16x512xf32>
    %886 = vector.extract_strided_slice %885 {offsets = [0, 0], sizes = [16, 128], strides = [1, 1]} : vector<16x512xf32> to vector<16x128xf32>
    %cst_427 = arith.constant 5.000000e-01 : f32
    %887 = vector.broadcast %cst_427 : f32 to vector<16x128xf32>
    %888 = arith.mulf %887, %886 : vector<16x128xf32>
    %889 = math.tanh %888 : vector<16x128xf32>
    %cst_428 = arith.constant 1.000000e+00 : f32
    %890 = vector.broadcast %cst_428 : f32 to vector<16x128xf32>
    %891 = arith.addf %889, %890 : vector<16x128xf32>
    %cst_429 = arith.constant 5.000000e-01 : f32
    %892 = vector.broadcast %cst_429 : f32 to vector<16x128xf32>
    %893 = arith.mulf %892, %891 : vector<16x128xf32>
    %894 = vector.extract_strided_slice %885 {offsets = [0, 128], sizes = [16, 128], strides = [1, 1]} : vector<16x512xf32> to vector<16x128xf32>
    %cst_430 = arith.constant 5.000000e-01 : f32
    %895 = vector.broadcast %cst_430 : f32 to vector<16x128xf32>
    %896 = arith.mulf %895, %894 : vector<16x128xf32>
    %897 = math.tanh %896 : vector<16x128xf32>
    %cst_431 = arith.constant 1.000000e+00 : f32
    %898 = vector.broadcast %cst_431 : f32 to vector<16x128xf32>
    %899 = arith.addf %897, %898 : vector<16x128xf32>
    %cst_432 = arith.constant 5.000000e-01 : f32
    %900 = vector.broadcast %cst_432 : f32 to vector<16x128xf32>
    %901 = arith.mulf %900, %899 : vector<16x128xf32>
    %902 = vector.extract_strided_slice %885 {offsets = [0, 256], sizes = [16, 128], strides = [1, 1]} : vector<16x512xf32> to vector<16x128xf32>
    %903 = math.tanh %902 : vector<16x128xf32>
    %904 = vector.extract_strided_slice %885 {offsets = [0, 384], sizes = [16, 128], strides = [1, 1]} : vector<16x512xf32> to vector<16x128xf32>
    %cst_433 = arith.constant 5.000000e-01 : f32
    %905 = vector.broadcast %cst_433 : f32 to vector<16x128xf32>
    %906 = arith.mulf %905, %904 : vector<16x128xf32>
    %907 = math.tanh %906 : vector<16x128xf32>
    %cst_434 = arith.constant 1.000000e+00 : f32
    %908 = vector.broadcast %cst_434 : f32 to vector<16x128xf32>
    %909 = arith.addf %907, %908 : vector<16x128xf32>
    %cst_435 = arith.constant 5.000000e-01 : f32
    %910 = vector.broadcast %cst_435 : f32 to vector<16x128xf32>
    %911 = arith.mulf %910, %909 : vector<16x128xf32>
    %c0_436 = arith.constant 0 : index
    %c0_437 = arith.constant 0 : index
    %912 = vector.load %arg7[%c0_436, %c0_437] : memref<16x128xf32, #tpu.memory_space<vmem>>, vector<16x128xf32>
    %913 = arith.mulf %901, %912 : vector<16x128xf32>
    %914 = arith.mulf %893, %903 : vector<16x128xf32>
    %915 = arith.addf %913, %914 : vector<16x128xf32>
    %916 = math.tanh %915 : vector<16x128xf32>
    %917 = arith.mulf %911, %916 : vector<16x128xf32>
    %c0_438 = arith.constant 0 : index
    %c0_439 = arith.constant 0 : index
    %918 = vector.load %arg7[%c0_438, %c0_439] : memref<16x128xf32, #tpu.memory_space<vmem>>, vector<16x128xf32>
    tpu.vector_store %arg7[%c0_438, %c0_439], %915 {strides = array<i32>} : memref<16x128xf32, #tpu.memory_space<vmem>>, vector<16x128xf32>,
    %919 = vector.extract_strided_slice %917 {offsets = [0, 0], sizes = [8, 128], strides = [1, 1]} : vector<16x128xf32> to vector<8x128xf32>
    %920 = arith.index_cast %c14_i32 : i32 to index
    %c0_440 = arith.constant 0 : index
    %c0_441 = arith.constant 0 : index
    %921 = vector.load %arg4[%920, %c0_440, %c0_441] : memref<16x8x128xf32, #tpu.memory_space<vmem>>, vector<1x8x128xf32>
    %922 = vector.shape_cast %921 : vector<1x8x128xf32> to vector<8x128xf32>
    %923 = vector.shape_cast %919 : vector<8x128xf32> to vector<1x8x128xf32>
    tpu.vector_store %arg4[%920, %c0_440, %c0_441], %923 {strides = array<i32>} : memref<16x8x128xf32, #tpu.memory_space<vmem>>, vector<1x8x128xf32>,
    %924 = vector.extract_strided_slice %917 {offsets = [8, 0], sizes = [8, 128], strides = [1, 1]} : vector<16x128xf32> to vector<8x128xf32>
    %c15_i32_442 = arith.constant 15 : i32
    %925 = arith.subi %c15_i32_442, %c14_i32 : i32
    %926 = arith.index_cast %925 : i32 to index
    %c0_443 = arith.constant 0 : index
    %c0_444 = arith.constant 0 : index
    %927 = vector.load %arg5[%926, %c0_443, %c0_444] : memref<16x8x128xf32, #tpu.memory_space<vmem>>, vector<1x8x128xf32>
    %928 = vector.shape_cast %927 : vector<1x8x128xf32> to vector<8x128xf32>
    %929 = vector.shape_cast %924 : vector<8x128xf32> to vector<1x8x128xf32>
    tpu.vector_store %arg5[%926, %c0_443, %c0_444], %929 {strides = array<i32>} : memref<16x8x128xf32, #tpu.memory_space<vmem>>, vector<1x8x128xf32>,
    %930 = vector.extract_strided_slice %917 {offsets = [0, 0], sizes = [8, 128], strides = [1, 1]} : vector<16x128xf32> to vector<8x128xf32>
    %c0_445 = arith.constant 0 : index
    %c0_446 = arith.constant 0 : index
    %931 = vector.load %arg6[%c0_445, %c0_446] : memref<16x256xf32, #tpu.memory_space<vmem>>, vector<8x128xf32>
    tpu.vector_store %arg6[%c0_445, %c0_446], %930 {strides = array<i32>} : memref<16x256xf32, #tpu.memory_space<vmem>>, vector<8x128xf32>,
    %932 = vector.extract_strided_slice %917 {offsets = [8, 0], sizes = [8, 128], strides = [1, 1]} : vector<16x128xf32> to vector<8x128xf32>
    %c8_447 = arith.constant 8 : index
    %c128_448 = arith.constant 128 : index
    %933 = vector.load %arg6[%c8_447, %c128_448] : memref<16x256xf32, #tpu.memory_space<vmem>>, vector<8x128xf32>
    tpu.vector_store %arg6[%c8_447, %c128_448], %932 {strides = array<i32>} : memref<16x256xf32, #tpu.memory_space<vmem>>, vector<8x128xf32>,
    %c15_i32_449 = arith.constant 15 : i32
    %934 = arith.index_cast %c15_i32_449 : i32 to index
    %c0_450 = arith.constant 0 : index
    %c0_451 = arith.constant 0 : index
    %935 = vector.load %arg1[%934, %c0_450, %c0_451] : memref<16x8x512xbf16, #tpu.memory_space<vmem>>, vector<1x8x512xbf16>
    %936 = vector.shape_cast %935 : vector<1x8x512xbf16> to vector<8x512xbf16>
    %937 = arith.extf %936 : vector<8x512xbf16> to vector<8x512xf32>
    %c15_i32_452 = arith.constant 15 : i32
    %938 = arith.subi %c15_i32_452, %c15_i32_449 : i32
    %939 = arith.index_cast %938 : i32 to index
    %c0_453 = arith.constant 0 : index
    %c0_454 = arith.constant 0 : index
    %940 = vector.load %arg2[%939, %c0_453, %c0_454] : memref<16x8x512xbf16, #tpu.memory_space<vmem>>, vector<1x8x512xbf16>
    %941 = vector.shape_cast %940 : vector<1x8x512xbf16> to vector<8x512xbf16>
    %942 = arith.extf %941 : vector<8x512xbf16> to vector<8x512xf32>
    %943 = tpu.concatenate %937, %942 in 0 : vector<8x512xf32>, vector<8x512xf32> -> vector<16x512xf32>
    %c0_455 = arith.constant 0 : index
    %c0_456 = arith.constant 0 : index
    %944 = vector.load %arg6[%c0_455, %c0_456] : memref<16x256xf32, #tpu.memory_space<vmem>>, vector<16x256xf32>
    %945 = arith.truncf %944 : vector<16x256xf32> to vector<16x256xbf16>
    %cst_457 = arith.constant dense<0.000000e+00> : vector<16x512xf32>
    %946 = tpu.matmul %945, %3, %cst_457 {dimension_numbers = #tpu.dot_dimension_numbers<[1], [0], [0], [1], [0, 0, 1, 1], [], []>} : vector<16x256xbf16>, vector<256x512xbf16>, vector<16x512xf32> -> vector<16x512xf32>
    %947 = arith.addf %943, %946 : vector<16x512xf32>
    %948 = vector.extract_strided_slice %947 {offsets = [0, 0], sizes = [16, 128], strides = [1, 1]} : vector<16x512xf32> to vector<16x128xf32>
    %cst_458 = arith.constant 5.000000e-01 : f32
    %949 = vector.broadcast %cst_458 : f32 to vector<16x128xf32>
    %950 = arith.mulf %949, %948 : vector<16x128xf32>
    %951 = math.tanh %950 : vector<16x128xf32>
    %cst_459 = arith.constant 1.000000e+00 : f32
    %952 = vector.broadcast %cst_459 : f32 to vector<16x128xf32>
    %953 = arith.addf %951, %952 : vector<16x128xf32>
    %cst_460 = arith.constant 5.000000e-01 : f32
    %954 = vector.broadcast %cst_460 : f32 to vector<16x128xf32>
    %955 = arith.mulf %954, %953 : vector<16x128xf32>
    %956 = vector.extract_strided_slice %947 {offsets = [0, 128], sizes = [16, 128], strides = [1, 1]} : vector<16x512xf32> to vector<16x128xf32>
    %cst_461 = arith.constant 5.000000e-01 : f32
    %957 = vector.broadcast %cst_461 : f32 to vector<16x128xf32>
    %958 = arith.mulf %957, %956 : vector<16x128xf32>
    %959 = math.tanh %958 : vector<16x128xf32>
    %cst_462 = arith.constant 1.000000e+00 : f32
    %960 = vector.broadcast %cst_462 : f32 to vector<16x128xf32>
    %961 = arith.addf %959, %960 : vector<16x128xf32>
    %cst_463 = arith.constant 5.000000e-01 : f32
    %962 = vector.broadcast %cst_463 : f32 to vector<16x128xf32>
    %963 = arith.mulf %962, %961 : vector<16x128xf32>
    %964 = vector.extract_strided_slice %947 {offsets = [0, 256], sizes = [16, 128], strides = [1, 1]} : vector<16x512xf32> to vector<16x128xf32>
    %965 = math.tanh %964 : vector<16x128xf32>
    %966 = vector.extract_strided_slice %947 {offsets = [0, 384], sizes = [16, 128], strides = [1, 1]} : vector<16x512xf32> to vector<16x128xf32>
    %cst_464 = arith.constant 5.000000e-01 : f32
    %967 = vector.broadcast %cst_464 : f32 to vector<16x128xf32>
    %968 = arith.mulf %967, %966 : vector<16x128xf32>
    %969 = math.tanh %968 : vector<16x128xf32>
    %cst_465 = arith.constant 1.000000e+00 : f32
    %970 = vector.broadcast %cst_465 : f32 to vector<16x128xf32>
    %971 = arith.addf %969, %970 : vector<16x128xf32>
    %cst_466 = arith.constant 5.000000e-01 : f32
    %972 = vector.broadcast %cst_466 : f32 to vector<16x128xf32>
    %973 = arith.mulf %972, %971 : vector<16x128xf32>
    %c0_467 = arith.constant 0 : index
    %c0_468 = arith.constant 0 : index
    %974 = vector.load %arg7[%c0_467, %c0_468] : memref<16x128xf32, #tpu.memory_space<vmem>>, vector<16x128xf32>
    %975 = arith.mulf %963, %974 : vector<16x128xf32>
    %976 = arith.mulf %955, %965 : vector<16x128xf32>
    %977 = arith.addf %975, %976 : vector<16x128xf32>
    %978 = math.tanh %977 : vector<16x128xf32>
    %979 = arith.mulf %973, %978 : vector<16x128xf32>
    %c0_469 = arith.constant 0 : index
    %c0_470 = arith.constant 0 : index
    %980 = vector.load %arg7[%c0_469, %c0_470] : memref<16x128xf32, #tpu.memory_space<vmem>>, vector<16x128xf32>
    tpu.vector_store %arg7[%c0_469, %c0_470], %977 {strides = array<i32>} : memref<16x128xf32, #tpu.memory_space<vmem>>, vector<16x128xf32>,
    %981 = vector.extract_strided_slice %979 {offsets = [0, 0], sizes = [8, 128], strides = [1, 1]} : vector<16x128xf32> to vector<8x128xf32>
    %982 = arith.index_cast %c15_i32_449 : i32 to index
    %c0_471 = arith.constant 0 : index
    %c0_472 = arith.constant 0 : index
    %983 = vector.load %arg4[%982, %c0_471, %c0_472] : memref<16x8x128xf32, #tpu.memory_space<vmem>>, vector<1x8x128xf32>
    %984 = vector.shape_cast %983 : vector<1x8x128xf32> to vector<8x128xf32>
    %985 = vector.shape_cast %981 : vector<8x128xf32> to vector<1x8x128xf32>
    tpu.vector_store %arg4[%982, %c0_471, %c0_472], %985 {strides = array<i32>} : memref<16x8x128xf32, #tpu.memory_space<vmem>>, vector<1x8x128xf32>,
    %986 = vector.extract_strided_slice %979 {offsets = [8, 0], sizes = [8, 128], strides = [1, 1]} : vector<16x128xf32> to vector<8x128xf32>
    %c15_i32_473 = arith.constant 15 : i32
    %987 = arith.subi %c15_i32_473, %c15_i32_449 : i32
    %988 = arith.index_cast %987 : i32 to index
    %c0_474 = arith.constant 0 : index
    %c0_475 = arith.constant 0 : index
    %989 = vector.load %arg5[%988, %c0_474, %c0_475] : memref<16x8x128xf32, #tpu.memory_space<vmem>>, vector<1x8x128xf32>
    %990 = vector.shape_cast %989 : vector<1x8x128xf32> to vector<8x128xf32>
    %991 = vector.shape_cast %986 : vector<8x128xf32> to vector<1x8x128xf32>
    tpu.vector_store %arg5[%988, %c0_474, %c0_475], %991 {strides = array<i32>} : memref<16x8x128xf32, #tpu.memory_space<vmem>>, vector<1x8x128xf32>,
    %992 = vector.extract_strided_slice %979 {offsets = [0, 0], sizes = [8, 128], strides = [1, 1]} : vector<16x128xf32> to vector<8x128xf32>
    %c0_476 = arith.constant 0 : index
    %c0_477 = arith.constant 0 : index
    %993 = vector.load %arg6[%c0_476, %c0_477] : memref<16x256xf32, #tpu.memory_space<vmem>>, vector<8x128xf32>
    tpu.vector_store %arg6[%c0_476, %c0_477], %992 {strides = array<i32>} : memref<16x256xf32, #tpu.memory_space<vmem>>, vector<8x128xf32>,
    %994 = vector.extract_strided_slice %979 {offsets = [8, 0], sizes = [8, 128], strides = [1, 1]} : vector<16x128xf32> to vector<8x128xf32>
    %c8_478 = arith.constant 8 : index
    %c128_479 = arith.constant 128 : index
    %995 = vector.load %arg6[%c8_478, %c128_479] : memref<16x256xf32, #tpu.memory_space<vmem>>, vector<8x128xf32>
    tpu.vector_store %arg6[%c8_478, %c128_479], %994 {strides = array<i32>} : memref<16x256xf32, #tpu.memory_space<vmem>>, vector<8x128xf32>,
    %c16_i32 = arith.constant 16 : i32
    return
  }
  func.func @transform_0(%arg0: i32) -> (i32, i32, i32) {
    %c0_i32 = arith.constant 0 : i32
    %c0_i32_0 = arith.constant 0 : i32
    %c0_i32_1 = arith.constant 0 : i32
    return %arg0, %c0_i32, %c0_i32_0 : i32, i32, i32
  }
  func.func @transform_1(%arg0: i32) -> (i32, i32, i32) {
    %c0_i32 = arith.constant 0 : i32
    %0 = arith.subi %c0_i32, %arg0 : i32
    %c0_i32_0 = arith.constant 0 : i32
    %c1_i32 = arith.constant 1 : i32
    %c0_i32_1 = arith.constant 0 : i32
    return %0, %c0_i32_0, %c1_i32 : i32, i32, i32
  }
  func.func @transform_2(%arg0: i32) -> (i32, i32) {
    %c0_i32 = arith.constant 0 : i32
    %c0_i32_0 = arith.constant 0 : i32
    %c0_i32_1 = arith.constant 0 : i32
    return %c0_i32, %c0_i32_0 : i32, i32
  }
  func.func @transform_3(%arg0: i32) -> (i32, i32, i32) {
    %c0_i32 = arith.constant 0 : i32
    %c0_i32_0 = arith.constant 0 : i32
    %c0_i32_1 = arith.constant 0 : i32
    return %arg0, %c0_i32, %c0_i32_0 : i32, i32, i32
  }
  func.func @transform_4(%arg0: i32) -> (i32, i32, i32) {
    %c0_i32 = arith.constant 0 : i32
    %0 = arith.subi %c0_i32, %arg0 : i32
    %c0_i32_0 = arith.constant 0 : i32
    %c0_i32_1 = arith.constant 0 : i32
    %c0_i32_2 = arith.constant 0 : i32
    return %0, %c0_i32_0, %c0_i32_1 : i32, i32, i32
  }
}

</mosaic_0001>

<llo_original>
// kernel: forward.3
$region0: #{forward.3}
  #allocation0 [shape = 'u32[]', space=smem, size = 0x4, offset = 0x4, fixed_abs, tag = 'smem constant byte address 0x4 - core index']
  #allocation1 [shape = 'u32[144,128]{1,0:T(1,128)}', space=vmem, size = 0x12000, scoped, tag = 'internal scratch']
  %s0 = inlined_call_operand.vmem [shape: bf16[128,128], index: 0, kind: input, shape index: {}]
  %s1 = inlined_call_operand.vmem [shape: bf16[128,1024], index: 1, kind: input, shape index: {}]
  %s2 = inlined_call_operand.vmem [shape: f32[1,1024], index: 2, kind: input, shape index: {}]
  %s3 = inlined_call_operand.vmem [shape: bf16[128,1024], index: 3, kind: output, shape index: {}]
  %s4 = sld [smem:[#allocation0]]
  $region22: #{forward.3} parent=0
    _
  %s6 = ssub.s32 1, %s4
  %s7 = scalar_select 0, %s6, %s4
  // Predicated region
  $region2: #{forward.3} parent=0 // pred_check
    _
  $region3: #{forward.3} parent=0 // pred_check_branch
    %9 = sbr.rel (0) target = $region5
  $region4: #{forward.3} parent=0 // pred_region
    _
  $region5: #{forward.3} parent=0 // pred_fallthru
    _
  // Predicated region
  $region6: #{forward.3} parent=0 // pred_check
    _
  $region7: #{forward.3} parent=0 // pred_check_branch
    %11 = sbr.rel (0) target = $region9
  $region8: #{forward.3} parent=0 // pred_region
    _
  $region9: #{forward.3} parent=0 // pred_fallthru
    _
  // Predicated region
  $region10: #{forward.3} parent=0 // pred_check
    _
  $region11: #{forward.3} parent=0 // pred_check_branch
    %13 = sbr.rel (0) target = $region13
  $region12: #{forward.3} parent=0 // pred_region
    _
  $region13: #{forward.3} parent=0 // pred_fallthru
    _
  %v15 = vld [vmem:[%s0] sm:$0xf]
  %v16 = vld [vmem:[%s0 + $0x4] sm:$0xf]
  %v17 = vld [vmem:[%s0 + $0x8] sm:$0xf]
  %v18 = vld [vmem:[%s0 + $0xc] sm:$0xf]
  %v19 = vld [vmem:[%s0 + $0x10] sm:$0xf]
  %v20 = vld [vmem:[%s0 + $0x14] sm:$0xf]
  %v21 = vld [vmem:[%s0 + $0x18] sm:$0xf]
  %v22 = vld [vmem:[%s0 + $0x1c] sm:$0xf]
  %v23 = vld [vmem:[%s0 + $0x20] sm:$0xf]
  %v24 = vld [vmem:[%s0 + $0x24] sm:$0xf]
  %v25 = vld [vmem:[%s0 + $0x28] sm:$0xf]
  %v26 = vld [vmem:[%s0 + $0x2c] sm:$0xf]
  %v27 = vld [vmem:[%s0 + $0x30] sm:$0xf]
  %v28 = vld [vmem:[%s0 + $0x34] sm:$0xf]
  %v29 = vld [vmem:[%s0 + $0x38] sm:$0xf]
  %v30 = vld [vmem:[%s0 + $0x3c] sm:$0xf]
  %v31 = vld [vmem:[%s1] sm:$0xff]
  %v32 = vld [vmem:[%s1 + $0x8] sm:$0xff]
  %v33 = vld [vmem:[%s1 + $0x10] sm:$0xff]
  %v34 = vld [vmem:[%s1 + $0x18] sm:$0xff]
  %v35 = vld [vmem:[%s1 + $0x20] sm:$0xff]
  %v36 = vld [vmem:[%s1 + $0x28] sm:$0xff]
  %v37 = vld [vmem:[%s1 + $0x30] sm:$0xff]
  %v38 = vld [vmem:[%s1 + $0x38] sm:$0xff]
  %v39 = vld [vmem:[%s1 + $0x40] sm:$0xff]
  %v40 = vld [vmem:[%s1 + $0x48] sm:$0xff]
  %v41 = vld [vmem:[%s1 + $0x50] sm:$0xff]
  %v42 = vld [vmem:[%s1 + $0x58] sm:$0xff]
  %v43 = vld [vmem:[%s1 + $0x60] sm:$0xff]
  %v44 = vld [vmem:[%s1 + $0x68] sm:$0xff]
  %v45 = vld [vmem:[%s1 + $0x70] sm:$0xff]
  %v46 = vld [vmem:[%s1 + $0x78] sm:$0xff]
  %v47 = vld [vmem:[%s1 + $0x80] sm:$0xff]
  %v48 = vld [vmem:[%s1 + $0x88] sm:$0xff]
  %v49 = vld [vmem:[%s1 + $0x90] sm:$0xff]
  %v50 = vld [vmem:[%s1 + $0x98] sm:$0xff]
  %v51 = vld [vmem:[%s1 + $0xa0] sm:$0xff]
  %v52 = vld [vmem:[%s1 + $0xa8] sm:$0xff]
  %v53 = vld [vmem:[%s1 + $0xb0] sm:$0xff]
  %v54 = vld [vmem:[%s1 + $0xb8] sm:$0xff]
  %v55 = vld [vmem:[%s1 + $0xc0] sm:$0xff]
  %v56 = vld [vmem:[%s1 + $0xc8] sm:$0xff]
  %v57 = vld [vmem:[%s1 + $0xd0] sm:$0xff]
  %v58 = vld [vmem:[%s1 + $0xd8] sm:$0xff]
  %v59 = vld [vmem:[%s1 + $0xe0] sm:$0xff]
  %v60 = vld [vmem:[%s1 + $0xe8] sm:$0xff]
  %v61 = vld [vmem:[%s1 + $0xf0] sm:$0xff]
  %v62 = vld [vmem:[%s1 + $0xf8] sm:$0xff]
  %v63 = vld [vmem:[%s1 + $0x100] sm:$0xff]
  %v64 = vld [vmem:[%s1 + $0x108] sm:$0xff]
  %v65 = vld [vmem:[%s1 + $0x110] sm:$0xff]
  %v66 = vld [vmem:[%s1 + $0x118] sm:$0xff]
  %v67 = vld [vmem:[%s1 + $0x120] sm:$0xff]
  %v68 = vld [vmem:[%s1 + $0x128] sm:$0xff]
  %v69 = vld [vmem:[%s1 + $0x130] sm:$0xff]
  %v70 = vld [vmem:[%s1 + $0x138] sm:$0xff]
  %v71 = vld [vmem:[%s1 + $0x140] sm:$0xff]
  %v72 = vld [vmem:[%s1 + $0x148] sm:$0xff]
  %v73 = vld [vmem:[%s1 + $0x150] sm:$0xff]
  %v74 = vld [vmem:[%s1 + $0x158] sm:$0xff]
  %v75 = vld [vmem:[%s1 + $0x160] sm:$0xff]
  %v76 = vld [vmem:[%s1 + $0x168] sm:$0xff]
  %v77 = vld [vmem:[%s1 + $0x170] sm:$0xff]
  %v78 = vld [vmem:[%s1 + $0x178] sm:$0xff]
  %v79 = vld [vmem:[%s1 + $0x180] sm:$0xff]
  %v80 = vld [vmem:[%s1 + $0x188] sm:$0xff]
  %v81 = vld [vmem:[%s1 + $0x190] sm:$0xff]
  %v82 = vld [vmem:[%s1 + $0x198] sm:$0xff]
  %v83 = vld [vmem:[%s1 + $0x1a0] sm:$0xff]
  %v84 = vld [vmem:[%s1 + $0x1a8] sm:$0xff]
  %v85 = vld [vmem:[%s1 + $0x1b0] sm:$0xff]
  %v86 = vld [vmem:[%s1 + $0x1b8] sm:$0xff]
  %v87 = vld [vmem:[%s1 + $0x1c0] sm:$0xff]
  %v88 = vld [vmem:[%s1 + $0x1c8] sm:$0xff]
  %v89 = vld [vmem:[%s1 + $0x1d0] sm:$0xff]
  %v90 = vld [vmem:[%s1 + $0x1d8] sm:$0xff]
  %v91 = vld [vmem:[%s1 + $0x1e0] sm:$0xff]
  %v92 = vld [vmem:[%s1 + $0x1e8] sm:$0xff]
  %v93 = vld [vmem:[%s1 + $0x1f0] sm:$0xff]
  %v94 = vld [vmem:[%s1 + $0x1f8] sm:$0xff]
  %v95 = vld [vmem:[%s2] sm:$0xff]
  %v97 = vlaneseq
  %v98 = vshrl.u32 %v97, 7
  %v99 = vsub.s32 0, %v98
  %v100 = vrot.slane %v95, %v99
  %v101 = vlaneseq
  %v102 = vshrl.u32 %v101, 7
  %v103 = vsub.s32 1, %v102
  %v104 = vrot.slane %v95, %v103
  %v105 = vlaneseq
  %v106 = vshrl.u32 %v105, 7
  %v107 = vsub.s32 2, %v106
  %v108 = vrot.slane %v95, %v107
  %v109 = vlaneseq
  %v110 = vshrl.u32 %v109, 7
  %v111 = vsub.s32 3, %v110
  %v112 = vrot.slane %v95, %v111
  %v113 = vlaneseq
  %v114 = vshrl.u32 %v113, 7
  %v115 = vsub.s32 4, %v114
  %v116 = vrot.slane %v95, %v115
  %v117 = vlaneseq
  %v118 = vshrl.u32 %v117, 7
  %v119 = vsub.s32 5, %v118
  %v120 = vrot.slane %v95, %v119
  %v121 = vlaneseq
  %v122 = vshrl.u32 %v121, 7
  %v123 = vsub.s32 6, %v122
  %v124 = vrot.slane %v95, %v123
  %v125 = vlaneseq
  %v126 = vshrl.u32 %v125, 7
  %v127 = vsub.s32 7, %v126
  %v128 = vrot.slane %v95, %v127
  %v153 = vunpack.c.l.b16 %v15
  %v154 = vunpack.c.l.b16 %v16
  %v155 = vunpack.c.l.b16 %v17
  %v156 = vunpack.c.l.b16 %v18
  %v157 = vunpack.c.l.b16 %v19
  %v158 = vunpack.c.l.b16 %v20
  %v159 = vunpack.c.l.b16 %v21
  %v160 = vunpack.c.l.b16 %v22
  %v161 = vunpack.c.l.b16 %v23
  %v162 = vunpack.c.l.b16 %v24
  %v163 = vunpack.c.l.b16 %v25
  %v164 = vunpack.c.l.b16 %v26
  %v165 = vunpack.c.l.b16 %v27
  %v166 = vunpack.c.l.b16 %v28
  %v167 = vunpack.c.l.b16 %v29
  %v168 = vunpack.c.l.b16 %v30
  %v169 = vpack.c.b16 %v154, %v153
  %v170 = vpack.c.b16 %v156, %v155
  %v171 = vpack.c.b16 %v158, %v157
  %v172 = vpack.c.b16 %v160, %v159
  %v173 = vpack.c.b16 %v162, %v161
  %v174 = vpack.c.b16 %v164, %v163
  %v175 = vpack.c.b16 %v166, %v165
  %v176 = vpack.c.b16 %v168, %v167
  %v249 = vunpack.c.l.b16 %v31
  %v250 = vunpack.c.h.b16 %v31
  %v251 = vunpack.c.l.b16 %v32
  %v252 = vunpack.c.h.b16 %v32
  %v253 = vunpack.c.l.b16 %v33
  %v254 = vunpack.c.h.b16 %v33
  %v255 = vunpack.c.l.b16 %v34
  %v256 = vunpack.c.h.b16 %v34
  %v257 = vunpack.c.l.b16 %v35
  %v258 = vunpack.c.h.b16 %v35
  %v259 = vunpack.c.l.b16 %v36
  %v260 = vunpack.c.h.b16 %v36
  %v261 = vunpack.c.l.b16 %v37
  %v262 = vunpack.c.h.b16 %v37
  %v263 = vunpack.c.l.b16 %v38
  %v264 = vunpack.c.h.b16 %v38
  %v265 = vunpack.c.l.b16 %v39
  %v266 = vunpack.c.h.b16 %v39
  %v267 = vunpack.c.l.b16 %v40
  %v268 = vunpack.c.h.b16 %v40
  %v269 = vunpack.c.l.b16 %v41
  %v270 = vunpack.c.h.b16 %v41
  %v271 = vunpack.c.l.b16 %v42
  %v272 = vunpack.c.h.b16 %v42
  %v273 = vunpack.c.l.b16 %v43
  %v274 = vunpack.c.h.b16 %v43
  %v275 = vunpack.c.l.b16 %v44
  %v276 = vunpack.c.h.b16 %v44
  %v277 = vunpack.c.l.b16 %v45
  %v278 = vunpack.c.h.b16 %v45
  %v279 = vunpack.c.l.b16 %v46
  %v280 = vunpack.c.h.b16 %v46
  %v281 = vunpack.c.l.b16 %v47
  %v282 = vunpack.c.h.b16 %v47
  %v283 = vunpack.c.l.b16 %v48
  %v284 = vunpack.c.h.b16 %v48
  %v285 = vunpack.c.l.b16 %v49
  %v286 = vunpack.c.h.b16 %v49
  %v287 = vunpack.c.l.b16 %v50
  %v288 = vunpack.c.h.b16 %v50
  %v289 = vunpack.c.l.b16 %v51
  %v290 = vunpack.c.h.b16 %v51
  %v291 = vunpack.c.l.b16 %v52
  %v292 = vunpack.c.h.b16 %v52
  %v293 = vunpack.c.l.b16 %v53
  %v294 = vunpack.c.h.b16 %v53
  %v295 = vunpack.c.l.b16 %v54
  %v296 = vunpack.c.h.b16 %v54
  %v297 = vunpack.c.l.b16 %v55
  %v298 = vunpack.c.h.b16 %v55
  %v299 = vunpack.c.l.b16 %v56
  %v300 = vunpack.c.h.b16 %v56
  %v301 = vunpack.c.l.b16 %v57
  %v302 = vunpack.c.h.b16 %v57
  %v303 = vunpack.c.l.b16 %v58
  %v304 = vunpack.c.h.b16 %v58
  %v305 = vunpack.c.l.b16 %v59
  %v306 = vunpack.c.h.b16 %v59
  %v307 = vunpack.c.l.b16 %v60
  %v308 = vunpack.c.h.b16 %v60
  %v309 = vunpack.c.l.b16 %v61
  %v310 = vunpack.c.h.b16 %v61
  %v311 = vunpack.c.l.b16 %v62
  %v312 = vunpack.c.h.b16 %v62
  %v313 = vunpack.c.l.b16 %v63
  %v314 = vunpack.c.h.b16 %v63
  %v315 = vunpack.c.l.b16 %v64
  %v316 = vunpack.c.h.b16 %v64
  %v317 = vunpack.c.l.b16 %v65
  %v318 = vunpack.c.h.b16 %v65
  %v319 = vunpack.c.l.b16 %v66
  %v320 = vunpack.c.h.b16 %v66
  %v321 = vunpack.c.l.b16 %v67
  %v322 = vunpack.c.h.b16 %v67
  %v323 = vunpack.c.l.b16 %v68
  %v324 = vunpack.c.h.b16 %v68
  %v325 = vunpack.c.l.b16 %v69
  %v326 = vunpack.c.h.b16 %v69
  %v327 = vunpack.c.l.b16 %v70
  %v328 = vunpack.c.h.b16 %v70
  %v329 = vunpack.c.l.b16 %v71
  %v330 = vunpack.c.h.b16 %v71
  %v331 = vunpack.c.l.b16 %v72
  %v332 = vunpack.c.h.b16 %v72
  %v333 = vunpack.c.l.b16 %v73
  %v334 = vunpack.c.h.b16 %v73
  %v335 = vunpack.c.l.b16 %v74
  %v336 = vunpack.c.h.b16 %v74
  %v337 = vunpack.c.l.b16 %v75
  %v338 = vunpack.c.h.b16 %v75
  %v339 = vunpack.c.l.b16 %v76
  %v340 = vunpack.c.h.b16 %v76
  %v341 = vunpack.c.l.b16 %v77
  %v342 = vunpack.c.h.b16 %v77
  %v343 = vunpack.c.l.b16 %v78
  %v344 = vunpack.c.h.b16 %v78
  %v345 = vunpack.c.l.b16 %v79
  %v346 = vunpack.c.h.b16 %v79
  %v347 = vunpack.c.l.b16 %v80
  %v348 = vunpack.c.h.b16 %v80
  %v349 = vunpack.c.l.b16 %v81
  %v350 = vunpack.c.h.b16 %v81
  %v351 = vunpack.c.l.b16 %v82
  %v352 = vunpack.c.h.b16 %v82
  %v353 = vunpack.c.l.b16 %v83
  %v354 = vunpack.c.h.b16 %v83
  %v355 = vunpack.c.l.b16 %v84
  %v356 = vunpack.c.h.b16 %v84
  %v357 = vunpack.c.l.b16 %v85
  %v358 = vunpack.c.h.b16 %v85
  %v359 = vunpack.c.l.b16 %v86
  %v360 = vunpack.c.h.b16 %v86
  %v361 = vunpack.c.l.b16 %v87
  %v362 = vunpack.c.h.b16 %v87
  %v363 = vunpack.c.l.b16 %v88
  %v364 = vunpack.c.h.b16 %v88
  %v365 = vunpack.c.l.b16 %v89
  %v366 = vunpack.c.h.b16 %v89
  %v367 = vunpack.c.l.b16 %v90
  %v368 = vunpack.c.h.b16 %v90
  %v369 = vunpack.c.l.b16 %v91
  %v370 = vunpack.c.h.b16 %v91
  %v371 = vunpack.c.l.b16 %v92
  %v372 = vunpack.c.h.b16 %v92
  %v373 = vunpack.c.l.b16 %v93
  %v374 = vunpack.c.h.b16 %v93
  %v375 = vunpack.c.l.b16 %v94
  %v376 = vunpack.c.h.b16 %v94
  %v377 = vpack.c.b16 %v257, %v249
  %v378 = vpack.c.b16 %v258, %v250
  %v379 = vpack.c.b16 %v259, %v251
  %v380 = vpack.c.b16 %v260, %v252
  %v381 = vpack.c.b16 %v261, %v253
  %v382 = vpack.c.b16 %v262, %v254
  %v383 = vpack.c.b16 %v263, %v255
  %v384 = vpack.c.b16 %v264, %v256
  %v385 = vpack.c.b16 %v273, %v265
  %v386 = vpack.c.b16 %v274, %v266
  %v387 = vpack.c.b16 %v275, %v267
  %v388 = vpack.c.b16 %v276, %v268
  %v389 = vpack.c.b16 %v277, %v269
  %v390 = vpack.c.b16 %v278, %v270
  %v391 = vpack.c.b16 %v279, %v271
  %v392 = vpack.c.b16 %v280, %v272
  %v393 = vpack.c.b16 %v289, %v281
  %v394 = vpack.c.b16 %v290, %v282
  %v395 = vpack.c.b16 %v291, %v283
  %v396 = vpack.c.b16 %v292, %v284
  %v397 = vpack.c.b16 %v293, %v285
  %v398 = vpack.c.b16 %v294, %v286
  %v399 = vpack.c.b16 %v295, %v287
  %v400 = vpack.c.b16 %v296, %v288
  %v401 = vpack.c.b16 %v305, %v297
  %v402 = vpack.c.b16 %v306, %v298
  %v403 = vpack.c.b16 %v307, %v299
  %v404 = vpack.c.b16 %v308, %v300
  %v405 = vpack.c.b16 %v309, %v301
  %v406 = vpack.c.b16 %v310, %v302
  %v407 = vpack.c.b16 %v311, %v303
  %v408 = vpack.c.b16 %v312, %v304
  %v409 = vpack.c.b16 %v321, %v313
  %v410 = vpack.c.b16 %v322, %v314
  %v411 = vpack.c.b16 %v323, %v315
  %v412 = vpack.c.b16 %v324, %v316
  %v413 = vpack.c.b16 %v325, %v317
  %v414 = vpack.c.b16 %v326, %v318
  %v415 = vpack.c.b16 %v327, %v319
  %v416 = vpack.c.b16 %v328, %v320
  %v417 = vpack.c.b16 %v337, %v329
  %v418 = vpack.c.b16 %v338, %v330
  %v419 = vpack.c.b16 %v339, %v331
  %v420 = vpack.c.b16 %v340, %v332
  %v421 = vpack.c.b16 %v341, %v333
  %v422 = vpack.c.b16 %v342, %v334
  %v423 = vpack.c.b16 %v343, %v335
  %v424 = vpack.c.b16 %v344, %v336
  %v425 = vpack.c.b16 %v353, %v345
  %v426 = vpack.c.b16 %v354, %v346
  %v427 = vpack.c.b16 %v355, %v347
  %v428 = vpack.c.b16 %v356, %v348
  %v429 = vpack.c.b16 %v357, %v349
  %v430 = vpack.c.b16 %v358, %v350
  %v431 = vpack.c.b16 %v359, %v351
  %v432 = vpack.c.b16 %v360, %v352
  %v433 = vpack.c.b16 %v369, %v361
  %v434 = vpack.c.b16 %v370, %v362
  %v435 = vpack.c.b16 %v371, %v363
  %v436 = vpack.c.b16 %v372, %v364
  %v437 = vpack.c.b16 %v373, %v365
  %v438 = vpack.c.b16 %v374, %v366
  %v439 = vpack.c.b16 %v375, %v367
  %v440 = vpack.c.b16 %v376, %v368
  %505 = vmatprep.subr.bf16.mxu0 %v434
  %506 = vmatpush1.bf16.msra.mxu0 %v433
  %507 = vmatprep.subr.bf16.mxu0 %v426
  %508 = vmatpush1.bf16.msra.mxu0 %v425
  %509 = vmatprep.subr.bf16.mxu0 %v418
  %510 = vmatpush1.bf16.msra.mxu0 %v417
  %511 = vmatprep.subr.bf16.mxu0 %v410
  %512 = vmatpush1.bf16.msra.mxu0 %v409
  %513 = vmatprep.subr.bf16.mxu0 %v402
  %514 = vmatpush1.bf16.msra.mxu0 %v401
  %515 = vmatprep.subr.bf16.mxu0 %v394
  %516 = vmatpush1.bf16.msra.mxu0 %v393
  %517 = vmatprep.subr.bf16.mxu0 %v386
  %518 = vmatpush1.bf16.msra.mxu0 %v385
  %519 = vmatprep.subr.bf16.mxu0 %v378
  %520 = vmatpush1.bf16.msra.mxu0 %v377
  %521 = vmatprep.subr.bf16.mxu0 0
  %522 = vmatpush2.bf16.msra.mxu0 0
  %523 = vmatprep.subr.bf16.mxu0 0
  %524 = vmatpush2.bf16.msra.mxu0 0
  %525 = vmatprep.subr.bf16.mxu0 0
  %526 = vmatpush2.bf16.msra.mxu0 0
  %527 = vmatprep.subr.bf16.mxu0 0
  %528 = vmatpush2.bf16.msra.mxu0 0
  %529 = vmatprep.subr.bf16.mxu0 0
  %530 = vmatpush2.bf16.msra.mxu0 0
  %531 = vmatprep.subr.bf16.mxu0 0
  %532 = vmatpush2.bf16.msra.mxu0 0
  %533 = vmatprep.subr.bf16.mxu0 0
  %534 = vmatpush2.bf16.msra.mxu0 0
  %535 = vmatprep.subr.bf16.mxu0 0
  %536 = vmatpush2.bf16.msra.mxu0 0
  %537 = vmatprep.mubr.bf16.mxu0 0
  %538 = vmatmul.mubr.bf16.gmra.mxu0 %v169
  %v539 = vpop.f32.mrf.mxu0
  %v540 = vadd.f32 %v100, %v539
  %v541 = vpop.f32.mrf.mxu0
  %v542 = vadd.f32 %v104, %v541
  %v543 = vpop.f32.mrf.mxu0
  %v544 = vadd.f32 %v100, %v543
  %v545 = vpop.f32.mrf.mxu0
  %v546 = vadd.f32 %v104, %v545
  %547 = vmatprep.mubr.bf16.mxu0 0
  %548 = vmatmul.mubr.bf16.gmra.mxu0 %v170
  %v549 = vpop.f32.mrf.mxu0
  %v550 = vadd.f32 %v100, %v549
  %v551 = vpop.f32.mrf.mxu0
  %v552 = vadd.f32 %v104, %v551
  %v553 = vpop.f32.mrf.mxu0
  %v554 = vadd.f32 %v100, %v553
  %v555 = vpop.f32.mrf.mxu0
  %v556 = vadd.f32 %v104, %v555
  %557 = vmatprep.mubr.bf16.mxu0 0
  %558 = vmatmul.mubr.bf16.gmra.mxu0 %v171
  %v559 = vpop.f32.mrf.mxu0
  %v560 = vadd.f32 %v100, %v559
  %v561 = vpop.f32.mrf.mxu0
  %v562 = vadd.f32 %v104, %v561
  %v563 = vpop.f32.mrf.mxu0
  %v564 = vadd.f32 %v100, %v563
  %v565 = vpop.f32.mrf.mxu0
  %v566 = vadd.f32 %v104, %v565
  %567 = vmatprep.mubr.bf16.mxu0 0
  %568 = vmatmul.mubr.bf16.gmra.mxu0 %v172
  %v569 = vpop.f32.mrf.mxu0
  %v570 = vadd.f32 %v100, %v569
  %v571 = vpop.f32.mrf.mxu0
  %v572 = vadd.f32 %v104, %v571
  %v573 = vpop.f32.mrf.mxu0
  %v574 = vadd.f32 %v100, %v573
  %v575 = vpop.f32.mrf.mxu0
  %v576 = vadd.f32 %v104, %v575
  %577 = vmatprep.mubr.bf16.mxu0 0
  %578 = vmatmul.mubr.bf16.gmra.mxu0 %v173
  %v579 = vpop.f32.mrf.mxu0
  %v580 = vadd.f32 %v100, %v579
  %v581 = vpop.f32.mrf.mxu0
  %v582 = vadd.f32 %v104, %v581
  %v583 = vpop.f32.mrf.mxu0
  %v584 = vadd.f32 %v100, %v583
  %v585 = vpop.f32.mrf.mxu0
  %v586 = vadd.f32 %v104, %v585
  %587 = vmatprep.mubr.bf16.mxu0 0
  %588 = vmatmul.mubr.bf16.gmra.mxu0 %v174
  %v589 = vpop.f32.mrf.mxu0
  %v590 = vadd.f32 %v100, %v589
  %v591 = vpop.f32.mrf.mxu0
  %v592 = vadd.f32 %v104, %v591
  %v593 = vpop.f32.mrf.mxu0
  %v594 = vadd.f32 %v100, %v593
  %v595 = vpop.f32.mrf.mxu0
  %v596 = vadd.f32 %v104, %v595
  %597 = vmatprep.mubr.bf16.mxu0 0
  %598 = vmatmul.mubr.bf16.gmra.mxu0 %v175
  %v599 = vpop.f32.mrf.mxu0
  %v600 = vadd.f32 %v100, %v599
  %v601 = vpop.f32.mrf.mxu0
  %v602 = vadd.f32 %v104, %v601
  %v603 = vpop.f32.mrf.mxu0
  %v604 = vadd.f32 %v100, %v603
  %v605 = vpop.f32.mrf.mxu0
  %v606 = vadd.f32 %v104, %v605
  %607 = vmatprep.mubr.bf16.mxu0 0
  %608 = vmatmul.mubr.bf16.gmra.mxu0 %v176
  %v609 = vpop.f32.mrf.mxu0
  %v610 = vadd.f32 %v100, %v609
  %v611 = vpop.f32.mrf.mxu0
  %v612 = vadd.f32 %v104, %v611
  %v613 = vpop.f32.mrf.mxu0
  %v614 = vadd.f32 %v100, %v613
  %v615 = vpop.f32.mrf.mxu0
  %v616 = vadd.f32 %v104, %v615
  %617 = vdwg.mxu0
  %618 = vmatprep.subr.bf16.mxu0 %v436
  %619 = vmatpush1.bf16.msra.mxu0 %v435
  %620 = vmatprep.subr.bf16.mxu0 %v428
  %621 = vmatpush1.bf16.msra.mxu0 %v427
  %622 = vmatprep.subr.bf16.mxu0 %v420
  %623 = vmatpush1.bf16.msra.mxu0 %v419
  %624 = vmatprep.subr.bf16.mxu0 %v412
  %625 = vmatpush1.bf16.msra.mxu0 %v411
  %626 = vmatprep.subr.bf16.mxu0 %v404
  %627 = vmatpush1.bf16.msra.mxu0 %v403
  %628 = vmatprep.subr.bf16.mxu0 %v396
  %629 = vmatpush1.bf16.msra.mxu0 %v395
  %630 = vmatprep.subr.bf16.mxu0 %v388
  %631 = vmatpush1.bf16.msra.mxu0 %v387
  %632 = vmatprep.subr.bf16.mxu0 %v380
  %633 = vmatpush1.bf16.msra.mxu0 %v379
  %634 = vmatprep.subr.bf16.mxu0 0
  %635 = vmatpush2.bf16.msra.mxu0 0
  %636 = vmatprep.subr.bf16.mxu0 0
  %637 = vmatpush2.bf16.msra.mxu0 0
  %638 = vmatprep.subr.bf16.mxu0 0
  %639 = vmatpush2.bf16.msra.mxu0 0
  %640 = vmatprep.subr.bf16.mxu0 0
  %641 = vmatpush2.bf16.msra.mxu0 0
  %642 = vmatprep.subr.bf16.mxu0 0
  %643 = vmatpush2.bf16.msra.mxu0 0
  %644 = vmatprep.subr.bf16.mxu0 0
  %645 = vmatpush2.bf16.msra.mxu0 0
  %646 = vmatprep.subr.bf16.mxu0 0
  %647 = vmatpush2.bf16.msra.mxu0 0
  %648 = vmatprep.subr.bf16.mxu0 0
  %649 = vmatpush2.bf16.msra.mxu0 0
  %650 = vmatprep.mubr.bf16.mxu0 0
  %651 = vmatmul.mubr.bf16.gmra.mxu0 %v169
  %v652 = vpop.f32.mrf.mxu0
  %v653 = vadd.f32 %v108, %v652
  %v654 = vpop.f32.mrf.mxu0
  %v655 = vadd.f32 %v112, %v654
  %v656 = vpop.f32.mrf.mxu0
  %v657 = vadd.f32 %v108, %v656
  %v658 = vpop.f32.mrf.mxu0
  %v659 = vadd.f32 %v112, %v658
  %660 = vmatprep.mubr.bf16.mxu0 0
  %661 = vmatmul.mubr.bf16.gmra.mxu0 %v170
  %v662 = vpop.f32.mrf.mxu0
  %v663 = vadd.f32 %v108, %v662
  %v664 = vpop.f32.mrf.mxu0
  %v665 = vadd.f32 %v112, %v664
  %v666 = vpop.f32.mrf.mxu0
  %v667 = vadd.f32 %v108, %v666
  %v668 = vpop.f32.mrf.mxu0
  %v669 = vadd.f32 %v112, %v668
  %670 = vmatprep.mubr.bf16.mxu0 0
  %671 = vmatmul.mubr.bf16.gmra.mxu0 %v171
  %v672 = vpop.f32.mrf.mxu0
  %v673 = vadd.f32 %v108, %v672
  %v674 = vpop.f32.mrf.mxu0
  %v675 = vadd.f32 %v112, %v674
  %v676 = vpop.f32.mrf.mxu0
  %v677 = vadd.f32 %v108, %v676
  %v678 = vpop.f32.mrf.mxu0
  %v679 = vadd.f32 %v112, %v678
  %680 = vmatprep.mubr.bf16.mxu0 0
  %681 = vmatmul.mubr.bf16.gmra.mxu0 %v172
  %v682 = vpop.f32.mrf.mxu0
  %v683 = vadd.f32 %v108, %v682
  %v684 = vpop.f32.mrf.mxu0
  %v685 = vadd.f32 %v112, %v684
  %v686 = vpop.f32.mrf.mxu0
  %v687 = vadd.f32 %v108, %v686
  %v688 = vpop.f32.mrf.mxu0
  %v689 = vadd.f32 %v112, %v688
  %690 = vmatprep.mubr.bf16.mxu0 0
  %691 = vmatmul.mubr.bf16.gmra.mxu0 %v173
  %v692 = vpop.f32.mrf.mxu0
  %v693 = vadd.f32 %v108, %v692
  %v694 = vpop.f32.mrf.mxu0
  %v695 = vadd.f32 %v112, %v694
  %v696 = vpop.f32.mrf.mxu0
  %v697 = vadd.f32 %v108, %v696
  %v698 = vpop.f32.mrf.mxu0
  %v699 = vadd.f32 %v112, %v698
  %700 = vmatprep.mubr.bf16.mxu0 0
  %701 = vmatmul.mubr.bf16.gmra.mxu0 %v174
  %v702 = vpop.f32.mrf.mxu0
  %v703 = vadd.f32 %v108, %v702
  %v704 = vpop.f32.mrf.mxu0
  %v705 = vadd.f32 %v112, %v704
  %v706 = vpop.f32.mrf.mxu0
  %v707 = vadd.f32 %v108, %v706
  %v708 = vpop.f32.mrf.mxu0
  %v709 = vadd.f32 %v112, %v708
  %710 = vmatprep.mubr.bf16.mxu0 0
  %711 = vmatmul.mubr.bf16.gmra.mxu0 %v175
  %v712 = vpop.f32.mrf.mxu0
  %v713 = vadd.f32 %v108, %v712
  %v714 = vpop.f32.mrf.mxu0
  %v715 = vadd.f32 %v112, %v714
  %v716 = vpop.f32.mrf.mxu0
  %v717 = vadd.f32 %v108, %v716
  %v718 = vpop.f32.mrf.mxu0
  %v719 = vadd.f32 %v112, %v718
  %720 = vmatprep.mubr.bf16.mxu0 0
  %721 = vmatmul.mubr.bf16.gmra.mxu0 %v176
  %v722 = vpop.f32.mrf.mxu0
  %v723 = vadd.f32 %v108, %v722
  %v724 = vpop.f32.mrf.mxu0
  %v725 = vadd.f32 %v112, %v724
  %v726 = vpop.f32.mrf.mxu0
  %v727 = vadd.f32 %v108, %v726
  %v728 = vpop.f32.mrf.mxu0
  %v729 = vadd.f32 %v112, %v728
  %730 = vdwg.mxu0
  %731 = vmatprep.subr.bf16.mxu0 %v438
  %732 = vmatpush1.bf16.msra.mxu0 %v437
  %733 = vmatprep.subr.bf16.mxu0 %v430
  %734 = vmatpush1.bf16.msra.mxu0 %v429
  %735 = vmatprep.subr.bf16.mxu0 %v422
  %736 = vmatpush1.bf16.msra.mxu0 %v421
  %737 = vmatprep.subr.bf16.mxu0 %v414
  %738 = vmatpush1.bf16.msra.mxu0 %v413
  %739 = vmatprep.subr.bf16.mxu0 %v406
  %740 = vmatpush1.bf16.msra.mxu0 %v405
  %741 = vmatprep.subr.bf16.mxu0 %v398
  %742 = vmatpush1.bf16.msra.mxu0 %v397
  %743 = vmatprep.subr.bf16.mxu0 %v390
  %744 = vmatpush1.bf16.msra.mxu0 %v389
  %745 = vmatprep.subr.bf16.mxu0 %v382
  %746 = vmatpush1.bf16.msra.mxu0 %v381
  %747 = vmatprep.subr.bf16.mxu0 0
  %748 = vmatpush2.bf16.msra.mxu0 0
  %749 = vmatprep.subr.bf16.mxu0 0
  %750 = vmatpush2.bf16.msra.mxu0 0
  %751 = vmatprep.subr.bf16.mxu0 0
  %752 = vmatpush2.bf16.msra.mxu0 0
  %753 = vmatprep.subr.bf16.mxu0 0
  %754 = vmatpush2.bf16.msra.mxu0 0
  %755 = vmatprep.subr.bf16.mxu0 0
  %756 = vmatpush2.bf16.msra.mxu0 0
  %757 = vmatprep.subr.bf16.mxu0 0
  %758 = vmatpush2.bf16.msra.mxu0 0
  %759 = vmatprep.subr.bf16.mxu0 0
  %760 = vmatpush2.bf16.msra.mxu0 0
  %761 = vmatprep.subr.bf16.mxu0 0
  %762 = vmatpush2.bf16.msra.mxu0 0
  %763 = vmatprep.mubr.bf16.mxu0 0
  %764 = vmatmul.mubr.bf16.gmra.mxu0 %v169
  %v765 = vpop.f32.mrf.mxu0
  %v766 = vadd.f32 %v116, %v765
  %v767 = vpop.f32.mrf.mxu0
  %v768 = vadd.f32 %v120, %v767
  %v769 = vpop.f32.mrf.mxu0
  %v770 = vadd.f32 %v116, %v769
  %v771 = vpop.f32.mrf.mxu0
  %v772 = vadd.f32 %v120, %v771
  %773 = vmatprep.mubr.bf16.mxu0 0
  %774 = vmatmul.mubr.bf16.gmra.mxu0 %v170
  %v775 = vpop.f32.mrf.mxu0
  %v776 = vadd.f32 %v116, %v775
  %v777 = vpop.f32.mrf.mxu0
  %v778 = vadd.f32 %v120, %v777
  %v779 = vpop.f32.mrf.mxu0
  %v780 = vadd.f32 %v116, %v779
  %v781 = vpop.f32.mrf.mxu0
  %v782 = vadd.f32 %v120, %v781
  %783 = vmatprep.mubr.bf16.mxu0 0
  %784 = vmatmul.mubr.bf16.gmra.mxu0 %v171
  %v785 = vpop.f32.mrf.mxu0
  %v786 = vadd.f32 %v116, %v785
  %v787 = vpop.f32.mrf.mxu0
  %v788 = vadd.f32 %v120, %v787
  %v789 = vpop.f32.mrf.mxu0
  %v790 = vadd.f32 %v116, %v789
  %v791 = vpop.f32.mrf.mxu0
  %v792 = vadd.f32 %v120, %v791
  %793 = vmatprep.mubr.bf16.mxu0 0
  %794 = vmatmul.mubr.bf16.gmra.mxu0 %v172
  %v795 = vpop.f32.mrf.mxu0
  %v796 = vadd.f32 %v116, %v795
  %v797 = vpop.f32.mrf.mxu0
  %v798 = vadd.f32 %v120, %v797
  %v799 = vpop.f32.mrf.mxu0
  %v800 = vadd.f32 %v116, %v799
  %v801 = vpop.f32.mrf.mxu0
  %v802 = vadd.f32 %v120, %v801
  %803 = vmatprep.mubr.bf16.mxu0 0
  %804 = vmatmul.mubr.bf16.gmra.mxu0 %v173
  %v805 = vpop.f32.mrf.mxu0
  %v806 = vadd.f32 %v116, %v805
  %v807 = vpop.f32.mrf.mxu0
  %v808 = vadd.f32 %v120, %v807
  %v809 = vpop.f32.mrf.mxu0
  %v810 = vadd.f32 %v116, %v809
  %v811 = vpop.f32.mrf.mxu0
  %v812 = vadd.f32 %v120, %v811
  %813 = vmatprep.mubr.bf16.mxu0 0
  %814 = vmatmul.mubr.bf16.gmra.mxu0 %v174
  %v815 = vpop.f32.mrf.mxu0
  %v816 = vadd.f32 %v116, %v815
  %v817 = vpop.f32.mrf.mxu0
  %v818 = vadd.f32 %v120, %v817
  %v819 = vpop.f32.mrf.mxu0
  %v820 = vadd.f32 %v116, %v819
  %v821 = vpop.f32.mrf.mxu0
  %v822 = vadd.f32 %v120, %v821
  %823 = vmatprep.mubr.bf16.mxu0 0
  %824 = vmatmul.mubr.bf16.gmra.mxu0 %v175
  %v825 = vpop.f32.mrf.mxu0
  %v826 = vadd.f32 %v116, %v825
  %v827 = vpop.f32.mrf.mxu0
  %v828 = vadd.f32 %v120, %v827
  %v829 = vpop.f32.mrf.mxu0
  %v830 = vadd.f32 %v116, %v829
  %v831 = vpop.f32.mrf.mxu0
  %v832 = vadd.f32 %v120, %v831
  %833 = vmatprep.mubr.bf16.mxu0 0
  %834 = vmatmul.mubr.bf16.gmra.mxu0 %v176
  %v835 = vpop.f32.mrf.mxu0
  %v836 = vadd.f32 %v116, %v835
  %v837 = vpop.f32.mrf.mxu0
  %v838 = vadd.f32 %v120, %v837
  %v839 = vpop.f32.mrf.mxu0
  %v840 = vadd.f32 %v116, %v839
  %v841 = vpop.f32.mrf.mxu0
  %v842 = vadd.f32 %v120, %v841
  %843 = vdwg.mxu0
  %844 = vmatprep.subr.bf16.mxu0 %v440
  %845 = vmatpush1.bf16.msra.mxu0 %v439
  %846 = vmatprep.subr.bf16.mxu0 %v432
  %847 = vmatpush1.bf16.msra.mxu0 %v431
  %848 = vmatprep.subr.bf16.mxu0 %v424
  %849 = vmatpush1.bf16.msra.mxu0 %v423
  %850 = vmatprep.subr.bf16.mxu0 %v416
  %851 = vmatpush1.bf16.msra.mxu0 %v415
  %852 = vmatprep.subr.bf16.mxu0 %v408
  %853 = vmatpush1.bf16.msra.mxu0 %v407
  %854 = vmatprep.subr.bf16.mxu0 %v400
  %855 = vmatpush1.bf16.msra.mxu0 %v399
  %856 = vmatprep.subr.bf16.mxu0 %v392
  %857 = vmatpush1.bf16.msra.mxu0 %v391
  %858 = vmatprep.subr.bf16.mxu0 %v384
  %859 = vmatpush1.bf16.msra.mxu0 %v383
  %860 = vmatprep.subr.bf16.mxu0 0
  %861 = vmatpush2.bf16.msra.mxu0 0
  %862 = vmatprep.subr.bf16.mxu0 0
  %863 = vmatpush2.bf16.msra.mxu0 0
  %864 = vmatprep.subr.bf16.mxu0 0
  %865 = vmatpush2.bf16.msra.mxu0 0
  %866 = vmatprep.subr.bf16.mxu0 0
  %867 = vmatpush2.bf16.msra.mxu0 0
  %868 = vmatprep.subr.bf16.mxu0 0
  %869 = vmatpush2.bf16.msra.mxu0 0
  %870 = vmatprep.subr.bf16.mxu0 0
  %871 = vmatpush2.bf16.msra.mxu0 0
  %872 = vmatprep.subr.bf16.mxu0 0
  %873 = vmatpush2.bf16.msra.mxu0 0
  %874 = vmatprep.subr.bf16.mxu0 0
  %875 = vmatpush2.bf16.msra.mxu0 0
  %876 = vmatprep.mubr.bf16.mxu0 0
  %877 = vmatmul.mubr.bf16.gmra.mxu0 %v169
  %v878 = vpop.f32.mrf.mxu0
  %v879 = vadd.f32 %v124, %v878
  %v880 = vpop.f32.mrf.mxu0
  %v881 = vadd.f32 %v128, %v880
  %v882 = vpop.f32.mrf.mxu0
  %v883 = vadd.f32 %v124, %v882
  %v884 = vpop.f32.mrf.mxu0
  %v885 = vadd.f32 %v128, %v884
  %886 = vmatprep.mubr.bf16.mxu0 0
  %887 = vmatmul.mubr.bf16.gmra.mxu0 %v170
  %v888 = vpop.f32.mrf.mxu0
  %v889 = vadd.f32 %v124, %v888
  %v890 = vpop.f32.mrf.mxu0
  %v891 = vadd.f32 %v128, %v890
  %v892 = vpop.f32.mrf.mxu0
  %v893 = vadd.f32 %v124, %v892
  %v894 = vpop.f32.mrf.mxu0
  %v895 = vadd.f32 %v128, %v894
  %896 = vmatprep.mubr.bf16.mxu0 0
  %897 = vmatmul.mubr.bf16.gmra.mxu0 %v171
  %v898 = vpop.f32.mrf.mxu0
  %v899 = vadd.f32 %v124, %v898
  %v900 = vpop.f32.mrf.mxu0
  %v901 = vadd.f32 %v128, %v900
  %v902 = vpop.f32.mrf.mxu0
  %v903 = vadd.f32 %v124, %v902
  %v904 = vpop.f32.mrf.mxu0
  %v905 = vadd.f32 %v128, %v904
  %906 = vmatprep.mubr.bf16.mxu0 0
  %907 = vmatmul.mubr.bf16.gmra.mxu0 %v172
  %v908 = vpop.f32.mrf.mxu0
  %v909 = vadd.f32 %v124, %v908
  %v910 = vpop.f32.mrf.mxu0
  %v911 = vadd.f32 %v128, %v910
  %v912 = vpop.f32.mrf.mxu0
  %v913 = vadd.f32 %v124, %v912
  %v914 = vpop.f32.mrf.mxu0
  %v915 = vadd.f32 %v128, %v914
  %916 = vmatprep.mubr.bf16.mxu0 0
  %917 = vmatmul.mubr.bf16.gmra.mxu0 %v173
  %v918 = vpop.f32.mrf.mxu0
  %v919 = vadd.f32 %v124, %v918
  %v920 = vpop.f32.mrf.mxu0
  %v921 = vadd.f32 %v128, %v920
  %v922 = vpop.f32.mrf.mxu0
  %v923 = vadd.f32 %v124, %v922
  %v924 = vpop.f32.mrf.mxu0
  %v925 = vadd.f32 %v128, %v924
  %926 = vmatprep.mubr.bf16.mxu0 0
  %927 = vmatmul.mubr.bf16.gmra.mxu0 %v174
  %v928 = vpop.f32.mrf.mxu0
  %v929 = vadd.f32 %v124, %v928
  %v930 = vpop.f32.mrf.mxu0
  %v931 = vadd.f32 %v128, %v930
  %v932 = vpop.f32.mrf.mxu0
  %v933 = vadd.f32 %v124, %v932
  %v934 = vpop.f32.mrf.mxu0
  %v935 = vadd.f32 %v128, %v934
  %936 = vmatprep.mubr.bf16.mxu0 0
  %937 = vmatmul.mubr.bf16.gmra.mxu0 %v175
  %v938 = vpop.f32.mrf.mxu0
  %v939 = vadd.f32 %v124, %v938
  %v940 = vpop.f32.mrf.mxu0
  %v941 = vadd.f32 %v128, %v940
  %v942 = vpop.f32.mrf.mxu0
  %v943 = vadd.f32 %v124, %v942
  %v944 = vpop.f32.mrf.mxu0
  %v945 = vadd.f32 %v128, %v944
  %946 = vmatprep.mubr.bf16.mxu0 0
  %947 = vmatmul.mubr.bf16.gmra.mxu0 %v176
  %v948 = vpop.f32.mrf.mxu0
  %v949 = vadd.f32 %v124, %v948
  %v950 = vpop.f32.mrf.mxu0
  %v951 = vadd.f32 %v128, %v950
  %v952 = vpop.f32.mrf.mxu0
  %v953 = vadd.f32 %v124, %v952
  %v954 = vpop.f32.mrf.mxu0
  %v955 = vadd.f32 %v128, %v954
  %956 = vdwg.mxu0
  %v957 = vpack.c.bf16 %v544, %v540
  %v958 = vpack.c.bf16 %v546, %v542
  %v959 = vpack.c.bf16 %v657, %v653
  %v960 = vpack.c.bf16 %v659, %v655
  %v961 = vpack.c.bf16 %v770, %v766
  %v962 = vpack.c.bf16 %v772, %v768
  %v963 = vpack.c.bf16 %v883, %v879
  %v964 = vpack.c.bf16 %v885, %v881
  %v965 = vpack.c.bf16 %v554, %v550
  %v966 = vpack.c.bf16 %v556, %v552
  %v967 = vpack.c.bf16 %v667, %v663
  %v968 = vpack.c.bf16 %v669, %v665
  %v969 = vpack.c.bf16 %v780, %v776
  %v970 = vpack.c.bf16 %v782, %v778
  %v971 = vpack.c.bf16 %v893, %v889
  %v972 = vpack.c.bf16 %v895, %v891
  %v973 = vpack.c.bf16 %v564, %v560
  %v974 = vpack.c.bf16 %v566, %v562
  %v975 = vpack.c.bf16 %v677, %v673
  %v976 = vpack.c.bf16 %v679, %v675
  %v977 = vpack.c.bf16 %v790, %v786
  %v978 = vpack.c.bf16 %v792, %v788
  %v979 = vpack.c.bf16 %v903, %v899
  %v980 = vpack.c.bf16 %v905, %v901
  %v981 = vpack.c.bf16 %v574, %v570
  %v982 = vpack.c.bf16 %v576, %v572
  %v983 = vpack.c.bf16 %v687, %v683
  %v984 = vpack.c.bf16 %v689, %v685
  %v985 = vpack.c.bf16 %v800, %v796
  %v986 = vpack.c.bf16 %v802, %v798
  %v987 = vpack.c.bf16 %v913, %v909
  %v988 = vpack.c.bf16 %v915, %v911
  %v989 = vpack.c.bf16 %v584, %v580
  %v990 = vpack.c.bf16 %v586, %v582
  %v991 = vpack.c.bf16 %v697, %v693
  %v992 = vpack.c.bf16 %v699, %v695
  %v993 = vpack.c.bf16 %v810, %v806
  %v994 = vpack.c.bf16 %v812, %v808
  %v995 = vpack.c.bf16 %v923, %v919
  %v996 = vpack.c.bf16 %v925, %v921
  %v997 = vpack.c.bf16 %v594, %v590
  %v998 = vpack.c.bf16 %v596, %v592
  %v999 = vpack.c.bf16 %v707, %v703
  %v1000 = vpack.c.bf16 %v709, %v705
  %v1001 = vpack.c.bf16 %v820, %v816
  %v1002 = vpack.c.bf16 %v822, %v818
  %v1003 = vpack.c.bf16 %v933, %v929
  %v1004 = vpack.c.bf16 %v935, %v931
  %v1005 = vpack.c.bf16 %v604, %v600
  %v1006 = vpack.c.bf16 %v606, %v602
  %v1007 = vpack.c.bf16 %v717, %v713
  %v1008 = vpack.c.bf16 %v719, %v715
  %v1009 = vpack.c.bf16 %v830, %v826
  %v1010 = vpack.c.bf16 %v832, %v828
  %v1011 = vpack.c.bf16 %v943, %v939
  %v1012 = vpack.c.bf16 %v945, %v941
  %v1013 = vpack.c.bf16 %v614, %v610
  %v1014 = vpack.c.bf16 %v616, %v612
  %v1015 = vpack.c.bf16 %v727, %v723
  %v1016 = vpack.c.bf16 %v729, %v725
  %v1017 = vpack.c.bf16 %v840, %v836
  %v1018 = vpack.c.bf16 %v842, %v838
  %v1019 = vpack.c.bf16 %v953, %v949
  %v1020 = vpack.c.bf16 %v955, %v951
  %v1085 = vunpack.c.l.b16 %v957
  %v1086 = vunpack.c.l.b16 %v958
  %v1087 = vunpack.c.l.b16 %v959
  %v1088 = vunpack.c.l.b16 %v960
  %v1089 = vunpack.c.l.b16 %v961
  %v1090 = vunpack.c.l.b16 %v962
  %v1091 = vunpack.c.l.b16 %v963
  %v1092 = vunpack.c.l.b16 %v964
  %v1093 = vunpack.c.h.b16 %v957
  %v1094 = vunpack.c.h.b16 %v958
  %v1095 = vunpack.c.h.b16 %v959
  %v1096 = vunpack.c.h.b16 %v960
  %v1097 = vunpack.c.h.b16 %v961
  %v1098 = vunpack.c.h.b16 %v962
  %v1099 = vunpack.c.h.b16 %v963
  %v1100 = vunpack.c.h.b16 %v964
  %v1101 = vunpack.c.l.b16 %v965
  %v1102 = vunpack.c.l.b16 %v966
  %v1103 = vunpack.c.l.b16 %v967
  %v1104 = vunpack.c.l.b16 %v968
  %v1105 = vunpack.c.l.b16 %v969
  %v1106 = vunpack.c.l.b16 %v970
  %v1107 = vunpack.c.l.b16 %v971
  %v1108 = vunpack.c.l.b16 %v972
  %v1109 = vunpack.c.h.b16 %v965
  %v1110 = vunpack.c.h.b16 %v966
  %v1111 = vunpack.c.h.b16 %v967
  %v1112 = vunpack.c.h.b16 %v968
  %v1113 = vunpack.c.h.b16 %v969
  %v1114 = vunpack.c.h.b16 %v970
  %v1115 = vunpack.c.h.b16 %v971
  %v1116 = vunpack.c.h.b16 %v972
  %v1117 = vunpack.c.l.b16 %v973
  %v1118 = vunpack.c.l.b16 %v974
  %v1119 = vunpack.c.l.b16 %v975
  %v1120 = vunpack.c.l.b16 %v976
  %v1121 = vunpack.c.l.b16 %v977
  %v1122 = vunpack.c.l.b16 %v978
  %v1123 = vunpack.c.l.b16 %v979
  %v1124 = vunpack.c.l.b16 %v980
  %v1125 = vunpack.c.h.b16 %v973
  %v1126 = vunpack.c.h.b16 %v974
  %v1127 = vunpack.c.h.b16 %v975
  %v1128 = vunpack.c.h.b16 %v976
  %v1129 = vunpack.c.h.b16 %v977
  %v1130 = vunpack.c.h.b16 %v978
  %v1131 = vunpack.c.h.b16 %v979
  %v1132 = vunpack.c.h.b16 %v980
  %v1133 = vunpack.c.l.b16 %v981
  %v1134 = vunpack.c.l.b16 %v982
  %v1135 = vunpack.c.l.b16 %v983
  %v1136 = vunpack.c.l.b16 %v984
  %v1137 = vunpack.c.l.b16 %v985
  %v1138 = vunpack.c.l.b16 %v986
  %v1139 = vunpack.c.l.b16 %v987
  %v1140 = vunpack.c.l.b16 %v988
  %v1141 = vunpack.c.h.b16 %v981
  %v1142 = vunpack.c.h.b16 %v982
  %v1143 = vunpack.c.h.b16 %v983
  %v1144 = vunpack.c.h.b16 %v984
  %v1145 = vunpack.c.h.b16 %v985
  %v1146 = vunpack.c.h.b16 %v986
  %v1147 = vunpack.c.h.b16 %v987
  %v1148 = vunpack.c.h.b16 %v988
  %v1149 = vunpack.c.l.b16 %v989
  %v1150 = vunpack.c.l.b16 %v990
  %v1151 = vunpack.c.l.b16 %v991
  %v1152 = vunpack.c.l.b16 %v992
  %v1153 = vunpack.c.l.b16 %v993
  %v1154 = vunpack.c.l.b16 %v994
  %v1155 = vunpack.c.l.b16 %v995
  %v1156 = vunpack.c.l.b16 %v996
  %v1157 = vunpack.c.h.b16 %v989
  %v1158 = vunpack.c.h.b16 %v990
  %v1159 = vunpack.c.h.b16 %v991
  %v1160 = vunpack.c.h.b16 %v992
  %v1161 = vunpack.c.h.b16 %v993
  %v1162 = vunpack.c.h.b16 %v994
  %v1163 = vunpack.c.h.b16 %v995
  %v1164 = vunpack.c.h.b16 %v996
  %v1165 = vunpack.c.l.b16 %v997
  %v1166 = vunpack.c.l.b16 %v998
  %v1167 = vunpack.c.l.b16 %v999
  %v1168 = vunpack.c.l.b16 %v1000
  %v1169 = vunpack.c.l.b16 %v1001
  %v1170 = vunpack.c.l.b16 %v1002
  %v1171 = vunpack.c.l.b16 %v1003
  %v1172 = vunpack.c.l.b16 %v1004
  %v1173 = vunpack.c.h.b16 %v997
  %v1174 = vunpack.c.h.b16 %v998
  %v1175 = vunpack.c.h.b16 %v999
  %v1176 = vunpack.c.h.b16 %v1000
  %v1177 = vunpack.c.h.b16 %v1001
  %v1178 = vunpack.c.h.b16 %v1002
  %v1179 = vunpack.c.h.b16 %v1003
  %v1180 = vunpack.c.h.b16 %v1004
  %v1181 = vunpack.c.l.b16 %v1005
  %v1182 = vunpack.c.l.b16 %v1006
  %v1183 = vunpack.c.l.b16 %v1007
  %v1184 = vunpack.c.l.b16 %v1008
  %v1185 = vunpack.c.l.b16 %v1009
  %v1186 = vunpack.c.l.b16 %v1010
  %v1187 = vunpack.c.l.b16 %v1011
  %v1188 = vunpack.c.l.b16 %v1012
  %v1189 = vunpack.c.h.b16 %v1005
  %v1190 = vunpack.c.h.b16 %v1006
  %v1191 = vunpack.c.h.b16 %v1007
  %v1192 = vunpack.c.h.b16 %v1008
  %v1193 = vunpack.c.h.b16 %v1009
  %v1194 = vunpack.c.h.b16 %v1010
  %v1195 = vunpack.c.h.b16 %v1011
  %v1196 = vunpack.c.h.b16 %v1012
  %v1197 = vunpack.c.l.b16 %v1013
  %v1198 = vunpack.c.l.b16 %v1014
  %v1199 = vunpack.c.l.b16 %v1015
  %v1200 = vunpack.c.l.b16 %v1016
  %v1201 = vunpack.c.l.b16 %v1017
  %v1202 = vunpack.c.l.b16 %v1018
  %v1203 = vunpack.c.l.b16 %v1019
  %v1204 = vunpack.c.l.b16 %v1020
  %v1205 = vunpack.c.h.b16 %v1013
  %v1206 = vunpack.c.h.b16 %v1014
  %v1207 = vunpack.c.h.b16 %v1015
  %v1208 = vunpack.c.h.b16 %v1016
  %v1209 = vunpack.c.h.b16 %v1017
  %v1210 = vunpack.c.h.b16 %v1018
  %v1211 = vunpack.c.h.b16 %v1019
  %v1212 = vunpack.c.h.b16 %v1020
  %v1213 = vpack.c.b16 %v1086, %v1085
  %v1214 = vpack.c.b16 %v1088, %v1087
  %v1215 = vpack.c.b16 %v1090, %v1089
  %v1216 = vpack.c.b16 %v1092, %v1091
  %v1217 = vpack.c.b16 %v1094, %v1093
  %v1218 = vpack.c.b16 %v1096, %v1095
  %v1219 = vpack.c.b16 %v1098, %v1097
  %v1220 = vpack.c.b16 %v1100, %v1099
  %v1221 = vpack.c.b16 %v1102, %v1101
  %v1222 = vpack.c.b16 %v1104, %v1103
  %v1223 = vpack.c.b16 %v1106, %v1105
  %v1224 = vpack.c.b16 %v1108, %v1107
  %v1225 = vpack.c.b16 %v1110, %v1109
  %v1226 = vpack.c.b16 %v1112, %v1111
  %v1227 = vpack.c.b16 %v1114, %v1113
  %v1228 = vpack.c.b16 %v1116, %v1115
  %v1229 = vpack.c.b16 %v1118, %v1117
  %v1230 = vpack.c.b16 %v1120, %v1119
  %v1231 = vpack.c.b16 %v1122, %v1121
  %v1232 = vpack.c.b16 %v1124, %v1123
  %v1233 = vpack.c.b16 %v1126, %v1125
  %v1234 = vpack.c.b16 %v1128, %v1127
  %v1235 = vpack.c.b16 %v1130, %v1129
  %v1236 = vpack.c.b16 %v1132, %v1131
  %v1237 = vpack.c.b16 %v1134, %v1133
  %v1238 = vpack.c.b16 %v1136, %v1135
  %v1239 = vpack.c.b16 %v1138, %v1137
  %v1240 = vpack.c.b16 %v1140, %v1139
  %v1241 = vpack.c.b16 %v1142, %v1141
  %v1242 = vpack.c.b16 %v1144, %v1143
  %v1243 = vpack.c.b16 %v1146, %v1145
  %v1244 = vpack.c.b16 %v1148, %v1147
  %v1245 = vpack.c.b16 %v1150, %v1149
  %v1246 = vpack.c.b16 %v1152, %v1151
  %v1247 = vpack.c.b16 %v1154, %v1153
  %v1248 = vpack.c.b16 %v1156, %v1155
  %v1249 = vpack.c.b16 %v1158, %v1157
  %v1250 = vpack.c.b16 %v1160, %v1159
  %v1251 = vpack.c.b16 %v1162, %v1161
  %v1252 = vpack.c.b16 %v1164, %v1163
  %v1253 = vpack.c.b16 %v1166, %v1165
  %v1254 = vpack.c.b16 %v1168, %v1167
  %v1255 = vpack.c.b16 %v1170, %v1169
  %v1256 = vpack.c.b16 %v1172, %v1171
  %v1257 = vpack.c.b16 %v1174, %v1173
  %v1258 = vpack.c.b16 %v1176, %v1175
  %v1259 = vpack.c.b16 %v1178, %v1177
  %v1260 = vpack.c.b16 %v1180, %v1179
  %v1261 = vpack.c.b16 %v1182, %v1181
  %v1262 = vpack.c.b16 %v1184, %v1183
  %v1263 = vpack.c.b16 %v1186, %v1185
  %v1264 = vpack.c.b16 %v1188, %v1187
  %v1265 = vpack.c.b16 %v1190, %v1189
  %v1266 = vpack.c.b16 %v1192, %v1191
  %v1267 = vpack.c.b16 %v1194, %v1193
  %v1268 = vpack.c.b16 %v1196, %v1195
  %v1269 = vpack.c.b16 %v1198, %v1197
  %v1270 = vpack.c.b16 %v1200, %v1199
  %v1271 = vpack.c.b16 %v1202, %v1201
  %v1272 = vpack.c.b16 %v1204, %v1203
  %v1273 = vpack.c.b16 %v1206, %v1205
  %v1274 = vpack.c.b16 %v1208, %v1207
  %v1275 = vpack.c.b16 %v1210, %v1209
  %v1276 = vpack.c.b16 %v1212, %v1211
  %1341 = vst [vmem:[%s3] sm:$0xff] %v1213
  %1342 = vst [vmem:[%s3 + $0x8] sm:$0xff] %v1214
  %1343 = vst [vmem:[%s3 + $0x10] sm:$0xff] %v1215
  %1344 = vst [vmem:[%s3 + $0x18] sm:$0xff] %v1216
  %1345 = vst [vmem:[%s3 + $0x20] sm:$0xff] %v1217
  %1346 = vst [vmem:[%s3 + $0x28] sm:$0xff] %v1218
  %1347 = vst [vmem:[%s3 + $0x30] sm:$0xff] %v1219
  %1348 = vst [vmem:[%s3 + $0x38] sm:$0xff] %v1220
  %1349 = vst [vmem:[%s3 + $0x40] sm:$0xff] %v1221
  %1350 = vst [vmem:[%s3 + $0x48] sm:$0xff] %v1222
  %1351 = vst [vmem:[%s3 + $0x50] sm:$0xff] %v1223
  %1352 = vst [vmem:[%s3 + $0x58] sm:$0xff] %v1224
  %1353 = vst [vmem:[%s3 + $0x60] sm:$0xff] %v1225
  %1354 = vst [vmem:[%s3 + $0x68] sm:$0xff] %v1226
  %1355 = vst [vmem:[%s3 + $0x70] sm:$0xff] %v1227
  %1356 = vst [vmem:[%s3 + $0x78] sm:$0xff] %v1228
  %1357 = vst [vmem:[%s3 + $0x80] sm:$0xff] %v1229
  %1358 = vst [vmem:[%s3 + $0x88] sm:$0xff] %v1230
  %1359 = vst [vmem:[%s3 + $0x90] sm:$0xff] %v1231
  %1360 = vst [vmem:[%s3 + $0x98] sm:$0xff] %v1232
  %1361 = vst [vmem:[%s3 + $0xa0] sm:$0xff] %v1233
  %1362 = vst [vmem:[%s3 + $0xa8] sm:$0xff] %v1234
  %1363 = vst [vmem:[%s3 + $0xb0] sm:$0xff] %v1235
  %1364 = vst [vmem:[%s3 + $0xb8] sm:$0xff] %v1236
  %1365 = vst [vmem:[%s3 + $0xc0] sm:$0xff] %v1237
  %1366 = vst [vmem:[%s3 + $0xc8] sm:$0xff] %v1238
  %1367 = vst [vmem:[%s3 + $0xd0] sm:$0xff] %v1239
  %1368 = vst [vmem:[%s3 + $0xd8] sm:$0xff] %v1240
  %1369 = vst [vmem:[%s3 + $0xe0] sm:$0xff] %v1241
  %1370 = vst [vmem:[%s3 + $0xe8] sm:$0xff] %v1242
  %1371 = vst [vmem:[%s3 + $0xf0] sm:$0xff] %v1243
  %1372 = vst [vmem:[%s3 + $0xf8] sm:$0xff] %v1244
  %1373 = vst [vmem:[%s3 + $0x100] sm:$0xff] %v1245
  %1374 = vst [vmem:[%s3 + $0x108] sm:$0xff] %v1246
  %1375 = vst [vmem:[%s3 + $0x110] sm:$0xff] %v1247
  %1376 = vst [vmem:[%s3 + $0x118] sm:$0xff] %v1248
  %1377 = vst [vmem:[%s3 + $0x120] sm:$0xff] %v1249
  %1378 = vst [vmem:[%s3 + $0x128] sm:$0xff] %v1250
  %1379 = vst [vmem:[%s3 + $0x130] sm:$0xff] %v1251
  %1380 = vst [vmem:[%s3 + $0x138] sm:$0xff] %v1252
  %1381 = vst [vmem:[%s3 + $0x140] sm:$0xff] %v1253
  %1382 = vst [vmem:[%s3 + $0x148] sm:$0xff] %v1254
  %1383 = vst [vmem:[%s3 + $0x150] sm:$0xff] %v1255
  %1384 = vst [vmem:[%s3 + $0x158] sm:$0xff] %v1256
  %1385 = vst [vmem:[%s3 + $0x160] sm:$0xff] %v1257
  %1386 = vst [vmem:[%s3 + $0x168] sm:$0xff] %v1258
  %1387 = vst [vmem:[%s3 + $0x170] sm:$0xff] %v1259
  %1388 = vst [vmem:[%s3 + $0x178] sm:$0xff] %v1260
  %1389 = vst [vmem:[%s3 + $0x180] sm:$0xff] %v1261
  %1390 = vst [vmem:[%s3 + $0x188] sm:$0xff] %v1262
  %1391 = vst [vmem:[%s3 + $0x190] sm:$0xff] %v1263
  %1392 = vst [vmem:[%s3 + $0x198] sm:$0xff] %v1264
  %1393 = vst [vmem:[%s3 + $0x1a0] sm:$0xff] %v1265
  %1394 = vst [vmem:[%s3 + $0x1a8] sm:$0xff] %v1266
  %1395 = vst [vmem:[%s3 + $0x1b0] sm:$0xff] %v1267
  %1396 = vst [vmem:[%s3 + $0x1b8] sm:$0xff] %v1268
  %1397 = vst [vmem:[%s3 + $0x1c0] sm:$0xff] %v1269
  %1398 = vst [vmem:[%s3 + $0x1c8] sm:$0xff] %v1270
  %1399 = vst [vmem:[%s3 + $0x1d0] sm:$0xff] %v1271
  %1400 = vst [vmem:[%s3 + $0x1d8] sm:$0xff] %v1272
  %1401 = vst [vmem:[%s3 + $0x1e0] sm:$0xff] %v1273
  %1402 = vst [vmem:[%s3 + $0x1e8] sm:$0xff] %v1274
  %1403 = vst [vmem:[%s3 + $0x1f0] sm:$0xff] %v1275
  %1404 = vst [vmem:[%s3 + $0x1f8] sm:$0xff] %v1276
  // Predicated region
  $region14: #{forward.3} parent=0 // pred_check
    _
  $region15: #{forward.3} parent=0 // pred_check_branch
    %1406 = sbr.rel (0) target = $region17
  $region16: #{forward.3} parent=0 // pred_region
    _
  $region17: #{forward.3} parent=0 // pred_fallthru
    _
  // Predicated region
  $region18: #{forward.3} parent=0 // pred_check
    _
  $region19: #{forward.3} parent=0 // pred_check_branch
    %1408 = sbr.rel (0) target = $region21
  $region20: #{forward.3} parent=0 // pred_region
    _
  $region21: #{forward.3} parent=0 // pred_fallthru
    _

// kernel: forward.5
$region0: #{forward.5}
  #allocation0 [shape = 'u32[]', space=smem, size = 0x4, offset = 0x4, fixed_abs, tag = 'smem constant byte address 0x4 - core index']
  #allocation1 [shape = 'u32[144,128]{1,0:T(1,128)}', space=vmem, size = 0x12000, scoped, tag = 'internal scratch']
  #allocation2 [shape = 'f32[8,256]{1,0:T(8,128)}', space=vmem, size = 0x2000, scoped, tag = 'scratch operand']
  #allocation3 [shape = 'f32[8,128]{1,0:T(8,128)}', space=vmem, size = 0x1000, scoped, tag = 'scratch operand']
  #allocation4 [shape = 'f32[8,128]{1,0:T(8,128)}', space=vmem, size = 0x1000, scoped, tag = 'scratch operand']
  %s0 = inlined_call_operand.vmem [shape: f32[16,8,128], index: 0, kind: input, shape index: {}]
  %s1 = inlined_call_operand.vmem [shape: f32[16,8,128], index: 1, kind: input, shape index: {}]
  %s2 = inlined_call_operand.vmem [shape: f32[3,16,8,1], index: 2, kind: input, shape index: {}]
  %s3 = inlined_call_operand.vmem [shape: bf16[128,128], index: 3, kind: input, shape index: {}]
  %s4 = inlined_call_operand.vmem [shape: bf16[128,128], index: 4, kind: input, shape index: {}]
  %s5 = inlined_call_operand.vmem [shape: f32[1,128], index: 5, kind: input, shape index: {}]
  %s6 = inlined_call_operand.vmem [shape: bf16[256,128], index: 6, kind: input, shape index: {}]
  %s7 = inlined_call_operand.vmem [shape: bf16[128,128], index: 7, kind: input, shape index: {}]
  %s8 = inlined_call_operand.vmem [shape: bf16[128,128], index: 8, kind: input, shape index: {}]
  %s9 = inlined_call_operand.vmem [shape: f32[1,128], index: 9, kind: input, shape index: {}]
  %s10 = inlined_call_operand.vmem [shape: f32[8,128], index: 10, kind: output, shape index: {}]
  %s11 = sld [smem:[#allocation0]]
  $region58: #{forward.5} parent=0
    _
  %s13 = ssub.s32 1, %s11
  %s14 = scalar_select 0, %s13, %s11
  // Predicated region
  $region2: #{forward.5} parent=0 // pred_check
    _
  $region3: #{forward.5} parent=0 // pred_check_branch
    %16 = sbr.rel (0) target = $region5
  $region4: #{forward.5} parent=0 // pred_region
    _
  $region5: #{forward.5} parent=0 // pred_fallthru
    _
  // Predicated region
  $region6: #{forward.5} parent=0 // pred_check
    _
  $region7: #{forward.5} parent=0 // pred_check_branch
    %18 = sbr.rel (0) target = $region9
  $region8: #{forward.5} parent=0 // pred_region
    _
  $region9: #{forward.5} parent=0 // pred_fallthru
    _
  // Predicated region
  $region10: #{forward.5} parent=0 // pred_check
    _
  $region11: #{forward.5} parent=0 // pred_check_branch
    %20 = sbr.rel (0) target = $region13
  $region12: #{forward.5} parent=0 // pred_region
    _
  $region13: #{forward.5} parent=0 // pred_fallthru
    _
  // Predicated region
  $region14: #{forward.5} parent=0 // pred_check
    _
  $region15: #{forward.5} parent=0 // pred_check_branch
    %22 = sbr.rel (0) target = $region17
  $region16: #{forward.5} parent=0 // pred_region
    _
  $region17: #{forward.5} parent=0 // pred_fallthru
    _
  // Predicated region
  $region18: #{forward.5} parent=0 // pred_check
    _
  $region19: #{forward.5} parent=0 // pred_check_branch
    %24 = sbr.rel (0) target = $region21
  $region20: #{forward.5} parent=0 // pred_region
    _
  $region21: #{forward.5} parent=0 // pred_fallthru
    _
  // Predicated region
  $region22: #{forward.5} parent=0 // pred_check
    _
  $region23: #{forward.5} parent=0 // pred_check_branch
    %26 = sbr.rel (0) target = $region25
  $region24: #{forward.5} parent=0 // pred_region
    _
  $region25: #{forward.5} parent=0 // pred_fallthru
    _
  // Predicated region
  $region26: #{forward.5} parent=0 // pred_check
    _
  $region27: #{forward.5} parent=0 // pred_check_branch
    %28 = sbr.rel (0) target = $region29
  $region28: #{forward.5} parent=0 // pred_region
    _
  $region29: #{forward.5} parent=0 // pred_fallthru
    _
  // Predicated region
  $region30: #{forward.5} parent=0 // pred_check
    _
  $region31: #{forward.5} parent=0 // pred_check_branch
    %30 = sbr.rel (0) target = $region33
  $region32: #{forward.5} parent=0 // pred_region
    _
  $region33: #{forward.5} parent=0 // pred_fallthru
    _
  // Predicated region
  $region34: #{forward.5} parent=0 // pred_check
    _
  $region35: #{forward.5} parent=0 // pred_check_branch
    %32 = sbr.rel (0) target = $region37
  $region36: #{forward.5} parent=0 // pred_region
    _
  $region37: #{forward.5} parent=0 // pred_fallthru
    _
  // Predicated region
  $region38: #{forward.5} parent=0 // pred_check
    _
  $region39: #{forward.5} parent=0 // pred_check_branch
    %34 = sbr.rel (0) target = $region41
  $region40: #{forward.5} parent=0 // pred_region
    _
  $region41: #{forward.5} parent=0 // pred_fallthru
    _
  %p36 = scmp.eq.s32.totalorder 0, 0
  // Predicated region
  $region42: #{forward.5} parent=0 // pred_check
    %p37 = pneg %p36
  $region43: #{forward.5} parent=0 // pred_check_branch
    %39 = sbr.rel (%p37) target = $region45
  $region44: #{forward.5} parent=0 // pred_region
    %40 = vst [vmem:[#allocation2] sm:$0xff] -inf
    %41 = vst [vmem:[#allocation2 + $0x8] sm:$0xff] -inf
    %42 = vst [vmem:[#allocation3] sm:$0xff] -inf
    %43 = vst [vmem:[#allocation4] sm:$0xff] -inf
  $region45: #{forward.5} parent=0 // pred_fallthru
    _
  %v44 = vld [vmem:[%s0] sm:$0xff]
  %v45 = vld [vmem:[%s0 + $0x8] sm:$0xff]
  %v46 = vld [vmem:[%s0 + $0x10] sm:$0xff]
  %v47 = vld [vmem:[%s0 + $0x18] sm:$0xff]
  %v48 = vld [vmem:[%s0 + $0x20] sm:$0xff]
  %v49 = vld [vmem:[%s0 + $0x28] sm:$0xff]
  %v50 = vld [vmem:[%s0 + $0x30] sm:$0xff]
  %v51 = vld [vmem:[%s0 + $0x38] sm:$0xff]
  %v52 = vld [vmem:[%s0 + $0x40] sm:$0xff]
  %v53 = vld [vmem:[%s0 + $0x48] sm:$0xff]
  %v54 = vld [vmem:[%s0 + $0x50] sm:$0xff]
  %v55 = vld [vmem:[%s0 + $0x58] sm:$0xff]
  %v56 = vld [vmem:[%s0 + $0x60] sm:$0xff]
  %v57 = vld [vmem:[%s0 + $0x68] sm:$0xff]
  %v58 = vld [vmem:[%s0 + $0x70] sm:$0xff]
  %v59 = vld [vmem:[%s0 + $0x78] sm:$0xff]
  %v60 = vld [vmem:[%s1] sm:$0xff]
  %v61 = vld [vmem:[%s1 + $0x8] sm:$0xff]
  %v62 = vld [vmem:[%s1 + $0x10] sm:$0xff]
  %v63 = vld [vmem:[%s1 + $0x18] sm:$0xff]
  %v64 = vld [vmem:[%s1 + $0x20] sm:$0xff]
  %v65 = vld [vmem:[%s1 + $0x28] sm:$0xff]
  %v66 = vld [vmem:[%s1 + $0x30] sm:$0xff]
  %v67 = vld [vmem:[%s1 + $0x38] sm:$0xff]
  %v68 = vld [vmem:[%s1 + $0x40] sm:$0xff]
  %v69 = vld [vmem:[%s1 + $0x48] sm:$0xff]
  %v70 = vld [vmem:[%s1 + $0x50] sm:$0xff]
  %v71 = vld [vmem:[%s1 + $0x58] sm:$0xff]
  %v72 = vld [vmem:[%s1 + $0x60] sm:$0xff]
  %v73 = vld [vmem:[%s1 + $0x68] sm:$0xff]
  %v74 = vld [vmem:[%s1 + $0x70] sm:$0xff]
  %v75 = vld [vmem:[%s1 + $0x78] sm:$0xff]
  %v76 = vld [vmem:[%s2] sm:$0xff]
  %v77 = vld [vmem:[%s2 + $0x8] sm:$0xff]
  %v78 = vld [vmem:[%s2 + $0x10] sm:$0xff]
  %v79 = vld [vmem:[%s2 + $0x18] sm:$0xff]
  %v80 = vld [vmem:[%s2 + $0x20] sm:$0xff]
  %v81 = vld [vmem:[%s2 + $0x28] sm:$0xff]
  %v82 = vld [vmem:[%s2 + $0x30] sm:$0xff]
  %v83 = vld [vmem:[%s2 + $0x38] sm:$0xff]
  %v84 = vld [vmem:[%s2 + $0x40] sm:$0xff]
  %v85 = vld [vmem:[%s2 + $0x48] sm:$0xff]
  %v86 = vld [vmem:[%s2 + $0x50] sm:$0xff]
  %v87 = vld [vmem:[%s2 + $0x58] sm:$0xff]
  %v88 = vld [vmem:[%s2 + $0x60] sm:$0xff]
  %v89 = vld [vmem:[%s2 + $0x68] sm:$0xff]
  %v90 = vld [vmem:[%s2 + $0x70] sm:$0xff]
  %v91 = vld [vmem:[%s2 + $0x78] sm:$0xff]
  %s92 = scalar_lea.vmem %s2, 128
  %v93 = vld [vmem:[%s92] sm:$0xff]
  %v94 = vld [vmem:[%s92 + $0x8] sm:$0xff]
  %v95 = vld [vmem:[%s92 + $0x10] sm:$0xff]
  %v96 = vld [vmem:[%s92 + $0x18] sm:$0xff]
  %v97 = vld [vmem:[%s92 + $0x20] sm:$0xff]
  %v98 = vld [vmem:[%s92 + $0x28] sm:$0xff]
  %v99 = vld [vmem:[%s92 + $0x30] sm:$0xff]
  %v100 = vld [vmem:[%s92 + $0x38] sm:$0xff]
  %v101 = vld [vmem:[%s92 + $0x40] sm:$0xff]
  %v102 = vld [vmem:[%s92 + $0x48] sm:$0xff]
  %v103 = vld [vmem:[%s92 + $0x50] sm:$0xff]
  %v104 = vld [vmem:[%s92 + $0x58] sm:$0xff]
  %v105 = vld [vmem:[%s92 + $0x60] sm:$0xff]
  %v106 = vld [vmem:[%s92 + $0x68] sm:$0xff]
  %v107 = vld [vmem:[%s92 + $0x70] sm:$0xff]
  %v108 = vld [vmem:[%s92 + $0x78] sm:$0xff]
  %s109 = scalar_lea.vmem %s2, 256
  %v110 = vld [vmem:[%s109] sm:$0xff]
  %v111 = vld [vmem:[%s109 + $0x8] sm:$0xff]
  %v112 = vld [vmem:[%s109 + $0x10] sm:$0xff]
  %v113 = vld [vmem:[%s109 + $0x18] sm:$0xff]
  %v114 = vld [vmem:[%s109 + $0x20] sm:$0xff]
  %v115 = vld [vmem:[%s109 + $0x28] sm:$0xff]
  %v116 = vld [vmem:[%s109 + $0x30] sm:$0xff]
  %v117 = vld [vmem:[%s109 + $0x38] sm:$0xff]
  %v118 = vld [vmem:[%s109 + $0x40] sm:$0xff]
  %v119 = vld [vmem:[%s109 + $0x48] sm:$0xff]
  %v120 = vld [vmem:[%s109 + $0x50] sm:$0xff]
  %v121 = vld [vmem:[%s109 + $0x58] sm:$0xff]
  %v122 = vld [vmem:[%s109 + $0x60] sm:$0xff]
  %v123 = vld [vmem:[%s109 + $0x68] sm:$0xff]
  %v124 = vld [vmem:[%s109 + $0x70] sm:$0xff]
  %v125 = vld [vmem:[%s109 + $0x78] sm:$0xff]
  %v126 = vld [vmem:[#allocation2] sm:$0xff]
  %128 = vset.pattern.permute.xlu0 0
  %129 = vperm.xlu0 %128, %v76
  %v130 = vpop.permute.xlu0 %129
  %133 = vset.pattern.permute.xlu0 0
  %134 = vperm.xlu0 %133, %v77
  %v135 = vpop.permute.xlu0 %134
  %138 = vset.pattern.permute.xlu0 0
  %139 = vperm.xlu0 %138, %v78
  %v140 = vpop.permute.xlu0 %139
  %143 = vset.pattern.permute.xlu0 0
  %144 = vperm.xlu0 %143, %v79
  %v145 = vpop.permute.xlu0 %144
  %148 = vset.pattern.permute.xlu0 0
  %149 = vperm.xlu0 %148, %v80
  %v150 = vpop.permute.xlu0 %149
  %153 = vset.pattern.permute.xlu0 0
  %154 = vperm.xlu0 %153, %v81
  %v155 = vpop.permute.xlu0 %154
  %158 = vset.pattern.permute.xlu0 0
  %159 = vperm.xlu0 %158, %v82
  %v160 = vpop.permute.xlu0 %159
  %163 = vset.pattern.permute.xlu0 0
  %164 = vperm.xlu0 %163, %v83
  %v165 = vpop.permute.xlu0 %164
  %168 = vset.pattern.permute.xlu0 0
  %169 = vperm.xlu0 %168, %v84
  %v170 = vpop.permute.xlu0 %169
  %173 = vset.pattern.permute.xlu0 0
  %174 = vperm.xlu0 %173, %v85
  %v175 = vpop.permute.xlu0 %174
  %178 = vset.pattern.permute.xlu0 0
  %179 = vperm.xlu0 %178, %v86
  %v180 = vpop.permute.xlu0 %179
  %183 = vset.pattern.permute.xlu0 0
  %184 = vperm.xlu0 %183, %v87
  %v185 = vpop.permute.xlu0 %184
  %188 = vset.pattern.permute.xlu0 0
  %189 = vperm.xlu0 %188, %v88
  %v190 = vpop.permute.xlu0 %189
  %193 = vset.pattern.permute.xlu0 0
  %194 = vperm.xlu0 %193, %v89
  %v195 = vpop.permute.xlu0 %194
  %198 = vset.pattern.permute.xlu0 0
  %199 = vperm.xlu0 %198, %v90
  %v200 = vpop.permute.xlu0 %199
  %203 = vset.pattern.permute.xlu0 0
  %204 = vperm.xlu0 %203, %v91
  %v205 = vpop.permute.xlu0 %204
  %v207 = vadd.f32 %v44, %v130
  %v208 = vadd.f32 %v45, %v135
  %v209 = vadd.f32 %v46, %v140
  %v210 = vadd.f32 %v47, %v145
  %v211 = vadd.f32 %v48, %v150
  %v212 = vadd.f32 %v49, %v155
  %v213 = vadd.f32 %v50, %v160
  %v214 = vadd.f32 %v51, %v165
  %v215 = vadd.f32 %v52, %v170
  %v216 = vadd.f32 %v53, %v175
  %v217 = vadd.f32 %v54, %v180
  %v218 = vadd.f32 %v55, %v185
  %v219 = vadd.f32 %v56, %v190
  %v220 = vadd.f32 %v57, %v195
  %v221 = vadd.f32 %v58, %v200
  %v222 = vadd.f32 %v59, %v205
  %v223 = vmax.f32 %v207, %v211
  %v224 = vmax.f32 %v208, %v212
  %v225 = vmax.f32 %v209, %v213
  %v226 = vmax.f32 %v210, %v214
  %v227 = vmax.f32 %v223, %v215
  %v228 = vmax.f32 %v224, %v216
  %v229 = vmax.f32 %v225, %v217
  %v230 = vmax.f32 %v226, %v218
  %v231 = vmax.f32 %v227, %v219
  %v232 = vmax.f32 %v228, %v220
  %v233 = vmax.f32 %v229, %v221
  %v234 = vmax.f32 %v230, %v222
  %v235 = vmax.f32 %v231, %v232
  %v236 = vmax.f32 %v233, %v234
  %v237 = vmax.f32 %v235, %v236
  %v238 = vmax.f32 %v126, %v237
  %239 = vst [vmem:[#allocation2] sm:$0xff] %v238
  %v240 = vld [vmem:[#allocation2 + $0x8] sm:$0xff]
  %v241 = vadd.f32 %v60, %v130
  %v242 = vadd.f32 %v61, %v135
  %v243 = vadd.f32 %v62, %v140
  %v244 = vadd.f32 %v63, %v145
  %v245 = vadd.f32 %v64, %v150
  %v246 = vadd.f32 %v65, %v155
  %v247 = vadd.f32 %v66, %v160
  %v248 = vadd.f32 %v67, %v165
  %v249 = vadd.f32 %v68, %v170
  %v250 = vadd.f32 %v69, %v175
  %v251 = vadd.f32 %v70, %v180
  %v252 = vadd.f32 %v71, %v185
  %v253 = vadd.f32 %v72, %v190
  %v254 = vadd.f32 %v73, %v195
  %v255 = vadd.f32 %v74, %v200
  %v256 = vadd.f32 %v75, %v205
  %v257 = vmax.f32 %v241, %v245
  %v258 = vmax.f32 %v242, %v246
  %v259 = vmax.f32 %v243, %v247
  %v260 = vmax.f32 %v244, %v248
  %v261 = vmax.f32 %v257, %v249
  %v262 = vmax.f32 %v258, %v250
  %v263 = vmax.f32 %v259, %v251
  %v264 = vmax.f32 %v260, %v252
  %v265 = vmax.f32 %v261, %v253
  %v266 = vmax.f32 %v262, %v254
  %v267 = vmax.f32 %v263, %v255
  %v268 = vmax.f32 %v264, %v256
  %v269 = vmax.f32 %v265, %v266
  %v270 = vmax.f32 %v267, %v268
  %v271 = vmax.f32 %v269, %v270
  %v272 = vmax.f32 %v240, %v271
  %273 = vst [vmem:[#allocation2 + $0x8] sm:$0xff] %v272
  %v274 = vpack.c.bf16 %v45, %v44
  %v275 = vpack.c.bf16 %v47, %v46
  %v276 = vpack.c.bf16 %v49, %v48
  %v277 = vpack.c.bf16 %v51, %v50
  %v278 = vpack.c.bf16 %v53, %v52
  %v279 = vpack.c.bf16 %v55, %v54
  %v280 = vpack.c.bf16 %v57, %v56
  %v281 = vpack.c.bf16 %v59, %v58
  %v282 = vld [vmem:[%s3] sm:$0xf]
  %v283 = vld [vmem:[%s3 + $0x4] sm:$0xf]
  %v284 = vld [vmem:[%s3 + $0x8] sm:$0xf]
  %v285 = vld [vmem:[%s3 + $0xc] sm:$0xf]
  %v286 = vld [vmem:[%s3 + $0x10] sm:$0xf]
  %v287 = vld [vmem:[%s3 + $0x14] sm:$0xf]
  %v288 = vld [vmem:[%s3 + $0x18] sm:$0xf]
  %v289 = vld [vmem:[%s3 + $0x1c] sm:$0xf]
  %v290 = vld [vmem:[%s3 + $0x20] sm:$0xf]
  %v291 = vld [vmem:[%s3 + $0x24] sm:$0xf]
  %v292 = vld [vmem:[%s3 + $0x28] sm:$0xf]
  %v293 = vld [vmem:[%s3 + $0x2c] sm:$0xf]
  %v294 = vld [vmem:[%s3 + $0x30] sm:$0xf]
  %v295 = vld [vmem:[%s3 + $0x34] sm:$0xf]
  %v296 = vld [vmem:[%s3 + $0x38] sm:$0xf]
  %v297 = vld [vmem:[%s3 + $0x3c] sm:$0xf]
  %v298 = vpack.c.bf16 %v61, %v60
  %v299 = vpack.c.bf16 %v63, %v62
  %v300 = vpack.c.bf16 %v65, %v64
  %v301 = vpack.c.bf16 %v67, %v66
  %v302 = vpack.c.bf16 %v69, %v68
  %v303 = vpack.c.bf16 %v71, %v70
  %v304 = vpack.c.bf16 %v73, %v72
  %v305 = vpack.c.bf16 %v75, %v74
  %v306 = vld [vmem:[%s4] sm:$0xf]
  %v307 = vld [vmem:[%s4 + $0x4] sm:$0xf]
  %v308 = vld [vmem:[%s4 + $0x8] sm:$0xf]
  %v309 = vld [vmem:[%s4 + $0xc] sm:$0xf]
  %v310 = vld [vmem:[%s4 + $0x10] sm:$0xf]
  %v311 = vld [vmem:[%s4 + $0x14] sm:$0xf]
  %v312 = vld [vmem:[%s4 + $0x18] sm:$0xf]
  %v313 = vld [vmem:[%s4 + $0x1c] sm:$0xf]
  %v314 = vld [vmem:[%s4 + $0x20] sm:$0xf]
  %v315 = vld [vmem:[%s4 + $0x24] sm:$0xf]
  %v316 = vld [vmem:[%s4 + $0x28] sm:$0xf]
  %v317 = vld [vmem:[%s4 + $0x2c] sm:$0xf]
  %v318 = vld [vmem:[%s4 + $0x30] sm:$0xf]
  %v319 = vld [vmem:[%s4 + $0x34] sm:$0xf]
  %v320 = vld [vmem:[%s4 + $0x38] sm:$0xf]
  %v321 = vld [vmem:[%s4 + $0x3c] sm:$0xf]
  %v338 = vunpack.c.l.b16 %v306
  %v339 = vunpack.c.l.b16 %v307
  %v340 = vunpack.c.l.b16 %v308
  %v341 = vunpack.c.l.b16 %v309
  %v342 = vunpack.c.l.b16 %v310
  %v343 = vunpack.c.l.b16 %v311
  %v344 = vunpack.c.l.b16 %v312
  %v345 = vunpack.c.l.b16 %v313
  %v346 = vunpack.c.l.b16 %v314
  %v347 = vunpack.c.l.b16 %v315
  %v348 = vunpack.c.l.b16 %v316
  %v349 = vunpack.c.l.b16 %v317
  %v350 = vunpack.c.l.b16 %v318
  %v351 = vunpack.c.l.b16 %v319
  %v352 = vunpack.c.l.b16 %v320
  %v353 = vunpack.c.l.b16 %v321
  %v354 = vpack.c.b16 %v339, %v338
  %v355 = vpack.c.b16 %v341, %v340
  %v356 = vpack.c.b16 %v343, %v342
  %v357 = vpack.c.b16 %v345, %v344
  %v358 = vpack.c.b16 %v347, %v346
  %v359 = vpack.c.b16 %v349, %v348
  %v360 = vpack.c.b16 %v351, %v350
  %v361 = vpack.c.b16 %v353, %v352
  %370 = vmatprep.subr.bf16.mxu0 0
  %371 = vmatpush1.bf16.msra.mxu0 %v361
  %372 = vmatprep.subr.bf16.mxu0 0
  %373 = vmatpush1.bf16.msra.mxu0 %v360
  %374 = vmatprep.subr.bf16.mxu0 0
  %375 = vmatpush1.bf16.msra.mxu0 %v359
  %376 = vmatprep.subr.bf16.mxu0 0
  %377 = vmatpush1.bf16.msra.mxu0 %v358
  %378 = vmatprep.subr.bf16.mxu0 0
  %379 = vmatpush1.bf16.msra.mxu0 %v357
  %380 = vmatprep.subr.bf16.mxu0 0
  %381 = vmatpush1.bf16.msra.mxu0 %v356
  %382 = vmatprep.subr.bf16.mxu0 0
  %383 = vmatpush1.bf16.msra.mxu0 %v355
  %384 = vmatprep.subr.bf16.mxu0 0
  %385 = vmatpush1.bf16.msra.mxu0 %v354
  %386 = vmatprep.subr.bf16.mxu0 0
  %387 = vmatpush2.bf16.msra.mxu0 0
  %388 = vmatprep.subr.bf16.mxu0 0
  %389 = vmatpush2.bf16.msra.mxu0 0
  %390 = vmatprep.subr.bf16.mxu0 0
  %391 = vmatpush2.bf16.msra.mxu0 0
  %392 = vmatprep.subr.bf16.mxu0 0
  %393 = vmatpush2.bf16.msra.mxu0 0
  %394 = vmatprep.subr.bf16.mxu0 0
  %395 = vmatpush2.bf16.msra.mxu0 0
  %396 = vmatprep.subr.bf16.mxu0 0
  %397 = vmatpush2.bf16.msra.mxu0 0
  %398 = vmatprep.subr.bf16.mxu0 0
  %399 = vmatpush2.bf16.msra.mxu0 0
  %400 = vmatprep.subr.bf16.mxu0 0
  %401 = vmatpush2.bf16.msra.mxu0 0
  %402 = vmatprep.mubr.bf16.mxu0 0
  %403 = vmatmul.mubr.bf16.gmra.mxu0 %v298
  %v404 = vpop.f32.mrf.mxu0
  %v405 = vadd.f32 0.0, %v404
  %v406 = vpop.f32.mrf.mxu0
  %v407 = vpop.f32.mrf.mxu0
  %v408 = vadd.f32 0.0, %v407
  %v409 = vpop.f32.mrf.mxu0
  %410 = vmatprep.mubr.bf16.mxu0 0
  %411 = vmatmul.mubr.bf16.gmra.mxu0 %v299
  %v412 = vpop.f32.mrf.mxu0
  %v413 = vadd.f32 0.0, %v412
  %v414 = vpop.f32.mrf.mxu0
  %v415 = vpop.f32.mrf.mxu0
  %v416 = vadd.f32 0.0, %v415
  %v417 = vpop.f32.mrf.mxu0
  %418 = vmatprep.mubr.bf16.mxu0 0
  %419 = vmatmul.mubr.bf16.gmra.mxu0 %v300
  %v420 = vpop.f32.mrf.mxu0
  %v421 = vadd.f32 0.0, %v420
  %v422 = vpop.f32.mrf.mxu0
  %v423 = vpop.f32.mrf.mxu0
  %v424 = vadd.f32 0.0, %v423
  %v425 = vpop.f32.mrf.mxu0
  %426 = vmatprep.mubr.bf16.mxu0 0
  %427 = vmatmul.mubr.bf16.gmra.mxu0 %v301
  %v428 = vpop.f32.mrf.mxu0
  %v429 = vadd.f32 0.0, %v428
  %v430 = vpop.f32.mrf.mxu0
  %v431 = vpop.f32.mrf.mxu0
  %v432 = vadd.f32 0.0, %v431
  %v433 = vpop.f32.mrf.mxu0
  %434 = vmatprep.mubr.bf16.mxu0 0
  %435 = vmatmul.mubr.bf16.gmra.mxu0 %v302
  %v436 = vpop.f32.mrf.mxu0
  %v437 = vadd.f32 0.0, %v436
  %v438 = vpop.f32.mrf.mxu0
  %v439 = vpop.f32.mrf.mxu0
  %v440 = vadd.f32 0.0, %v439
  %v441 = vpop.f32.mrf.mxu0
  %442 = vmatprep.mubr.bf16.mxu0 0
  %443 = vmatmul.mubr.bf16.gmra.mxu0 %v303
  %v444 = vpop.f32.mrf.mxu0
  %v445 = vadd.f32 0.0, %v444
  %v446 = vpop.f32.mrf.mxu0
  %v447 = vpop.f32.mrf.mxu0
  %v448 = vadd.f32 0.0, %v447
  %v449 = vpop.f32.mrf.mxu0
  %450 = vmatprep.mubr.bf16.mxu0 0
  %451 = vmatmul.mubr.bf16.gmra.mxu0 %v304
  %v452 = vpop.f32.mrf.mxu0
  %v453 = vadd.f32 0.0, %v452
  %v454 = vpop.f32.mrf.mxu0
  %v455 = vpop.f32.mrf.mxu0
  %v456 = vadd.f32 0.0, %v455
  %v457 = vpop.f32.mrf.mxu0
  %458 = vmatprep.mubr.bf16.mxu0 0
  %459 = vmatmul.mubr.bf16.gmra.mxu0 %v305
  %v460 = vpop.f32.mrf.mxu0
  %v461 = vadd.f32 0.0, %v460
  %v462 = vpop.f32.mrf.mxu0
  %v463 = vpop.f32.mrf.mxu0
  %v464 = vadd.f32 0.0, %v463
  %v465 = vpop.f32.mrf.mxu0
  %466 = vdwg.mxu0
  %v483 = vunpack.c.l.b16 %v282
  %v484 = vunpack.c.l.b16 %v283
  %v485 = vunpack.c.l.b16 %v284
  %v486 = vunpack.c.l.b16 %v285
  %v487 = vunpack.c.l.b16 %v286
  %v488 = vunpack.c.l.b16 %v287
  %v489 = vunpack.c.l.b16 %v288
  %v490 = vunpack.c.l.b16 %v289
  %v491 = vunpack.c.l.b16 %v290
  %v492 = vunpack.c.l.b16 %v291
  %v493 = vunpack.c.l.b16 %v292
  %v494 = vunpack.c.l.b16 %v293
  %v495 = vunpack.c.l.b16 %v294
  %v496 = vunpack.c.l.b16 %v295
  %v497 = vunpack.c.l.b16 %v296
  %v498 = vunpack.c.l.b16 %v297
  %v499 = vpack.c.b16 %v484, %v483
  %v500 = vpack.c.b16 %v486, %v485
  %v501 = vpack.c.b16 %v488, %v487
  %v502 = vpack.c.b16 %v490, %v489
  %v503 = vpack.c.b16 %v492, %v491
  %v504 = vpack.c.b16 %v494, %v493
  %v505 = vpack.c.b16 %v496, %v495
  %v506 = vpack.c.b16 %v498, %v497
  %515 = vmatprep.subr.bf16.mxu0 0
  %516 = vmatpush1.bf16.msra.mxu0 %v506
  %517 = vmatprep.subr.bf16.mxu0 0
  %518 = vmatpush1.bf16.msra.mxu0 %v505
  %519 = vmatprep.subr.bf16.mxu0 0
  %520 = vmatpush1.bf16.msra.mxu0 %v504
  %521 = vmatprep.subr.bf16.mxu0 0
  %522 = vmatpush1.bf16.msra.mxu0 %v503
  %523 = vmatprep.subr.bf16.mxu0 0
  %524 = vmatpush1.bf16.msra.mxu0 %v502
  %525 = vmatprep.subr.bf16.mxu0 0
  %526 = vmatpush1.bf16.msra.mxu0 %v501
  %527 = vmatprep.subr.bf16.mxu0 0
  %528 = vmatpush1.bf16.msra.mxu0 %v500
  %529 = vmatprep.subr.bf16.mxu0 0
  %530 = vmatpush1.bf16.msra.mxu0 %v499
  %531 = vmatprep.subr.bf16.mxu0 0
  %532 = vmatpush2.bf16.msra.mxu0 0
  %533 = vmatprep.subr.bf16.mxu0 0
  %534 = vmatpush2.bf16.msra.mxu0 0
  %535 = vmatprep.subr.bf16.mxu0 0
  %536 = vmatpush2.bf16.msra.mxu0 0
  %537 = vmatprep.subr.bf16.mxu0 0
  %538 = vmatpush2.bf16.msra.mxu0 0
  %539 = vmatprep.subr.bf16.mxu0 0
  %540 = vmatpush2.bf16.msra.mxu0 0
  %541 = vmatprep.subr.bf16.mxu0 0
  %542 = vmatpush2.bf16.msra.mxu0 0
  %543 = vmatprep.subr.bf16.mxu0 0
  %544 = vmatpush2.bf16.msra.mxu0 0
  %545 = vmatprep.subr.bf16.mxu0 0
  %546 = vmatpush2.bf16.msra.mxu0 0
  %547 = vmatprep.mubr.bf16.mxu0 0
  %548 = vmatmul.mubr.bf16.gmra.mxu0 %v274
  %v549 = vpop.f32.mrf.mxu0
  %v550 = vadd.f32 %v405, %v549
  %v551 = vpop.f32.mrf.mxu0
  %v552 = vpop.f32.mrf.mxu0
  %v553 = vadd.f32 %v408, %v552
  %v554 = vpop.f32.mrf.mxu0
  %555 = vmatprep.mubr.bf16.mxu0 0
  %556 = vmatmul.mubr.bf16.gmra.mxu0 %v275
  %v557 = vpop.f32.mrf.mxu0
  %v558 = vadd.f32 %v413, %v557
  %v559 = vpop.f32.mrf.mxu0
  %v560 = vpop.f32.mrf.mxu0
  %v561 = vadd.f32 %v416, %v560
  %v562 = vpop.f32.mrf.mxu0
  %563 = vmatprep.mubr.bf16.mxu0 0
  %564 = vmatmul.mubr.bf16.gmra.mxu0 %v276
  %v565 = vpop.f32.mrf.mxu0
  %v566 = vadd.f32 %v421, %v565
  %v567 = vpop.f32.mrf.mxu0
  %v568 = vpop.f32.mrf.mxu0
  %v569 = vadd.f32 %v424, %v568
  %v570 = vpop.f32.mrf.mxu0
  %571 = vmatprep.mubr.bf16.mxu0 0
  %572 = vmatmul.mubr.bf16.gmra.mxu0 %v277
  %v573 = vpop.f32.mrf.mxu0
  %v574 = vadd.f32 %v429, %v573
  %v575 = vpop.f32.mrf.mxu0
  %v576 = vpop.f32.mrf.mxu0
  %v577 = vadd.f32 %v432, %v576
  %v578 = vpop.f32.mrf.mxu0
  %579 = vmatprep.mubr.bf16.mxu0 0
  %580 = vmatmul.mubr.bf16.gmra.mxu0 %v278
  %v581 = vpop.f32.mrf.mxu0
  %v582 = vadd.f32 %v437, %v581
  %v583 = vpop.f32.mrf.mxu0
  %v584 = vpop.f32.mrf.mxu0
  %v585 = vadd.f32 %v440, %v584
  %v586 = vpop.f32.mrf.mxu0
  %587 = vmatprep.mubr.bf16.mxu0 0
  %588 = vmatmul.mubr.bf16.gmra.mxu0 %v279
  %v589 = vpop.f32.mrf.mxu0
  %v590 = vadd.f32 %v445, %v589
  %v591 = vpop.f32.mrf.mxu0
  %v592 = vpop.f32.mrf.mxu0
  %v593 = vadd.f32 %v448, %v592
  %v594 = vpop.f32.mrf.mxu0
  %595 = vmatprep.mubr.bf16.mxu0 0
  %596 = vmatmul.mubr.bf16.gmra.mxu0 %v280
  %v597 = vpop.f32.mrf.mxu0
  %v598 = vadd.f32 %v453, %v597
  %v599 = vpop.f32.mrf.mxu0
  %v600 = vpop.f32.mrf.mxu0
  %v601 = vadd.f32 %v456, %v600
  %v602 = vpop.f32.mrf.mxu0
  %603 = vmatprep.mubr.bf16.mxu0 0
  %604 = vmatmul.mubr.bf16.gmra.mxu0 %v281
  %v605 = vpop.f32.mrf.mxu0
  %v606 = vadd.f32 %v461, %v605
  %v607 = vpop.f32.mrf.mxu0
  %v608 = vpop.f32.mrf.mxu0
  %v609 = vadd.f32 %v464, %v608
  %v610 = vpop.f32.mrf.mxu0
  %611 = vdwg.mxu0
  %v612 = vld [vmem:[%s5] sm:$0x1]
  %v614 = vlaneseq
  %v615 = vshrl.u32 %v614, 7
  %v616 = vsub.s32 0, %v615
  %v617 = vrot.slane %v612, %v616
  %v619 = vadd.f32 %v550, %v617
  %v620 = vadd.f32 %v553, %v617
  %v621 = vadd.f32 %v558, %v617
  %v622 = vadd.f32 %v561, %v617
  %v623 = vadd.f32 %v566, %v617
  %v624 = vadd.f32 %v569, %v617
  %v625 = vadd.f32 %v574, %v617
  %v626 = vadd.f32 %v577, %v617
  %v627 = vadd.f32 %v582, %v617
  %v628 = vadd.f32 %v585, %v617
  %v629 = vadd.f32 %v590, %v617
  %v630 = vadd.f32 %v593, %v617
  %v631 = vadd.f32 %v598, %v617
  %v632 = vadd.f32 %v601, %v617
  %v633 = vadd.f32 %v606, %v617
  %v634 = vadd.f32 %v609, %v617
  %v635 = vld [vmem:[#allocation3] sm:$0xff]
  %637 = vset.pattern.permute.xlu0 0
  %638 = vperm.xlu0 %637, %v93
  %v639 = vpop.permute.xlu0 %638
  %642 = vset.pattern.permute.xlu0 0
  %643 = vperm.xlu0 %642, %v94
  %v644 = vpop.permute.xlu0 %643
  %647 = vset.pattern.permute.xlu0 0
  %648 = vperm.xlu0 %647, %v95
  %v649 = vpop.permute.xlu0 %648
  %652 = vset.pattern.permute.xlu0 0
  %653 = vperm.xlu0 %652, %v96
  %v654 = vpop.permute.xlu0 %653
  %657 = vset.pattern.permute.xlu0 0
  %658 = vperm.xlu0 %657, %v97
  %v659 = vpop.permute.xlu0 %658
  %662 = vset.pattern.permute.xlu0 0
  %663 = vperm.xlu0 %662, %v98
  %v664 = vpop.permute.xlu0 %663
  %667 = vset.pattern.permute.xlu0 0
  %668 = vperm.xlu0 %667, %v99
  %v669 = vpop.permute.xlu0 %668
  %672 = vset.pattern.permute.xlu0 0
  %673 = vperm.xlu0 %672, %v100
  %v674 = vpop.permute.xlu0 %673
  %677 = vset.pattern.permute.xlu0 0
  %678 = vperm.xlu0 %677, %v101
  %v679 = vpop.permute.xlu0 %678
  %682 = vset.pattern.permute.xlu0 0
  %683 = vperm.xlu0 %682, %v102
  %v684 = vpop.permute.xlu0 %683
  %687 = vset.pattern.permute.xlu0 0
  %688 = vperm.xlu0 %687, %v103
  %v689 = vpop.permute.xlu0 %688
  %692 = vset.pattern.permute.xlu0 0
  %693 = vperm.xlu0 %692, %v104
  %v694 = vpop.permute.xlu0 %693
  %697 = vset.pattern.permute.xlu0 0
  %698 = vperm.xlu0 %697, %v105
  %v699 = vpop.permute.xlu0 %698
  %702 = vset.pattern.permute.xlu0 0
  %703 = vperm.xlu0 %702, %v106
  %v704 = vpop.permute.xlu0 %703
  %707 = vset.pattern.permute.xlu0 0
  %708 = vperm.xlu0 %707, %v107
  %v709 = vpop.permute.xlu0 %708
  %712 = vset.pattern.permute.xlu0 0
  %713 = vperm.xlu0 %712, %v108
  %v714 = vpop.permute.xlu0 %713
  %v716 = vadd.f32 %v619, %v639
  %v717 = vadd.f32 %v620, %v644
  %v718 = vadd.f32 %v621, %v649
  %v719 = vadd.f32 %v622, %v654
  %v720 = vadd.f32 %v623, %v659
  %v721 = vadd.f32 %v624, %v664
  %v722 = vadd.f32 %v625, %v669
  %v723 = vadd.f32 %v626, %v674
  %v724 = vadd.f32 %v627, %v679
  %v725 = vadd.f32 %v628, %v684
  %v726 = vadd.f32 %v629, %v689
  %v727 = vadd.f32 %v630, %v694
  %v728 = vadd.f32 %v631, %v699
  %v729 = vadd.f32 %v632, %v704
  %v730 = vadd.f32 %v633, %v709
  %v731 = vadd.f32 %v634, %v714
  %v732 = vmax.f32 %v716, %v720
  %v733 = vmax.f32 %v717, %v721
  %v734 = vmax.f32 %v718, %v722
  %v735 = vmax.f32 %v719, %v723
  %v736 = vmax.f32 %v732, %v724
  %v737 = vmax.f32 %v733, %v725
  %v738 = vmax.f32 %v734, %v726
  %v739 = vmax.f32 %v735, %v727
  %v740 = vmax.f32 %v736, %v728
  %v741 = vmax.f32 %v737, %v729
  %v742 = vmax.f32 %v738, %v730
  %v743 = vmax.f32 %v739, %v731
  %v744 = vmax.f32 %v740, %v741
  %v745 = vmax.f32 %v742, %v743
  %v746 = vmax.f32 %v744, %v745
  %v747 = vmax.f32 %v635, %v746
  %748 = vst [vmem:[#allocation3] sm:$0xff] %v747
  %v749 = vld [vmem:[#allocation4] sm:$0xff]
  %751 = vset.pattern.permute.xlu0 0
  %752 = vperm.xlu0 %751, %v110
  %v753 = vpop.permute.xlu0 %752
  %756 = vset.pattern.permute.xlu0 0
  %757 = vperm.xlu0 %756, %v111
  %v758 = vpop.permute.xlu0 %757
  %761 = vset.pattern.permute.xlu0 0
  %762 = vperm.xlu0 %761, %v112
  %v763 = vpop.permute.xlu0 %762
  %766 = vset.pattern.permute.xlu0 0
  %767 = vperm.xlu0 %766, %v113
  %v768 = vpop.permute.xlu0 %767
  %771 = vset.pattern.permute.xlu0 0
  %772 = vperm.xlu0 %771, %v114
  %v773 = vpop.permute.xlu0 %772
  %776 = vset.pattern.permute.xlu0 0
  %777 = vperm.xlu0 %776, %v115
  %v778 = vpop.permute.xlu0 %777
  %781 = vset.pattern.permute.xlu0 0
  %782 = vperm.xlu0 %781, %v116
  %v783 = vpop.permute.xlu0 %782
  %786 = vset.pattern.permute.xlu0 0
  %787 = vperm.xlu0 %786, %v117
  %v788 = vpop.permute.xlu0 %787
  %791 = vset.pattern.permute.xlu0 0
  %792 = vperm.xlu0 %791, %v118
  %v793 = vpop.permute.xlu0 %792
  %796 = vset.pattern.permute.xlu0 0
  %797 = vperm.xlu0 %796, %v119
  %v798 = vpop.permute.xlu0 %797
  %801 = vset.pattern.permute.xlu0 0
  %802 = vperm.xlu0 %801, %v120
  %v803 = vpop.permute.xlu0 %802
  %806 = vset.pattern.permute.xlu0 0
  %807 = vperm.xlu0 %806, %v121
  %v808 = vpop.permute.xlu0 %807
  %811 = vset.pattern.permute.xlu0 0
  %812 = vperm.xlu0 %811, %v122
  %v813 = vpop.permute.xlu0 %812
  %816 = vset.pattern.permute.xlu0 0
  %817 = vperm.xlu0 %816, %v123
  %v818 = vpop.permute.xlu0 %817
  %821 = vset.pattern.permute.xlu0 0
  %822 = vperm.xlu0 %821, %v124
  %v823 = vpop.permute.xlu0 %822
  %826 = vset.pattern.permute.xlu0 0
  %827 = vperm.xlu0 %826, %v125
  %v828 = vpop.permute.xlu0 %827
  %v830 = vadd.f32 %v619, %v753
  %v831 = vadd.f32 %v620, %v758
  %v832 = vadd.f32 %v621, %v763
  %v833 = vadd.f32 %v622, %v768
  %v834 = vadd.f32 %v623, %v773
  %v835 = vadd.f32 %v624, %v778
  %v836 = vadd.f32 %v625, %v783
  %v837 = vadd.f32 %v626, %v788
  %v838 = vadd.f32 %v627, %v793
  %v839 = vadd.f32 %v628, %v798
  %v840 = vadd.f32 %v629, %v803
  %v841 = vadd.f32 %v630, %v808
  %v842 = vadd.f32 %v631, %v813
  %v843 = vadd.f32 %v632, %v818
  %v844 = vadd.f32 %v633, %v823
  %v845 = vadd.f32 %v634, %v828
  %v846 = vmax.f32 %v830, %v834
  %v847 = vmax.f32 %v831, %v835
  %v848 = vmax.f32 %v832, %v836
  %v849 = vmax.f32 %v833, %v837
  %v850 = vmax.f32 %v846, %v838
  %v851 = vmax.f32 %v847, %v839
  %v852 = vmax.f32 %v848, %v840
  %v853 = vmax.f32 %v849, %v841
  %v854 = vmax.f32 %v850, %v842
  %v855 = vmax.f32 %v851, %v843
  %v856 = vmax.f32 %v852, %v844
  %v857 = vmax.f32 %v853, %v845
  %v858 = vmax.f32 %v854, %v855
  %v859 = vmax.f32 %v856, %v857
  %v860 = vmax.f32 %v858, %v859
  %v861 = vmax.f32 %v749, %v860
  %862 = vst [vmem:[#allocation4] sm:$0xff] %v861
  // Predicated region
  $region46: #{forward.5} parent=0 // pred_check
    %p863 = pneg %p36
  $region47: #{forward.5} parent=0 // pred_check_branch
    %865 = sbr.rel (%p863) target = $region49
  $region48: #{forward.5} parent=0 // pred_region
    %v866 = vld [vmem:[#allocation2] sm:$0xff]
    %v867 = vld [vmem:[#allocation2 + $0x8] sm:$0xff]
    %v868 = vpack.c.bf16 %v866, %v866
    %v869 = vpack.c.bf16 %v867, %v867
    %v870 = vld [vmem:[%s6] sm:$0xf]
    %v871 = vld [vmem:[%s6 + $0x4] sm:$0xf]
    %v872 = vld [vmem:[%s6 + $0x8] sm:$0xf]
    %v873 = vld [vmem:[%s6 + $0xc] sm:$0xf]
    %v874 = vld [vmem:[%s6 + $0x10] sm:$0xf]
    %v875 = vld [vmem:[%s6 + $0x14] sm:$0xf]
    %v876 = vld [vmem:[%s6 + $0x18] sm:$0xf]
    %v877 = vld [vmem:[%s6 + $0x1c] sm:$0xf]
    %v878 = vld [vmem:[%s6 + $0x20] sm:$0xf]
    %v879 = vld [vmem:[%s6 + $0x24] sm:$0xf]
    %v880 = vld [vmem:[%s6 + $0x28] sm:$0xf]
    %v881 = vld [vmem:[%s6 + $0x2c] sm:$0xf]
    %v882 = vld [vmem:[%s6 + $0x30] sm:$0xf]
    %v883 = vld [vmem:[%s6 + $0x34] sm:$0xf]
    %v884 = vld [vmem:[%s6 + $0x38] sm:$0xf]
    %v885 = vld [vmem:[%s6 + $0x3c] sm:$0xf]
    %v886 = vld [vmem:[%s6 + $0x40] sm:$0xf]
    %v887 = vld [vmem:[%s6 + $0x44] sm:$0xf]
    %v888 = vld [vmem:[%s6 + $0x48] sm:$0xf]
    %v889 = vld [vmem:[%s6 + $0x4c] sm:$0xf]
    %v890 = vld [vmem:[%s6 + $0x50] sm:$0xf]
    %v891 = vld [vmem:[%s6 + $0x54] sm:$0xf]
    %v892 = vld [vmem:[%s6 + $0x58] sm:$0xf]
    %v893 = vld [vmem:[%s6 + $0x5c] sm:$0xf]
    %v894 = vld [vmem:[%s6 + $0x60] sm:$0xf]
    %v895 = vld [vmem:[%s6 + $0x64] sm:$0xf]
    %v896 = vld [vmem:[%s6 + $0x68] sm:$0xf]
    %v897 = vld [vmem:[%s6 + $0x6c] sm:$0xf]
    %v898 = vld [vmem:[%s6 + $0x70] sm:$0xf]
    %v899 = vld [vmem:[%s6 + $0x74] sm:$0xf]
    %v900 = vld [vmem:[%s6 + $0x78] sm:$0xf]
    %v901 = vld [vmem:[%s6 + $0x7c] sm:$0xf]
    %v902 = vld [vmem:[#allocation3] sm:$0xff]
    %v903 = vpack.c.bf16 %v902, %v902
    %v904 = vld [vmem:[%s7] sm:$0xf]
    %v905 = vld [vmem:[%s7 + $0x4] sm:$0xf]
    %v906 = vld [vmem:[%s7 + $0x8] sm:$0xf]
    %v907 = vld [vmem:[%s7 + $0xc] sm:$0xf]
    %v908 = vld [vmem:[%s7 + $0x10] sm:$0xf]
    %v909 = vld [vmem:[%s7 + $0x14] sm:$0xf]
    %v910 = vld [vmem:[%s7 + $0x18] sm:$0xf]
    %v911 = vld [vmem:[%s7 + $0x1c] sm:$0xf]
    %v912 = vld [vmem:[%s7 + $0x20] sm:$0xf]
    %v913 = vld [vmem:[%s7 + $0x24] sm:$0xf]
    %v914 = vld [vmem:[%s7 + $0x28] sm:$0xf]
    %v915 = vld [vmem:[%s7 + $0x2c] sm:$0xf]
    %v916 = vld [vmem:[%s7 + $0x30] sm:$0xf]
    %v917 = vld [vmem:[%s7 + $0x34] sm:$0xf]
    %v918 = vld [vmem:[%s7 + $0x38] sm:$0xf]
    %v919 = vld [vmem:[%s7 + $0x3c] sm:$0xf]
    %v936 = vunpack.c.l.b16 %v904
    %v937 = vunpack.c.l.b16 %v905
    %v938 = vunpack.c.l.b16 %v906
    %v939 = vunpack.c.l.b16 %v907
    %v940 = vunpack.c.l.b16 %v908
    %v941 = vunpack.c.l.b16 %v909
    %v942 = vunpack.c.l.b16 %v910
    %v943 = vunpack.c.l.b16 %v911
    %v944 = vunpack.c.l.b16 %v912
    %v945 = vunpack.c.l.b16 %v913
    %v946 = vunpack.c.l.b16 %v914
    %v947 = vunpack.c.l.b16 %v915
    %v948 = vunpack.c.l.b16 %v916
    %v949 = vunpack.c.l.b16 %v917
    %v950 = vunpack.c.l.b16 %v918
    %v951 = vunpack.c.l.b16 %v919
    %v952 = vpack.c.b16 %v937, %v936
    %v953 = vpack.c.b16 %v939, %v938
    %v954 = vpack.c.b16 %v941, %v940
    %v955 = vpack.c.b16 %v943, %v942
    %v956 = vpack.c.b16 %v945, %v944
    %v957 = vpack.c.b16 %v947, %v946
    %v958 = vpack.c.b16 %v949, %v948
    %v959 = vpack.c.b16 %v951, %v950
    %968 = vmatprep.subr.bf16.mxu0 0
    %969 = vmatpush1.bf16.msra.mxu0 %v959
    %970 = vmatprep.subr.bf16.mxu0 0
    %971 = vmatpush1.bf16.msra.mxu0 %v958
    %972 = vmatprep.subr.bf16.mxu0 0
    %973 = vmatpush1.bf16.msra.mxu0 %v957
    %974 = vmatprep.subr.bf16.mxu0 0
    %975 = vmatpush1.bf16.msra.mxu0 %v956
    %976 = vmatprep.subr.bf16.mxu0 0
    %977 = vmatpush1.bf16.msra.mxu0 %v955
    %978 = vmatprep.subr.bf16.mxu0 0
    %979 = vmatpush1.bf16.msra.mxu0 %v954
    %980 = vmatprep.subr.bf16.mxu0 0
    %981 = vmatpush1.bf16.msra.mxu0 %v953
    %982 = vmatprep.subr.bf16.mxu0 0
    %983 = vmatpush1.bf16.msra.mxu0 %v952
    %984 = vmatprep.subr.bf16.mxu0 0
    %985 = vmatpush2.bf16.msra.mxu0 0
    %986 = vmatprep.subr.bf16.mxu0 0
    %987 = vmatpush2.bf16.msra.mxu0 0
    %988 = vmatprep.subr.bf16.mxu0 0
    %989 = vmatpush2.bf16.msra.mxu0 0
    %990 = vmatprep.subr.bf16.mxu0 0
    %991 = vmatpush2.bf16.msra.mxu0 0
    %992 = vmatprep.subr.bf16.mxu0 0
    %993 = vmatpush2.bf16.msra.mxu0 0
    %994 = vmatprep.subr.bf16.mxu0 0
    %995 = vmatpush2.bf16.msra.mxu0 0
    %996 = vmatprep.subr.bf16.mxu0 0
    %997 = vmatpush2.bf16.msra.mxu0 0
    %998 = vmatprep.subr.bf16.mxu0 0
    %999 = vmatpush2.bf16.msra.mxu0 0
    %1000 = vmatprep.mubr.bf16.mxu0 0
    %1001 = vmatmul.mubr.bf16.gmra.mxu0 %v903
    %v1002 = vpop.f32.mrf.mxu0
    %v1003 = vadd.f32 0.0, %v1002
    %v1004 = vpop.f32.mrf.mxu0
    %v1005 = vpop.f32.mrf.mxu0
    %v1006 = vpop.f32.mrf.mxu0
    %1007 = vdwg.mxu0
    %v1040 = vunpack.c.l.b16 %v870
    %v1041 = vunpack.c.l.b16 %v871
    %v1042 = vunpack.c.l.b16 %v872
    %v1043 = vunpack.c.l.b16 %v873
    %v1044 = vunpack.c.l.b16 %v874
    %v1045 = vunpack.c.l.b16 %v875
    %v1046 = vunpack.c.l.b16 %v876
    %v1047 = vunpack.c.l.b16 %v877
    %v1048 = vunpack.c.l.b16 %v878
    %v1049 = vunpack.c.l.b16 %v879
    %v1050 = vunpack.c.l.b16 %v880
    %v1051 = vunpack.c.l.b16 %v881
    %v1052 = vunpack.c.l.b16 %v882
    %v1053 = vunpack.c.l.b16 %v883
    %v1054 = vunpack.c.l.b16 %v884
    %v1055 = vunpack.c.l.b16 %v885
    %v1056 = vunpack.c.l.b16 %v886
    %v1057 = vunpack.c.l.b16 %v887
    %v1058 = vunpack.c.l.b16 %v888
    %v1059 = vunpack.c.l.b16 %v889
    %v1060 = vunpack.c.l.b16 %v890
    %v1061 = vunpack.c.l.b16 %v891
    %v1062 = vunpack.c.l.b16 %v892
    %v1063 = vunpack.c.l.b16 %v893
    %v1064 = vunpack.c.l.b16 %v894
    %v1065 = vunpack.c.l.b16 %v895
    %v1066 = vunpack.c.l.b16 %v896
    %v1067 = vunpack.c.l.b16 %v897
    %v1068 = vunpack.c.l.b16 %v898
    %v1069 = vunpack.c.l.b16 %v899
    %v1070 = vunpack.c.l.b16 %v900
    %v1071 = vunpack.c.l.b16 %v901
    %v1072 = vpack.c.b16 %v1041, %v1040
    %v1073 = vpack.c.b16 %v1043, %v1042
    %v1074 = vpack.c.b16 %v1045, %v1044
    %v1075 = vpack.c.b16 %v1047, %v1046
    %v1076 = vpack.c.b16 %v1049, %v1048
    %v1077 = vpack.c.b16 %v1051, %v1050
    %v1078 = vpack.c.b16 %v1053, %v1052
    %v1079 = vpack.c.b16 %v1055, %v1054
    %v1080 = vpack.c.b16 %v1057, %v1056
    %v1081 = vpack.c.b16 %v1059, %v1058
    %v1082 = vpack.c.b16 %v1061, %v1060
    %v1083 = vpack.c.b16 %v1063, %v1062
    %v1084 = vpack.c.b16 %v1065, %v1064
    %v1085 = vpack.c.b16 %v1067, %v1066
    %v1086 = vpack.c.b16 %v1069, %v1068
    %v1087 = vpack.c.b16 %v1071, %v1070
    %1104 = vmatprep.subr.bf16.mxu0 0
    %1105 = vmatpush1.bf16.msra.mxu0 %v1079
    %1106 = vmatprep.subr.bf16.mxu0 0
    %1107 = vmatpush1.bf16.msra.mxu0 %v1078
    %1108 = vmatprep.subr.bf16.mxu0 0
    %1109 = vmatpush1.bf16.msra.mxu0 %v1077
    %1110 = vmatprep.subr.bf16.mxu0 0
    %1111 = vmatpush1.bf16.msra.mxu0 %v1076
    %1112 = vmatprep.subr.bf16.mxu0 0
    %1113 = vmatpush1.bf16.msra.mxu0 %v1075
    %1114 = vmatprep.subr.bf16.mxu0 0
    %1115 = vmatpush1.bf16.msra.mxu0 %v1074
    %1116 = vmatprep.subr.bf16.mxu0 0
    %1117 = vmatpush1.bf16.msra.mxu0 %v1073
    %1118 = vmatprep.subr.bf16.mxu0 0
    %1119 = vmatpush1.bf16.msra.mxu0 %v1072
    %1120 = vmatprep.subr.bf16.mxu0 0
    %1121 = vmatpush2.bf16.msra.mxu0 %v1087
    %1122 = vmatprep.subr.bf16.mxu0 0
    %1123 = vmatpush2.bf16.msra.mxu0 %v1086
    %1124 = vmatprep.subr.bf16.mxu0 0
    %1125 = vmatpush2.bf16.msra.mxu0 %v1085
    %1126 = vmatprep.subr.bf16.mxu0 0
    %1127 = vmatpush2.bf16.msra.mxu0 %v1084
    %1128 = vmatprep.subr.bf16.mxu0 0
    %1129 = vmatpush2.bf16.msra.mxu0 %v1083
    %1130 = vmatprep.subr.bf16.mxu0 0
    %1131 = vmatpush2.bf16.msra.mxu0 %v1082
    %1132 = vmatprep.subr.bf16.mxu0 0
    %1133 = vmatpush2.bf16.msra.mxu0 %v1081
    %1134 = vmatprep.subr.bf16.mxu0 0
    %1135 = vmatpush2.bf16.msra.mxu0 %v1080
    %1136 = vmatprep.mubr.bf16.mxu0 %v869
    %1137 = vmatmul.mubr.bf16.gmra.mxu0 %v868
    %v1138 = vpop.f32.mrf.mxu0
    %v1139 = vadd.f32 %v1003, %v1138
    %v1140 = vpop.f32.mrf.mxu0
    %v1141 = vpop.f32.mrf.mxu0
    %v1142 = vpop.f32.mrf.mxu0
    %1143 = vdwg.mxu0
    %v1144 = vld [vmem:[#allocation4] sm:$0xff]
    %v1145 = vpack.c.bf16 %v1144, %v1144
    %v1146 = vld [vmem:[%s8] sm:$0xf]
    %v1147 = vld [vmem:[%s8 + $0x4] sm:$0xf]
    %v1148 = vld [vmem:[%s8 + $0x8] sm:$0xf]
    %v1149 = vld [vmem:[%s8 + $0xc] sm:$0xf]
    %v1150 = vld [vmem:[%s8 + $0x10] sm:$0xf]
    %v1151 = vld [vmem:[%s8 + $0x14] sm:$0xf]
    %v1152 = vld [vmem:[%s8 + $0x18] sm:$0xf]
    %v1153 = vld [vmem:[%s8 + $0x1c] sm:$0xf]
    %v1154 = vld [vmem:[%s8 + $0x20] sm:$0xf]
    %v1155 = vld [vmem:[%s8 + $0x24] sm:$0xf]
    %v1156 = vld [vmem:[%s8 + $0x28] sm:$0xf]
    %v1157 = vld [vmem:[%s8 + $0x2c] sm:$0xf]
    %v1158 = vld [vmem:[%s8 + $0x30] sm:$0xf]
    %v1159 = vld [vmem:[%s8 + $0x34] sm:$0xf]
    %v1160 = vld [vmem:[%s8 + $0x38] sm:$0xf]
    %v1161 = vld [vmem:[%s8 + $0x3c] sm:$0xf]
    %v1178 = vunpack.c.l.b16 %v1146
    %v1179 = vunpack.c.l.b16 %v1147
    %v1180 = vunpack.c.l.b16 %v1148
    %v1181 = vunpack.c.l.b16 %v1149
    %v1182 = vunpack.c.l.b16 %v1150
    %v1183 = vunpack.c.l.b16 %v1151
    %v1184 = vunpack.c.l.b16 %v1152
    %v1185 = vunpack.c.l.b16 %v1153
    %v1186 = vunpack.c.l.b16 %v1154
    %v1187 = vunpack.c.l.b16 %v1155
    %v1188 = vunpack.c.l.b16 %v1156
    %v1189 = vunpack.c.l.b16 %v1157
    %v1190 = vunpack.c.l.b16 %v1158
    %v1191 = vunpack.c.l.b16 %v1159
    %v1192 = vunpack.c.l.b16 %v1160
    %v1193 = vunpack.c.l.b16 %v1161
    %v1194 = vpack.c.b16 %v1179, %v1178
    %v1195 = vpack.c.b16 %v1181, %v1180
    %v1196 = vpack.c.b16 %v1183, %v1182
    %v1197 = vpack.c.b16 %v1185, %v1184
    %v1198 = vpack.c.b16 %v1187, %v1186
    %v1199 = vpack.c.b16 %v1189, %v1188
    %v1200 = vpack.c.b16 %v1191, %v1190
    %v1201 = vpack.c.b16 %v1193, %v1192
    %1210 = vmatprep.subr.bf16.mxu0 0
    %1211 = vmatpush1.bf16.msra.mxu0 %v1201
    %1212 = vmatprep.subr.bf16.mxu0 0
    %1213 = vmatpush1.bf16.msra.mxu0 %v1200
    %1214 = vmatprep.subr.bf16.mxu0 0
    %1215 = vmatpush1.bf16.msra.mxu0 %v1199
    %1216 = vmatprep.subr.bf16.mxu0 0
    %1217 = vmatpush1.bf16.msra.mxu0 %v1198
    %1218 = vmatprep.subr.bf16.mxu0 0
    %1219 = vmatpush1.bf16.msra.mxu0 %v1197
    %1220 = vmatprep.subr.bf16.mxu0 0
    %1221 = vmatpush1.bf16.msra.mxu0 %v1196
    %1222 = vmatprep.subr.bf16.mxu0 0
    %1223 = vmatpush1.bf16.msra.mxu0 %v1195
    %1224 = vmatprep.subr.bf16.mxu0 0
    %1225 = vmatpush1.bf16.msra.mxu0 %v1194
    %1226 = vmatprep.subr.bf16.mxu0 0
    %1227 = vmatpush2.bf16.msra.mxu0 0
    %1228 = vmatprep.subr.bf16.mxu0 0
    %1229 = vmatpush2.bf16.msra.mxu0 0
    %1230 = vmatprep.subr.bf16.mxu0 0
    %1231 = vmatpush2.bf16.msra.mxu0 0
    %1232 = vmatprep.subr.bf16.mxu0 0
    %1233 = vmatpush2.bf16.msra.mxu0 0
    %1234 = vmatprep.subr.bf16.mxu0 0
    %1235 = vmatpush2.bf16.msra.mxu0 0
    %1236 = vmatprep.subr.bf16.mxu0 0
    %1237 = vmatpush2.bf16.msra.mxu0 0
    %1238 = vmatprep.subr.bf16.mxu0 0
    %1239 = vmatpush2.bf16.msra.mxu0 0
    %1240 = vmatprep.subr.bf16.mxu0 0
    %1241 = vmatpush2.bf16.msra.mxu0 0
    %1242 = vmatprep.mubr.bf16.mxu0 0
    %1243 = vmatmul.mubr.bf16.gmra.mxu0 %v1145
    %v1244 = vpop.f32.mrf.mxu0
    %v1245 = vadd.f32 0.0, %v1244
    %v1246 = vpop.f32.mrf.mxu0
    %v1247 = vpop.f32.mrf.mxu0
    %v1248 = vpop.f32.mrf.mxu0
    %1249 = vdwg.mxu0
    %v1250 = vadd.f32 %v1139, %v1245
    %v1251 = vld [vmem:[%s9] sm:$0x1]
    %v1253 = vlaneseq
    %v1254 = vshrl.u32 %v1253, 7
    %v1255 = vsub.s32 0, %v1254
    %v1256 = vrot.slane %v1251, %v1255
    %v1258 = vadd.f32 %v1250, %v1256
    %1259 = vst [vmem:[%s10] sm:$0xff] %v1258
  $region49: #{forward.5} parent=0 // pred_fallthru
    _
  // Predicated region
  $region50: #{forward.5} parent=0 // pred_check
    _
  $region51: #{forward.5} parent=0 // pred_check_branch
    %1261 = sbr.rel (0) target = $region53
  $region52: #{forward.5} parent=0 // pred_region
    _
  $region53: #{forward.5} parent=0 // pred_fallthru
    _
  // Predicated region
  $region54: #{forward.5} parent=0 // pred_check
    _
  $region55: #{forward.5} parent=0 // pred_check_branch
    %1263 = sbr.rel (0) target = $region57
  $region56: #{forward.5} parent=0 // pred_region
    _
  $region57: #{forward.5} parent=0 // pred_fallthru
    _

// kernel: forward.4
$region0: #{forward.4}
  #allocation0 [shape = 'u32[]', space=smem, size = 0x4, offset = 0x4, fixed_abs, tag = 'smem constant byte address 0x4 - core index']
  #allocation1 [shape = 'u32[144,128]{1,0:T(1,128)}', space=vmem, size = 0x12000, scoped, tag = 'internal scratch']
  #allocation2 [shape = 'f32[16,256]{1,0:T(8,128)}', space=vmem, size = 0x4000, scoped, tag = 'scratch operand']
  #allocation3 [shape = 'f32[16,128]{1,0:T(8,128)}', space=vmem, size = 0x2000, scoped, tag = 'scratch operand']
  %s0 = inlined_call_operand.vmem [shape: bf16[16,8,1024], index: 0, kind: input, shape index: {}, may-alias: {0,1}]
  %s1 = inlined_call_operand.vmem [shape: bf16[16,8,1024], index: 1, kind: input, shape index: {}, may-alias: {0,1}]
  %s2 = inlined_call_operand.vmem [shape: bf16[256,512], index: 2, kind: input, shape index: {}]
  %s3 = inlined_call_operand.vmem [shape: f32[16,8,128], index: 3, kind: output, shape index: {0}]
  %s4 = inlined_call_operand.vmem [shape: f32[16,8,128], index: 4, kind: output, shape index: {1}]
  %5 = xla_tuple %s3, %s4
  %s6 = sld [smem:[#allocation0]]
  $region80: #{forward.4} parent=0
    _
  %s8 = ssub.s32 1, %s6
  %s9 = scalar_select 0, %s8, %s6
  $region1: #{forward.4} parent=0
    #allocation4 [shape = 'u8[131072]{0}', space=vmem, size = 0x20000, scoped, tag = 'input window, operand 0, single buffered']
    #allocation5 [shape = 'u8[131072]{0}', space=vmem, size = 0x20000, scoped, tag = 'input window, operand 1, single buffered']
    // Predicated region
    $region2: #{forward.4} parent=1 // pred_check
      _
    $region3: #{forward.4} parent=1 // pred_check_branch
      %11 = sbr.rel (0) target = $region5
    $region4: #{forward.4} parent=1 // pred_region
      // Predicated region
      $region6: #{forward.4} parent=4 // pred_check
        _
      $region7: #{forward.4} parent=4 // pred_check_branch
        %13 = sbr.rel (0) target = $region9
      $region8: #{forward.4} parent=4 // pred_region
        // Predicated region
        $region10: #{forward.4} parent=8 // pred_check
          _
        $region11: #{forward.4} parent=8 // pred_check_branch
          %15 = sbr.rel (0) target = $region13
        $region12: #{forward.4} parent=8 // pred_region
          loop: start=0, step=1, limit=1
          $region14: #{forward.4} parent=12 // loop_pre_header
            _
          $region15: #{forward.4} parent=12 // loop_header
            %s17 = sphi 0, %s21
            %p18 = scmp.ge.s32.totalorder %s17, 1
            %s22 = sphi %s0, %s0
            %s23 = sphi [#allocation4], [#allocation4]
          $region16: #{forward.4} parent=12 // loop_header_branch
            %20 = sbr.rel (%p18) target = $region20
          $region17: #{forward.4} parent=12 // loop_body
            %v24 = vld [vmem:[%s22] sm:$0xff]
            %25 = vst [vmem:[%s23] sm:$0xff] %v24
            %v26 = vld [vmem:[%s22 + $0x8] sm:$0xff]
            %27 = vst [vmem:[%s23 + $0x8] sm:$0xff] %v26
            %v28 = vld [vmem:[%s22 + $0x20] sm:$0xff]
            %29 = vst [vmem:[%s23 + $0x10] sm:$0xff] %v28
            %v30 = vld [vmem:[%s22 + $0x28] sm:$0xff]
            %31 = vst [vmem:[%s23 + $0x18] sm:$0xff] %v30
            %v32 = vld [vmem:[%s22 + $0x40] sm:$0xff]
            %33 = vst [vmem:[%s23 + $0x20] sm:$0xff] %v32
            %v34 = vld [vmem:[%s22 + $0x48] sm:$0xff]
            %35 = vst [vmem:[%s23 + $0x28] sm:$0xff] %v34
            %v36 = vld [vmem:[%s22 + $0x60] sm:$0xff]
            %37 = vst [vmem:[%s23 + $0x30] sm:$0xff] %v36
            %v38 = vld [vmem:[%s22 + $0x68] sm:$0xff]
            %39 = vst [vmem:[%s23 + $0x38] sm:$0xff] %v38
            %v40 = vld [vmem:[%s22 + $0x80] sm:$0xff]
            %41 = vst [vmem:[%s23 + $0x40] sm:$0xff] %v40
            %v42 = vld [vmem:[%s22 + $0x88] sm:$0xff]
            %43 = vst [vmem:[%s23 + $0x48] sm:$0xff] %v42
            %v44 = vld [vmem:[%s22 + $0xa0] sm:$0xff]
            %45 = vst [vmem:[%s23 + $0x50] sm:$0xff] %v44
            %v46 = vld [vmem:[%s22 + $0xa8] sm:$0xff]
            %47 = vst [vmem:[%s23 + $0x58] sm:$0xff] %v46
            %v48 = vld [vmem:[%s22 + $0xc0] sm:$0xff]
            %49 = vst [vmem:[%s23 + $0x60] sm:$0xff] %v48
            %v50 = vld [vmem:[%s22 + $0xc8] sm:$0xff]
            %51 = vst [vmem:[%s23 + $0x68] sm:$0xff] %v50
            %v52 = vld [vmem:[%s22 + $0xe0] sm:$0xff]
            %53 = vst [vmem:[%s23 + $0x70] sm:$0xff] %v52
            %v54 = vld [vmem:[%s22 + $0xe8] sm:$0xff]
            %55 = vst [vmem:[%s23 + $0x78] sm:$0xff] %v54
            %v56 = vld [vmem:[%s22 + $0x100] sm:$0xff]
            %57 = vst [vmem:[%s23 + $0x80] sm:$0xff] %v56
            %v58 = vld [vmem:[%s22 + $0x108] sm:$0xff]
            %59 = vst [vmem:[%s23 + $0x88] sm:$0xff] %v58
            %v60 = vld [vmem:[%s22 + $0x120] sm:$0xff]
            %61 = vst [vmem:[%s23 + $0x90] sm:$0xff] %v60
            %v62 = vld [vmem:[%s22 + $0x128] sm:$0xff]
            %63 = vst [vmem:[%s23 + $0x98] sm:$0xff] %v62
            %v64 = vld [vmem:[%s22 + $0x140] sm:$0xff]
            %65 = vst [vmem:[%s23 + $0xa0] sm:$0xff] %v64
            %v66 = vld [vmem:[%s22 + $0x148] sm:$0xff]
            %67 = vst [vmem:[%s23 + $0xa8] sm:$0xff] %v66
            %v68 = vld [vmem:[%s22 + $0x160] sm:$0xff]
            %69 = vst [vmem:[%s23 + $0xb0] sm:$0xff] %v68
            %v70 = vld [vmem:[%s22 + $0x168] sm:$0xff]
            %71 = vst [vmem:[%s23 + $0xb8] sm:$0xff] %v70
            %v72 = vld [vmem:[%s22 + $0x180] sm:$0xff]
            %73 = vst [vmem:[%s23 + $0xc0] sm:$0xff] %v72
            %v74 = vld [vmem:[%s22 + $0x188] sm:$0xff]
            %75 = vst [vmem:[%s23 + $0xc8] sm:$0xff] %v74
            %v76 = vld [vmem:[%s22 + $0x1a0] sm:$0xff]
            %77 = vst [vmem:[%s23 + $0xd0] sm:$0xff] %v76
            %v78 = vld [vmem:[%s22 + $0x1a8] sm:$0xff]
            %79 = vst [vmem:[%s23 + $0xd8] sm:$0xff] %v78
            %v80 = vld [vmem:[%s22 + $0x1c0] sm:$0xff]
            %81 = vst [vmem:[%s23 + $0xe0] sm:$0xff] %v80
            %v82 = vld [vmem:[%s22 + $0x1c8] sm:$0xff]
            %83 = vst [vmem:[%s23 + $0xe8] sm:$0xff] %v82
            %v84 = vld [vmem:[%s22 + $0x1e0] sm:$0xff]
            %85 = vst [vmem:[%s23 + $0xf0] sm:$0xff] %v84
            %v86 = vld [vmem:[%s22 + $0x1e8] sm:$0xff]
            %87 = vst [vmem:[%s23 + $0xf8] sm:$0xff] %v86
          $region18: #{forward.4} parent=12 // loop_footer
            %s21 = sadd.s32 1, %s17
          $region19: #{forward.4} parent=12 // loop_footer_branch
            %16 = sbr.rel target = $region15
          $region20: #{forward.4} parent=12 // loop_exit
            _
        $region13: #{forward.4} parent=8 // pred_fallthru
          _
        // Predicated region
        $region21: #{forward.4} parent=8 // pred_check
          _
        $region22: #{forward.4} parent=8 // pred_check_branch
          %89 = sbr.rel target = $region24
        $region23: #{forward.4} parent=8 // pred_region
          _
        $region24: #{forward.4} parent=8 // pred_fallthru
          _
      $region9: #{forward.4} parent=4 // pred_fallthru
        _
      %90 = vnop
    $region5: #{forward.4} parent=1 // pred_fallthru
      _
    // Predicated region
    $region25: #{forward.4} parent=1 // pred_check
      _
    $region26: #{forward.4} parent=1 // pred_check_branch
      %92 = sbr.rel (0) target = $region28
    $region27: #{forward.4} parent=1 // pred_region
      %s93 = ssub.s32 0, 0
      %s94 = smul.u32 16, %s93
      %s95 = smul.addr %s94, 8
      %s96 = sadd.s32 4, %s95
      %s97 = smul.addr %s96, 4
      %s98 = scalar_lea.vmem %s1, %s97
      // Predicated region
      $region29: #{forward.4} parent=27 // pred_check
        _
      $region30: #{forward.4} parent=27 // pred_check_branch
        %100 = sbr.rel (0) target = $region32
      $region31: #{forward.4} parent=27 // pred_region
        // Predicated region
        $region33: #{forward.4} parent=31 // pred_check
          _
        $region34: #{forward.4} parent=31 // pred_check_branch
          %102 = sbr.rel (0) target = $region36
        $region35: #{forward.4} parent=31 // pred_region
          loop: start=0, step=1, limit=1
          $region37: #{forward.4} parent=35 // loop_pre_header
            _
          $region38: #{forward.4} parent=35 // loop_header
            %s104 = sphi 0, %s108
            %p105 = scmp.ge.s32.totalorder %s104, 1
            %s109 = sphi %s98, %s98
            %s110 = sphi [#allocation5], [#allocation5]
          $region39: #{forward.4} parent=35 // loop_header_branch
            %107 = sbr.rel (%p105) target = $region43
          $region40: #{forward.4} parent=35 // loop_body
            %v111 = vld [vmem:[%s109] sm:$0xff]
            %112 = vst [vmem:[%s110] sm:$0xff] %v111
            %v113 = vld [vmem:[%s109 + $0x8] sm:$0xff]
            %114 = vst [vmem:[%s110 + $0x8] sm:$0xff] %v113
            %v115 = vld [vmem:[%s109 + $0x20] sm:$0xff]
            %116 = vst [vmem:[%s110 + $0x10] sm:$0xff] %v115
            %v117 = vld [vmem:[%s109 + $0x28] sm:$0xff]
            %118 = vst [vmem:[%s110 + $0x18] sm:$0xff] %v117
            %v119 = vld [vmem:[%s109 + $0x40] sm:$0xff]
            %120 = vst [vmem:[%s110 + $0x20] sm:$0xff] %v119
            %v121 = vld [vmem:[%s109 + $0x48] sm:$0xff]
            %122 = vst [vmem:[%s110 + $0x28] sm:$0xff] %v121
            %v123 = vld [vmem:[%s109 + $0x60] sm:$0xff]
            %124 = vst [vmem:[%s110 + $0x30] sm:$0xff] %v123
            %v125 = vld [vmem:[%s109 + $0x68] sm:$0xff]
            %126 = vst [vmem:[%s110 + $0x38] sm:$0xff] %v125
            %v127 = vld [vmem:[%s109 + $0x80] sm:$0xff]
            %128 = vst [vmem:[%s110 + $0x40] sm:$0xff] %v127
            %v129 = vld [vmem:[%s109 + $0x88] sm:$0xff]
            %130 = vst [vmem:[%s110 + $0x48] sm:$0xff] %v129
            %v131 = vld [vmem:[%s109 + $0xa0] sm:$0xff]
            %132 = vst [vmem:[%s110 + $0x50] sm:$0xff] %v131
            %v133 = vld [vmem:[%s109 + $0xa8] sm:$0xff]
            %134 = vst [vmem:[%s110 + $0x58] sm:$0xff] %v133
            %v135 = vld [vmem:[%s109 + $0xc0] sm:$0xff]
            %136 = vst [vmem:[%s110 + $0x60] sm:$0xff] %v135
            %v137 = vld [vmem:[%s109 + $0xc8] sm:$0xff]
            %138 = vst [vmem:[%s110 + $0x68] sm:$0xff] %v137
            %v139 = vld [vmem:[%s109 + $0xe0] sm:$0xff]
            %140 = vst [vmem:[%s110 + $0x70] sm:$0xff] %v139
            %v141 = vld [vmem:[%s109 + $0xe8] sm:$0xff]
            %142 = vst [vmem:[%s110 + $0x78] sm:$0xff] %v141
            %v143 = vld [vmem:[%s109 + $0x100] sm:$0xff]
            %144 = vst [vmem:[%s110 + $0x80] sm:$0xff] %v143
            %v145 = vld [vmem:[%s109 + $0x108] sm:$0xff]
            %146 = vst [vmem:[%s110 + $0x88] sm:$0xff] %v145
            %v147 = vld [vmem:[%s109 + $0x120] sm:$0xff]
            %148 = vst [vmem:[%s110 + $0x90] sm:$0xff] %v147
            %v149 = vld [vmem:[%s109 + $0x128] sm:$0xff]
            %150 = vst [vmem:[%s110 + $0x98] sm:$0xff] %v149
            %v151 = vld [vmem:[%s109 + $0x140] sm:$0xff]
            %152 = vst [vmem:[%s110 + $0xa0] sm:$0xff] %v151
            %v153 = vld [vmem:[%s109 + $0x148] sm:$0xff]
            %154 = vst [vmem:[%s110 + $0xa8] sm:$0xff] %v153
            %v155 = vld [vmem:[%s109 + $0x160] sm:$0xff]
            %156 = vst [vmem:[%s110 + $0xb0] sm:$0xff] %v155
            %v157 = vld [vmem:[%s109 + $0x168] sm:$0xff]
            %158 = vst [vmem:[%s110 + $0xb8] sm:$0xff] %v157
            %v159 = vld [vmem:[%s109 + $0x180] sm:$0xff]
            %160 = vst [vmem:[%s110 + $0xc0] sm:$0xff] %v159
            %v161 = vld [vmem:[%s109 + $0x188] sm:$0xff]
            %162 = vst [vmem:[%s110 + $0xc8] sm:$0xff] %v161
            %v163 = vld [vmem:[%s109 + $0x1a0] sm:$0xff]
            %164 = vst [vmem:[%s110 + $0xd0] sm:$0xff] %v163
            %v165 = vld [vmem:[%s109 + $0x1a8] sm:$0xff]
            %166 = vst [vmem:[%s110 + $0xd8] sm:$0xff] %v165
            %v167 = vld [vmem:[%s109 + $0x1c0] sm:$0xff]
            %168 = vst [vmem:[%s110 + $0xe0] sm:$0xff] %v167
            %v169 = vld [vmem:[%s109 + $0x1c8] sm:$0xff]
            %170 = vst [vmem:[%s110 + $0xe8] sm:$0xff] %v169
            %v171 = vld [vmem:[%s109 + $0x1e0] sm:$0xff]
            %172 = vst [vmem:[%s110 + $0xf0] sm:$0xff] %v171
            %v173 = vld [vmem:[%s109 + $0x1e8] sm:$0xff]
            %174 = vst [vmem:[%s110 + $0xf8] sm:$0xff] %v173
          $region41: #{forward.4} parent=35 // loop_footer
            %s108 = sadd.s32 1, %s104
          $region42: #{forward.4} parent=35 // loop_footer_branch
            %103 = sbr.rel target = $region38
          $region43: #{forward.4} parent=35 // loop_exit
            _
        $region36: #{forward.4} parent=31 // pred_fallthru
          _
        // Predicated region
        $region44: #{forward.4} parent=31 // pred_check
          _
        $region45: #{forward.4} parent=31 // pred_check_branch
          %176 = sbr.rel target = $region47
        $region46: #{forward.4} parent=31 // pred_region
          _
        $region47: #{forward.4} parent=31 // pred_fallthru
          _
      $region32: #{forward.4} parent=27 // pred_fallthru
        _
      %177 = vnop
    $region28: #{forward.4} parent=1 // pred_fallthru
      _
    // Predicated region
    $region48: #{forward.4} parent=1 // pred_check
      _
    $region49: #{forward.4} parent=1 // pred_check_branch
      %179 = sbr.rel (0) target = $region51
    $region50: #{forward.4} parent=1 // pred_region
      _
    $region51: #{forward.4} parent=1 // pred_fallthru
      _
    // Predicated region
    $region52: #{forward.4} parent=1 // pred_check
      _
    $region53: #{forward.4} parent=1 // pred_check_branch
      %181 = sbr.rel (0) target = $region55
    $region54: #{forward.4} parent=1 // pred_region
      _
    $region55: #{forward.4} parent=1 // pred_fallthru
      _
    // Predicated region
    $region56: #{forward.4} parent=1 // pred_check
      _
    $region57: #{forward.4} parent=1 // pred_check_branch
      %183 = sbr.rel (0) target = $region59
    $region58: #{forward.4} parent=1 // pred_region
      _
    $region59: #{forward.4} parent=1 // pred_fallthru
      _
    %s184 = ssub.s32 0, 0
    %s185 = smul.u32 16, %s184
    %p186 = scmp.lt.s32.totalorder %s185, 15
    %s187 = scalar_select %p186, %s185, 15
    %s188 = smul.addr %s187, 8
    %s189 = scalar_lea.vmem %s4, %s188
    %s190 = ssub.s32 0, 0
    %s191 = smul.u32 16, %s190
    %s192 = ssub.s32 0, 0
    %s193 = smul.u32 16, %s192
    %p194 = scmp.lt.s32.totalorder %s193, 15
    %s195 = scalar_select %p194, %s193, 15
    %s196 = smul.addr %s195, 8
    %s197 = scalar_lea.vmem %s4, %s196
    %s198 = ssub.s32 0, 0
    %s199 = smul.u32 16, %s198
    %p200 = scmp.eq.s32.totalorder 0, 0
    // Predicated region
    $region60: #{forward.4} parent=1 // pred_check
      %p201 = pneg %p200
    $region61: #{forward.4} parent=1 // pred_check_branch
      %203 = sbr.rel (%p201) target = $region63
    $region62: #{forward.4} parent=1 // pred_region
      %204 = vst [vmem:[#allocation2] sm:$0xff] 0.0
      %205 = vst [vmem:[#allocation2 + $0x8] sm:$0xff] 0.0
      %206 = vst [vmem:[#allocation2 + $0x10] sm:$0xff] 0.0
      %207 = vst [vmem:[#allocation2 + $0x18] sm:$0xff] 0.0
      %208 = vst [vmem:[#allocation3] sm:$0xff] 0.0
      %209 = vst [vmem:[#allocation3 + $0x8] sm:$0xff] 0.0
    $region63: #{forward.4} parent=1 // pred_fallthru
      _
    %v210 = vld [vmem:[%s2] sm:$0xff]
    %v211 = vld [vmem:[%s2 + $0x8] sm:$0xff]
    %v212 = vld [vmem:[%s2 + $0x10] sm:$0xff]
    %v213 = vld [vmem:[%s2 + $0x18] sm:$0xff]
    %v214 = vld [vmem:[%s2 + $0x20] sm:$0xff]
    %v215 = vld [vmem:[%s2 + $0x28] sm:$0xff]
    %v216 = vld [vmem:[%s2 + $0x30] sm:$0xff]
    %v217 = vld [vmem:[%s2 + $0x38] sm:$0xff]
    %v218 = vld [vmem:[%s2 + $0x40] sm:$0xff]
    %v219 = vld [vmem:[%s2 + $0x48] sm:$0xff]
    %v220 = vld [vmem:[%s2 + $0x50] sm:$0xff]
    %v221 = vld [vmem:[%s2 + $0x58] sm:$0xff]
    %v222 = vld [vmem:[%s2 + $0x60] sm:$0xff]
    %v223 = vld [vmem:[%s2 + $0x68] sm:$0xff]
    %v224 = vld [vmem:[%s2 + $0x70] sm:$0xff]
    %v225 = vld [vmem:[%s2 + $0x78] sm:$0xff]
    %v226 = vld [vmem:[%s2 + $0x80] sm:$0xff]
    %v227 = vld [vmem:[%s2 + $0x88] sm:$0xff]
    %v228 = vld [vmem:[%s2 + $0x90] sm:$0xff]
    %v229 = vld [vmem:[%s2 + $0x98] sm:$0xff]
    %v230 = vld [vmem:[%s2 + $0xa0] sm:$0xff]
    %v231 = vld [vmem:[%s2 + $0xa8] sm:$0xff]
    %v232 = vld [vmem:[%s2 + $0xb0] sm:$0xff]
    %v233 = vld [vmem:[%s2 + $0xb8] sm:$0xff]
    %v234 = vld [vmem:[%s2 + $0xc0] sm:$0xff]
    %v235 = vld [vmem:[%s2 + $0xc8] sm:$0xff]
    %v236 = vld [vmem:[%s2 + $0xd0] sm:$0xff]
    %v237 = vld [vmem:[%s2 + $0xd8] sm:$0xff]
    %v238 = vld [vmem:[%s2 + $0xe0] sm:$0xff]
    %v239 = vld [vmem:[%s2 + $0xe8] sm:$0xff]
    %v240 = vld [vmem:[%s2 + $0xf0] sm:$0xff]
    %v241 = vld [vmem:[%s2 + $0xf8] sm:$0xff]
    %v242 = vld [vmem:[%s2 + $0x100] sm:$0xff]
    %v243 = vld [vmem:[%s2 + $0x108] sm:$0xff]
    %v244 = vld [vmem:[%s2 + $0x110] sm:$0xff]
    %v245 = vld [vmem:[%s2 + $0x118] sm:$0xff]
    %v246 = vld [vmem:[%s2 + $0x120] sm:$0xff]
    %v247 = vld [vmem:[%s2 + $0x128] sm:$0xff]
    %v248 = vld [vmem:[%s2 + $0x130] sm:$0xff]
    %v249 = vld [vmem:[%s2 + $0x138] sm:$0xff]
    %v250 = vld [vmem:[%s2 + $0x140] sm:$0xff]
    %v251 = vld [vmem:[%s2 + $0x148] sm:$0xff]
    %v252 = vld [vmem:[%s2 + $0x150] sm:$0xff]
    %v253 = vld [vmem:[%s2 + $0x158] sm:$0xff]
    %v254 = vld [vmem:[%s2 + $0x160] sm:$0xff]
    %v255 = vld [vmem:[%s2 + $0x168] sm:$0xff]
    %v256 = vld [vmem:[%s2 + $0x170] sm:$0xff]
    %v257 = vld [vmem:[%s2 + $0x178] sm:$0xff]
    %v258 = vld [vmem:[%s2 + $0x180] sm:$0xff]
    %v259 = vld [vmem:[%s2 + $0x188] sm:$0xff]
    %v260 = vld [vmem:[%s2 + $0x190] sm:$0xff]
    %v261 = vld [vmem:[%s2 + $0x198] sm:$0xff]
    %v262 = vld [vmem:[%s2 + $0x1a0] sm:$0xff]
    %v263 = vld [vmem:[%s2 + $0x1a8] sm:$0xff]
    %v264 = vld [vmem:[%s2 + $0x1b0] sm:$0xff]
    %v265 = vld [vmem:[%s2 + $0x1b8] sm:$0xff]
    %v266 = vld [vmem:[%s2 + $0x1c0] sm:$0xff]
    %v267 = vld [vmem:[%s2 + $0x1c8] sm:$0xff]
    %v268 = vld [vmem:[%s2 + $0x1d0] sm:$0xff]
    %v269 = vld [vmem:[%s2 + $0x1d8] sm:$0xff]
    %v270 = vld [vmem:[%s2 + $0x1e0] sm:$0xff]
    %v271 = vld [vmem:[%s2 + $0x1e8] sm:$0xff]
    %v272 = vld [vmem:[%s2 + $0x1f0] sm:$0xff]
    %v273 = vld [vmem:[%s2 + $0x1f8] sm:$0xff]
    %v274 = vld [vmem:[#allocation4] sm:$0xff]
    %v275 = vld [vmem:[#allocation4 + $0x8] sm:$0xff]
    %v276 = vunpack.c.l.bf16 %v274
    %v277 = vunpack.c.h.bf16 %v274
    %v278 = vunpack.c.l.bf16 %v275
    %v279 = vunpack.c.h.bf16 %v275
    %s280 = scalar_lea.vmem [#allocation5], 240
    %v281 = vld [vmem:[%s280] sm:$0xff]
    %v282 = vld [vmem:[%s280 + $0x8] sm:$0xff]
    %v283 = vunpack.c.l.bf16 %v281
    %v284 = vunpack.c.h.bf16 %v281
    %v285 = vunpack.c.l.bf16 %v282
    %v286 = vunpack.c.h.bf16 %v282
    %v287 = vld [vmem:[#allocation2] sm:$0xff]
    %v288 = vld [vmem:[#allocation2 + $0x8] sm:$0xff]
    %v289 = vld [vmem:[#allocation2 + $0x10] sm:$0xff]
    %v290 = vld [vmem:[#allocation2 + $0x18] sm:$0xff]
    %v291 = vpack.c.bf16 %v289, %v287
    %v292 = vpack.c.bf16 %v290, %v288
    %v357 = vunpack.c.l.b16 %v210
    %v358 = vunpack.c.h.b16 %v210
    %v359 = vunpack.c.l.b16 %v211
    %v360 = vunpack.c.h.b16 %v211
    %v361 = vunpack.c.l.b16 %v212
    %v362 = vunpack.c.h.b16 %v212
    %v363 = vunpack.c.l.b16 %v213
    %v364 = vunpack.c.h.b16 %v213
    %v365 = vunpack.c.l.b16 %v214
    %v366 = vunpack.c.h.b16 %v214
    %v367 = vunpack.c.l.b16 %v215
    %v368 = vunpack.c.h.b16 %v215
    %v369 = vunpack.c.l.b16 %v216
    %v370 = vunpack.c.h.b16 %v216
    %v371 = vunpack.c.l.b16 %v217
    %v372 = vunpack.c.h.b16 %v217
    %v373 = vunpack.c.l.b16 %v218
    %v374 = vunpack.c.h.b16 %v218
    %v375 = vunpack.c.l.b16 %v219
    %v376 = vunpack.c.h.b16 %v219
    %v377 = vunpack.c.l.b16 %v220
    %v378 = vunpack.c.h.b16 %v220
    %v379 = vunpack.c.l.b16 %v221
    %v380 = vunpack.c.h.b16 %v221
    %v381 = vunpack.c.l.b16 %v222
    %v382 = vunpack.c.h.b16 %v222
    %v383 = vunpack.c.l.b16 %v223
    %v384 = vunpack.c.h.b16 %v223
    %v385 = vunpack.c.l.b16 %v224
    %v386 = vunpack.c.h.b16 %v224
    %v387 = vunpack.c.l.b16 %v225
    %v388 = vunpack.c.h.b16 %v225
    %v389 = vunpack.c.l.b16 %v226
    %v390 = vunpack.c.h.b16 %v226
    %v391 = vunpack.c.l.b16 %v227
    %v392 = vunpack.c.h.b16 %v227
    %v393 = vunpack.c.l.b16 %v228
    %v394 = vunpack.c.h.b16 %v228
    %v395 = vunpack.c.l.b16 %v229
    %v396 = vunpack.c.h.b16 %v229
    %v397 = vunpack.c.l.b16 %v230
    %v398 = vunpack.c.h.b16 %v230
    %v399 = vunpack.c.l.b16 %v231
    %v400 = vunpack.c.h.b16 %v231
    %v401 = vunpack.c.l.b16 %v232
    %v402 = vunpack.c.h.b16 %v232
    %v403 = vunpack.c.l.b16 %v233
    %v404 = vunpack.c.h.b16 %v233
    %v405 = vunpack.c.l.b16 %v234
    %v406 = vunpack.c.h.b16 %v234
    %v407 = vunpack.c.l.b16 %v235
    %v408 = vunpack.c.h.b16 %v235
    %v409 = vunpack.c.l.b16 %v236
    %v410 = vunpack.c.h.b16 %v236
    %v411 = vunpack.c.l.b16 %v237
    %v412 = vunpack.c.h.b16 %v237
    %v413 = vunpack.c.l.b16 %v238
    %v414 = vunpack.c.h.b16 %v238
    %v415 = vunpack.c.l.b16 %v239
    %v416 = vunpack.c.h.b16 %v239
    %v417 = vunpack.c.l.b16 %v240
    %v418 = vunpack.c.h.b16 %v240
    %v419 = vunpack.c.l.b16 %v241
    %v420 = vunpack.c.h.b16 %v241
    %v421 = vunpack.c.l.b16 %v242
    %v422 = vunpack.c.h.b16 %v242
    %v423 = vunpack.c.l.b16 %v243
    %v424 = vunpack.c.h.b16 %v243
    %v425 = vunpack.c.l.b16 %v244
    %v426 = vunpack.c.h.b16 %v244
    %v427 = vunpack.c.l.b16 %v245
    %v428 = vunpack.c.h.b16 %v245
    %v429 = vunpack.c.l.b16 %v246
    %v430 = vunpack.c.h.b16 %v246
    %v431 = vunpack.c.l.b16 %v247
    %v432 = vunpack.c.h.b16 %v247
    %v433 = vunpack.c.l.b16 %v248
    %v434 = vunpack.c.h.b16 %v248
    %v435 = vunpack.c.l.b16 %v249
    %v436 = vunpack.c.h.b16 %v249
    %v437 = vunpack.c.l.b16 %v250
    %v438 = vunpack.c.h.b16 %v250
    %v439 = vunpack.c.l.b16 %v251
    %v440 = vunpack.c.h.b16 %v251
    %v441 = vunpack.c.l.b16 %v252
    %v442 = vunpack.c.h.b16 %v252
    %v443 = vunpack.c.l.b16 %v253
    %v444 = vunpack.c.h.b16 %v253
    %v445 = vunpack.c.l.b16 %v254
    %v446 = vunpack.c.h.b16 %v254
    %v447 = vunpack.c.l.b16 %v255
    %v448 = vunpack.c.h.b16 %v255
    %v449 = vunpack.c.l.b16 %v256
    %v450 = vunpack.c.h.b16 %v256
    %v451 = vunpack.c.l.b16 %v257
    %v452 = vunpack.c.h.b16 %v257
    %v453 = vunpack.c.l.b16 %v258
    %v454 = vunpack.c.h.b16 %v258
    %v455 = vunpack.c.l.b16 %v259
    %v456 = vunpack.c.h.b16 %v259
    %v457 = vunpack.c.l.b16 %v260
    %v458 = vunpack.c.h.b16 %v260
    %v459 = vunpack.c.l.b16 %v261
    %v460 = vunpack.c.h.b16 %v261
    %v461 = vunpack.c.l.b16 %v262
    %v462 = vunpack.c.h.b16 %v262
    %v463 = vunpack.c.l.b16 %v263
    %v464 = vunpack.c.h.b16 %v263
    %v465 = vunpack.c.l.b16 %v264
    %v466 = vunpack.c.h.b16 %v264
    %v467 = vunpack.c.l.b16 %v265
    %v468 = vunpack.c.h.b16 %v265
    %v469 = vunpack.c.l.b16 %v266
    %v470 = vunpack.c.h.b16 %v266
    %v471 = vunpack.c.l.b16 %v267
    %v472 = vunpack.c.h.b16 %v267
    %v473 = vunpack.c.l.b16 %v268
    %v474 = vunpack.c.h.b16 %v268
    %v475 = vunpack.c.l.b16 %v269
    %v476 = vunpack.c.h.b16 %v269
    %v477 = vunpack.c.l.b16 %v270
    %v478 = vunpack.c.h.b16 %v270
    %v479 = vunpack.c.l.b16 %v271
    %v480 = vunpack.c.h.b16 %v271
    %v481 = vunpack.c.l.b16 %v272
    %v482 = vunpack.c.h.b16 %v272
    %v483 = vunpack.c.l.b16 %v273
    %v484 = vunpack.c.h.b16 %v273
    %v485 = vpack.c.b16 %v361, %v357
    %v486 = vpack.c.b16 %v362, %v358
    %v487 = vpack.c.b16 %v363, %v359
    %v488 = vpack.c.b16 %v364, %v360
    %v489 = vpack.c.b16 %v369, %v365
    %v490 = vpack.c.b16 %v370, %v366
    %v491 = vpack.c.b16 %v371, %v367
    %v492 = vpack.c.b16 %v372, %v368
    %v493 = vpack.c.b16 %v377, %v373
    %v494 = vpack.c.b16 %v378, %v374
    %v495 = vpack.c.b16 %v379, %v375
    %v496 = vpack.c.b16 %v380, %v376
    %v497 = vpack.c.b16 %v385, %v381
    %v498 = vpack.c.b16 %v386, %v382
    %v499 = vpack.c.b16 %v387, %v383
    %v500 = vpack.c.b16 %v388, %v384
    %v501 = vpack.c.b16 %v393, %v389
    %v502 = vpack.c.b16 %v394, %v390
    %v503 = vpack.c.b16 %v395, %v391
    %v504 = vpack.c.b16 %v396, %v392
    %v505 = vpack.c.b16 %v401, %v397
    %v506 = vpack.c.b16 %v402, %v398
    %v507 = vpack.c.b16 %v403, %v399
    %v508 = vpack.c.b16 %v404, %v400
    %v509 = vpack.c.b16 %v409, %v405
    %v510 = vpack.c.b16 %v410, %v406
    %v511 = vpack.c.b16 %v411, %v407
    %v512 = vpack.c.b16 %v412, %v408
    %v513 = vpack.c.b16 %v417, %v413
    %v514 = vpack.c.b16 %v418, %v414
    %v515 = vpack.c.b16 %v419, %v415
    %v516 = vpack.c.b16 %v420, %v416
    %v517 = vpack.c.b16 %v425, %v421
    %v518 = vpack.c.b16 %v426, %v422
    %v519 = vpack.c.b16 %v427, %v423
    %v520 = vpack.c.b16 %v428, %v424
    %v521 = vpack.c.b16 %v433, %v429
    %v522 = vpack.c.b16 %v434, %v430
    %v523 = vpack.c.b16 %v435, %v431
    %v524 = vpack.c.b16 %v436, %v432
    %v525 = vpack.c.b16 %v441, %v437
    %v526 = vpack.c.b16 %v442, %v438
    %v527 = vpack.c.b16 %v443, %v439
    %v528 = vpack.c.b16 %v444, %v440
    %v529 = vpack.c.b16 %v449, %v445
    %v530 = vpack.c.b16 %v450, %v446
    %v531 = vpack.c.b16 %v451, %v447
    %v532 = vpack.c.b16 %v452, %v448
    %v533 = vpack.c.b16 %v457, %v453
    %v534 = vpack.c.b16 %v458, %v454
    %v535 = vpack.c.b16 %v459, %v455
    %v536 = vpack.c.b16 %v460, %v456
    %v537 = vpack.c.b16 %v465, %v461
    %v538 = vpack.c.b16 %v466, %v462
    %v539 = vpack.c.b16 %v467, %v463
    %v540 = vpack.c.b16 %v468, %v464
    %v541 = vpack.c.b16 %v473, %v469
    %v542 = vpack.c.b16 %v474, %v470
    %v543 = vpack.c.b16 %v475, %v471
    %v544 = vpack.c.b16 %v476, %v472
    %v545 = vpack.c.b16 %v481, %v477
    %v546 = vpack.c.b16 %v482, %v478
    %v547 = vpack.c.b16 %v483, %v479
    %v548 = vpack.c.b16 %v484, %v480
    %613 = vmatprep.subr.bf16.mxu0 %v514
    %614 = vmatpush1.bf16.msra.mxu0 %v513
    %615 = vmatprep.subr.bf16.mxu0 %v510
    %616 = vmatpush1.bf16.msra.mxu0 %v509
    %617 = vmatprep.subr.bf16.mxu0 %v506
    %618 = vmatpush1.bf16.msra.mxu0 %v505
    %619 = vmatprep.subr.bf16.mxu0 %v502
    %620 = vmatpush1.bf16.msra.mxu0 %v501
    %621 = vmatprep.subr.bf16.mxu0 %v498
    %622 = vmatpush1.bf16.msra.mxu0 %v497
    %623 = vmatprep.subr.bf16.mxu0 %v494
    %624 = vmatpush1.bf16.msra.mxu0 %v493
    %625 = vmatprep.subr.bf16.mxu0 %v490
    %626 = vmatpush1.bf16.msra.mxu0 %v489
    %627 = vmatprep.subr.bf16.mxu0 %v486
    %628 = vmatpush1.bf16.msra.mxu0 %v485
    %629 = vmatprep.subr.bf16.mxu0 %v546
    %630 = vmatpush2.bf16.msra.mxu0 %v545
    %631 = vmatprep.subr.bf16.mxu0 %v542
    %632 = vmatpush2.bf16.msra.mxu0 %v541
    %633 = vmatprep.subr.bf16.mxu0 %v538
    %634 = vmatpush2.bf16.msra.mxu0 %v537
    %635 = vmatprep.subr.bf16.mxu0 %v534
    %636 = vmatpush2.bf16.msra.mxu0 %v533
    %637 = vmatprep.subr.bf16.mxu0 %v530
    %638 = vmatpush2.bf16.msra.mxu0 %v529
    %639 = vmatprep.subr.bf16.mxu0 %v526
    %640 = vmatpush2.bf16.msra.mxu0 %v525
    %641 = vmatprep.subr.bf16.mxu0 %v522
    %642 = vmatpush2.bf16.msra.mxu0 %v521
    %643 = vmatprep.subr.bf16.mxu0 %v518
    %644 = vmatpush2.bf16.msra.mxu0 %v517
    %645 = vmatprep.mubr.bf16.mxu0 %v292
    %646 = vmatmul.mubr.bf16.gmra.mxu0 %v291
    %v647 = vpop.f32.mrf.mxu0
    %v648 = vadd.f32 0.0, %v647
    %v649 = vpop.f32.mrf.mxu0
    %v650 = vadd.f32 0.0, %v649
    %v651 = vpop.f32.mrf.mxu0
    %v652 = vadd.f32 0.0, %v651
    %v653 = vpop.f32.mrf.mxu0
    %v654 = vadd.f32 0.0, %v653
    %655 = vdwg.mxu0
    %656 = vmatprep.subr.bf16.mxu0 %v516
    %657 = vmatpush1.bf16.msra.mxu0 %v515
    %658 = vmatprep.subr.bf16.mxu0 %v512
    %659 = vmatpush1.bf16.msra.mxu0 %v511
    %660 = vmatprep.subr.bf16.mxu0 %v508
    %661 = vmatpush1.bf16.msra.mxu0 %v507
    %662 = vmatprep.subr.bf16.mxu0 %v504
    %663 = vmatpush1.bf16.msra.mxu0 %v503
    %664 = vmatprep.subr.bf16.mxu0 %v500
    %665 = vmatpush1.bf16.msra.mxu0 %v499
    %666 = vmatprep.subr.bf16.mxu0 %v496
    %667 = vmatpush1.bf16.msra.mxu0 %v495
    %668 = vmatprep.subr.bf16.mxu0 %v492
    %669 = vmatpush1.bf16.msra.mxu0 %v491
    %670 = vmatprep.subr.bf16.mxu0 %v488
    %671 = vmatpush1.bf16.msra.mxu0 %v487
    %672 = vmatprep.subr.bf16.mxu0 %v548
    %673 = vmatpush2.bf16.msra.mxu0 %v547
    %674 = vmatprep.subr.bf16.mxu0 %v544
    %675 = vmatpush2.bf16.msra.mxu0 %v543
    %676 = vmatprep.subr.bf16.mxu0 %v540
    %677 = vmatpush2.bf16.msra.mxu0 %v539
    %678 = vmatprep.subr.bf16.mxu0 %v536
    %679 = vmatpush2.bf16.msra.mxu0 %v535
    %680 = vmatprep.subr.bf16.mxu0 %v532
    %681 = vmatpush2.bf16.msra.mxu0 %v531
    %682 = vmatprep.subr.bf16.mxu0 %v528
    %683 = vmatpush2.bf16.msra.mxu0 %v527
    %684 = vmatprep.subr.bf16.mxu0 %v524
    %685 = vmatpush2.bf16.msra.mxu0 %v523
    %686 = vmatprep.subr.bf16.mxu0 %v520
    %687 = vmatpush2.bf16.msra.mxu0 %v519
    %688 = vmatprep.mubr.bf16.mxu0 %v292
    %689 = vmatmul.mubr.bf16.gmra.mxu0 %v291
    %v690 = vpop.f32.mrf.mxu0
    %v691 = vadd.f32 0.0, %v690
    %v692 = vpop.f32.mrf.mxu0
    %v693 = vadd.f32 0.0, %v692
    %v694 = vpop.f32.mrf.mxu0
    %v695 = vadd.f32 0.0, %v694
    %v696 = vpop.f32.mrf.mxu0
    %v697 = vadd.f32 0.0, %v696
    %698 = vdwg.mxu0
    %v699 = vadd.f32 %v276, %v648
    %v700 = vadd.f32 %v277, %v650
    %v701 = vadd.f32 %v278, %v691
    %v702 = vadd.f32 %v279, %v693
    %v703 = vadd.f32 %v283, %v652
    %v704 = vadd.f32 %v284, %v654
    %v705 = vadd.f32 %v285, %v695
    %v706 = vadd.f32 %v286, %v697
    %v707 = vmul.f32 %v699, 0.5
    %v708 = vmul.f32 %v703, 0.5
    %v709 = vtanh.pop %v707
    %v710 = vtanh.pop %v708
    %v711 = vadd.f32 %v709, 1.0
    %v712 = vadd.f32 %v710, 1.0
    %v713 = vmul.f32 %v711, 0.5
    %v714 = vmul.f32 %v712, 0.5
    %v715 = vmul.f32 %v700, 0.5
    %v716 = vmul.f32 %v704, 0.5
    %v717 = vtanh.pop %v715
    %v718 = vtanh.pop %v716
    %v719 = vadd.f32 %v717, 1.0
    %v720 = vadd.f32 %v718, 1.0
    %v721 = vmul.f32 %v719, 0.5
    %v722 = vmul.f32 %v720, 0.5
    %v723 = vtanh.pop %v701
    %v724 = vtanh.pop %v705
    %v725 = vmul.f32 %v702, 0.5
    %v726 = vmul.f32 %v706, 0.5
    %v727 = vtanh.pop %v725
    %v728 = vtanh.pop %v726
    %v729 = vadd.f32 %v727, 1.0
    %v730 = vadd.f32 %v728, 1.0
    %v731 = vmul.f32 %v729, 0.5
    %v732 = vmul.f32 %v730, 0.5
    %v733 = vld [vmem:[#allocation3] sm:$0xff]
    %v734 = vld [vmem:[#allocation3 + $0x8] sm:$0xff]
    %v735 = vmul.f32 %v721, %v733
    %v736 = vmul.f32 %v722, %v734
    %v737 = vmul.f32 %v713, %v723
    %v738 = vmul.f32 %v714, %v724
    %v739 = vadd.f32 %v735, %v737
    %v740 = vadd.f32 %v736, %v738
    %v741 = vtanh.pop %v739
    %v742 = vtanh.pop %v740
    %v743 = vmul.f32 %v731, %v741
    %v744 = vmul.f32 %v732, %v742
    %745 = vst [vmem:[#allocation3] sm:$0xff] %v739
    %746 = vst [vmem:[#allocation3 + $0x8] sm:$0xff] %v740
    %747 = vst [vmem:[%s3] sm:$0xff] %v743
    %s748 = scalar_lea.vmem %s197, 120
    %749 = vst [vmem:[%s748] sm:$0xff] %v744
    %750 = vst [vmem:[#allocation2] sm:$0xff] %v743
    %751 = vst [vmem:[#allocation2 + $0x18] sm:$0xff] %v744
    %s752 = scalar_lea.vmem [#allocation4], 16
    %v753 = vld [vmem:[%s752] sm:$0xff]
    %v754 = vld [vmem:[%s752 + $0x8] sm:$0xff]
    %v755 = vunpack.c.l.bf16 %v753
    %v756 = vunpack.c.h.bf16 %v753
    %v757 = vunpack.c.l.bf16 %v754
    %v758 = vunpack.c.h.bf16 %v754
    %s759 = scalar_lea.vmem [#allocation5], 224
    %v760 = vld [vmem:[%s759] sm:$0xff]
    %v761 = vld [vmem:[%s759 + $0x8] sm:$0xff]
    %v762 = vunpack.c.l.bf16 %v760
    %v763 = vunpack.c.h.bf16 %v760
    %v764 = vunpack.c.l.bf16 %v761
    %v765 = vunpack.c.h.bf16 %v761
    %v766 = vld [vmem:[#allocation2] sm:$0xff]
    %v767 = vld [vmem:[#allocation2 + $0x8] sm:$0xff]
    %v768 = vld [vmem:[#allocation2 + $0x10] sm:$0xff]
    %v769 = vld [vmem:[#allocation2 + $0x18] sm:$0xff]
    %v770 = vpack.c.bf16 %v768, %v766
    %v771 = vpack.c.bf16 %v769, %v767
    %772 = vmatprep.subr.bf16.mxu0 %v514
    %773 = vmatpush1.bf16.msra.mxu0 %v513
    %774 = vmatprep.subr.bf16.mxu0 %v510
    %775 = vmatpush1.bf16.msra.mxu0 %v509
    %776 = vmatprep.subr.bf16.mxu0 %v506
    %777 = vmatpush1.bf16.msra.mxu0 %v505
    %778 = vmatprep.subr.bf16.mxu0 %v502
    %779 = vmatpush1.bf16.msra.mxu0 %v501
    %780 = vmatprep.subr.bf16.mxu0 %v498
    %781 = vmatpush1.bf16.msra.mxu0 %v497
    %782 = vmatprep.subr.bf16.mxu0 %v494
    %783 = vmatpush1.bf16.msra.mxu0 %v493
    %784 = vmatprep.subr.bf16.mxu0 %v490
    %785 = vmatpush1.bf16.msra.mxu0 %v489
    %786 = vmatprep.subr.bf16.mxu0 %v486
    %787 = vmatpush1.bf16.msra.mxu0 %v485
    %788 = vmatprep.subr.bf16.mxu0 %v546
    %789 = vmatpush2.bf16.msra.mxu0 %v545
    %790 = vmatprep.subr.bf16.mxu0 %v542
    %791 = vmatpush2.bf16.msra.mxu0 %v541
    %792 = vmatprep.subr.bf16.mxu0 %v538
    %793 = vmatpush2.bf16.msra.mxu0 %v537
    %794 = vmatprep.subr.bf16.mxu0 %v534
    %795 = vmatpush2.bf16.msra.mxu0 %v533
    %796 = vmatprep.subr.bf16.mxu0 %v530
    %797 = vmatpush2.bf16.msra.mxu0 %v529
    %798 = vmatprep.subr.bf16.mxu0 %v526
    %799 = vmatpush2.bf16.msra.mxu0 %v525
    %800 = vmatprep.subr.bf16.mxu0 %v522
    %801 = vmatpush2.bf16.msra.mxu0 %v521
    %802 = vmatprep.subr.bf16.mxu0 %v518
    %803 = vmatpush2.bf16.msra.mxu0 %v517
    %804 = vmatprep.mubr.bf16.mxu0 %v771
    %805 = vmatmul.mubr.bf16.gmra.mxu0 %v770
    %v806 = vpop.f32.mrf.mxu0
    %v807 = vadd.f32 0.0, %v806
    %v808 = vpop.f32.mrf.mxu0
    %v809 = vadd.f32 0.0, %v808
    %v810 = vpop.f32.mrf.mxu0
    %v811 = vadd.f32 0.0, %v810
    %v812 = vpop.f32.mrf.mxu0
    %v813 = vadd.f32 0.0, %v812
    %814 = vdwg.mxu0
    %815 = vmatprep.subr.bf16.mxu0 %v516
    %816 = vmatpush1.bf16.msra.mxu0 %v515
    %817 = vmatprep.subr.bf16.mxu0 %v512
    %818 = vmatpush1.bf16.msra.mxu0 %v511
    %819 = vmatprep.subr.bf16.mxu0 %v508
    %820 = vmatpush1.bf16.msra.mxu0 %v507
    %821 = vmatprep.subr.bf16.mxu0 %v504
    %822 = vmatpush1.bf16.msra.mxu0 %v503
    %823 = vmatprep.subr.bf16.mxu0 %v500
    %824 = vmatpush1.bf16.msra.mxu0 %v499
    %825 = vmatprep.subr.bf16.mxu0 %v496
    %826 = vmatpush1.bf16.msra.mxu0 %v495
    %827 = vmatprep.subr.bf16.mxu0 %v492
    %828 = vmatpush1.bf16.msra.mxu0 %v491
    %829 = vmatprep.subr.bf16.mxu0 %v488
    %830 = vmatpush1.bf16.msra.mxu0 %v487
    %831 = vmatprep.subr.bf16.mxu0 %v548
    %832 = vmatpush2.bf16.msra.mxu0 %v547
    %833 = vmatprep.subr.bf16.mxu0 %v544
    %834 = vmatpush2.bf16.msra.mxu0 %v543
    %835 = vmatprep.subr.bf16.mxu0 %v540
    %836 = vmatpush2.bf16.msra.mxu0 %v539
    %837 = vmatprep.subr.bf16.mxu0 %v536
    %838 = vmatpush2.bf16.msra.mxu0 %v535
    %839 = vmatprep.subr.bf16.mxu0 %v532
    %840 = vmatpush2.bf16.msra.mxu0 %v531
    %841 = vmatprep.subr.bf16.mxu0 %v528
    %842 = vmatpush2.bf16.msra.mxu0 %v527
    %843 = vmatprep.subr.bf16.mxu0 %v524
    %844 = vmatpush2.bf16.msra.mxu0 %v523
    %845 = vmatprep.subr.bf16.mxu0 %v520
    %846 = vmatpush2.bf16.msra.mxu0 %v519
    %847 = vmatprep.mubr.bf16.mxu0 %v771
    %848 = vmatmul.mubr.bf16.gmra.mxu0 %v770
    %v849 = vpop.f32.mrf.mxu0
    %v850 = vadd.f32 0.0, %v849
    %v851 = vpop.f32.mrf.mxu0
    %v852 = vadd.f32 0.0, %v851
    %v853 = vpop.f32.mrf.mxu0
    %v854 = vadd.f32 0.0, %v853
    %v855 = vpop.f32.mrf.mxu0
    %v856 = vadd.f32 0.0, %v855
    %857 = vdwg.mxu0
    %v858 = vadd.f32 %v755, %v807
    %v859 = vadd.f32 %v756, %v809
    %v860 = vadd.f32 %v757, %v850
    %v861 = vadd.f32 %v758, %v852
    %v862 = vadd.f32 %v762, %v811
    %v863 = vadd.f32 %v763, %v813
    %v864 = vadd.f32 %v764, %v854
    %v865 = vadd.f32 %v765, %v856
    %v866 = vmul.f32 %v858, 0.5
    %v867 = vmul.f32 %v862, 0.5
    %v868 = vtanh.pop %v866
    %v869 = vtanh.pop %v867
    %v870 = vadd.f32 %v868, 1.0
    %v871 = vadd.f32 %v869, 1.0
    %v872 = vmul.f32 %v870, 0.5
    %v873 = vmul.f32 %v871, 0.5
    %v874 = vmul.f32 %v859, 0.5
    %v875 = vmul.f32 %v863, 0.5
    %v876 = vtanh.pop %v874
    %v877 = vtanh.pop %v875
    %v878 = vadd.f32 %v876, 1.0
    %v879 = vadd.f32 %v877, 1.0
    %v880 = vmul.f32 %v878, 0.5
    %v881 = vmul.f32 %v879, 0.5
    %v882 = vtanh.pop %v860
    %v883 = vtanh.pop %v864
    %v884 = vmul.f32 %v861, 0.5
    %v885 = vmul.f32 %v865, 0.5
    %v886 = vtanh.pop %v884
    %v887 = vtanh.pop %v885
    %v888 = vadd.f32 %v886, 1.0
    %v889 = vadd.f32 %v887, 1.0
    %v890 = vmul.f32 %v888, 0.5
    %v891 = vmul.f32 %v889, 0.5
    %v892 = vld [vmem:[#allocation3] sm:$0xff]
    %v893 = vld [vmem:[#allocation3 + $0x8] sm:$0xff]
    %v894 = vmul.f32 %v880, %v892
    %v895 = vmul.f32 %v881, %v893
    %v896 = vmul.f32 %v872, %v882
    %v897 = vmul.f32 %v873, %v883
    %v898 = vadd.f32 %v894, %v896
    %v899 = vadd.f32 %v895, %v897
    %v900 = vtanh.pop %v898
    %v901 = vtanh.pop %v899
    %v902 = vmul.f32 %v890, %v900
    %v903 = vmul.f32 %v891, %v901
    %904 = vst [vmem:[#allocation3] sm:$0xff] %v898
    %905 = vst [vmem:[#allocation3 + $0x8] sm:$0xff] %v899
    %s906 = scalar_lea.vmem %s3, 8
    %907 = vst [vmem:[%s906] sm:$0xff] %v902
    %s908 = scalar_lea.vmem %s197, 112
    %909 = vst [vmem:[%s908] sm:$0xff] %v903
    %910 = vst [vmem:[#allocation2] sm:$0xff] %v902
    %911 = vst [vmem:[#allocation2 + $0x18] sm:$0xff] %v903
    %s912 = scalar_lea.vmem [#allocation4], 32
    %v913 = vld [vmem:[%s912] sm:$0xff]
    %v914 = vld [vmem:[%s912 + $0x8] sm:$0xff]
    %v915 = vunpack.c.l.bf16 %v913
    %v916 = vunpack.c.h.bf16 %v913
    %v917 = vunpack.c.l.bf16 %v914
    %v918 = vunpack.c.h.bf16 %v914
    %s919 = scalar_lea.vmem [#allocation5], 208
    %v920 = vld [vmem:[%s919] sm:$0xff]
    %v921 = vld [vmem:[%s919 + $0x8] sm:$0xff]
    %v922 = vunpack.c.l.bf16 %v920
    %v923 = vunpack.c.h.bf16 %v920
    %v924 = vunpack.c.l.bf16 %v921
    %v925 = vunpack.c.h.bf16 %v921
    %v926 = vld [vmem:[#allocation2] sm:$0xff]
    %v927 = vld [vmem:[#allocation2 + $0x8] sm:$0xff]
    %v928 = vld [vmem:[#allocation2 + $0x10] sm:$0xff]
    %v929 = vld [vmem:[#allocation2 + $0x18] sm:$0xff]
    %v930 = vpack.c.bf16 %v928, %v926
    %v931 = vpack.c.bf16 %v929, %v927
    %932 = vmatprep.subr.bf16.mxu0 %v514
    %933 = vmatpush1.bf16.msra.mxu0 %v513
    %934 = vmatprep.subr.bf16.mxu0 %v510
    %935 = vmatpush1.bf16.msra.mxu0 %v509
    %936 = vmatprep.subr.bf16.mxu0 %v506
    %937 = vmatpush1.bf16.msra.mxu0 %v505
    %938 = vmatprep.subr.bf16.mxu0 %v502
    %939 = vmatpush1.bf16.msra.mxu0 %v501
    %940 = vmatprep.subr.bf16.mxu0 %v498
    %941 = vmatpush1.bf16.msra.mxu0 %v497
    %942 = vmatprep.subr.bf16.mxu0 %v494
    %943 = vmatpush1.bf16.msra.mxu0 %v493
    %944 = vmatprep.subr.bf16.mxu0 %v490
    %945 = vmatpush1.bf16.msra.mxu0 %v489
    %946 = vmatprep.subr.bf16.mxu0 %v486
    %947 = vmatpush1.bf16.msra.mxu0 %v485
    %948 = vmatprep.subr.bf16.mxu0 %v546
    %949 = vmatpush2.bf16.msra.mxu0 %v545
    %950 = vmatprep.subr.bf16.mxu0 %v542
    %951 = vmatpush2.bf16.msra.mxu0 %v541
    %952 = vmatprep.subr.bf16.mxu0 %v538
    %953 = vmatpush2.bf16.msra.mxu0 %v537
    %954 = vmatprep.subr.bf16.mxu0 %v534
    %955 = vmatpush2.bf16.msra.mxu0 %v533
    %956 = vmatprep.subr.bf16.mxu0 %v530
    %957 = vmatpush2.bf16.msra.mxu0 %v529
    %958 = vmatprep.subr.bf16.mxu0 %v526
    %959 = vmatpush2.bf16.msra.mxu0 %v525
    %960 = vmatprep.subr.bf16.mxu0 %v522
    %961 = vmatpush2.bf16.msra.mxu0 %v521
    %962 = vmatprep.subr.bf16.mxu0 %v518
    %963 = vmatpush2.bf16.msra.mxu0 %v517
    %964 = vmatprep.mubr.bf16.mxu0 %v931
    %965 = vmatmul.mubr.bf16.gmra.mxu0 %v930
    %v966 = vpop.f32.mrf.mxu0
    %v967 = vadd.f32 0.0, %v966
    %v968 = vpop.f32.mrf.mxu0
    %v969 = vadd.f32 0.0, %v968
    %v970 = vpop.f32.mrf.mxu0
    %v971 = vadd.f32 0.0, %v970
    %v972 = vpop.f32.mrf.mxu0
    %v973 = vadd.f32 0.0, %v972
    %974 = vdwg.mxu0
    %975 = vmatprep.subr.bf16.mxu0 %v516
    %976 = vmatpush1.bf16.msra.mxu0 %v515
    %977 = vmatprep.subr.bf16.mxu0 %v512
    %978 = vmatpush1.bf16.msra.mxu0 %v511
    %979 = vmatprep.subr.bf16.mxu0 %v508
    %980 = vmatpush1.bf16.msra.mxu0 %v507
    %981 = vmatprep.subr.bf16.mxu0 %v504
    %982 = vmatpush1.bf16.msra.mxu0 %v503
    %983 = vmatprep.subr.bf16.mxu0 %v500
    %984 = vmatpush1.bf16.msra.mxu0 %v499
    %985 = vmatprep.subr.bf16.mxu0 %v496
    %986 = vmatpush1.bf16.msra.mxu0 %v495
    %987 = vmatprep.subr.bf16.mxu0 %v492
    %988 = vmatpush1.bf16.msra.mxu0 %v491
    %989 = vmatprep.subr.bf16.mxu0 %v488
    %990 = vmatpush1.bf16.msra.mxu0 %v487
    %991 = vmatprep.subr.bf16.mxu0 %v548
    %992 = vmatpush2.bf16.msra.mxu0 %v547
    %993 = vmatprep.subr.bf16.mxu0 %v544
    %994 = vmatpush2.bf16.msra.mxu0 %v543
    %995 = vmatprep.subr.bf16.mxu0 %v540
    %996 = vmatpush2.bf16.msra.mxu0 %v539
    %997 = vmatprep.subr.bf16.mxu0 %v536
    %998 = vmatpush2.bf16.msra.mxu0 %v535
    %999 = vmatprep.subr.bf16.mxu0 %v532
    %1000 = vmatpush2.bf16.msra.mxu0 %v531
    %1001 = vmatprep.subr.bf16.mxu0 %v528
    %1002 = vmatpush2.bf16.msra.mxu0 %v527
    %1003 = vmatprep.subr.bf16.mxu0 %v524
    %1004 = vmatpush2.bf16.msra.mxu0 %v523
    %1005 = vmatprep.subr.bf16.mxu0 %v520
    %1006 = vmatpush2.bf16.msra.mxu0 %v519
    %1007 = vmatprep.mubr.bf16.mxu0 %v931
    %1008 = vmatmul.mubr.bf16.gmra.mxu0 %v930
    %v1009 = vpop.f32.mrf.mxu0
    %v1010 = vadd.f32 0.0, %v1009
    %v1011 = vpop.f32.mrf.mxu0
    %v1012 = vadd.f32 0.0, %v1011
    %v1013 = vpop.f32.mrf.mxu0
    %v1014 = vadd.f32 0.0, %v1013
    %v1015 = vpop.f32.mrf.mxu0
    %v1016 = vadd.f32 0.0, %v1015
    %1017 = vdwg.mxu0
    %v1018 = vadd.f32 %v915, %v967
    %v1019 = vadd.f32 %v916, %v969
    %v1020 = vadd.f32 %v917, %v1010
    %v1021 = vadd.f32 %v918, %v1012
    %v1022 = vadd.f32 %v922, %v971
    %v1023 = vadd.f32 %v923, %v973
    %v1024 = vadd.f32 %v924, %v1014
    %v1025 = vadd.f32 %v925, %v1016
    %v1026 = vmul.f32 %v1018, 0.5
    %v1027 = vmul.f32 %v1022, 0.5
    %v1028 = vtanh.pop %v1026
    %v1029 = vtanh.pop %v1027
    %v1030 = vadd.f32 %v1028, 1.0
    %v1031 = vadd.f32 %v1029, 1.0
    %v1032 = vmul.f32 %v1030, 0.5
    %v1033 = vmul.f32 %v1031, 0.5
    %v1034 = vmul.f32 %v1019, 0.5
    %v1035 = vmul.f32 %v1023, 0.5
    %v1036 = vtanh.pop %v1034
    %v1037 = vtanh.pop %v1035
    %v1038 = vadd.f32 %v1036, 1.0
    %v1039 = vadd.f32 %v1037, 1.0
    %v1040 = vmul.f32 %v1038, 0.5
    %v1041 = vmul.f32 %v1039, 0.5
    %v1042 = vtanh.pop %v1020
    %v1043 = vtanh.pop %v1024
    %v1044 = vmul.f32 %v1021, 0.5
    %v1045 = vmul.f32 %v1025, 0.5
    %v1046 = vtanh.pop %v1044
    %v1047 = vtanh.pop %v1045
    %v1048 = vadd.f32 %v1046, 1.0
    %v1049 = vadd.f32 %v1047, 1.0
    %v1050 = vmul.f32 %v1048, 0.5
    %v1051 = vmul.f32 %v1049, 0.5
    %v1052 = vld [vmem:[#allocation3] sm:$0xff]
    %v1053 = vld [vmem:[#allocation3 + $0x8] sm:$0xff]
    %v1054 = vmul.f32 %v1040, %v1052
    %v1055 = vmul.f32 %v1041, %v1053
    %v1056 = vmul.f32 %v1032, %v1042
    %v1057 = vmul.f32 %v1033, %v1043
    %v1058 = vadd.f32 %v1054, %v1056
    %v1059 = vadd.f32 %v1055, %v1057
    %v1060 = vtanh.pop %v1058
    %v1061 = vtanh.pop %v1059
    %v1062 = vmul.f32 %v1050, %v1060
    %v1063 = vmul.f32 %v1051, %v1061
    %1064 = vst [vmem:[#allocation3] sm:$0xff] %v1058
    %1065 = vst [vmem:[#allocation3 + $0x8] sm:$0xff] %v1059
    %s1066 = scalar_lea.vmem %s3, 16
    %1067 = vst [vmem:[%s1066] sm:$0xff] %v1062
    %s1068 = scalar_lea.vmem %s197, 104
    %1069 = vst [vmem:[%s1068] sm:$0xff] %v1063
    %1070 = vst [vmem:[#allocation2] sm:$0xff] %v1062
    %1071 = vst [vmem:[#allocation2 + $0x18] sm:$0xff] %v1063
    %s1072 = scalar_lea.vmem [#allocation4], 48
    %v1073 = vld [vmem:[%s1072] sm:$0xff]
    %v1074 = vld [vmem:[%s1072 + $0x8] sm:$0xff]
    %v1075 = vunpack.c.l.bf16 %v1073
    %v1076 = vunpack.c.h.bf16 %v1073
    %v1077 = vunpack.c.l.bf16 %v1074
    %v1078 = vunpack.c.h.bf16 %v1074
    %s1079 = scalar_lea.vmem [#allocation5], 192
    %v1080 = vld [vmem:[%s1079] sm:$0xff]
    %v1081 = vld [vmem:[%s1079 + $0x8] sm:$0xff]
    %v1082 = vunpack.c.l.bf16 %v1080
    %v1083 = vunpack.c.h.bf16 %v1080
    %v1084 = vunpack.c.l.bf16 %v1081
    %v1085 = vunpack.c.h.bf16 %v1081
    %v1086 = vld [vmem:[#allocation2] sm:$0xff]
    %v1087 = vld [vmem:[#allocation2 + $0x8] sm:$0xff]
    %v1088 = vld [vmem:[#allocation2 + $0x10] sm:$0xff]
    %v1089 = vld [vmem:[#allocation2 + $0x18] sm:$0xff]
    %v1090 = vpack.c.bf16 %v1088, %v1086
    %v1091 = vpack.c.bf16 %v1089, %v1087
    %1092 = vmatprep.subr.bf16.mxu0 %v514
    %1093 = vmatpush1.bf16.msra.mxu0 %v513
    %1094 = vmatprep.subr.bf16.mxu0 %v510
    %1095 = vmatpush1.bf16.msra.mxu0 %v509
    %1096 = vmatprep.subr.bf16.mxu0 %v506
    %1097 = vmatpush1.bf16.msra.mxu0 %v505
    %1098 = vmatprep.subr.bf16.mxu0 %v502
    %1099 = vmatpush1.bf16.msra.mxu0 %v501
    %1100 = vmatprep.subr.bf16.mxu0 %v498
    %1101 = vmatpush1.bf16.msra.mxu0 %v497
    %1102 = vmatprep.subr.bf16.mxu0 %v494
    %1103 = vmatpush1.bf16.msra.mxu0 %v493
    %1104 = vmatprep.subr.bf16.mxu0 %v490
    %1105 = vmatpush1.bf16.msra.mxu0 %v489
    %1106 = vmatprep.subr.bf16.mxu0 %v486
    %1107 = vmatpush1.bf16.msra.mxu0 %v485
    %1108 = vmatprep.subr.bf16.mxu0 %v546
    %1109 = vmatpush2.bf16.msra.mxu0 %v545
    %1110 = vmatprep.subr.bf16.mxu0 %v542
    %1111 = vmatpush2.bf16.msra.mxu0 %v541
    %1112 = vmatprep.subr.bf16.mxu0 %v538
    %1113 = vmatpush2.bf16.msra.mxu0 %v537
    %1114 = vmatprep.subr.bf16.mxu0 %v534
    %1115 = vmatpush2.bf16.msra.mxu0 %v533
    %1116 = vmatprep.subr.bf16.mxu0 %v530
    %1117 = vmatpush2.bf16.msra.mxu0 %v529
    %1118 = vmatprep.subr.bf16.mxu0 %v526
    %1119 = vmatpush2.bf16.msra.mxu0 %v525
    %1120 = vmatprep.subr.bf16.mxu0 %v522
    %1121 = vmatpush2.bf16.msra.mxu0 %v521
    %1122 = vmatprep.subr.bf16.mxu0 %v518
    %1123 = vmatpush2.bf16.msra.mxu0 %v517
    %1124 = vmatprep.mubr.bf16.mxu0 %v1091
    %1125 = vmatmul.mubr.bf16.gmra.mxu0 %v1090
    %v1126 = vpop.f32.mrf.mxu0
    %v1127 = vadd.f32 0.0, %v1126
    %v1128 = vpop.f32.mrf.mxu0
    %v1129 = vadd.f32 0.0, %v1128
    %v1130 = vpop.f32.mrf.mxu0
    %v1131 = vadd.f32 0.0, %v1130
    %v1132 = vpop.f32.mrf.mxu0
    %v1133 = vadd.f32 0.0, %v1132
    %1134 = vdwg.mxu0
    %1135 = vmatprep.subr.bf16.mxu0 %v516
    %1136 = vmatpush1.bf16.msra.mxu0 %v515
    %1137 = vmatprep.subr.bf16.mxu0 %v512
    %1138 = vmatpush1.bf16.msra.mxu0 %v511
    %1139 = vmatprep.subr.bf16.mxu0 %v508
    %1140 = vmatpush1.bf16.msra.mxu0 %v507
    %1141 = vmatprep.subr.bf16.mxu0 %v504
    %1142 = vmatpush1.bf16.msra.mxu0 %v503
    %1143 = vmatprep.subr.bf16.mxu0 %v500
    %1144 = vmatpush1.bf16.msra.mxu0 %v499
    %1145 = vmatprep.subr.bf16.mxu0 %v496
    %1146 = vmatpush1.bf16.msra.mxu0 %v495
    %1147 = vmatprep.subr.bf16.mxu0 %v492
    %1148 = vmatpush1.bf16.msra.mxu0 %v491
    %1149 = vmatprep.subr.bf16.mxu0 %v488
    %1150 = vmatpush1.bf16.msra.mxu0 %v487
    %1151 = vmatprep.subr.bf16.mxu0 %v548
    %1152 = vmatpush2.bf16.msra.mxu0 %v547
    %1153 = vmatprep.subr.bf16.mxu0 %v544
    %1154 = vmatpush2.bf16.msra.mxu0 %v543
    %1155 = vmatprep.subr.bf16.mxu0 %v540
    %1156 = vmatpush2.bf16.msra.mxu0 %v539
    %1157 = vmatprep.subr.bf16.mxu0 %v536
    %1158 = vmatpush2.bf16.msra.mxu0 %v535
    %1159 = vmatprep.subr.bf16.mxu0 %v532
    %1160 = vmatpush2.bf16.msra.mxu0 %v531
    %1161 = vmatprep.subr.bf16.mxu0 %v528
    %1162 = vmatpush2.bf16.msra.mxu0 %v527
    %1163 = vmatprep.subr.bf16.mxu0 %v524
    %1164 = vmatpush2.bf16.msra.mxu0 %v523
    %1165 = vmatprep.subr.bf16.mxu0 %v520
    %1166 = vmatpush2.bf16.msra.mxu0 %v519
    %1167 = vmatprep.mubr.bf16.mxu0 %v1091
    %1168 = vmatmul.mubr.bf16.gmra.mxu0 %v1090
    %v1169 = vpop.f32.mrf.mxu0
    %v1170 = vadd.f32 0.0, %v1169
    %v1171 = vpop.f32.mrf.mxu0
    %v1172 = vadd.f32 0.0, %v1171
    %v1173 = vpop.f32.mrf.mxu0
    %v1174 = vadd.f32 0.0, %v1173
    %v1175 = vpop.f32.mrf.mxu0
    %v1176 = vadd.f32 0.0, %v1175
    %1177 = vdwg.mxu0
    %v1178 = vadd.f32 %v1075, %v1127
    %v1179 = vadd.f32 %v1076, %v1129
    %v1180 = vadd.f32 %v1077, %v1170
    %v1181 = vadd.f32 %v1078, %v1172
    %v1182 = vadd.f32 %v1082, %v1131
    %v1183 = vadd.f32 %v1083, %v1133
    %v1184 = vadd.f32 %v1084, %v1174
    %v1185 = vadd.f32 %v1085, %v1176
    %v1186 = vmul.f32 %v1178, 0.5
    %v1187 = vmul.f32 %v1182, 0.5
    %v1188 = vtanh.pop %v1186
    %v1189 = vtanh.pop %v1187
    %v1190 = vadd.f32 %v1188, 1.0
    %v1191 = vadd.f32 %v1189, 1.0
    %v1192 = vmul.f32 %v1190, 0.5
    %v1193 = vmul.f32 %v1191, 0.5
    %v1194 = vmul.f32 %v1179, 0.5
    %v1195 = vmul.f32 %v1183, 0.5
    %v1196 = vtanh.pop %v1194
    %v1197 = vtanh.pop %v1195
    %v1198 = vadd.f32 %v1196, 1.0
    %v1199 = vadd.f32 %v1197, 1.0
    %v1200 = vmul.f32 %v1198, 0.5
    %v1201 = vmul.f32 %v1199, 0.5
    %v1202 = vtanh.pop %v1180
    %v1203 = vtanh.pop %v1184
    %v1204 = vmul.f32 %v1181, 0.5
    %v1205 = vmul.f32 %v1185, 0.5
    %v1206 = vtanh.pop %v1204
    %v1207 = vtanh.pop %v1205
    %v1208 = vadd.f32 %v1206, 1.0
    %v1209 = vadd.f32 %v1207, 1.0
    %v1210 = vmul.f32 %v1208, 0.5
    %v1211 = vmul.f32 %v1209, 0.5
    %v1212 = vld [vmem:[#allocation3] sm:$0xff]
    %v1213 = vld [vmem:[#allocation3 + $0x8] sm:$0xff]
    %v1214 = vmul.f32 %v1200, %v1212
    %v1215 = vmul.f32 %v1201, %v1213
    %v1216 = vmul.f32 %v1192, %v1202
    %v1217 = vmul.f32 %v1193, %v1203
    %v1218 = vadd.f32 %v1214, %v1216
    %v1219 = vadd.f32 %v1215, %v1217
    %v1220 = vtanh.pop %v1218
    %v1221 = vtanh.pop %v1219
    %v1222 = vmul.f32 %v1210, %v1220
    %v1223 = vmul.f32 %v1211, %v1221
    %1224 = vst [vmem:[#allocation3] sm:$0xff] %v1218
    %1225 = vst [vmem:[#allocation3 + $0x8] sm:$0xff] %v1219
    %s1226 = scalar_lea.vmem %s3, 24
    %1227 = vst [vmem:[%s1226] sm:$0xff] %v1222
    %s1228 = scalar_lea.vmem %s197, 96
    %1229 = vst [vmem:[%s1228] sm:$0xff] %v1223
    %1230 = vst [vmem:[#allocation2] sm:$0xff] %v1222
    %1231 = vst [vmem:[#allocation2 + $0x18] sm:$0xff] %v1223
    %s1232 = scalar_lea.vmem [#allocation4], 64
    %v1233 = vld [vmem:[%s1232] sm:$0xff]
    %v1234 = vld [vmem:[%s1232 + $0x8] sm:$0xff]
    %v1235 = vunpack.c.l.bf16 %v1233
    %v1236 = vunpack.c.h.bf16 %v1233
    %v1237 = vunpack.c.l.bf16 %v1234
    %v1238 = vunpack.c.h.bf16 %v1234
    %s1239 = scalar_lea.vmem [#allocation5], 176
    %v1240 = vld [vmem:[%s1239] sm:$0xff]
    %v1241 = vld [vmem:[%s1239 + $0x8] sm:$0xff]
    %v1242 = vunpack.c.l.bf16 %v1240
    %v1243 = vunpack.c.h.bf16 %v1240
    %v1244 = vunpack.c.l.bf16 %v1241
    %v1245 = vunpack.c.h.bf16 %v1241
    %v1246 = vld [vmem:[#allocation2] sm:$0xff]
    %v1247 = vld [vmem:[#allocation2 + $0x8] sm:$0xff]
    %v1248 = vld [vmem:[#allocation2 + $0x10] sm:$0xff]
    %v1249 = vld [vmem:[#allocation2 + $0x18] sm:$0xff]
    %v1250 = vpack.c.bf16 %v1248, %v1246
    %v1251 = vpack.c.bf16 %v1249, %v1247
    %1252 = vmatprep.subr.bf16.mxu0 %v514
    %1253 = vmatpush1.bf16.msra.mxu0 %v513
    %1254 = vmatprep.subr.bf16.mxu0 %v510
    %1255 = vmatpush1.bf16.msra.mxu0 %v509
    %1256 = vmatprep.subr.bf16.mxu0 %v506
    %1257 = vmatpush1.bf16.msra.mxu0 %v505
    %1258 = vmatprep.subr.bf16.mxu0 %v502
    %1259 = vmatpush1.bf16.msra.mxu0 %v501
    %1260 = vmatprep.subr.bf16.mxu0 %v498
    %1261 = vmatpush1.bf16.msra.mxu0 %v497
    %1262 = vmatprep.subr.bf16.mxu0 %v494
    %1263 = vmatpush1.bf16.msra.mxu0 %v493
    %1264 = vmatprep.subr.bf16.mxu0 %v490
    %1265 = vmatpush1.bf16.msra.mxu0 %v489
    %1266 = vmatprep.subr.bf16.mxu0 %v486
    %1267 = vmatpush1.bf16.msra.mxu0 %v485
    %1268 = vmatprep.subr.bf16.mxu0 %v546
    %1269 = vmatpush2.bf16.msra.mxu0 %v545
    %1270 = vmatprep.subr.bf16.mxu0 %v542
    %1271 = vmatpush2.bf16.msra.mxu0 %v541
    %1272 = vmatprep.subr.bf16.mxu0 %v538
    %1273 = vmatpush2.bf16.msra.mxu0 %v537
    %1274 = vmatprep.subr.bf16.mxu0 %v534
    %1275 = vmatpush2.bf16.msra.mxu0 %v533
    %1276 = vmatprep.subr.bf16.mxu0 %v530
    %1277 = vmatpush2.bf16.msra.mxu0 %v529
    %1278 = vmatprep.subr.bf16.mxu0 %v526
    %1279 = vmatpush2.bf16.msra.mxu0 %v525
    %1280 = vmatprep.subr.bf16.mxu0 %v522
    %1281 = vmatpush2.bf16.msra.mxu0 %v521
    %1282 = vmatprep.subr.bf16.mxu0 %v518
    %1283 = vmatpush2.bf16.msra.mxu0 %v517
    %1284 = vmatprep.mubr.bf16.mxu0 %v1251
    %1285 = vmatmul.mubr.bf16.gmra.mxu0 %v1250
    %v1286 = vpop.f32.mrf.mxu0
    %v1287 = vadd.f32 0.0, %v1286
    %v1288 = vpop.f32.mrf.mxu0
    %v1289 = vadd.f32 0.0, %v1288
    %v1290 = vpop.f32.mrf.mxu0
    %v1291 = vadd.f32 0.0, %v1290
    %v1292 = vpop.f32.mrf.mxu0
    %v1293 = vadd.f32 0.0, %v1292
    %1294 = vdwg.mxu0
    %1295 = vmatprep.subr.bf16.mxu0 %v516
    %1296 = vmatpush1.bf16.msra.mxu0 %v515
    %1297 = vmatprep.subr.bf16.mxu0 %v512
    %1298 = vmatpush1.bf16.msra.mxu0 %v511
    %1299 = vmatprep.subr.bf16.mxu0 %v508
    %1300 = vmatpush1.bf16.msra.mxu0 %v507
    %1301 = vmatprep.subr.bf16.mxu0 %v504
    %1302 = vmatpush1.bf16.msra.mxu0 %v503
    %1303 = vmatprep.subr.bf16.mxu0 %v500
    %1304 = vmatpush1.bf16.msra.mxu0 %v499
    %1305 = vmatprep.subr.bf16.mxu0 %v496
    %1306 = vmatpush1.bf16.msra.mxu0 %v495
    %1307 = vmatprep.subr.bf16.mxu0 %v492
    %1308 = vmatpush1.bf16.msra.mxu0 %v491
    %1309 = vmatprep.subr.bf16.mxu0 %v488
    %1310 = vmatpush1.bf16.msra.mxu0 %v487
    %1311 = vmatprep.subr.bf16.mxu0 %v548
    %1312 = vmatpush2.bf16.msra.mxu0 %v547
    %1313 = vmatprep.subr.bf16.mxu0 %v544
    %1314 = vmatpush2.bf16.msra.mxu0 %v543
    %1315 = vmatprep.subr.bf16.mxu0 %v540
    %1316 = vmatpush2.bf16.msra.mxu0 %v539
    %1317 = vmatprep.subr.bf16.mxu0 %v536
    %1318 = vmatpush2.bf16.msra.mxu0 %v535
    %1319 = vmatprep.subr.bf16.mxu0 %v532
    %1320 = vmatpush2.bf16.msra.mxu0 %v531
    %1321 = vmatprep.subr.bf16.mxu0 %v528
    %1322 = vmatpush2.bf16.msra.mxu0 %v527
    %1323 = vmatprep.subr.bf16.mxu0 %v524
    %1324 = vmatpush2.bf16.msra.mxu0 %v523
    %1325 = vmatprep.subr.bf16.mxu0 %v520
    %1326 = vmatpush2.bf16.msra.mxu0 %v519
    %1327 = vmatprep.mubr.bf16.mxu0 %v1251
    %1328 = vmatmul.mubr.bf16.gmra.mxu0 %v1250
    %v1329 = vpop.f32.mrf.mxu0
    %v1330 = vadd.f32 0.0, %v1329
    %v1331 = vpop.f32.mrf.mxu0
    %v1332 = vadd.f32 0.0, %v1331
    %v1333 = vpop.f32.mrf.mxu0
    %v1334 = vadd.f32 0.0, %v1333
    %v1335 = vpop.f32.mrf.mxu0
    %v1336 = vadd.f32 0.0, %v1335
    %1337 = vdwg.mxu0
    %v1338 = vadd.f32 %v1235, %v1287
    %v1339 = vadd.f32 %v1236, %v1289
    %v1340 = vadd.f32 %v1237, %v1330
    %v1341 = vadd.f32 %v1238, %v1332
    %v1342 = vadd.f32 %v1242, %v1291
    %v1343 = vadd.f32 %v1243, %v1293
    %v1344 = vadd.f32 %v1244, %v1334
    %v1345 = vadd.f32 %v1245, %v1336
    %v1346 = vmul.f32 %v1338, 0.5
    %v1347 = vmul.f32 %v1342, 0.5
    %v1348 = vtanh.pop %v1346
    %v1349 = vtanh.pop %v1347
    %v1350 = vadd.f32 %v1348, 1.0
    %v1351 = vadd.f32 %v1349, 1.0
    %v1352 = vmul.f32 %v1350, 0.5
    %v1353 = vmul.f32 %v1351, 0.5
    %v1354 = vmul.f32 %v1339, 0.5
    %v1355 = vmul.f32 %v1343, 0.5
    %v1356 = vtanh.pop %v1354
    %v1357 = vtanh.pop %v1355
    %v1358 = vadd.f32 %v1356, 1.0
    %v1359 = vadd.f32 %v1357, 1.0
    %v1360 = vmul.f32 %v1358, 0.5
    %v1361 = vmul.f32 %v1359, 0.5
    %v1362 = vtanh.pop %v1340
    %v1363 = vtanh.pop %v1344
    %v1364 = vmul.f32 %v1341, 0.5
    %v1365 = vmul.f32 %v1345, 0.5
    %v1366 = vtanh.pop %v1364
    %v1367 = vtanh.pop %v1365
    %v1368 = vadd.f32 %v1366, 1.0
    %v1369 = vadd.f32 %v1367, 1.0
    %v1370 = vmul.f32 %v1368, 0.5
    %v1371 = vmul.f32 %v1369, 0.5
    %v1372 = vld [vmem:[#allocation3] sm:$0xff]
    %v1373 = vld [vmem:[#allocation3 + $0x8] sm:$0xff]
    %v1374 = vmul.f32 %v1360, %v1372
    %v1375 = vmul.f32 %v1361, %v1373
    %v1376 = vmul.f32 %v1352, %v1362
    %v1377 = vmul.f32 %v1353, %v1363
    %v1378 = vadd.f32 %v1374, %v1376
    %v1379 = vadd.f32 %v1375, %v1377
    %v1380 = vtanh.pop %v1378
    %v1381 = vtanh.pop %v1379
    %v1382 = vmul.f32 %v1370, %v1380
    %v1383 = vmul.f32 %v1371, %v1381
    %1384 = vst [vmem:[#allocation3] sm:$0xff] %v1378
    %1385 = vst [vmem:[#allocation3 + $0x8] sm:$0xff] %v1379
    %s1386 = scalar_lea.vmem %s3, 32
    %1387 = vst [vmem:[%s1386] sm:$0xff] %v1382
    %s1388 = scalar_lea.vmem %s197, 88
    %1389 = vst [vmem:[%s1388] sm:$0xff] %v1383
    %1390 = vst [vmem:[#allocation2] sm:$0xff] %v1382
    %1391 = vst [vmem:[#allocation2 + $0x18] sm:$0xff] %v1383
    %s1392 = scalar_lea.vmem [#allocation4], 80
    %v1393 = vld [vmem:[%s1392] sm:$0xff]
    %v1394 = vld [vmem:[%s1392 + $0x8] sm:$0xff]
    %v1395 = vunpack.c.l.bf16 %v1393
    %v1396 = vunpack.c.h.bf16 %v1393
    %v1397 = vunpack.c.l.bf16 %v1394
    %v1398 = vunpack.c.h.bf16 %v1394
    %s1399 = scalar_lea.vmem [#allocation5], 160
    %v1400 = vld [vmem:[%s1399] sm:$0xff]
    %v1401 = vld [vmem:[%s1399 + $0x8] sm:$0xff]
    %v1402 = vunpack.c.l.bf16 %v1400
    %v1403 = vunpack.c.h.bf16 %v1400
    %v1404 = vunpack.c.l.bf16 %v1401
    %v1405 = vunpack.c.h.bf16 %v1401
    %v1406 = vld [vmem:[#allocation2] sm:$0xff]
    %v1407 = vld [vmem:[#allocation2 + $0x8] sm:$0xff]
    %v1408 = vld [vmem:[#allocation2 + $0x10] sm:$0xff]
    %v1409 = vld [vmem:[#allocation2 + $0x18] sm:$0xff]
    %v1410 = vpack.c.bf16 %v1408, %v1406
    %v1411 = vpack.c.bf16 %v1409, %v1407
    %1412 = vmatprep.subr.bf16.mxu0 %v514
    %1413 = vmatpush1.bf16.msra.mxu0 %v513
    %1414 = vmatprep.subr.bf16.mxu0 %v510
    %1415 = vmatpush1.bf16.msra.mxu0 %v509
    %1416 = vmatprep.subr.bf16.mxu0 %v506
    %1417 = vmatpush1.bf16.msra.mxu0 %v505
    %1418 = vmatprep.subr.bf16.mxu0 %v502
    %1419 = vmatpush1.bf16.msra.mxu0 %v501
    %1420 = vmatprep.subr.bf16.mxu0 %v498
    %1421 = vmatpush1.bf16.msra.mxu0 %v497
    %1422 = vmatprep.subr.bf16.mxu0 %v494
    %1423 = vmatpush1.bf16.msra.mxu0 %v493
    %1424 = vmatprep.subr.bf16.mxu0 %v490
    %1425 = vmatpush1.bf16.msra.mxu0 %v489
    %1426 = vmatprep.subr.bf16.mxu0 %v486
    %1427 = vmatpush1.bf16.msra.mxu0 %v485
    %1428 = vmatprep.subr.bf16.mxu0 %v546
    %1429 = vmatpush2.bf16.msra.mxu0 %v545
    %1430 = vmatprep.subr.bf16.mxu0 %v542
    %1431 = vmatpush2.bf16.msra.mxu0 %v541
    %1432 = vmatprep.subr.bf16.mxu0 %v538
    %1433 = vmatpush2.bf16.msra.mxu0 %v537
    %1434 = vmatprep.subr.bf16.mxu0 %v534
    %1435 = vmatpush2.bf16.msra.mxu0 %v533
    %1436 = vmatprep.subr.bf16.mxu0 %v530
    %1437 = vmatpush2.bf16.msra.mxu0 %v529
    %1438 = vmatprep.subr.bf16.mxu0 %v526
    %1439 = vmatpush2.bf16.msra.mxu0 %v525
    %1440 = vmatprep.subr.bf16.mxu0 %v522
    %1441 = vmatpush2.bf16.msra.mxu0 %v521
    %1442 = vmatprep.subr.bf16.mxu0 %v518
    %1443 = vmatpush2.bf16.msra.mxu0 %v517
    %1444 = vmatprep.mubr.bf16.mxu0 %v1411
    %1445 = vmatmul.mubr.bf16.gmra.mxu0 %v1410
    %v1446 = vpop.f32.mrf.mxu0
    %v1447 = vadd.f32 0.0, %v1446
    %v1448 = vpop.f32.mrf.mxu0
    %v1449 = vadd.f32 0.0, %v1448
    %v1450 = vpop.f32.mrf.mxu0
    %v1451 = vadd.f32 0.0, %v1450
    %v1452 = vpop.f32.mrf.mxu0
    %v1453 = vadd.f32 0.0, %v1452
    %1454 = vdwg.mxu0
    %1455 = vmatprep.subr.bf16.mxu0 %v516
    %1456 = vmatpush1.bf16.msra.mxu0 %v515
    %1457 = vmatprep.subr.bf16.mxu0 %v512
    %1458 = vmatpush1.bf16.msra.mxu0 %v511
    %1459 = vmatprep.subr.bf16.mxu0 %v508
    %1460 = vmatpush1.bf16.msra.mxu0 %v507
    %1461 = vmatprep.subr.bf16.mxu0 %v504
    %1462 = vmatpush1.bf16.msra.mxu0 %v503
    %1463 = vmatprep.subr.bf16.mxu0 %v500
    %1464 = vmatpush1.bf16.msra.mxu0 %v499
    %1465 = vmatprep.subr.bf16.mxu0 %v496
    %1466 = vmatpush1.bf16.msra.mxu0 %v495
    %1467 = vmatprep.subr.bf16.mxu0 %v492
    %1468 = vmatpush1.bf16.msra.mxu0 %v491
    %1469 = vmatprep.subr.bf16.mxu0 %v488
    %1470 = vmatpush1.bf16.msra.mxu0 %v487
    %1471 = vmatprep.subr.bf16.mxu0 %v548
    %1472 = vmatpush2.bf16.msra.mxu0 %v547
    %1473 = vmatprep.subr.bf16.mxu0 %v544
    %1474 = vmatpush2.bf16.msra.mxu0 %v543
    %1475 = vmatprep.subr.bf16.mxu0 %v540
    %1476 = vmatpush2.bf16.msra.mxu0 %v539
    %1477 = vmatprep.subr.bf16.mxu0 %v536
    %1478 = vmatpush2.bf16.msra.mxu0 %v535
    %1479 = vmatprep.subr.bf16.mxu0 %v532
    %1480 = vmatpush2.bf16.msra.mxu0 %v531
    %1481 = vmatprep.subr.bf16.mxu0 %v528
    %1482 = vmatpush2.bf16.msra.mxu0 %v527
    %1483 = vmatprep.subr.bf16.mxu0 %v524
    %1484 = vmatpush2.bf16.msra.mxu0 %v523
    %1485 = vmatprep.subr.bf16.mxu0 %v520
    %1486 = vmatpush2.bf16.msra.mxu0 %v519
    %1487 = vmatprep.mubr.bf16.mxu0 %v1411
    %1488 = vmatmul.mubr.bf16.gmra.mxu0 %v1410
    %v1489 = vpop.f32.mrf.mxu0
    %v1490 = vadd.f32 0.0, %v1489
    %v1491 = vpop.f32.mrf.mxu0
    %v1492 = vadd.f32 0.0, %v1491
    %v1493 = vpop.f32.mrf.mxu0
    %v1494 = vadd.f32 0.0, %v1493
    %v1495 = vpop.f32.mrf.mxu0
    %v1496 = vadd.f32 0.0, %v1495
    %1497 = vdwg.mxu0
    %v1498 = vadd.f32 %v1395, %v1447
    %v1499 = vadd.f32 %v1396, %v1449
    %v1500 = vadd.f32 %v1397, %v1490
    %v1501 = vadd.f32 %v1398, %v1492
    %v1502 = vadd.f32 %v1402, %v1451
    %v1503 = vadd.f32 %v1403, %v1453
    %v1504 = vadd.f32 %v1404, %v1494
    %v1505 = vadd.f32 %v1405, %v1496
    %v1506 = vmul.f32 %v1498, 0.5
    %v1507 = vmul.f32 %v1502, 0.5
    %v1508 = vtanh.pop %v1506
    %v1509 = vtanh.pop %v1507
    %v1510 = vadd.f32 %v1508, 1.0
    %v1511 = vadd.f32 %v1509, 1.0
    %v1512 = vmul.f32 %v1510, 0.5
    %v1513 = vmul.f32 %v1511, 0.5
    %v1514 = vmul.f32 %v1499, 0.5
    %v1515 = vmul.f32 %v1503, 0.5
    %v1516 = vtanh.pop %v1514
    %v1517 = vtanh.pop %v1515
    %v1518 = vadd.f32 %v1516, 1.0
    %v1519 = vadd.f32 %v1517, 1.0
    %v1520 = vmul.f32 %v1518, 0.5
    %v1521 = vmul.f32 %v1519, 0.5
    %v1522 = vtanh.pop %v1500
    %v1523 = vtanh.pop %v1504
    %v1524 = vmul.f32 %v1501, 0.5
    %v1525 = vmul.f32 %v1505, 0.5
    %v1526 = vtanh.pop %v1524
    %v1527 = vtanh.pop %v1525
    %v1528 = vadd.f32 %v1526, 1.0
    %v1529 = vadd.f32 %v1527, 1.0
    %v1530 = vmul.f32 %v1528, 0.5
    %v1531 = vmul.f32 %v1529, 0.5
    %v1532 = vld [vmem:[#allocation3] sm:$0xff]
    %v1533 = vld [vmem:[#allocation3 + $0x8] sm:$0xff]
    %v1534 = vmul.f32 %v1520, %v1532
    %v1535 = vmul.f32 %v1521, %v1533
    %v1536 = vmul.f32 %v1512, %v1522
    %v1537 = vmul.f32 %v1513, %v1523
    %v1538 = vadd.f32 %v1534, %v1536
    %v1539 = vadd.f32 %v1535, %v1537
    %v1540 = vtanh.pop %v1538
    %v1541 = vtanh.pop %v1539
    %v1542 = vmul.f32 %v1530, %v1540
    %v1543 = vmul.f32 %v1531, %v1541
    %1544 = vst [vmem:[#allocation3] sm:$0xff] %v1538
    %1545 = vst [vmem:[#allocation3 + $0x8] sm:$0xff] %v1539
    %s1546 = scalar_lea.vmem %s3, 40
    %1547 = vst [vmem:[%s1546] sm:$0xff] %v1542
    %s1548 = scalar_lea.vmem %s197, 80
    %1549 = vst [vmem:[%s1548] sm:$0xff] %v1543
    %1550 = vst [vmem:[#allocation2] sm:$0xff] %v1542
    %1551 = vst [vmem:[#allocation2 + $0x18] sm:$0xff] %v1543
    %s1552 = scalar_lea.vmem [#allocation4], 96
    %v1553 = vld [vmem:[%s1552] sm:$0xff]
    %v1554 = vld [vmem:[%s1552 + $0x8] sm:$0xff]
    %v1555 = vunpack.c.l.bf16 %v1553
    %v1556 = vunpack.c.h.bf16 %v1553
    %v1557 = vunpack.c.l.bf16 %v1554
    %v1558 = vunpack.c.h.bf16 %v1554
    %s1559 = scalar_lea.vmem [#allocation5], 144
    %v1560 = vld [vmem:[%s1559] sm:$0xff]
    %v1561 = vld [vmem:[%s1559 + $0x8] sm:$0xff]
    %v1562 = vunpack.c.l.bf16 %v1560
    %v1563 = vunpack.c.h.bf16 %v1560
    %v1564 = vunpack.c.l.bf16 %v1561
    %v1565 = vunpack.c.h.bf16 %v1561
    %v1566 = vld [vmem:[#allocation2] sm:$0xff]
    %v1567 = vld [vmem:[#allocation2 + $0x8] sm:$0xff]
    %v1568 = vld [vmem:[#allocation2 + $0x10] sm:$0xff]
    %v1569 = vld [vmem:[#allocation2 + $0x18] sm:$0xff]
    %v1570 = vpack.c.bf16 %v1568, %v1566
    %v1571 = vpack.c.bf16 %v1569, %v1567
    %1572 = vmatprep.subr.bf16.mxu0 %v514
    %1573 = vmatpush1.bf16.msra.mxu0 %v513
    %1574 = vmatprep.subr.bf16.mxu0 %v510
    %1575 = vmatpush1.bf16.msra.mxu0 %v509
    %1576 = vmatprep.subr.bf16.mxu0 %v506
    %1577 = vmatpush1.bf16.msra.mxu0 %v505
    %1578 = vmatprep.subr.bf16.mxu0 %v502
    %1579 = vmatpush1.bf16.msra.mxu0 %v501
    %1580 = vmatprep.subr.bf16.mxu0 %v498
    %1581 = vmatpush1.bf16.msra.mxu0 %v497
    %1582 = vmatprep.subr.bf16.mxu0 %v494
    %1583 = vmatpush1.bf16.msra.mxu0 %v493
    %1584 = vmatprep.subr.bf16.mxu0 %v490
    %1585 = vmatpush1.bf16.msra.mxu0 %v489
    %1586 = vmatprep.subr.bf16.mxu0 %v486
    %1587 = vmatpush1.bf16.msra.mxu0 %v485
    %1588 = vmatprep.subr.bf16.mxu0 %v546
    %1589 = vmatpush2.bf16.msra.mxu0 %v545
    %1590 = vmatprep.subr.bf16.mxu0 %v542
    %1591 = vmatpush2.bf16.msra.mxu0 %v541
    %1592 = vmatprep.subr.bf16.mxu0 %v538
    %1593 = vmatpush2.bf16.msra.mxu0 %v537
    %1594 = vmatprep.subr.bf16.mxu0 %v534
    %1595 = vmatpush2.bf16.msra.mxu0 %v533
    %1596 = vmatprep.subr.bf16.mxu0 %v530
    %1597 = vmatpush2.bf16.msra.mxu0 %v529
    %1598 = vmatprep.subr.bf16.mxu0 %v526
    %1599 = vmatpush2.bf16.msra.mxu0 %v525
    %1600 = vmatprep.subr.bf16.mxu0 %v522
    %1601 = vmatpush2.bf16.msra.mxu0 %v521
    %1602 = vmatprep.subr.bf16.mxu0 %v518
    %1603 = vmatpush2.bf16.msra.mxu0 %v517
    %1604 = vmatprep.mubr.bf16.mxu0 %v1571
    %1605 = vmatmul.mubr.bf16.gmra.mxu0 %v1570
    %v1606 = vpop.f32.mrf.mxu0
    %v1607 = vadd.f32 0.0, %v1606
    %v1608 = vpop.f32.mrf.mxu0
    %v1609 = vadd.f32 0.0, %v1608
    %v1610 = vpop.f32.mrf.mxu0
    %v1611 = vadd.f32 0.0, %v1610
    %v1612 = vpop.f32.mrf.mxu0
    %v1613 = vadd.f32 0.0, %v1612
    %1614 = vdwg.mxu0
    %1615 = vmatprep.subr.bf16.mxu0 %v516
    %1616 = vmatpush1.bf16.msra.mxu0 %v515
    %1617 = vmatprep.subr.bf16.mxu0 %v512
    %1618 = vmatpush1.bf16.msra.mxu0 %v511
    %1619 = vmatprep.subr.bf16.mxu0 %v508
    %1620 = vmatpush1.bf16.msra.mxu0 %v507
    %1621 = vmatprep.subr.bf16.mxu0 %v504
    %1622 = vmatpush1.bf16.msra.mxu0 %v503
    %1623 = vmatprep.subr.bf16.mxu0 %v500
    %1624 = vmatpush1.bf16.msra.mxu0 %v499
    %1625 = vmatprep.subr.bf16.mxu0 %v496
    %1626 = vmatpush1.bf16.msra.mxu0 %v495
    %1627 = vmatprep.subr.bf16.mxu0 %v492
    %1628 = vmatpush1.bf16.msra.mxu0 %v491
    %1629 = vmatprep.subr.bf16.mxu0 %v488
    %1630 = vmatpush1.bf16.msra.mxu0 %v487
    %1631 = vmatprep.subr.bf16.mxu0 %v548
    %1632 = vmatpush2.bf16.msra.mxu0 %v547
    %1633 = vmatprep.subr.bf16.mxu0 %v544
    %1634 = vmatpush2.bf16.msra.mxu0 %v543
    %1635 = vmatprep.subr.bf16.mxu0 %v540
    %1636 = vmatpush2.bf16.msra.mxu0 %v539
    %1637 = vmatprep.subr.bf16.mxu0 %v536
    %1638 = vmatpush2.bf16.msra.mxu0 %v535
    %1639 = vmatprep.subr.bf16.mxu0 %v532
    %1640 = vmatpush2.bf16.msra.mxu0 %v531
    %1641 = vmatprep.subr.bf16.mxu0 %v528
    %1642 = vmatpush2.bf16.msra.mxu0 %v527
    %1643 = vmatprep.subr.bf16.mxu0 %v524
    %1644 = vmatpush2.bf16.msra.mxu0 %v523
    %1645 = vmatprep.subr.bf16.mxu0 %v520
    %1646 = vmatpush2.bf16.msra.mxu0 %v519
    %1647 = vmatprep.mubr.bf16.mxu0 %v1571
    %1648 = vmatmul.mubr.bf16.gmra.mxu0 %v1570
    %v1649 = vpop.f32.mrf.mxu0
    %v1650 = vadd.f32 0.0, %v1649
    %v1651 = vpop.f32.mrf.mxu0
    %v1652 = vadd.f32 0.0, %v1651
    %v1653 = vpop.f32.mrf.mxu0
    %v1654 = vadd.f32 0.0, %v1653
    %v1655 = vpop.f32.mrf.mxu0
    %v1656 = vadd.f32 0.0, %v1655
    %1657 = vdwg.mxu0
    %v1658 = vadd.f32 %v1555, %v1607
    %v1659 = vadd.f32 %v1556, %v1609
    %v1660 = vadd.f32 %v1557, %v1650
    %v1661 = vadd.f32 %v1558, %v1652
    %v1662 = vadd.f32 %v1562, %v1611
    %v1663 = vadd.f32 %v1563, %v1613
    %v1664 = vadd.f32 %v1564, %v1654
    %v1665 = vadd.f32 %v1565, %v1656
    %v1666 = vmul.f32 %v1658, 0.5
    %v1667 = vmul.f32 %v1662, 0.5
    %v1668 = vtanh.pop %v1666
    %v1669 = vtanh.pop %v1667
    %v1670 = vadd.f32 %v1668, 1.0
    %v1671 = vadd.f32 %v1669, 1.0
    %v1672 = vmul.f32 %v1670, 0.5
    %v1673 = vmul.f32 %v1671, 0.5
    %v1674 = vmul.f32 %v1659, 0.5
    %v1675 = vmul.f32 %v1663, 0.5
    %v1676 = vtanh.pop %v1674
    %v1677 = vtanh.pop %v1675
    %v1678 = vadd.f32 %v1676, 1.0
    %v1679 = vadd.f32 %v1677, 1.0
    %v1680 = vmul.f32 %v1678, 0.5
    %v1681 = vmul.f32 %v1679, 0.5
    %v1682 = vtanh.pop %v1660
    %v1683 = vtanh.pop %v1664
    %v1684 = vmul.f32 %v1661, 0.5
    %v1685 = vmul.f32 %v1665, 0.5
    %v1686 = vtanh.pop %v1684
    %v1687 = vtanh.pop %v1685
    %v1688 = vadd.f32 %v1686, 1.0
    %v1689 = vadd.f32 %v1687, 1.0
    %v1690 = vmul.f32 %v1688, 0.5
    %v1691 = vmul.f32 %v1689, 0.5
    %v1692 = vld [vmem:[#allocation3] sm:$0xff]
    %v1693 = vld [vmem:[#allocation3 + $0x8] sm:$0xff]
    %v1694 = vmul.f32 %v1680, %v1692
    %v1695 = vmul.f32 %v1681, %v1693
    %v1696 = vmul.f32 %v1672, %v1682
    %v1697 = vmul.f32 %v1673, %v1683
    %v1698 = vadd.f32 %v1694, %v1696
    %v1699 = vadd.f32 %v1695, %v1697
    %v1700 = vtanh.pop %v1698
    %v1701 = vtanh.pop %v1699
    %v1702 = vmul.f32 %v1690, %v1700
    %v1703 = vmul.f32 %v1691, %v1701
    %1704 = vst [vmem:[#allocation3] sm:$0xff] %v1698
    %1705 = vst [vmem:[#allocation3 + $0x8] sm:$0xff] %v1699
    %s1706 = scalar_lea.vmem %s3, 48
    %1707 = vst [vmem:[%s1706] sm:$0xff] %v1702
    %s1708 = scalar_lea.vmem %s197, 72
    %1709 = vst [vmem:[%s1708] sm:$0xff] %v1703
    %1710 = vst [vmem:[#allocation2] sm:$0xff] %v1702
    %1711 = vst [vmem:[#allocation2 + $0x18] sm:$0xff] %v1703
    %s1712 = scalar_lea.vmem [#allocation4], 112
    %v1713 = vld [vmem:[%s1712] sm:$0xff]
    %v1714 = vld [vmem:[%s1712 + $0x8] sm:$0xff]
    %v1715 = vunpack.c.l.bf16 %v1713
    %v1716 = vunpack.c.h.bf16 %v1713
    %v1717 = vunpack.c.l.bf16 %v1714
    %v1718 = vunpack.c.h.bf16 %v1714
    %s1719 = scalar_lea.vmem [#allocation5], 128
    %v1720 = vld [vmem:[%s1719] sm:$0xff]
    %v1721 = vld [vmem:[%s1719 + $0x8] sm:$0xff]
    %v1722 = vunpack.c.l.bf16 %v1720
    %v1723 = vunpack.c.h.bf16 %v1720
    %v1724 = vunpack.c.l.bf16 %v1721
    %v1725 = vunpack.c.h.bf16 %v1721
    %v1726 = vld [vmem:[#allocation2] sm:$0xff]
    %v1727 = vld [vmem:[#allocation2 + $0x8] sm:$0xff]
    %v1728 = vld [vmem:[#allocation2 + $0x10] sm:$0xff]
    %v1729 = vld [vmem:[#allocation2 + $0x18] sm:$0xff]
    %v1730 = vpack.c.bf16 %v1728, %v1726
    %v1731 = vpack.c.bf16 %v1729, %v1727
    %1732 = vmatprep.subr.bf16.mxu0 %v514
    %1733 = vmatpush1.bf16.msra.mxu0 %v513
    %1734 = vmatprep.subr.bf16.mxu0 %v510
    %1735 = vmatpush1.bf16.msra.mxu0 %v509
    %1736 = vmatprep.subr.bf16.mxu0 %v506
    %1737 = vmatpush1.bf16.msra.mxu0 %v505
    %1738 = vmatprep.subr.bf16.mxu0 %v502
    %1739 = vmatpush1.bf16.msra.mxu0 %v501
    %1740 = vmatprep.subr.bf16.mxu0 %v498
    %1741 = vmatpush1.bf16.msra.mxu0 %v497
    %1742 = vmatprep.subr.bf16.mxu0 %v494
    %1743 = vmatpush1.bf16.msra.mxu0 %v493
    %1744 = vmatprep.subr.bf16.mxu0 %v490
    %1745 = vmatpush1.bf16.msra.mxu0 %v489
    %1746 = vmatprep.subr.bf16.mxu0 %v486
    %1747 = vmatpush1.bf16.msra.mxu0 %v485
    %1748 = vmatprep.subr.bf16.mxu0 %v546
    %1749 = vmatpush2.bf16.msra.mxu0 %v545
    %1750 = vmatprep.subr.bf16.mxu0 %v542
    %1751 = vmatpush2.bf16.msra.mxu0 %v541
    %1752 = vmatprep.subr.bf16.mxu0 %v538
    %1753 = vmatpush2.bf16.msra.mxu0 %v537
    %1754 = vmatprep.subr.bf16.mxu0 %v534
    %1755 = vmatpush2.bf16.msra.mxu0 %v533
    %1756 = vmatprep.subr.bf16.mxu0 %v530
    %1757 = vmatpush2.bf16.msra.mxu0 %v529
    %1758 = vmatprep.subr.bf16.mxu0 %v526
    %1759 = vmatpush2.bf16.msra.mxu0 %v525
    %1760 = vmatprep.subr.bf16.mxu0 %v522
    %1761 = vmatpush2.bf16.msra.mxu0 %v521
    %1762 = vmatprep.subr.bf16.mxu0 %v518
    %1763 = vmatpush2.bf16.msra.mxu0 %v517
    %1764 = vmatprep.mubr.bf16.mxu0 %v1731
    %1765 = vmatmul.mubr.bf16.gmra.mxu0 %v1730
    %v1766 = vpop.f32.mrf.mxu0
    %v1767 = vadd.f32 0.0, %v1766
    %v1768 = vpop.f32.mrf.mxu0
    %v1769 = vadd.f32 0.0, %v1768
    %v1770 = vpop.f32.mrf.mxu0
    %v1771 = vadd.f32 0.0, %v1770
    %v1772 = vpop.f32.mrf.mxu0
    %v1773 = vadd.f32 0.0, %v1772
    %1774 = vdwg.mxu0
    %1775 = vmatprep.subr.bf16.mxu0 %v516
    %1776 = vmatpush1.bf16.msra.mxu0 %v515
    %1777 = vmatprep.subr.bf16.mxu0 %v512
    %1778 = vmatpush1.bf16.msra.mxu0 %v511
    %1779 = vmatprep.subr.bf16.mxu0 %v508
    %1780 = vmatpush1.bf16.msra.mxu0 %v507
    %1781 = vmatprep.subr.bf16.mxu0 %v504
    %1782 = vmatpush1.bf16.msra.mxu0 %v503
    %1783 = vmatprep.subr.bf16.mxu0 %v500
    %1784 = vmatpush1.bf16.msra.mxu0 %v499
    %1785 = vmatprep.subr.bf16.mxu0 %v496
    %1786 = vmatpush1.bf16.msra.mxu0 %v495
    %1787 = vmatprep.subr.bf16.mxu0 %v492
    %1788 = vmatpush1.bf16.msra.mxu0 %v491
    %1789 = vmatprep.subr.bf16.mxu0 %v488
    %1790 = vmatpush1.bf16.msra.mxu0 %v487
    %1791 = vmatprep.subr.bf16.mxu0 %v548
    %1792 = vmatpush2.bf16.msra.mxu0 %v547
    %1793 = vmatprep.subr.bf16.mxu0 %v544
    %1794 = vmatpush2.bf16.msra.mxu0 %v543
    %1795 = vmatprep.subr.bf16.mxu0 %v540
    %1796 = vmatpush2.bf16.msra.mxu0 %v539
    %1797 = vmatprep.subr.bf16.mxu0 %v536
    %1798 = vmatpush2.bf16.msra.mxu0 %v535
    %1799 = vmatprep.subr.bf16.mxu0 %v532
    %1800 = vmatpush2.bf16.msra.mxu0 %v531
    %1801 = vmatprep.subr.bf16.mxu0 %v528
    %1802 = vmatpush2.bf16.msra.mxu0 %v527
    %1803 = vmatprep.subr.bf16.mxu0 %v524
    %1804 = vmatpush2.bf16.msra.mxu0 %v523
    %1805 = vmatprep.subr.bf16.mxu0 %v520
    %1806 = vmatpush2.bf16.msra.mxu0 %v519
    %1807 = vmatprep.mubr.bf16.mxu0 %v1731
    %1808 = vmatmul.mubr.bf16.gmra.mxu0 %v1730
    %v1809 = vpop.f32.mrf.mxu0
    %v1810 = vadd.f32 0.0, %v1809
    %v1811 = vpop.f32.mrf.mxu0
    %v1812 = vadd.f32 0.0, %v1811
    %v1813 = vpop.f32.mrf.mxu0
    %v1814 = vadd.f32 0.0, %v1813
    %v1815 = vpop.f32.mrf.mxu0
    %v1816 = vadd.f32 0.0, %v1815
    %1817 = vdwg.mxu0
    %v1818 = vadd.f32 %v1715, %v1767
    %v1819 = vadd.f32 %v1716, %v1769
    %v1820 = vadd.f32 %v1717, %v1810
    %v1821 = vadd.f32 %v1718, %v1812
    %v1822 = vadd.f32 %v1722, %v1771
    %v1823 = vadd.f32 %v1723, %v1773
    %v1824 = vadd.f32 %v1724, %v1814
    %v1825 = vadd.f32 %v1725, %v1816
    %v1826 = vmul.f32 %v1818, 0.5
    %v1827 = vmul.f32 %v1822, 0.5
    %v1828 = vtanh.pop %v1826
    %v1829 = vtanh.pop %v1827
    %v1830 = vadd.f32 %v1828, 1.0
    %v1831 = vadd.f32 %v1829, 1.0
    %v1832 = vmul.f32 %v1830, 0.5
    %v1833 = vmul.f32 %v1831, 0.5
    %v1834 = vmul.f32 %v1819, 0.5
    %v1835 = vmul.f32 %v1823, 0.5
    %v1836 = vtanh.pop %v1834
    %v1837 = vtanh.pop %v1835
    %v1838 = vadd.f32 %v1836, 1.0
    %v1839 = vadd.f32 %v1837, 1.0
    %v1840 = vmul.f32 %v1838, 0.5
    %v1841 = vmul.f32 %v1839, 0.5
    %v1842 = vtanh.pop %v1820
    %v1843 = vtanh.pop %v1824
    %v1844 = vmul.f32 %v1821, 0.5
    %v1845 = vmul.f32 %v1825, 0.5
    %v1846 = vtanh.pop %v1844
    %v1847 = vtanh.pop %v1845
    %v1848 = vadd.f32 %v1846, 1.0
    %v1849 = vadd.f32 %v1847, 1.0
    %v1850 = vmul.f32 %v1848, 0.5
    %v1851 = vmul.f32 %v1849, 0.5
    %v1852 = vld [vmem:[#allocation3] sm:$0xff]
    %v1853 = vld [vmem:[#allocation3 + $0x8] sm:$0xff]
    %v1854 = vmul.f32 %v1840, %v1852
    %v1855 = vmul.f32 %v1841, %v1853
    %v1856 = vmul.f32 %v1832, %v1842
    %v1857 = vmul.f32 %v1833, %v1843
    %v1858 = vadd.f32 %v1854, %v1856
    %v1859 = vadd.f32 %v1855, %v1857
    %v1860 = vtanh.pop %v1858
    %v1861 = vtanh.pop %v1859
    %v1862 = vmul.f32 %v1850, %v1860
    %v1863 = vmul.f32 %v1851, %v1861
    %1864 = vst [vmem:[#allocation3] sm:$0xff] %v1858
    %1865 = vst [vmem:[#allocation3 + $0x8] sm:$0xff] %v1859
    %s1866 = scalar_lea.vmem %s3, 56
    %1867 = vst [vmem:[%s1866] sm:$0xff] %v1862
    %s1868 = scalar_lea.vmem %s197, 64
    %1869 = vst [vmem:[%s1868] sm:$0xff] %v1863
    %1870 = vst [vmem:[#allocation2] sm:$0xff] %v1862
    %1871 = vst [vmem:[#allocation2 + $0x18] sm:$0xff] %v1863
    %s1872 = scalar_lea.vmem [#allocation4], 128
    %v1873 = vld [vmem:[%s1872] sm:$0xff]
    %v1874 = vld [vmem:[%s1872 + $0x8] sm:$0xff]
    %v1875 = vunpack.c.l.bf16 %v1873
    %v1876 = vunpack.c.h.bf16 %v1873
    %v1877 = vunpack.c.l.bf16 %v1874
    %v1878 = vunpack.c.h.bf16 %v1874
    %s1879 = scalar_lea.vmem [#allocation5], 112
    %v1880 = vld [vmem:[%s1879] sm:$0xff]
    %v1881 = vld [vmem:[%s1879 + $0x8] sm:$0xff]
    %v1882 = vunpack.c.l.bf16 %v1880
    %v1883 = vunpack.c.h.bf16 %v1880
    %v1884 = vunpack.c.l.bf16 %v1881
    %v1885 = vunpack.c.h.bf16 %v1881
    %v1886 = vld [vmem:[#allocation2] sm:$0xff]
    %v1887 = vld [vmem:[#allocation2 + $0x8] sm:$0xff]
    %v1888 = vld [vmem:[#allocation2 + $0x10] sm:$0xff]
    %v1889 = vld [vmem:[#allocation2 + $0x18] sm:$0xff]
    %v1890 = vpack.c.bf16 %v1888, %v1886
    %v1891 = vpack.c.bf16 %v1889, %v1887
    %1892 = vmatprep.subr.bf16.mxu0 %v514
    %1893 = vmatpush1.bf16.msra.mxu0 %v513
    %1894 = vmatprep.subr.bf16.mxu0 %v510
    %1895 = vmatpush1.bf16.msra.mxu0 %v509
    %1896 = vmatprep.subr.bf16.mxu0 %v506
    %1897 = vmatpush1.bf16.msra.mxu0 %v505
    %1898 = vmatprep.subr.bf16.mxu0 %v502
    %1899 = vmatpush1.bf16.msra.mxu0 %v501
    %1900 = vmatprep.subr.bf16.mxu0 %v498
    %1901 = vmatpush1.bf16.msra.mxu0 %v497
    %1902 = vmatprep.subr.bf16.mxu0 %v494
    %1903 = vmatpush1.bf16.msra.mxu0 %v493
    %1904 = vmatprep.subr.bf16.mxu0 %v490
    %1905 = vmatpush1.bf16.msra.mxu0 %v489
    %1906 = vmatprep.subr.bf16.mxu0 %v486
    %1907 = vmatpush1.bf16.msra.mxu0 %v485
    %1908 = vmatprep.subr.bf16.mxu0 %v546
    %1909 = vmatpush2.bf16.msra.mxu0 %v545
    %1910 = vmatprep.subr.bf16.mxu0 %v542
    %1911 = vmatpush2.bf16.msra.mxu0 %v541
    %1912 = vmatprep.subr.bf16.mxu0 %v538
    %1913 = vmatpush2.bf16.msra.mxu0 %v537
    %1914 = vmatprep.subr.bf16.mxu0 %v534
    %1915 = vmatpush2.bf16.msra.mxu0 %v533
    %1916 = vmatprep.subr.bf16.mxu0 %v530
    %1917 = vmatpush2.bf16.msra.mxu0 %v529
    %1918 = vmatprep.subr.bf16.mxu0 %v526
    %1919 = vmatpush2.bf16.msra.mxu0 %v525
    %1920 = vmatprep.subr.bf16.mxu0 %v522
    %1921 = vmatpush2.bf16.msra.mxu0 %v521
    %1922 = vmatprep.subr.bf16.mxu0 %v518
    %1923 = vmatpush2.bf16.msra.mxu0 %v517
    %1924 = vmatprep.mubr.bf16.mxu0 %v1891
    %1925 = vmatmul.mubr.bf16.gmra.mxu0 %v1890
    %v1926 = vpop.f32.mrf.mxu0
    %v1927 = vadd.f32 0.0, %v1926
    %v1928 = vpop.f32.mrf.mxu0
    %v1929 = vadd.f32 0.0, %v1928
    %v1930 = vpop.f32.mrf.mxu0
    %v1931 = vadd.f32 0.0, %v1930
    %v1932 = vpop.f32.mrf.mxu0
    %v1933 = vadd.f32 0.0, %v1932
    %1934 = vdwg.mxu0
    %1935 = vmatprep.subr.bf16.mxu0 %v516
    %1936 = vmatpush1.bf16.msra.mxu0 %v515
    %1937 = vmatprep.subr.bf16.mxu0 %v512
    %1938 = vmatpush1.bf16.msra.mxu0 %v511
    %1939 = vmatprep.subr.bf16.mxu0 %v508
    %1940 = vmatpush1.bf16.msra.mxu0 %v507
    %1941 = vmatprep.subr.bf16.mxu0 %v504
    %1942 = vmatpush1.bf16.msra.mxu0 %v503
    %1943 = vmatprep.subr.bf16.mxu0 %v500
    %1944 = vmatpush1.bf16.msra.mxu0 %v499
    %1945 = vmatprep.subr.bf16.mxu0 %v496
    %1946 = vmatpush1.bf16.msra.mxu0 %v495
    %1947 = vmatprep.subr.bf16.mxu0 %v492
    %1948 = vmatpush1.bf16.msra.mxu0 %v491
    %1949 = vmatprep.subr.bf16.mxu0 %v488
    %1950 = vmatpush1.bf16.msra.mxu0 %v487
    %1951 = vmatprep.subr.bf16.mxu0 %v548
    %1952 = vmatpush2.bf16.msra.mxu0 %v547
    %1953 = vmatprep.subr.bf16.mxu0 %v544
    %1954 = vmatpush2.bf16.msra.mxu0 %v543
    %1955 = vmatprep.subr.bf16.mxu0 %v540
    %1956 = vmatpush2.bf16.msra.mxu0 %v539
    %1957 = vmatprep.subr.bf16.mxu0 %v536
    %1958 = vmatpush2.bf16.msra.mxu0 %v535
    %1959 = vmatprep.subr.bf16.mxu0 %v532
    %1960 = vmatpush2.bf16.msra.mxu0 %v531
    %1961 = vmatprep.subr.bf16.mxu0 %v528
    %1962 = vmatpush2.bf16.msra.mxu0 %v527
    %1963 = vmatprep.subr.bf16.mxu0 %v524
    %1964 = vmatpush2.bf16.msra.mxu0 %v523
    %1965 = vmatprep.subr.bf16.mxu0 %v520
    %1966 = vmatpush2.bf16.msra.mxu0 %v519
    %1967 = vmatprep.mubr.bf16.mxu0 %v1891
    %1968 = vmatmul.mubr.bf16.gmra.mxu0 %v1890
    %v1969 = vpop.f32.mrf.mxu0
    %v1970 = vadd.f32 0.0, %v1969
    %v1971 = vpop.f32.mrf.mxu0
    %v1972 = vadd.f32 0.0, %v1971
    %v1973 = vpop.f32.mrf.mxu0
    %v1974 = vadd.f32 0.0, %v1973
    %v1975 = vpop.f32.mrf.mxu0
    %v1976 = vadd.f32 0.0, %v1975
    %1977 = vdwg.mxu0
    %v1978 = vadd.f32 %v1875, %v1927
    %v1979 = vadd.f32 %v1876, %v1929
    %v1980 = vadd.f32 %v1877, %v1970
    %v1981 = vadd.f32 %v1878, %v1972
    %v1982 = vadd.f32 %v1882, %v1931
    %v1983 = vadd.f32 %v1883, %v1933
    %v1984 = vadd.f32 %v1884, %v1974
    %v1985 = vadd.f32 %v1885, %v1976
    %v1986 = vmul.f32 %v1978, 0.5
    %v1987 = vmul.f32 %v1982, 0.5
    %v1988 = vtanh.pop %v1986
    %v1989 = vtanh.pop %v1987
    %v1990 = vadd.f32 %v1988, 1.0
    %v1991 = vadd.f32 %v1989, 1.0
    %v1992 = vmul.f32 %v1990, 0.5
    %v1993 = vmul.f32 %v1991, 0.5
    %v1994 = vmul.f32 %v1979, 0.5
    %v1995 = vmul.f32 %v1983, 0.5
    %v1996 = vtanh.pop %v1994
    %v1997 = vtanh.pop %v1995
    %v1998 = vadd.f32 %v1996, 1.0
    %v1999 = vadd.f32 %v1997, 1.0
    %v2000 = vmul.f32 %v1998, 0.5
    %v2001 = vmul.f32 %v1999, 0.5
    %v2002 = vtanh.pop %v1980
    %v2003 = vtanh.pop %v1984
    %v2004 = vmul.f32 %v1981, 0.5
    %v2005 = vmul.f32 %v1985, 0.5
    %v2006 = vtanh.pop %v2004
    %v2007 = vtanh.pop %v2005
    %v2008 = vadd.f32 %v2006, 1.0
    %v2009 = vadd.f32 %v2007, 1.0
    %v2010 = vmul.f32 %v2008, 0.5
    %v2011 = vmul.f32 %v2009, 0.5
    %v2012 = vld [vmem:[#allocation3] sm:$0xff]
    %v2013 = vld [vmem:[#allocation3 + $0x8] sm:$0xff]
    %v2014 = vmul.f32 %v2000, %v2012
    %v2015 = vmul.f32 %v2001, %v2013
    %v2016 = vmul.f32 %v1992, %v2002
    %v2017 = vmul.f32 %v1993, %v2003
    %v2018 = vadd.f32 %v2014, %v2016
    %v2019 = vadd.f32 %v2015, %v2017
    %v2020 = vtanh.pop %v2018
    %v2021 = vtanh.pop %v2019
    %v2022 = vmul.f32 %v2010, %v2020
    %v2023 = vmul.f32 %v2011, %v2021
    %2024 = vst [vmem:[#allocation3] sm:$0xff] %v2018
    %2025 = vst [vmem:[#allocation3 + $0x8] sm:$0xff] %v2019
    %s2026 = scalar_lea.vmem %s3, 64
    %2027 = vst [vmem:[%s2026] sm:$0xff] %v2022
    %s2028 = scalar_lea.vmem %s197, 56
    %2029 = vst [vmem:[%s2028] sm:$0xff] %v2023
    %2030 = vst [vmem:[#allocation2] sm:$0xff] %v2022
    %2031 = vst [vmem:[#allocation2 + $0x18] sm:$0xff] %v2023
    %s2032 = scalar_lea.vmem [#allocation4], 144
    %v2033 = vld [vmem:[%s2032] sm:$0xff]
    %v2034 = vld [vmem:[%s2032 + $0x8] sm:$0xff]
    %v2035 = vunpack.c.l.bf16 %v2033
    %v2036 = vunpack.c.h.bf16 %v2033
    %v2037 = vunpack.c.l.bf16 %v2034
    %v2038 = vunpack.c.h.bf16 %v2034
    %s2039 = scalar_lea.vmem [#allocation5], 96
    %v2040 = vld [vmem:[%s2039] sm:$0xff]
    %v2041 = vld [vmem:[%s2039 + $0x8] sm:$0xff]
    %v2042 = vunpack.c.l.bf16 %v2040
    %v2043 = vunpack.c.h.bf16 %v2040
    %v2044 = vunpack.c.l.bf16 %v2041
    %v2045 = vunpack.c.h.bf16 %v2041
    %v2046 = vld [vmem:[#allocation2] sm:$0xff]
    %v2047 = vld [vmem:[#allocation2 + $0x8] sm:$0xff]
    %v2048 = vld [vmem:[#allocation2 + $0x10] sm:$0xff]
    %v2049 = vld [vmem:[#allocation2 + $0x18] sm:$0xff]
    %v2050 = vpack.c.bf16 %v2048, %v2046
    %v2051 = vpack.c.bf16 %v2049, %v2047
    %2052 = vmatprep.subr.bf16.mxu0 %v514
    %2053 = vmatpush1.bf16.msra.mxu0 %v513
    %2054 = vmatprep.subr.bf16.mxu0 %v510
    %2055 = vmatpush1.bf16.msra.mxu0 %v509
    %2056 = vmatprep.subr.bf16.mxu0 %v506
    %2057 = vmatpush1.bf16.msra.mxu0 %v505
    %2058 = vmatprep.subr.bf16.mxu0 %v502
    %2059 = vmatpush1.bf16.msra.mxu0 %v501
    %2060 = vmatprep.subr.bf16.mxu0 %v498
    %2061 = vmatpush1.bf16.msra.mxu0 %v497
    %2062 = vmatprep.subr.bf16.mxu0 %v494
    %2063 = vmatpush1.bf16.msra.mxu0 %v493
    %2064 = vmatprep.subr.bf16.mxu0 %v490
    %2065 = vmatpush1.bf16.msra.mxu0 %v489
    %2066 = vmatprep.subr.bf16.mxu0 %v486
    %2067 = vmatpush1.bf16.msra.mxu0 %v485
    %2068 = vmatprep.subr.bf16.mxu0 %v546
    %2069 = vmatpush2.bf16.msra.mxu0 %v545
    %2070 = vmatprep.subr.bf16.mxu0 %v542
    %2071 = vmatpush2.bf16.msra.mxu0 %v541
    %2072 = vmatprep.subr.bf16.mxu0 %v538
    %2073 = vmatpush2.bf16.msra.mxu0 %v537
    %2074 = vmatprep.subr.bf16.mxu0 %v534
    %2075 = vmatpush2.bf16.msra.mxu0 %v533
    %2076 = vmatprep.subr.bf16.mxu0 %v530
    %2077 = vmatpush2.bf16.msra.mxu0 %v529
    %2078 = vmatprep.subr.bf16.mxu0 %v526
    %2079 = vmatpush2.bf16.msra.mxu0 %v525
    %2080 = vmatprep.subr.bf16.mxu0 %v522
    %2081 = vmatpush2.bf16.msra.mxu0 %v521
    %2082 = vmatprep.subr.bf16.mxu0 %v518
    %2083 = vmatpush2.bf16.msra.mxu0 %v517
    %2084 = vmatprep.mubr.bf16.mxu0 %v2051
    %2085 = vmatmul.mubr.bf16.gmra.mxu0 %v2050
    %v2086 = vpop.f32.mrf.mxu0
    %v2087 = vadd.f32 0.0, %v2086
    %v2088 = vpop.f32.mrf.mxu0
    %v2089 = vadd.f32 0.0, %v2088
    %v2090 = vpop.f32.mrf.mxu0
    %v2091 = vadd.f32 0.0, %v2090
    %v2092 = vpop.f32.mrf.mxu0
    %v2093 = vadd.f32 0.0, %v2092
    %2094 = vdwg.mxu0
    %2095 = vmatprep.subr.bf16.mxu0 %v516
    %2096 = vmatpush1.bf16.msra.mxu0 %v515
    %2097 = vmatprep.subr.bf16.mxu0 %v512
    %2098 = vmatpush1.bf16.msra.mxu0 %v511
    %2099 = vmatprep.subr.bf16.mxu0 %v508
    %2100 = vmatpush1.bf16.msra.mxu0 %v507
    %2101 = vmatprep.subr.bf16.mxu0 %v504
    %2102 = vmatpush1.bf16.msra.mxu0 %v503
    %2103 = vmatprep.subr.bf16.mxu0 %v500
    %2104 = vmatpush1.bf16.msra.mxu0 %v499
    %2105 = vmatprep.subr.bf16.mxu0 %v496
    %2106 = vmatpush1.bf16.msra.mxu0 %v495
    %2107 = vmatprep.subr.bf16.mxu0 %v492
    %2108 = vmatpush1.bf16.msra.mxu0 %v491
    %2109 = vmatprep.subr.bf16.mxu0 %v488
    %2110 = vmatpush1.bf16.msra.mxu0 %v487
    %2111 = vmatprep.subr.bf16.mxu0 %v548
    %2112 = vmatpush2.bf16.msra.mxu0 %v547
    %2113 = vmatprep.subr.bf16.mxu0 %v544
    %2114 = vmatpush2.bf16.msra.mxu0 %v543
    %2115 = vmatprep.subr.bf16.mxu0 %v540
    %2116 = vmatpush2.bf16.msra.mxu0 %v539
    %2117 = vmatprep.subr.bf16.mxu0 %v536
    %2118 = vmatpush2.bf16.msra.mxu0 %v535
    %2119 = vmatprep.subr.bf16.mxu0 %v532
    %2120 = vmatpush2.bf16.msra.mxu0 %v531
    %2121 = vmatprep.subr.bf16.mxu0 %v528
    %2122 = vmatpush2.bf16.msra.mxu0 %v527
    %2123 = vmatprep.subr.bf16.mxu0 %v524
    %2124 = vmatpush2.bf16.msra.mxu0 %v523
    %2125 = vmatprep.subr.bf16.mxu0 %v520
    %2126 = vmatpush2.bf16.msra.mxu0 %v519
    %2127 = vmatprep.mubr.bf16.mxu0 %v2051
    %2128 = vmatmul.mubr.bf16.gmra.mxu0 %v2050
    %v2129 = vpop.f32.mrf.mxu0
    %v2130 = vadd.f32 0.0, %v2129
    %v2131 = vpop.f32.mrf.mxu0
    %v2132 = vadd.f32 0.0, %v2131
    %v2133 = vpop.f32.mrf.mxu0
    %v2134 = vadd.f32 0.0, %v2133
    %v2135 = vpop.f32.mrf.mxu0
    %v2136 = vadd.f32 0.0, %v2135
    %2137 = vdwg.mxu0
    %v2138 = vadd.f32 %v2035, %v2087
    %v2139 = vadd.f32 %v2036, %v2089
    %v2140 = vadd.f32 %v2037, %v2130
    %v2141 = vadd.f32 %v2038, %v2132
    %v2142 = vadd.f32 %v2042, %v2091
    %v2143 = vadd.f32 %v2043, %v2093
    %v2144 = vadd.f32 %v2044, %v2134
    %v2145 = vadd.f32 %v2045, %v2136
    %v2146 = vmul.f32 %v2138, 0.5
    %v2147 = vmul.f32 %v2142, 0.5
    %v2148 = vtanh.pop %v2146
    %v2149 = vtanh.pop %v2147
    %v2150 = vadd.f32 %v2148, 1.0
    %v2151 = vadd.f32 %v2149, 1.0
    %v2152 = vmul.f32 %v2150, 0.5
    %v2153 = vmul.f32 %v2151, 0.5
    %v2154 = vmul.f32 %v2139, 0.5
    %v2155 = vmul.f32 %v2143, 0.5
    %v2156 = vtanh.pop %v2154
    %v2157 = vtanh.pop %v2155
    %v2158 = vadd.f32 %v2156, 1.0
    %v2159 = vadd.f32 %v2157, 1.0
    %v2160 = vmul.f32 %v2158, 0.5
    %v2161 = vmul.f32 %v2159, 0.5
    %v2162 = vtanh.pop %v2140
    %v2163 = vtanh.pop %v2144
    %v2164 = vmul.f32 %v2141, 0.5
    %v2165 = vmul.f32 %v2145, 0.5
    %v2166 = vtanh.pop %v2164
    %v2167 = vtanh.pop %v2165
    %v2168 = vadd.f32 %v2166, 1.0
    %v2169 = vadd.f32 %v2167, 1.0
    %v2170 = vmul.f32 %v2168, 0.5
    %v2171 = vmul.f32 %v2169, 0.5
    %v2172 = vld [vmem:[#allocation3] sm:$0xff]
    %v2173 = vld [vmem:[#allocation3 + $0x8] sm:$0xff]
    %v2174 = vmul.f32 %v2160, %v2172
    %v2175 = vmul.f32 %v2161, %v2173
    %v2176 = vmul.f32 %v2152, %v2162
    %v2177 = vmul.f32 %v2153, %v2163
    %v2178 = vadd.f32 %v2174, %v2176
    %v2179 = vadd.f32 %v2175, %v2177
    %v2180 = vtanh.pop %v2178
    %v2181 = vtanh.pop %v2179
    %v2182 = vmul.f32 %v2170, %v2180
    %v2183 = vmul.f32 %v2171, %v2181
    %2184 = vst [vmem:[#allocation3] sm:$0xff] %v2178
    %2185 = vst [vmem:[#allocation3 + $0x8] sm:$0xff] %v2179
    %s2186 = scalar_lea.vmem %s3, 72
    %2187 = vst [vmem:[%s2186] sm:$0xff] %v2182
    %s2188 = scalar_lea.vmem %s197, 48
    %2189 = vst [vmem:[%s2188] sm:$0xff] %v2183
    %2190 = vst [vmem:[#allocation2] sm:$0xff] %v2182
    %2191 = vst [vmem:[#allocation2 + $0x18] sm:$0xff] %v2183
    %s2192 = scalar_lea.vmem [#allocation4], 160
    %v2193 = vld [vmem:[%s2192] sm:$0xff]
    %v2194 = vld [vmem:[%s2192 + $0x8] sm:$0xff]
    %v2195 = vunpack.c.l.bf16 %v2193
    %v2196 = vunpack.c.h.bf16 %v2193
    %v2197 = vunpack.c.l.bf16 %v2194
    %v2198 = vunpack.c.h.bf16 %v2194
    %s2199 = scalar_lea.vmem [#allocation5], 80
    %v2200 = vld [vmem:[%s2199] sm:$0xff]
    %v2201 = vld [vmem:[%s2199 + $0x8] sm:$0xff]
    %v2202 = vunpack.c.l.bf16 %v2200
    %v2203 = vunpack.c.h.bf16 %v2200
    %v2204 = vunpack.c.l.bf16 %v2201
    %v2205 = vunpack.c.h.bf16 %v2201
    %v2206 = vld [vmem:[#allocation2] sm:$0xff]
    %v2207 = vld [vmem:[#allocation2 + $0x8] sm:$0xff]
    %v2208 = vld [vmem:[#allocation2 + $0x10] sm:$0xff]
    %v2209 = vld [vmem:[#allocation2 + $0x18] sm:$0xff]
    %v2210 = vpack.c.bf16 %v2208, %v2206
    %v2211 = vpack.c.bf16 %v2209, %v2207
    %2212 = vmatprep.subr.bf16.mxu0 %v514
    %2213 = vmatpush1.bf16.msra.mxu0 %v513
    %2214 = vmatprep.subr.bf16.mxu0 %v510
    %2215 = vmatpush1.bf16.msra.mxu0 %v509
    %2216 = vmatprep.subr.bf16.mxu0 %v506
    %2217 = vmatpush1.bf16.msra.mxu0 %v505
    %2218 = vmatprep.subr.bf16.mxu0 %v502
    %2219 = vmatpush1.bf16.msra.mxu0 %v501
    %2220 = vmatprep.subr.bf16.mxu0 %v498
    %2221 = vmatpush1.bf16.msra.mxu0 %v497
    %2222 = vmatprep.subr.bf16.mxu0 %v494
    %2223 = vmatpush1.bf16.msra.mxu0 %v493
    %2224 = vmatprep.subr.bf16.mxu0 %v490
    %2225 = vmatpush1.bf16.msra.mxu0 %v489
    %2226 = vmatprep.subr.bf16.mxu0 %v486
    %2227 = vmatpush1.bf16.msra.mxu0 %v485
    %2228 = vmatprep.subr.bf16.mxu0 %v546
    %2229 = vmatpush2.bf16.msra.mxu0 %v545
    %2230 = vmatprep.subr.bf16.mxu0 %v542
    %2231 = vmatpush2.bf16.msra.mxu0 %v541
    %2232 = vmatprep.subr.bf16.mxu0 %v538
    %2233 = vmatpush2.bf16.msra.mxu0 %v537
    %2234 = vmatprep.subr.bf16.mxu0 %v534
    %2235 = vmatpush2.bf16.msra.mxu0 %v533
    %2236 = vmatprep.subr.bf16.mxu0 %v530
    %2237 = vmatpush2.bf16.msra.mxu0 %v529
    %2238 = vmatprep.subr.bf16.mxu0 %v526
    %2239 = vmatpush2.bf16.msra.mxu0 %v525
    %2240 = vmatprep.subr.bf16.mxu0 %v522
    %2241 = vmatpush2.bf16.msra.mxu0 %v521
    %2242 = vmatprep.subr.bf16.mxu0 %v518
    %2243 = vmatpush2.bf16.msra.mxu0 %v517
    %2244 = vmatprep.mubr.bf16.mxu0 %v2211
    %2245 = vmatmul.mubr.bf16.gmra.mxu0 %v2210
    %v2246 = vpop.f32.mrf.mxu0
    %v2247 = vadd.f32 0.0, %v2246
    %v2248 = vpop.f32.mrf.mxu0
    %v2249 = vadd.f32 0.0, %v2248
    %v2250 = vpop.f32.mrf.mxu0
    %v2251 = vadd.f32 0.0, %v2250
    %v2252 = vpop.f32.mrf.mxu0
    %v2253 = vadd.f32 0.0, %v2252
    %2254 = vdwg.mxu0
    %2255 = vmatprep.subr.bf16.mxu0 %v516
    %2256 = vmatpush1.bf16.msra.mxu0 %v515
    %2257 = vmatprep.subr.bf16.mxu0 %v512
    %2258 = vmatpush1.bf16.msra.mxu0 %v511
    %2259 = vmatprep.subr.bf16.mxu0 %v508
    %2260 = vmatpush1.bf16.msra.mxu0 %v507
    %2261 = vmatprep.subr.bf16.mxu0 %v504
    %2262 = vmatpush1.bf16.msra.mxu0 %v503
    %2263 = vmatprep.subr.bf16.mxu0 %v500
    %2264 = vmatpush1.bf16.msra.mxu0 %v499
    %2265 = vmatprep.subr.bf16.mxu0 %v496
    %2266 = vmatpush1.bf16.msra.mxu0 %v495
    %2267 = vmatprep.subr.bf16.mxu0 %v492
    %2268 = vmatpush1.bf16.msra.mxu0 %v491
    %2269 = vmatprep.subr.bf16.mxu0 %v488
    %2270 = vmatpush1.bf16.msra.mxu0 %v487
    %2271 = vmatprep.subr.bf16.mxu0 %v548
    %2272 = vmatpush2.bf16.msra.mxu0 %v547
    %2273 = vmatprep.subr.bf16.mxu0 %v544
    %2274 = vmatpush2.bf16.msra.mxu0 %v543
    %2275 = vmatprep.subr.bf16.mxu0 %v540
    %2276 = vmatpush2.bf16.msra.mxu0 %v539
    %2277 = vmatprep.subr.bf16.mxu0 %v536
    %2278 = vmatpush2.bf16.msra.mxu0 %v535
    %2279 = vmatprep.subr.bf16.mxu0 %v532
    %2280 = vmatpush2.bf16.msra.mxu0 %v531
    %2281 = vmatprep.subr.bf16.mxu0 %v528
    %2282 = vmatpush2.bf16.msra.mxu0 %v527
    %2283 = vmatprep.subr.bf16.mxu0 %v524
    %2284 = vmatpush2.bf16.msra.mxu0 %v523
    %2285 = vmatprep.subr.bf16.mxu0 %v520
    %2286 = vmatpush2.bf16.msra.mxu0 %v519
    %2287 = vmatprep.mubr.bf16.mxu0 %v2211
    %2288 = vmatmul.mubr.bf16.gmra.mxu0 %v2210
    %v2289 = vpop.f32.mrf.mxu0
    %v2290 = vadd.f32 0.0, %v2289
    %v2291 = vpop.f32.mrf.mxu0
    %v2292 = vadd.f32 0.0, %v2291
    %v2293 = vpop.f32.mrf.mxu0
    %v2294 = vadd.f32 0.0, %v2293
    %v2295 = vpop.f32.mrf.mxu0
    %v2296 = vadd.f32 0.0, %v2295
    %2297 = vdwg.mxu0
    %v2298 = vadd.f32 %v2195, %v2247
    %v2299 = vadd.f32 %v2196, %v2249
    %v2300 = vadd.f32 %v2197, %v2290
    %v2301 = vadd.f32 %v2198, %v2292
    %v2302 = vadd.f32 %v2202, %v2251
    %v2303 = vadd.f32 %v2203, %v2253
    %v2304 = vadd.f32 %v2204, %v2294
    %v2305 = vadd.f32 %v2205, %v2296
    %v2306 = vmul.f32 %v2298, 0.5
    %v2307 = vmul.f32 %v2302, 0.5
    %v2308 = vtanh.pop %v2306
    %v2309 = vtanh.pop %v2307
    %v2310 = vadd.f32 %v2308, 1.0
    %v2311 = vadd.f32 %v2309, 1.0
    %v2312 = vmul.f32 %v2310, 0.5
    %v2313 = vmul.f32 %v2311, 0.5
    %v2314 = vmul.f32 %v2299, 0.5
    %v2315 = vmul.f32 %v2303, 0.5
    %v2316 = vtanh.pop %v2314
    %v2317 = vtanh.pop %v2315
    %v2318 = vadd.f32 %v2316, 1.0
    %v2319 = vadd.f32 %v2317, 1.0
    %v2320 = vmul.f32 %v2318, 0.5
    %v2321 = vmul.f32 %v2319, 0.5
    %v2322 = vtanh.pop %v2300
    %v2323 = vtanh.pop %v2304
    %v2324 = vmul.f32 %v2301, 0.5
    %v2325 = vmul.f32 %v2305, 0.5
    %v2326 = vtanh.pop %v2324
    %v2327 = vtanh.pop %v2325
    %v2328 = vadd.f32 %v2326, 1.0
    %v2329 = vadd.f32 %v2327, 1.0
    %v2330 = vmul.f32 %v2328, 0.5
    %v2331 = vmul.f32 %v2329, 0.5
    %v2332 = vld [vmem:[#allocation3] sm:$0xff]
    %v2333 = vld [vmem:[#allocation3 + $0x8] sm:$0xff]
    %v2334 = vmul.f32 %v2320, %v2332
    %v2335 = vmul.f32 %v2321, %v2333
    %v2336 = vmul.f32 %v2312, %v2322
    %v2337 = vmul.f32 %v2313, %v2323
    %v2338 = vadd.f32 %v2334, %v2336
    %v2339 = vadd.f32 %v2335, %v2337
    %v2340 = vtanh.pop %v2338
    %v2341 = vtanh.pop %v2339
    %v2342 = vmul.f32 %v2330, %v2340
    %v2343 = vmul.f32 %v2331, %v2341
    %2344 = vst [vmem:[#allocation3] sm:$0xff] %v2338
    %2345 = vst [vmem:[#allocation3 + $0x8] sm:$0xff] %v2339
    %s2346 = scalar_lea.vmem %s3, 80
    %2347 = vst [vmem:[%s2346] sm:$0xff] %v2342
    %s2348 = scalar_lea.vmem %s197, 40
    %2349 = vst [vmem:[%s2348] sm:$0xff] %v2343
    %2350 = vst [vmem:[#allocation2] sm:$0xff] %v2342
    %2351 = vst [vmem:[#allocation2 + $0x18] sm:$0xff] %v2343
    %s2352 = scalar_lea.vmem [#allocation4], 176
    %v2353 = vld [vmem:[%s2352] sm:$0xff]
    %v2354 = vld [vmem:[%s2352 + $0x8] sm:$0xff]
    %v2355 = vunpack.c.l.bf16 %v2353
    %v2356 = vunpack.c.h.bf16 %v2353
    %v2357 = vunpack.c.l.bf16 %v2354
    %v2358 = vunpack.c.h.bf16 %v2354
    %s2359 = scalar_lea.vmem [#allocation5], 64
    %v2360 = vld [vmem:[%s2359] sm:$0xff]
    %v2361 = vld [vmem:[%s2359 + $0x8] sm:$0xff]
    %v2362 = vunpack.c.l.bf16 %v2360
    %v2363 = vunpack.c.h.bf16 %v2360
    %v2364 = vunpack.c.l.bf16 %v2361
    %v2365 = vunpack.c.h.bf16 %v2361
    %v2366 = vld [vmem:[#allocation2] sm:$0xff]
    %v2367 = vld [vmem:[#allocation2 + $0x8] sm:$0xff]
    %v2368 = vld [vmem:[#allocation2 + $0x10] sm:$0xff]
    %v2369 = vld [vmem:[#allocation2 + $0x18] sm:$0xff]
    %v2370 = vpack.c.bf16 %v2368, %v2366
    %v2371 = vpack.c.bf16 %v2369, %v2367
    %2372 = vmatprep.subr.bf16.mxu0 %v514
    %2373 = vmatpush1.bf16.msra.mxu0 %v513
    %2374 = vmatprep.subr.bf16.mxu0 %v510
    %2375 = vmatpush1.bf16.msra.mxu0 %v509
    %2376 = vmatprep.subr.bf16.mxu0 %v506
    %2377 = vmatpush1.bf16.msra.mxu0 %v505
    %2378 = vmatprep.subr.bf16.mxu0 %v502
    %2379 = vmatpush1.bf16.msra.mxu0 %v501
    %2380 = vmatprep.subr.bf16.mxu0 %v498
    %2381 = vmatpush1.bf16.msra.mxu0 %v497
    %2382 = vmatprep.subr.bf16.mxu0 %v494
    %2383 = vmatpush1.bf16.msra.mxu0 %v493
    %2384 = vmatprep.subr.bf16.mxu0 %v490
    %2385 = vmatpush1.bf16.msra.mxu0 %v489
    %2386 = vmatprep.subr.bf16.mxu0 %v486
    %2387 = vmatpush1.bf16.msra.mxu0 %v485
    %2388 = vmatprep.subr.bf16.mxu0 %v546
    %2389 = vmatpush2.bf16.msra.mxu0 %v545
    %2390 = vmatprep.subr.bf16.mxu0 %v542
    %2391 = vmatpush2.bf16.msra.mxu0 %v541
    %2392 = vmatprep.subr.bf16.mxu0 %v538
    %2393 = vmatpush2.bf16.msra.mxu0 %v537
    %2394 = vmatprep.subr.bf16.mxu0 %v534
    %2395 = vmatpush2.bf16.msra.mxu0 %v533
    %2396 = vmatprep.subr.bf16.mxu0 %v530
    %2397 = vmatpush2.bf16.msra.mxu0 %v529
    %2398 = vmatprep.subr.bf16.mxu0 %v526
    %2399 = vmatpush2.bf16.msra.mxu0 %v525
    %2400 = vmatprep.subr.bf16.mxu0 %v522
    %2401 = vmatpush2.bf16.msra.mxu0 %v521
    %2402 = vmatprep.subr.bf16.mxu0 %v518
    %2403 = vmatpush2.bf16.msra.mxu0 %v517
    %2404 = vmatprep.mubr.bf16.mxu0 %v2371
    %2405 = vmatmul.mubr.bf16.gmra.mxu0 %v2370
    %v2406 = vpop.f32.mrf.mxu0
    %v2407 = vadd.f32 0.0, %v2406
    %v2408 = vpop.f32.mrf.mxu0
    %v2409 = vadd.f32 0.0, %v2408
    %v2410 = vpop.f32.mrf.mxu0
    %v2411 = vadd.f32 0.0, %v2410
    %v2412 = vpop.f32.mrf.mxu0
    %v2413 = vadd.f32 0.0, %v2412
    %2414 = vdwg.mxu0
    %2415 = vmatprep.subr.bf16.mxu0 %v516
    %2416 = vmatpush1.bf16.msra.mxu0 %v515
    %2417 = vmatprep.subr.bf16.mxu0 %v512
    %2418 = vmatpush1.bf16.msra.mxu0 %v511
    %2419 = vmatprep.subr.bf16.mxu0 %v508
    %2420 = vmatpush1.bf16.msra.mxu0 %v507
    %2421 = vmatprep.subr.bf16.mxu0 %v504
    %2422 = vmatpush1.bf16.msra.mxu0 %v503
    %2423 = vmatprep.subr.bf16.mxu0 %v500
    %2424 = vmatpush1.bf16.msra.mxu0 %v499
    %2425 = vmatprep.subr.bf16.mxu0 %v496
    %2426 = vmatpush1.bf16.msra.mxu0 %v495
    %2427 = vmatprep.subr.bf16.mxu0 %v492
    %2428 = vmatpush1.bf16.msra.mxu0 %v491
    %2429 = vmatprep.subr.bf16.mxu0 %v488
    %2430 = vmatpush1.bf16.msra.mxu0 %v487
    %2431 = vmatprep.subr.bf16.mxu0 %v548
    %2432 = vmatpush2.bf16.msra.mxu0 %v547
    %2433 = vmatprep.subr.bf16.mxu0 %v544
    %2434 = vmatpush2.bf16.msra.mxu0 %v543
    %2435 = vmatprep.subr.bf16.mxu0 %v540
    %2436 = vmatpush2.bf16.msra.mxu0 %v539
    %2437 = vmatprep.subr.bf16.mxu0 %v536
    %2438 = vmatpush2.bf16.msra.mxu0 %v535
    %2439 = vmatprep.subr.bf16.mxu0 %v532
    %2440 = vmatpush2.bf16.msra.mxu0 %v531
    %2441 = vmatprep.subr.bf16.mxu0 %v528
    %2442 = vmatpush2.bf16.msra.mxu0 %v527
    %2443 = vmatprep.subr.bf16.mxu0 %v524
    %2444 = vmatpush2.bf16.msra.mxu0 %v523
    %2445 = vmatprep.subr.bf16.mxu0 %v520
    %2446 = vmatpush2.bf16.msra.mxu0 %v519
    %2447 = vmatprep.mubr.bf16.mxu0 %v2371
    %2448 = vmatmul.mubr.bf16.gmra.mxu0 %v2370
    %v2449 = vpop.f32.mrf.mxu0
    %v2450 = vadd.f32 0.0, %v2449
    %v2451 = vpop.f32.mrf.mxu0
    %v2452 = vadd.f32 0.0, %v2451
    %v2453 = vpop.f32.mrf.mxu0
    %v2454 = vadd.f32 0.0, %v2453
    %v2455 = vpop.f32.mrf.mxu0
    %v2456 = vadd.f32 0.0, %v2455
    %2457 = vdwg.mxu0
    %v2458 = vadd.f32 %v2355, %v2407
    %v2459 = vadd.f32 %v2356, %v2409
    %v2460 = vadd.f32 %v2357, %v2450
    %v2461 = vadd.f32 %v2358, %v2452
    %v2462 = vadd.f32 %v2362, %v2411
    %v2463 = vadd.f32 %v2363, %v2413
    %v2464 = vadd.f32 %v2364, %v2454
    %v2465 = vadd.f32 %v2365, %v2456
    %v2466 = vmul.f32 %v2458, 0.5
    %v2467 = vmul.f32 %v2462, 0.5
    %v2468 = vtanh.pop %v2466
    %v2469 = vtanh.pop %v2467
    %v2470 = vadd.f32 %v2468, 1.0
    %v2471 = vadd.f32 %v2469, 1.0
    %v2472 = vmul.f32 %v2470, 0.5
    %v2473 = vmul.f32 %v2471, 0.5
    %v2474 = vmul.f32 %v2459, 0.5
    %v2475 = vmul.f32 %v2463, 0.5
    %v2476 = vtanh.pop %v2474
    %v2477 = vtanh.pop %v2475
    %v2478 = vadd.f32 %v2476, 1.0
    %v2479 = vadd.f32 %v2477, 1.0
    %v2480 = vmul.f32 %v2478, 0.5
    %v2481 = vmul.f32 %v2479, 0.5
    %v2482 = vtanh.pop %v2460
    %v2483 = vtanh.pop %v2464
    %v2484 = vmul.f32 %v2461, 0.5
    %v2485 = vmul.f32 %v2465, 0.5
    %v2486 = vtanh.pop %v2484
    %v2487 = vtanh.pop %v2485
    %v2488 = vadd.f32 %v2486, 1.0
    %v2489 = vadd.f32 %v2487, 1.0
    %v2490 = vmul.f32 %v2488, 0.5
    %v2491 = vmul.f32 %v2489, 0.5
    %v2492 = vld [vmem:[#allocation3] sm:$0xff]
    %v2493 = vld [vmem:[#allocation3 + $0x8] sm:$0xff]
    %v2494 = vmul.f32 %v2480, %v2492
    %v2495 = vmul.f32 %v2481, %v2493
    %v2496 = vmul.f32 %v2472, %v2482
    %v2497 = vmul.f32 %v2473, %v2483
    %v2498 = vadd.f32 %v2494, %v2496
    %v2499 = vadd.f32 %v2495, %v2497
    %v2500 = vtanh.pop %v2498
    %v2501 = vtanh.pop %v2499
    %v2502 = vmul.f32 %v2490, %v2500
    %v2503 = vmul.f32 %v2491, %v2501
    %2504 = vst [vmem:[#allocation3] sm:$0xff] %v2498
    %2505 = vst [vmem:[#allocation3 + $0x8] sm:$0xff] %v2499
    %s2506 = scalar_lea.vmem %s3, 88
    %2507 = vst [vmem:[%s2506] sm:$0xff] %v2502
    %s2508 = scalar_lea.vmem %s197, 32
    %2509 = vst [vmem:[%s2508] sm:$0xff] %v2503
    %2510 = vst [vmem:[#allocation2] sm:$0xff] %v2502
    %2511 = vst [vmem:[#allocation2 + $0x18] sm:$0xff] %v2503
    %s2512 = scalar_lea.vmem [#allocation4], 192
    %v2513 = vld [vmem:[%s2512] sm:$0xff]
    %v2514 = vld [vmem:[%s2512 + $0x8] sm:$0xff]
    %v2515 = vunpack.c.l.bf16 %v2513
    %v2516 = vunpack.c.h.bf16 %v2513
    %v2517 = vunpack.c.l.bf16 %v2514
    %v2518 = vunpack.c.h.bf16 %v2514
    %s2519 = scalar_lea.vmem [#allocation5], 48
    %v2520 = vld [vmem:[%s2519] sm:$0xff]
    %v2521 = vld [vmem:[%s2519 + $0x8] sm:$0xff]
    %v2522 = vunpack.c.l.bf16 %v2520
    %v2523 = vunpack.c.h.bf16 %v2520
    %v2524 = vunpack.c.l.bf16 %v2521
    %v2525 = vunpack.c.h.bf16 %v2521
    %v2526 = vld [vmem:[#allocation2] sm:$0xff]
    %v2527 = vld [vmem:[#allocation2 + $0x8] sm:$0xff]
    %v2528 = vld [vmem:[#allocation2 + $0x10] sm:$0xff]
    %v2529 = vld [vmem:[#allocation2 + $0x18] sm:$0xff]
    %v2530 = vpack.c.bf16 %v2528, %v2526
    %v2531 = vpack.c.bf16 %v2529, %v2527
    %2532 = vmatprep.subr.bf16.mxu0 %v514
    %2533 = vmatpush1.bf16.msra.mxu0 %v513
    %2534 = vmatprep.subr.bf16.mxu0 %v510
    %2535 = vmatpush1.bf16.msra.mxu0 %v509
    %2536 = vmatprep.subr.bf16.mxu0 %v506
    %2537 = vmatpush1.bf16.msra.mxu0 %v505
    %2538 = vmatprep.subr.bf16.mxu0 %v502
    %2539 = vmatpush1.bf16.msra.mxu0 %v501
    %2540 = vmatprep.subr.bf16.mxu0 %v498
    %2541 = vmatpush1.bf16.msra.mxu0 %v497
    %2542 = vmatprep.subr.bf16.mxu0 %v494
    %2543 = vmatpush1.bf16.msra.mxu0 %v493
    %2544 = vmatprep.subr.bf16.mxu0 %v490
    %2545 = vmatpush1.bf16.msra.mxu0 %v489
    %2546 = vmatprep.subr.bf16.mxu0 %v486
    %2547 = vmatpush1.bf16.msra.mxu0 %v485
    %2548 = vmatprep.subr.bf16.mxu0 %v546
    %2549 = vmatpush2.bf16.msra.mxu0 %v545
    %2550 = vmatprep.subr.bf16.mxu0 %v542
    %2551 = vmatpush2.bf16.msra.mxu0 %v541
    %2552 = vmatprep.subr.bf16.mxu0 %v538
    %2553 = vmatpush2.bf16.msra.mxu0 %v537
    %2554 = vmatprep.subr.bf16.mxu0 %v534
    %2555 = vmatpush2.bf16.msra.mxu0 %v533
    %2556 = vmatprep.subr.bf16.mxu0 %v530
    %2557 = vmatpush2.bf16.msra.mxu0 %v529
    %2558 = vmatprep.subr.bf16.mxu0 %v526
    %2559 = vmatpush2.bf16.msra.mxu0 %v525
    %2560 = vmatprep.subr.bf16.mxu0 %v522
    %2561 = vmatpush2.bf16.msra.mxu0 %v521
    %2562 = vmatprep.subr.bf16.mxu0 %v518
    %2563 = vmatpush2.bf16.msra.mxu0 %v517
    %2564 = vmatprep.mubr.bf16.mxu0 %v2531
    %2565 = vmatmul.mubr.bf16.gmra.mxu0 %v2530
    %v2566 = vpop.f32.mrf.mxu0
    %v2567 = vadd.f32 0.0, %v2566
    %v2568 = vpop.f32.mrf.mxu0
    %v2569 = vadd.f32 0.0, %v2568
    %v2570 = vpop.f32.mrf.mxu0
    %v2571 = vadd.f32 0.0, %v2570
    %v2572 = vpop.f32.mrf.mxu0
    %v2573 = vadd.f32 0.0, %v2572
    %2574 = vdwg.mxu0
    %2575 = vmatprep.subr.bf16.mxu0 %v516
    %2576 = vmatpush1.bf16.msra.mxu0 %v515
    %2577 = vmatprep.subr.bf16.mxu0 %v512
    %2578 = vmatpush1.bf16.msra.mxu0 %v511
    %2579 = vmatprep.subr.bf16.mxu0 %v508
    %2580 = vmatpush1.bf16.msra.mxu0 %v507
    %2581 = vmatprep.subr.bf16.mxu0 %v504
    %2582 = vmatpush1.bf16.msra.mxu0 %v503
    %2583 = vmatprep.subr.bf16.mxu0 %v500
    %2584 = vmatpush1.bf16.msra.mxu0 %v499
    %2585 = vmatprep.subr.bf16.mxu0 %v496
    %2586 = vmatpush1.bf16.msra.mxu0 %v495
    %2587 = vmatprep.subr.bf16.mxu0 %v492
    %2588 = vmatpush1.bf16.msra.mxu0 %v491
    %2589 = vmatprep.subr.bf16.mxu0 %v488
    %2590 = vmatpush1.bf16.msra.mxu0 %v487
    %2591 = vmatprep.subr.bf16.mxu0 %v548
    %2592 = vmatpush2.bf16.msra.mxu0 %v547
    %2593 = vmatprep.subr.bf16.mxu0 %v544
    %2594 = vmatpush2.bf16.msra.mxu0 %v543
    %2595 = vmatprep.subr.bf16.mxu0 %v540
    %2596 = vmatpush2.bf16.msra.mxu0 %v539
    %2597 = vmatprep.subr.bf16.mxu0 %v536
    %2598 = vmatpush2.bf16.msra.mxu0 %v535
    %2599 = vmatprep.subr.bf16.mxu0 %v532
    %2600 = vmatpush2.bf16.msra.mxu0 %v531
    %2601 = vmatprep.subr.bf16.mxu0 %v528
    %2602 = vmatpush2.bf16.msra.mxu0 %v527
    %2603 = vmatprep.subr.bf16.mxu0 %v524
    %2604 = vmatpush2.bf16.msra.mxu0 %v523
    %2605 = vmatprep.subr.bf16.mxu0 %v520
    %2606 = vmatpush2.bf16.msra.mxu0 %v519
    %2607 = vmatprep.mubr.bf16.mxu0 %v2531
    %2608 = vmatmul.mubr.bf16.gmra.mxu0 %v2530
    %v2609 = vpop.f32.mrf.mxu0
    %v2610 = vadd.f32 0.0, %v2609
    %v2611 = vpop.f32.mrf.mxu0
    %v2612 = vadd.f32 0.0, %v2611
    %v2613 = vpop.f32.mrf.mxu0
    %v2614 = vadd.f32 0.0, %v2613
    %v2615 = vpop.f32.mrf.mxu0
    %v2616 = vadd.f32 0.0, %v2615
    %2617 = vdwg.mxu0
    %v2618 = vadd.f32 %v2515, %v2567
    %v2619 = vadd.f32 %v2516, %v2569
    %v2620 = vadd.f32 %v2517, %v2610
    %v2621 = vadd.f32 %v2518, %v2612
    %v2622 = vadd.f32 %v2522, %v2571
    %v2623 = vadd.f32 %v2523, %v2573
    %v2624 = vadd.f32 %v2524, %v2614
    %v2625 = vadd.f32 %v2525, %v2616
    %v2626 = vmul.f32 %v2618, 0.5
    %v2627 = vmul.f32 %v2622, 0.5
    %v2628 = vtanh.pop %v2626
    %v2629 = vtanh.pop %v2627
    %v2630 = vadd.f32 %v2628, 1.0
    %v2631 = vadd.f32 %v2629, 1.0
    %v2632 = vmul.f32 %v2630, 0.5
    %v2633 = vmul.f32 %v2631, 0.5
    %v2634 = vmul.f32 %v2619, 0.5
    %v2635 = vmul.f32 %v2623, 0.5
    %v2636 = vtanh.pop %v2634
    %v2637 = vtanh.pop %v2635
    %v2638 = vadd.f32 %v2636, 1.0
    %v2639 = vadd.f32 %v2637, 1.0
    %v2640 = vmul.f32 %v2638, 0.5
    %v2641 = vmul.f32 %v2639, 0.5
    %v2642 = vtanh.pop %v2620
    %v2643 = vtanh.pop %v2624
    %v2644 = vmul.f32 %v2621, 0.5
    %v2645 = vmul.f32 %v2625, 0.5
    %v2646 = vtanh.pop %v2644
    %v2647 = vtanh.pop %v2645
    %v2648 = vadd.f32 %v2646, 1.0
    %v2649 = vadd.f32 %v2647, 1.0
    %v2650 = vmul.f32 %v2648, 0.5
    %v2651 = vmul.f32 %v2649, 0.5
    %v2652 = vld [vmem:[#allocation3] sm:$0xff]
    %v2653 = vld [vmem:[#allocation3 + $0x8] sm:$0xff]
    %v2654 = vmul.f32 %v2640, %v2652
    %v2655 = vmul.f32 %v2641, %v2653
    %v2656 = vmul.f32 %v2632, %v2642
    %v2657 = vmul.f32 %v2633, %v2643
    %v2658 = vadd.f32 %v2654, %v2656
    %v2659 = vadd.f32 %v2655, %v2657
    %v2660 = vtanh.pop %v2658
    %v2661 = vtanh.pop %v2659
    %v2662 = vmul.f32 %v2650, %v2660
    %v2663 = vmul.f32 %v2651, %v2661
    %2664 = vst [vmem:[#allocation3] sm:$0xff] %v2658
    %2665 = vst [vmem:[#allocation3 + $0x8] sm:$0xff] %v2659
    %s2666 = scalar_lea.vmem %s3, 96
    %2667 = vst [vmem:[%s2666] sm:$0xff] %v2662
    %s2668 = scalar_lea.vmem %s197, 24
    %2669 = vst [vmem:[%s2668] sm:$0xff] %v2663
    %2670 = vst [vmem:[#allocation2] sm:$0xff] %v2662
    %2671 = vst [vmem:[#allocation2 + $0x18] sm:$0xff] %v2663
    %s2672 = scalar_lea.vmem [#allocation4], 208
    %v2673 = vld [vmem:[%s2672] sm:$0xff]
    %v2674 = vld [vmem:[%s2672 + $0x8] sm:$0xff]
    %v2675 = vunpack.c.l.bf16 %v2673
    %v2676 = vunpack.c.h.bf16 %v2673
    %v2677 = vunpack.c.l.bf16 %v2674
    %v2678 = vunpack.c.h.bf16 %v2674
    %s2679 = scalar_lea.vmem [#allocation5], 32
    %v2680 = vld [vmem:[%s2679] sm:$0xff]
    %v2681 = vld [vmem:[%s2679 + $0x8] sm:$0xff]
    %v2682 = vunpack.c.l.bf16 %v2680
    %v2683 = vunpack.c.h.bf16 %v2680
    %v2684 = vunpack.c.l.bf16 %v2681
    %v2685 = vunpack.c.h.bf16 %v2681
    %v2686 = vld [vmem:[#allocation2] sm:$0xff]
    %v2687 = vld [vmem:[#allocation2 + $0x8] sm:$0xff]
    %v2688 = vld [vmem:[#allocation2 + $0x10] sm:$0xff]
    %v2689 = vld [vmem:[#allocation2 + $0x18] sm:$0xff]
    %v2690 = vpack.c.bf16 %v2688, %v2686
    %v2691 = vpack.c.bf16 %v2689, %v2687
    %2692 = vmatprep.subr.bf16.mxu0 %v514
    %2693 = vmatpush1.bf16.msra.mxu0 %v513
    %2694 = vmatprep.subr.bf16.mxu0 %v510
    %2695 = vmatpush1.bf16.msra.mxu0 %v509
    %2696 = vmatprep.subr.bf16.mxu0 %v506
    %2697 = vmatpush1.bf16.msra.mxu0 %v505
    %2698 = vmatprep.subr.bf16.mxu0 %v502
    %2699 = vmatpush1.bf16.msra.mxu0 %v501
    %2700 = vmatprep.subr.bf16.mxu0 %v498
    %2701 = vmatpush1.bf16.msra.mxu0 %v497
    %2702 = vmatprep.subr.bf16.mxu0 %v494
    %2703 = vmatpush1.bf16.msra.mxu0 %v493
    %2704 = vmatprep.subr.bf16.mxu0 %v490
    %2705 = vmatpush1.bf16.msra.mxu0 %v489
    %2706 = vmatprep.subr.bf16.mxu0 %v486
    %2707 = vmatpush1.bf16.msra.mxu0 %v485
    %2708 = vmatprep.subr.bf16.mxu0 %v546
    %2709 = vmatpush2.bf16.msra.mxu0 %v545
    %2710 = vmatprep.subr.bf16.mxu0 %v542
    %2711 = vmatpush2.bf16.msra.mxu0 %v541
    %2712 = vmatprep.subr.bf16.mxu0 %v538
    %2713 = vmatpush2.bf16.msra.mxu0 %v537
    %2714 = vmatprep.subr.bf16.mxu0 %v534
    %2715 = vmatpush2.bf16.msra.mxu0 %v533
    %2716 = vmatprep.subr.bf16.mxu0 %v530
    %2717 = vmatpush2.bf16.msra.mxu0 %v529
    %2718 = vmatprep.subr.bf16.mxu0 %v526
    %2719 = vmatpush2.bf16.msra.mxu0 %v525
    %2720 = vmatprep.subr.bf16.mxu0 %v522
    %2721 = vmatpush2.bf16.msra.mxu0 %v521
    %2722 = vmatprep.subr.bf16.mxu0 %v518
    %2723 = vmatpush2.bf16.msra.mxu0 %v517
    %2724 = vmatprep.mubr.bf16.mxu0 %v2691
    %2725 = vmatmul.mubr.bf16.gmra.mxu0 %v2690
    %v2726 = vpop.f32.mrf.mxu0
    %v2727 = vadd.f32 0.0, %v2726
    %v2728 = vpop.f32.mrf.mxu0
    %v2729 = vadd.f32 0.0, %v2728
    %v2730 = vpop.f32.mrf.mxu0
    %v2731 = vadd.f32 0.0, %v2730
    %v2732 = vpop.f32.mrf.mxu0
    %v2733 = vadd.f32 0.0, %v2732
    %2734 = vdwg.mxu0
    %2735 = vmatprep.subr.bf16.mxu0 %v516
    %2736 = vmatpush1.bf16.msra.mxu0 %v515
    %2737 = vmatprep.subr.bf16.mxu0 %v512
    %2738 = vmatpush1.bf16.msra.mxu0 %v511
    %2739 = vmatprep.subr.bf16.mxu0 %v508
    %2740 = vmatpush1.bf16.msra.mxu0 %v507
    %2741 = vmatprep.subr.bf16.mxu0 %v504
    %2742 = vmatpush1.bf16.msra.mxu0 %v503
    %2743 = vmatprep.subr.bf16.mxu0 %v500
    %2744 = vmatpush1.bf16.msra.mxu0 %v499
    %2745 = vmatprep.subr.bf16.mxu0 %v496
    %2746 = vmatpush1.bf16.msra.mxu0 %v495
    %2747 = vmatprep.subr.bf16.mxu0 %v492
    %2748 = vmatpush1.bf16.msra.mxu0 %v491
    %2749 = vmatprep.subr.bf16.mxu0 %v488
    %2750 = vmatpush1.bf16.msra.mxu0 %v487
    %2751 = vmatprep.subr.bf16.mxu0 %v548
    %2752 = vmatpush2.bf16.msra.mxu0 %v547
    %2753 = vmatprep.subr.bf16.mxu0 %v544
    %2754 = vmatpush2.bf16.msra.mxu0 %v543
    %2755 = vmatprep.subr.bf16.mxu0 %v540
    %2756 = vmatpush2.bf16.msra.mxu0 %v539
    %2757 = vmatprep.subr.bf16.mxu0 %v536
    %2758 = vmatpush2.bf16.msra.mxu0 %v535
    %2759 = vmatprep.subr.bf16.mxu0 %v532
    %2760 = vmatpush2.bf16.msra.mxu0 %v531
    %2761 = vmatprep.subr.bf16.mxu0 %v528
    %2762 = vmatpush2.bf16.msra.mxu0 %v527
    %2763 = vmatprep.subr.bf16.mxu0 %v524
    %2764 = vmatpush2.bf16.msra.mxu0 %v523
    %2765 = vmatprep.subr.bf16.mxu0 %v520
    %2766 = vmatpush2.bf16.msra.mxu0 %v519
    %2767 = vmatprep.mubr.bf16.mxu0 %v2691
    %2768 = vmatmul.mubr.bf16.gmra.mxu0 %v2690
    %v2769 = vpop.f32.mrf.mxu0
    %v2770 = vadd.f32 0.0, %v2769
    %v2771 = vpop.f32.mrf.mxu0
    %v2772 = vadd.f32 0.0, %v2771
    %v2773 = vpop.f32.mrf.mxu0
    %v2774 = vadd.f32 0.0, %v2773
    %v2775 = vpop.f32.mrf.mxu0
    %v2776 = vadd.f32 0.0, %v2775
    %2777 = vdwg.mxu0
    %v2778 = vadd.f32 %v2675, %v2727
    %v2779 = vadd.f32 %v2676, %v2729
    %v2780 = vadd.f32 %v2677, %v2770
    %v2781 = vadd.f32 %v2678, %v2772
    %v2782 = vadd.f32 %v2682, %v2731
    %v2783 = vadd.f32 %v2683, %v2733
    %v2784 = vadd.f32 %v2684, %v2774
    %v2785 = vadd.f32 %v2685, %v2776
    %v2786 = vmul.f32 %v2778, 0.5
    %v2787 = vmul.f32 %v2782, 0.5
    %v2788 = vtanh.pop %v2786
    %v2789 = vtanh.pop %v2787
    %v2790 = vadd.f32 %v2788, 1.0
    %v2791 = vadd.f32 %v2789, 1.0
    %v2792 = vmul.f32 %v2790, 0.5
    %v2793 = vmul.f32 %v2791, 0.5
    %v2794 = vmul.f32 %v2779, 0.5
    %v2795 = vmul.f32 %v2783, 0.5
    %v2796 = vtanh.pop %v2794
    %v2797 = vtanh.pop %v2795
    %v2798 = vadd.f32 %v2796, 1.0
    %v2799 = vadd.f32 %v2797, 1.0
    %v2800 = vmul.f32 %v2798, 0.5
    %v2801 = vmul.f32 %v2799, 0.5
    %v2802 = vtanh.pop %v2780
    %v2803 = vtanh.pop %v2784
    %v2804 = vmul.f32 %v2781, 0.5
    %v2805 = vmul.f32 %v2785, 0.5
    %v2806 = vtanh.pop %v2804
    %v2807 = vtanh.pop %v2805
    %v2808 = vadd.f32 %v2806, 1.0
    %v2809 = vadd.f32 %v2807, 1.0
    %v2810 = vmul.f32 %v2808, 0.5
    %v2811 = vmul.f32 %v2809, 0.5
    %v2812 = vld [vmem:[#allocation3] sm:$0xff]
    %v2813 = vld [vmem:[#allocation3 + $0x8] sm:$0xff]
    %v2814 = vmul.f32 %v2800, %v2812
    %v2815 = vmul.f32 %v2801, %v2813
    %v2816 = vmul.f32 %v2792, %v2802
    %v2817 = vmul.f32 %v2793, %v2803
    %v2818 = vadd.f32 %v2814, %v2816
    %v2819 = vadd.f32 %v2815, %v2817
    %v2820 = vtanh.pop %v2818
    %v2821 = vtanh.pop %v2819
    %v2822 = vmul.f32 %v2810, %v2820
    %v2823 = vmul.f32 %v2811, %v2821
    %2824 = vst [vmem:[#allocation3] sm:$0xff] %v2818
    %2825 = vst [vmem:[#allocation3 + $0x8] sm:$0xff] %v2819
    %s2826 = scalar_lea.vmem %s3, 104
    %2827 = vst [vmem:[%s2826] sm:$0xff] %v2822
    %s2828 = scalar_lea.vmem %s197, 16
    %2829 = vst [vmem:[%s2828] sm:$0xff] %v2823
    %2830 = vst [vmem:[#allocation2] sm:$0xff] %v2822
    %2831 = vst [vmem:[#allocation2 + $0x18] sm:$0xff] %v2823
    %s2832 = scalar_lea.vmem [#allocation4], 224
    %v2833 = vld [vmem:[%s2832] sm:$0xff]
    %v2834 = vld [vmem:[%s2832 + $0x8] sm:$0xff]
    %v2835 = vunpack.c.l.bf16 %v2833
    %v2836 = vunpack.c.h.bf16 %v2833
    %v2837 = vunpack.c.l.bf16 %v2834
    %v2838 = vunpack.c.h.bf16 %v2834
    %s2839 = scalar_lea.vmem [#allocation5], 16
    %v2840 = vld [vmem:[%s2839] sm:$0xff]
    %v2841 = vld [vmem:[%s2839 + $0x8] sm:$0xff]
    %v2842 = vunpack.c.l.bf16 %v2840
    %v2843 = vunpack.c.h.bf16 %v2840
    %v2844 = vunpack.c.l.bf16 %v2841
    %v2845 = vunpack.c.h.bf16 %v2841
    %v2846 = vld [vmem:[#allocation2] sm:$0xff]
    %v2847 = vld [vmem:[#allocation2 + $0x8] sm:$0xff]
    %v2848 = vld [vmem:[#allocation2 + $0x10] sm:$0xff]
    %v2849 = vld [vmem:[#allocation2 + $0x18] sm:$0xff]
    %v2850 = vpack.c.bf16 %v2848, %v2846
    %v2851 = vpack.c.bf16 %v2849, %v2847
    %2852 = vmatprep.subr.bf16.mxu0 %v514
    %2853 = vmatpush1.bf16.msra.mxu0 %v513
    %2854 = vmatprep.subr.bf16.mxu0 %v510
    %2855 = vmatpush1.bf16.msra.mxu0 %v509
    %2856 = vmatprep.subr.bf16.mxu0 %v506
    %2857 = vmatpush1.bf16.msra.mxu0 %v505
    %2858 = vmatprep.subr.bf16.mxu0 %v502
    %2859 = vmatpush1.bf16.msra.mxu0 %v501
    %2860 = vmatprep.subr.bf16.mxu0 %v498
    %2861 = vmatpush1.bf16.msra.mxu0 %v497
    %2862 = vmatprep.subr.bf16.mxu0 %v494
    %2863 = vmatpush1.bf16.msra.mxu0 %v493
    %2864 = vmatprep.subr.bf16.mxu0 %v490
    %2865 = vmatpush1.bf16.msra.mxu0 %v489
    %2866 = vmatprep.subr.bf16.mxu0 %v486
    %2867 = vmatpush1.bf16.msra.mxu0 %v485
    %2868 = vmatprep.subr.bf16.mxu0 %v546
    %2869 = vmatpush2.bf16.msra.mxu0 %v545
    %2870 = vmatprep.subr.bf16.mxu0 %v542
    %2871 = vmatpush2.bf16.msra.mxu0 %v541
    %2872 = vmatprep.subr.bf16.mxu0 %v538
    %2873 = vmatpush2.bf16.msra.mxu0 %v537
    %2874 = vmatprep.subr.bf16.mxu0 %v534
    %2875 = vmatpush2.bf16.msra.mxu0 %v533
    %2876 = vmatprep.subr.bf16.mxu0 %v530
    %2877 = vmatpush2.bf16.msra.mxu0 %v529
    %2878 = vmatprep.subr.bf16.mxu0 %v526
    %2879 = vmatpush2.bf16.msra.mxu0 %v525
    %2880 = vmatprep.subr.bf16.mxu0 %v522
    %2881 = vmatpush2.bf16.msra.mxu0 %v521
    %2882 = vmatprep.subr.bf16.mxu0 %v518
    %2883 = vmatpush2.bf16.msra.mxu0 %v517
    %2884 = vmatprep.mubr.bf16.mxu0 %v2851
    %2885 = vmatmul.mubr.bf16.gmra.mxu0 %v2850
    %v2886 = vpop.f32.mrf.mxu0
    %v2887 = vadd.f32 0.0, %v2886
    %v2888 = vpop.f32.mrf.mxu0
    %v2889 = vadd.f32 0.0, %v2888
    %v2890 = vpop.f32.mrf.mxu0
    %v2891 = vadd.f32 0.0, %v2890
    %v2892 = vpop.f32.mrf.mxu0
    %v2893 = vadd.f32 0.0, %v2892
    %2894 = vdwg.mxu0
    %2895 = vmatprep.subr.bf16.mxu0 %v516
    %2896 = vmatpush1.bf16.msra.mxu0 %v515
    %2897 = vmatprep.subr.bf16.mxu0 %v512
    %2898 = vmatpush1.bf16.msra.mxu0 %v511
    %2899 = vmatprep.subr.bf16.mxu0 %v508
    %2900 = vmatpush1.bf16.msra.mxu0 %v507
    %2901 = vmatprep.subr.bf16.mxu0 %v504
    %2902 = vmatpush1.bf16.msra.mxu0 %v503
    %2903 = vmatprep.subr.bf16.mxu0 %v500
    %2904 = vmatpush1.bf16.msra.mxu0 %v499
    %2905 = vmatprep.subr.bf16.mxu0 %v496
    %2906 = vmatpush1.bf16.msra.mxu0 %v495
    %2907 = vmatprep.subr.bf16.mxu0 %v492
    %2908 = vmatpush1.bf16.msra.mxu0 %v491
    %2909 = vmatprep.subr.bf16.mxu0 %v488
    %2910 = vmatpush1.bf16.msra.mxu0 %v487
    %2911 = vmatprep.subr.bf16.mxu0 %v548
    %2912 = vmatpush2.bf16.msra.mxu0 %v547
    %2913 = vmatprep.subr.bf16.mxu0 %v544
    %2914 = vmatpush2.bf16.msra.mxu0 %v543
    %2915 = vmatprep.subr.bf16.mxu0 %v540
    %2916 = vmatpush2.bf16.msra.mxu0 %v539
    %2917 = vmatprep.subr.bf16.mxu0 %v536
    %2918 = vmatpush2.bf16.msra.mxu0 %v535
    %2919 = vmatprep.subr.bf16.mxu0 %v532
    %2920 = vmatpush2.bf16.msra.mxu0 %v531
    %2921 = vmatprep.subr.bf16.mxu0 %v528
    %2922 = vmatpush2.bf16.msra.mxu0 %v527
    %2923 = vmatprep.subr.bf16.mxu0 %v524
    %2924 = vmatpush2.bf16.msra.mxu0 %v523
    %2925 = vmatprep.subr.bf16.mxu0 %v520
    %2926 = vmatpush2.bf16.msra.mxu0 %v519
    %2927 = vmatprep.mubr.bf16.mxu0 %v2851
    %2928 = vmatmul.mubr.bf16.gmra.mxu0 %v2850
    %v2929 = vpop.f32.mrf.mxu0
    %v2930 = vadd.f32 0.0, %v2929
    %v2931 = vpop.f32.mrf.mxu0
    %v2932 = vadd.f32 0.0, %v2931
    %v2933 = vpop.f32.mrf.mxu0
    %v2934 = vadd.f32 0.0, %v2933
    %v2935 = vpop.f32.mrf.mxu0
    %v2936 = vadd.f32 0.0, %v2935
    %2937 = vdwg.mxu0
    %v2938 = vadd.f32 %v2835, %v2887
    %v2939 = vadd.f32 %v2836, %v2889
    %v2940 = vadd.f32 %v2837, %v2930
    %v2941 = vadd.f32 %v2838, %v2932
    %v2942 = vadd.f32 %v2842, %v2891
    %v2943 = vadd.f32 %v2843, %v2893
    %v2944 = vadd.f32 %v2844, %v2934
    %v2945 = vadd.f32 %v2845, %v2936
    %v2946 = vmul.f32 %v2938, 0.5
    %v2947 = vmul.f32 %v2942, 0.5
    %v2948 = vtanh.pop %v2946
    %v2949 = vtanh.pop %v2947
    %v2950 = vadd.f32 %v2948, 1.0
    %v2951 = vadd.f32 %v2949, 1.0
    %v2952 = vmul.f32 %v2950, 0.5
    %v2953 = vmul.f32 %v2951, 0.5
    %v2954 = vmul.f32 %v2939, 0.5
    %v2955 = vmul.f32 %v2943, 0.5
    %v2956 = vtanh.pop %v2954
    %v2957 = vtanh.pop %v2955
    %v2958 = vadd.f32 %v2956, 1.0
    %v2959 = vadd.f32 %v2957, 1.0
    %v2960 = vmul.f32 %v2958, 0.5
    %v2961 = vmul.f32 %v2959, 0.5
    %v2962 = vtanh.pop %v2940
    %v2963 = vtanh.pop %v2944
    %v2964 = vmul.f32 %v2941, 0.5
    %v2965 = vmul.f32 %v2945, 0.5
    %v2966 = vtanh.pop %v2964
    %v2967 = vtanh.pop %v2965
    %v2968 = vadd.f32 %v2966, 1.0
    %v2969 = vadd.f32 %v2967, 1.0
    %v2970 = vmul.f32 %v2968, 0.5
    %v2971 = vmul.f32 %v2969, 0.5
    %v2972 = vld [vmem:[#allocation3] sm:$0xff]
    %v2973 = vld [vmem:[#allocation3 + $0x8] sm:$0xff]
    %v2974 = vmul.f32 %v2960, %v2972
    %v2975 = vmul.f32 %v2961, %v2973
    %v2976 = vmul.f32 %v2952, %v2962
    %v2977 = vmul.f32 %v2953, %v2963
    %v2978 = vadd.f32 %v2974, %v2976
    %v2979 = vadd.f32 %v2975, %v2977
    %v2980 = vtanh.pop %v2978
    %v2981 = vtanh.pop %v2979
    %v2982 = vmul.f32 %v2970, %v2980
    %v2983 = vmul.f32 %v2971, %v2981
    %2984 = vst [vmem:[#allocation3] sm:$0xff] %v2978
    %2985 = vst [vmem:[#allocation3 + $0x8] sm:$0xff] %v2979
    %s2986 = scalar_lea.vmem %s3, 112
    %2987 = vst [vmem:[%s2986] sm:$0xff] %v2982
    %s2988 = scalar_lea.vmem %s197, 8
    %2989 = vst [vmem:[%s2988] sm:$0xff] %v2983
    %2990 = vst [vmem:[#allocation2] sm:$0xff] %v2982
    %2991 = vst [vmem:[#allocation2 + $0x18] sm:$0xff] %v2983
    %s2992 = scalar_lea.vmem [#allocation4], 240
    %v2993 = vld [vmem:[%s2992] sm:$0xff]
    %v2994 = vld [vmem:[%s2992 + $0x8] sm:$0xff]
    %v2995 = vunpack.c.l.bf16 %v2993
    %v2996 = vunpack.c.h.bf16 %v2993
    %v2997 = vunpack.c.l.bf16 %v2994
    %v2998 = vunpack.c.h.bf16 %v2994
    %v2999 = vld [vmem:[#allocation5] sm:$0xff]
    %v3000 = vld [vmem:[#allocation5 + $0x8] sm:$0xff]
    %v3001 = vunpack.c.l.bf16 %v2999
    %v3002 = vunpack.c.h.bf16 %v2999
    %v3003 = vunpack.c.l.bf16 %v3000
    %v3004 = vunpack.c.h.bf16 %v3000
    %v3005 = vld [vmem:[#allocation2] sm:$0xff]
    %v3006 = vld [vmem:[#allocation2 + $0x8] sm:$0xff]
    %v3007 = vld [vmem:[#allocation2 + $0x10] sm:$0xff]
    %v3008 = vld [vmem:[#allocation2 + $0x18] sm:$0xff]
    %v3009 = vpack.c.bf16 %v3007, %v3005
    %v3010 = vpack.c.bf16 %v3008, %v3006
    %3011 = vmatprep.subr.bf16.mxu0 %v514
    %3012 = vmatpush1.bf16.msra.mxu0 %v513
    %3013 = vmatprep.subr.bf16.mxu0 %v510
    %3014 = vmatpush1.bf16.msra.mxu0 %v509
    %3015 = vmatprep.subr.bf16.mxu0 %v506
    %3016 = vmatpush1.bf16.msra.mxu0 %v505
    %3017 = vmatprep.subr.bf16.mxu0 %v502
    %3018 = vmatpush1.bf16.msra.mxu0 %v501
    %3019 = vmatprep.subr.bf16.mxu0 %v498
    %3020 = vmatpush1.bf16.msra.mxu0 %v497
    %3021 = vmatprep.subr.bf16.mxu0 %v494
    %3022 = vmatpush1.bf16.msra.mxu0 %v493
    %3023 = vmatprep.subr.bf16.mxu0 %v490
    %3024 = vmatpush1.bf16.msra.mxu0 %v489
    %3025 = vmatprep.subr.bf16.mxu0 %v486
    %3026 = vmatpush1.bf16.msra.mxu0 %v485
    %3027 = vmatprep.subr.bf16.mxu0 %v546
    %3028 = vmatpush2.bf16.msra.mxu0 %v545
    %3029 = vmatprep.subr.bf16.mxu0 %v542
    %3030 = vmatpush2.bf16.msra.mxu0 %v541
    %3031 = vmatprep.subr.bf16.mxu0 %v538
    %3032 = vmatpush2.bf16.msra.mxu0 %v537
    %3033 = vmatprep.subr.bf16.mxu0 %v534
    %3034 = vmatpush2.bf16.msra.mxu0 %v533
    %3035 = vmatprep.subr.bf16.mxu0 %v530
    %3036 = vmatpush2.bf16.msra.mxu0 %v529
    %3037 = vmatprep.subr.bf16.mxu0 %v526
    %3038 = vmatpush2.bf16.msra.mxu0 %v525
    %3039 = vmatprep.subr.bf16.mxu0 %v522
    %3040 = vmatpush2.bf16.msra.mxu0 %v521
    %3041 = vmatprep.subr.bf16.mxu0 %v518
    %3042 = vmatpush2.bf16.msra.mxu0 %v517
    %3043 = vmatprep.mubr.bf16.mxu0 %v3010
    %3044 = vmatmul.mubr.bf16.gmra.mxu0 %v3009
    %v3045 = vpop.f32.mrf.mxu0
    %v3046 = vadd.f32 0.0, %v3045
    %v3047 = vpop.f32.mrf.mxu0
    %v3048 = vadd.f32 0.0, %v3047
    %v3049 = vpop.f32.mrf.mxu0
    %v3050 = vadd.f32 0.0, %v3049
    %v3051 = vpop.f32.mrf.mxu0
    %v3052 = vadd.f32 0.0, %v3051
    %3053 = vdwg.mxu0
    %3054 = vmatprep.subr.bf16.mxu0 %v516
    %3055 = vmatpush1.bf16.msra.mxu0 %v515
    %3056 = vmatprep.subr.bf16.mxu0 %v512
    %3057 = vmatpush1.bf16.msra.mxu0 %v511
    %3058 = vmatprep.subr.bf16.mxu0 %v508
    %3059 = vmatpush1.bf16.msra.mxu0 %v507
    %3060 = vmatprep.subr.bf16.mxu0 %v504
    %3061 = vmatpush1.bf16.msra.mxu0 %v503
    %3062 = vmatprep.subr.bf16.mxu0 %v500
    %3063 = vmatpush1.bf16.msra.mxu0 %v499
    %3064 = vmatprep.subr.bf16.mxu0 %v496
    %3065 = vmatpush1.bf16.msra.mxu0 %v495
    %3066 = vmatprep.subr.bf16.mxu0 %v492
    %3067 = vmatpush1.bf16.msra.mxu0 %v491
    %3068 = vmatprep.subr.bf16.mxu0 %v488
    %3069 = vmatpush1.bf16.msra.mxu0 %v487
    %3070 = vmatprep.subr.bf16.mxu0 %v548
    %3071 = vmatpush2.bf16.msra.mxu0 %v547
    %3072 = vmatprep.subr.bf16.mxu0 %v544
    %3073 = vmatpush2.bf16.msra.mxu0 %v543
    %3074 = vmatprep.subr.bf16.mxu0 %v540
    %3075 = vmatpush2.bf16.msra.mxu0 %v539
    %3076 = vmatprep.subr.bf16.mxu0 %v536
    %3077 = vmatpush2.bf16.msra.mxu0 %v535
    %3078 = vmatprep.subr.bf16.mxu0 %v532
    %3079 = vmatpush2.bf16.msra.mxu0 %v531
    %3080 = vmatprep.subr.bf16.mxu0 %v528
    %3081 = vmatpush2.bf16.msra.mxu0 %v527
    %3082 = vmatprep.subr.bf16.mxu0 %v524
    %3083 = vmatpush2.bf16.msra.mxu0 %v523
    %3084 = vmatprep.subr.bf16.mxu0 %v520
    %3085 = vmatpush2.bf16.msra.mxu0 %v519
    %3086 = vmatprep.mubr.bf16.mxu0 %v3010
    %3087 = vmatmul.mubr.bf16.gmra.mxu0 %v3009
    %v3088 = vpop.f32.mrf.mxu0
    %v3089 = vadd.f32 0.0, %v3088
    %v3090 = vpop.f32.mrf.mxu0
    %v3091 = vadd.f32 0.0, %v3090
    %v3092 = vpop.f32.mrf.mxu0
    %v3093 = vadd.f32 0.0, %v3092
    %v3094 = vpop.f32.mrf.mxu0
    %v3095 = vadd.f32 0.0, %v3094
    %3096 = vdwg.mxu0
    %v3097 = vadd.f32 %v2995, %v3046
    %v3098 = vadd.f32 %v2996, %v3048
    %v3099 = vadd.f32 %v2997, %v3089
    %v3100 = vadd.f32 %v2998, %v3091
    %v3101 = vadd.f32 %v3001, %v3050
    %v3102 = vadd.f32 %v3002, %v3052
    %v3103 = vadd.f32 %v3003, %v3093
    %v3104 = vadd.f32 %v3004, %v3095
    %v3105 = vmul.f32 %v3097, 0.5
    %v3106 = vmul.f32 %v3101, 0.5
    %v3107 = vtanh.pop %v3105
    %v3108 = vtanh.pop %v3106
    %v3109 = vadd.f32 %v3107, 1.0
    %v3110 = vadd.f32 %v3108, 1.0
    %v3111 = vmul.f32 %v3109, 0.5
    %v3112 = vmul.f32 %v3110, 0.5
    %v3113 = vmul.f32 %v3098, 0.5
    %v3114 = vmul.f32 %v3102, 0.5
    %v3115 = vtanh.pop %v3113
    %v3116 = vtanh.pop %v3114
    %v3117 = vadd.f32 %v3115, 1.0
    %v3118 = vadd.f32 %v3116, 1.0
    %v3119 = vmul.f32 %v3117, 0.5
    %v3120 = vmul.f32 %v3118, 0.5
    %v3121 = vtanh.pop %v3099
    %v3122 = vtanh.pop %v3103
    %v3123 = vmul.f32 %v3100, 0.5
    %v3124 = vmul.f32 %v3104, 0.5
    %v3125 = vtanh.pop %v3123
    %v3126 = vtanh.pop %v3124
    %v3127 = vadd.f32 %v3125, 1.0
    %v3128 = vadd.f32 %v3126, 1.0
    %v3129 = vmul.f32 %v3127, 0.5
    %v3130 = vmul.f32 %v3128, 0.5
    %v3131 = vld [vmem:[#allocation3] sm:$0xff]
    %v3132 = vld [vmem:[#allocation3 + $0x8] sm:$0xff]
    %v3133 = vmul.f32 %v3119, %v3131
    %v3134 = vmul.f32 %v3120, %v3132
    %v3135 = vmul.f32 %v3111, %v3121
    %v3136 = vmul.f32 %v3112, %v3122
    %v3137 = vadd.f32 %v3133, %v3135
    %v3138 = vadd.f32 %v3134, %v3136
    %v3139 = vtanh.pop %v3137
    %v3140 = vtanh.pop %v3138
    %v3141 = vmul.f32 %v3129, %v3139
    %v3142 = vmul.f32 %v3130, %v3140
    %3143 = vst [vmem:[#allocation3] sm:$0xff] %v3137
    %3144 = vst [vmem:[#allocation3 + $0x8] sm:$0xff] %v3138
    %s3145 = scalar_lea.vmem %s3, 120
    %3146 = vst [vmem:[%s3145] sm:$0xff] %v3141
    %3147 = vst [vmem:[%s197] sm:$0xff] %v3142
    %3148 = vst [vmem:[#allocation2] sm:$0xff] %v3141
    %3149 = vst [vmem:[#allocation2 + $0x18] sm:$0xff] %v3142
    %s3150 = ssub.s32 0, 0
    %s3151 = smul.u32 16, %s3150
    %p3152 = scmp.lt.s32.totalorder %s3151, 15
    %s3153 = scalar_select %p3152, %s3151, 15
    %s3154 = smul.addr %s3153, 8
    %s3155 = scalar_lea.vmem %s4, %s3154
    // Predicated region
    $region64: #{forward.4} parent=1 // pred_check
      _
    $region65: #{forward.4} parent=1 // pred_check_branch
      %3157 = sbr.rel (0) target = $region67
    $region66: #{forward.4} parent=1 // pred_region
      _
    $region67: #{forward.4} parent=1 // pred_fallthru
      _
    // Predicated region
    $region68: #{forward.4} parent=1 // pred_check
      _
    $region69: #{forward.4} parent=1 // pred_check_branch
      %3159 = sbr.rel (0) target = $region71
    $region70: #{forward.4} parent=1 // pred_region
      %s3160 = ssub.s32 0, 0
      %s3161 = smul.u32 16, %s3160
    $region71: #{forward.4} parent=1 // pred_fallthru
      _
    // Predicated region
    $region72: #{forward.4} parent=1 // pred_check
      _
    $region73: #{forward.4} parent=1 // pred_check_branch
      %3163 = sbr.rel (0) target = $region75
    $region74: #{forward.4} parent=1 // pred_region
      _
    $region75: #{forward.4} parent=1 // pred_fallthru
      _
    // Predicated region
    $region76: #{forward.4} parent=1 // pred_check
      _
    $region77: #{forward.4} parent=1 // pred_check_branch
      %3165 = sbr.rel (0) target = $region79
    $region78: #{forward.4} parent=1 // pred_region
      %s3166 = ssub.s32 0, 0
      %s3167 = smul.u32 16, %s3166
      %p3168 = scmp.lt.s32.totalorder %s3167, 15
      %s3169 = scalar_select %p3168, %s3167, 15
      %s3170 = smul.addr %s3169, 8
      %s3171 = scalar_lea.vmem %s4, %s3170
    $region79: #{forward.4} parent=1 // pred_fallthru
      _

</llo_original>
